<compile_context>
chip_gen: v7x
topology: tpu7x:2x2x1
jax: 0.10.0
libtpu: 0.0.40
codegen_flags: <defaults>
</compile_context>

<pallas_src>
import functools

import jax
import jax.numpy as jnp
from jax.experimental import pallas as pl
from jax.experimental.pallas import tpu as pltpu


# ----------------------------------------------------------------------------
# Pallas kernel: one grid step == one chunk of T_CHUNK timesteps.
# ----------------------------------------------------------------------------
def _ode_lstm_kernel(xwb_ref, ts_ref,
                     w_hh_ref, w1_ref, b1_ref, w2_ref, b2_ref,
                     h_out_ref,
                     h_scr, c_scr,
                     *, hidden_pad, unroll):
    HP = hidden_pad
    T_BLK, B, _ = xwb_ref.shape

    @pl.when(pl.program_id(0) == 0)
    def _():
        h_scr[...] = jnp.zeros_like(h_scr)
        c_scr[...] = jnp.zeros_like(c_scr)

    def step(t, carry):
        h, c = carry

        # ---- LSTMCell gates: input projection (+ biases) precomputed in the
        #      wrapper; only the recurrent matmul stays on the serial path. ----
        gates = xwb_ref[t] + jnp.dot(h, w_hh_ref[...],
                                     preferred_element_type=jnp.float32)  # (B, 4HP)
        # Lane-aligned gate views (HP is a multiple of 128).
        i_g = jax.nn.sigmoid(gates[:, 0 * HP:1 * HP])
        f_g = jax.nn.sigmoid(gates[:, 1 * HP:2 * HP])
        g_g = jnp.tanh(gates[:, 2 * HP:3 * HP])
        o_g = jax.nn.sigmoid(gates[:, 3 * HP:4 * HP])

        c_new = f_g * c + i_g * g_g
        h_new = o_g * jnp.tanh(c_new)

        # ---- solve_fixed with fixed_euler: 3 Euler substeps of dt = ts/3.
        #      Broadcast dt to (B, HP) once (JAX does not CSE broadcasts). ----
        dt = jnp.broadcast_to(ts_ref[t] * (1.0 / 3.0), (B, HP))
        for _ in range(3):
            hdn = jnp.tanh(jnp.dot(h_new, w1_ref[...],
                                   preferred_element_type=jnp.float32) + b1_ref[...])
            dy = jnp.dot(hdn, w2_ref[...],
                         preferred_element_type=jnp.float32) + b2_ref[...]
            h_new = h_new + dt * dy

        # ---- lane-dense (B, HP) store of the hidden state; fc head is applied
        #      in the wrapper as one batched matmul over all timesteps. ----
        h_out_ref[t] = h_new.astype(h_out_ref.dtype)
        return (h_new, c_new)

    h_fin, c_fin = jax.lax.fori_loop(0, T_BLK, step, (h_scr[...], c_scr[...]),
                                     unroll=unroll)
    h_scr[...] = h_fin
    c_scr[...] = c_fin


# ----------------------------------------------------------------------------
# Padding helpers (all padding is exact zero-padding).
# ----------------------------------------------------------------------------
def _round_up(n, m):
    return ((n + m - 1) // m) * m


def _pad_axis(a, axis, new_size):
    pad = [(0, 0)] * a.ndim
    pad[axis] = (0, new_size - a.shape[axis])
    return jnp.pad(a, pad)


def _pad_gate_cols(w, H, HP):
    """(..., 4H) -> (..., 4HP): zero-pad each of the i/f/g/o blocks to HP lanes."""
    lead = w.shape[:-1]
    w4 = w.reshape(lead + (4, H))
    w4 = jnp.pad(w4, [(0, 0)] * len(lead) + [(0, 0), (0, HP - H)])
    return w4.reshape(lead + (4 * HP,))


# ----------------------------------------------------------------------------
# Wrapper
# ----------------------------------------------------------------------------
def ode_lstm_forward(x, timespans, params, *, t_chunk=None):
    """x: (B, T, I) float32, timespans: (B, T) float32 -> (B, T, O) float32."""
    B, T, I = x.shape
    H = params['w_hh_t'].shape[0]
    O = params['w_fc_t'].shape[1]
    HP = _round_up(H, 128)       # lane-aligned hidden size
    BP = _round_up(B, 8)         # sublane-aligned batch

    if t_chunk is None:
        t_chunk = T if T <= 64 else 32
    T_pad = _round_up(T, t_chunk)
    n_chunks = T_pad // t_chunk
    unroll = t_chunk if t_chunk <= 16 else 8   # give LLO scheduler visibility

    f32 = jnp.float32
    x32 = x.astype(f32)
    ts32 = timespans.astype(f32)

    # ---- per-gate zero-padded parameters (exact) ----
    w_ih_p = _pad_gate_cols(params['w_ih_t'].astype(f32), H, HP)                 # (I, 4HP)
    w_hh_p = _pad_axis(_pad_gate_cols(params['w_hh_t'].astype(f32), H, HP), 0, HP)  # (HP,4HP)
    b_lstm_p = _pad_gate_cols(
        (params['b_ih'] + params['b_hh']).astype(f32).reshape(1, 4 * H), H, HP)  # (1, 4HP)
    w1_p = _pad_axis(_pad_axis(params['w1_t'].astype(f32), 0, HP), 1, HP)        # (HP, HP)
    b1_p = _pad_axis(params['b1'].astype(f32).reshape(1, H), 1, HP)              # (1, HP)
    w2_p = _pad_axis(_pad_axis(params['w2_t'].astype(f32), 0, HP), 1, HP)        # (HP, HP)
    b2_p = _pad_axis(params['b2'].astype(f32).reshape(1, H), 1, HP)              # (1, HP)

    # ---- non-recurrent input projection hoisted out of the serial kernel:
    #      one big (T*B, I) x (I, 4HP) matmul instead of T tiny ones. ----
    xwb = jnp.einsum('bti,ik->tbk', x32, w_ih_p) + b_lstm_p                      # (T, B, 4HP)
    xwb = _pad_axis(_pad_axis(xwb, 1, BP), 0, T_pad)                             # (T_pad,BP,4HP)
    ts_seq = _pad_axis(
        _pad_axis(jnp.transpose(ts32, (1, 0))[:, :, None], 1, BP), 0, T_pad)     # (T_pad,BP,1)

    kernel = functools.partial(_ode_lstm_kernel, hidden_pad=HP, unroll=unroll)

    def full(shape):
        return pl.BlockSpec(shape, lambda c: (0,) * len(shape))

    # ---- explicit VMEM budget (double-buffered streamed blocks + weights + carry),
    #      capped under v7x's 64 MiB physical VMEM. ----
    def _b(*s):
        n = 4
        for d in s:
            n *= d
        return n
    vmem_bytes = (2 * (_b(t_chunk, BP, 4 * HP) + _b(t_chunk, BP, 1)
                       + _b(t_chunk, BP, HP))
                  + 2 * (_b(HP, 4 * HP) + 2 * _b(HP, HP) + 2 * _b(1, HP))
                  + 2 * _b(BP, HP))
    vmem_limit = int(min(vmem_bytes + (4 << 20), 64 << 20))

    h_seq = pl.pallas_call(
        kernel,
        out_shape=jax.ShapeDtypeStruct((T_pad, BP, HP), f32),
        grid_spec=pltpu.PrefetchScalarGridSpec(
            num_scalar_prefetch=0,
            grid=(n_chunks,),
            in_specs=[
                pl.BlockSpec((t_chunk, BP, 4 * HP), lambda c: (c, 0, 0)),  # xwb chunk
                pl.BlockSpec((t_chunk, BP, 1), lambda c: (c, 0, 0)),       # ts chunk
                full((HP, 4 * HP)),                                        # W_hh^T
                full((HP, HP)),                                            # f_node W1^T
                full((1, HP)),                                             # f_node b1
                full((HP, HP)),                                            # f_node W2^T
                full((1, HP)),                                             # f_node b2
            ],
            out_specs=pl.BlockSpec((t_chunk, BP, HP), lambda c: (c, 0, 0)),
            scratch_shapes=[
                pltpu.VMEM((BP, HP), f32),                                 # h carry
                pltpu.VMEM((BP, HP), f32),                                 # c carry
            ],
        ),
        compiler_params=pltpu.CompilerParams(
            dimension_semantics=("arbitrary",),   # sequential recurrence over time chunks
            vmem_limit_bytes=vmem_limit),
    )(xwb, ts_seq, w_hh_p, w1_p, b1_p, w2_p, b2_p)

    # ---- fc head as one batched matmul over all (real) timesteps (hoisted
    #      off the serial path; equivalent to per-step fc(h_t)). ----
    h_seq = h_seq[:T, :B, :H]                                              # (T, B, H)
    out = (jnp.einsum('tbh,ho->bto', h_seq, params['w_fc_t'].astype(f32))
           + params['b_fc'].astype(f32))                                   # (B, T, O)
    return out


# ----------------------------------------------------------------------------
# Deterministic parameter init (shapes follow the PyTorch module __init__).
# Weights are stored pre-transposed so kernels compute y = x @ W^T as x @ W_t.
# ----------------------------------------------------------------------------
def init_params(key, in_features, hidden_size, out_feature):
    ks = jax.random.split(key, 11)
    bound = 1.0 / jnp.sqrt(hidden_size)
    u = lambda k, shape: jax.random.uniform(k, shape, jnp.float32, -bound, bound)
    return {
        # nn.LSTMCell(in_features, hidden_size)
        'w_ih_t': u(ks[0], (in_features, 4 * hidden_size)),
        'w_hh_t': u(ks[1], (hidden_size, 4 * hidden_size)),
        'b_ih':   u(ks[2], (4 * hidden_size,)),
        'b_hh':   u(ks[3], (4 * hidden_size,)),
        # f_node = Linear(H,H) -> Tanh -> Linear(H,H)
        'w1_t':   u(ks[4], (hidden_size, hidden_size)),
        'b1':     u(ks[5], (hidden_size,)),
        'w2_t':   u(ks[6], (hidden_size, hidden_size)),
        'b2':     u(ks[7], (hidden_size,)),
        # fc = Linear(H, out_feature)
        'w_fc_t': u(ks[8], (hidden_size, out_feature)),
        'b_fc':   u(ks[9], (out_feature,)),
    }


# ----------------------------------------------------------------------------
# Pure-JAX reference (mirrors the PyTorch forward) for verification.
# ----------------------------------------------------------------------------
def ode_lstm_reference(x, timespans, params):
    B, T, I = x.shape
    H = params['w_hh_t'].shape[0]
    b_lstm = params['b_ih'] + params['b_hh']

    def f_node(y):
        hdn = jnp.tanh(y @ params['w1_t'] + params['b1'])
        return hdn @ params['w2_t'] + params['b2']

    def step(carry, inp):
        h, c = carry
        x_t, ts_t = inp
        gates = x_t @ params['w_ih_t'] + h @ params['w_hh_t'] + b_lstm
        i_g = jax.nn.sigmoid(gates[:, 0:H])
        f_g = jax.nn.sigmoid(gates[:, H:2 * H])
        g_g = jnp.tanh(gates[:, 2 * H:3 * H])
        o_g = jax.nn.sigmoid(gates[:, 3 * H:4 * H])
        c_new = f_g * c + i_g * g_g
        h_new = o_g * jnp.tanh(c_new)
        dt = ts_t.reshape(-1, 1) / 3.0
        for _ in range(3):
            h_new = h_new + dt * f_node(h_new)
        out = h_new @ params['w_fc_t'] + params['b_fc']
        return (h_new, c_new), out

    h0 = jnp.zeros((B, H), jnp.float32)
    c0 = jnp.zeros((B, H), jnp.float32)
    xs = (jnp.transpose(x, (1, 0, 2)), jnp.transpose(timespans, (1, 0)))
    _, outs = jax.lax.scan(step, (h0, c0), xs)
    return jnp.transpose(outs, (1, 0, 2))


if __name__ == "__main__":
    B, T, I, H, O = 4, 8, 16, 32, 8

    key = jax.random.PRNGKey(0)
    k_x, k_ts, k_p = jax.random.split(key, 3)
    x = jax.random.normal(k_x, (B, T, I), jnp.float32)
    timespans = jax.random.uniform(k_ts, (B, T), jnp.float32, 0.1, 1.0)
    params = init_params(k_p, I, H, O)

    out = jax.block_until_ready(ode_lstm_forward(x, timespans, params))
    ref = ode_lstm_reference(x, timespans, params)

    assert out.shape == (B, T, O)
    assert jnp.allclose(out, ref, atol=2e-5, rtol=2e-5), float(jnp.max(jnp.abs(out - ref)))
    print("KERNEL_OK")
</pallas_src>

<mosaic_0001>
module attributes {stable_mosaic.version = 11 : i64} {
  func.func @_ode_lstm_kernel(%arg0: i32, %arg1: memref<8x8x512xf32, #tpu.memory_space<vmem>>, %arg2: memref<8x8x1xf32, #tpu.memory_space<vmem>>, %arg3: memref<128x512xf32, #tpu.memory_space<vmem>>, %arg4: memref<128x128xf32, #tpu.memory_space<vmem>>, %arg5: memref<1x128xf32, #tpu.memory_space<vmem>>, %arg6: memref<128x128xf32, #tpu.memory_space<vmem>>, %arg7: memref<1x128xf32, #tpu.memory_space<vmem>>, %arg8: memref<8x8x128xf32, #tpu.memory_space<vmem>>, %arg9: memref<8x128xf32, #tpu.memory_space<vmem>>, %arg10: memref<8x128xf32, #tpu.memory_space<vmem>>) attributes {dimension_semantics = [#tpu.dimension_semantics<arbitrary>], iteration_bounds = array<i64: 1>, scalar_prefetch = 0 : i64, scratch_operands = 2 : i64, tpu.core_type = #tpu.core_type<tc>, window_params = [{transform_indices = @transform_0, window_bounds = array<i64: 8, 8, 512>}, {transform_indices = @transform_1, window_bounds = array<i64: 8, 8, 1>}, {pipeline_mode = #tpu.pipeline_mode<synchronous>, transform_indices = @transform_2, window_bounds = array<i64: 128, 512>}, {pipeline_mode = #tpu.pipeline_mode<synchronous>, transform_indices = @transform_3, window_bounds = array<i64: 128, 128>}, {pipeline_mode = #tpu.pipeline_mode<synchronous>, transform_indices = @transform_4, window_bounds = array<i64: 1, 128>}, {pipeline_mode = #tpu.pipeline_mode<synchronous>, transform_indices = @transform_5, window_bounds = array<i64: 128, 128>}, {pipeline_mode = #tpu.pipeline_mode<synchronous>, transform_indices = @transform_6, window_bounds = array<i64: 1, 128>}, {transform_indices = @transform_7, window_bounds = array<i64: 8, 8, 128>}]} {
    %c0_i32 = arith.constant 0 : i32
    %0 = arith.cmpi eq, %arg0, %c0_i32 : i32
    %1 = arith.extui %0 : i1 to i32
    %c0_i32_0 = arith.constant 0 : i32
    %2 = arith.cmpi ne, %1, %c0_i32_0 : i32
    scf.if %2 {
      %cst_352 = arith.constant 0.000000e+00 : f32
      %655 = vector.broadcast %cst_352 : f32 to vector<8x128xf32>
      %c0_353 = arith.constant 0 : index
      %c0_354 = arith.constant 0 : index
      %656 = vector.load %arg9[%c0_353, %c0_354] : memref<8x128xf32, #tpu.memory_space<vmem>>, vector<8x128xf32>
      tpu.vector_store %arg9[%c0_353, %c0_354], %655 {strides = array<i32>} : memref<8x128xf32, #tpu.memory_space<vmem>>, vector<8x128xf32>,
      %cst_355 = arith.constant 0.000000e+00 : f32
      %657 = vector.broadcast %cst_355 : f32 to vector<8x128xf32>
      %c0_356 = arith.constant 0 : index
      %c0_357 = arith.constant 0 : index
      %658 = vector.load %arg10[%c0_356, %c0_357] : memref<8x128xf32, #tpu.memory_space<vmem>>, vector<8x128xf32>
      tpu.vector_store %arg10[%c0_356, %c0_357], %657 {strides = array<i32>} : memref<8x128xf32, #tpu.memory_space<vmem>>, vector<8x128xf32>,
    } else {
    }
    %c0 = arith.constant 0 : index
    %c0_1 = arith.constant 0 : index
    %3 = vector.load %arg9[%c0, %c0_1] : memref<8x128xf32, #tpu.memory_space<vmem>>, vector<8x128xf32>
    %c0_2 = arith.constant 0 : index
    %c0_3 = arith.constant 0 : index
    %4 = vector.load %arg10[%c0_2, %c0_3] : memref<8x128xf32, #tpu.memory_space<vmem>>, vector<8x128xf32>
    %c0_i32_4 = arith.constant 0 : i32
    %5 = arith.index_cast %c0_i32_4 : i32 to index
    %c0_5 = arith.constant 0 : index
    %c0_6 = arith.constant 0 : index
    %6 = vector.load %arg1[%5, %c0_5, %c0_6] : memref<8x8x512xf32, #tpu.memory_space<vmem>>, vector<1x8x512xf32>
    %7 = vector.shape_cast %6 : vector<1x8x512xf32> to vector<8x512xf32>
    %c0_7 = arith.constant 0 : index
    %c0_8 = arith.constant 0 : index
    %8 = vector.load %arg3[%c0_7, %c0_8] : memref<128x512xf32, #tpu.memory_space<vmem>>, vector<128x512xf32>
    %cst = arith.constant dense<0.000000e+00> : vector<8x512xf32>
    %9 = tpu.matmul %3, %8, %cst {dimension_numbers = #tpu.dot_dimension_numbers<[1], [0], [0], [1], [0, 0, 1, 1], [], []>} : vector<8x128xf32>, vector<128x512xf32>, vector<8x512xf32> -> vector<8x512xf32>
    %10 = arith.addf %7, %9 : vector<8x512xf32>
    %11 = vector.extract_strided_slice %10 {offsets = [0, 0], sizes = [8, 128], strides = [1, 1]} : vector<8x512xf32> to vector<8x128xf32>
    %12 = arith.negf %11 : vector<8x128xf32>
    %13 = math.exp %12 : vector<8x128xf32>
    %cst_9 = arith.constant 1.000000e+00 : f32
    %14 = vector.broadcast %cst_9 : f32 to vector<8x128xf32>
    %15 = arith.addf %14, %13 : vector<8x128xf32>
    %16 = arith.divf %14, %15 : vector<8x128xf32>
    %17 = vector.extract_strided_slice %10 {offsets = [0, 128], sizes = [8, 128], strides = [1, 1]} : vector<8x512xf32> to vector<8x128xf32>
    %18 = arith.negf %17 : vector<8x128xf32>
    %19 = math.exp %18 : vector<8x128xf32>
    %cst_10 = arith.constant 1.000000e+00 : f32
    %20 = vector.broadcast %cst_10 : f32 to vector<8x128xf32>
    %21 = arith.addf %20, %19 : vector<8x128xf32>
    %22 = arith.divf %20, %21 : vector<8x128xf32>
    %23 = vector.extract_strided_slice %10 {offsets = [0, 256], sizes = [8, 128], strides = [1, 1]} : vector<8x512xf32> to vector<8x128xf32>
    %24 = math.tanh %23 : vector<8x128xf32>
    %25 = vector.extract_strided_slice %10 {offsets = [0, 384], sizes = [8, 128], strides = [1, 1]} : vector<8x512xf32> to vector<8x128xf32>
    %26 = arith.negf %25 : vector<8x128xf32>
    %27 = math.exp %26 : vector<8x128xf32>
    %cst_11 = arith.constant 1.000000e+00 : f32
    %28 = vector.broadcast %cst_11 : f32 to vector<8x128xf32>
    %29 = arith.addf %28, %27 : vector<8x128xf32>
    %30 = arith.divf %28, %29 : vector<8x128xf32>
    %31 = arith.mulf %22, %4 : vector<8x128xf32>
    %32 = arith.mulf %16, %24 : vector<8x128xf32>
    %33 = arith.addf %31, %32 : vector<8x128xf32>
    %34 = math.tanh %33 : vector<8x128xf32>
    %35 = arith.mulf %30, %34 : vector<8x128xf32>
    %36 = arith.index_cast %c0_i32_4 : i32 to index
    %c0_12 = arith.constant 0 : index
    %c0_13 = arith.constant 0 : index
    %37 = vector.load %arg2[%36, %c0_12, %c0_13] : memref<8x8x1xf32, #tpu.memory_space<vmem>>, vector<1x8x1xf32>
    %38 = vector.shape_cast %37 : vector<1x8x1xf32> to vector<8x1xf32>
    %cst_14 = arith.constant 0.333333343 : f32
    %39 = vector.broadcast %cst_14 : f32 to vector<8x1xf32>
    %40 = arith.mulf %38, %39 : vector<8x1xf32>
    %41 = vector.shape_cast %40 : vector<8x1xf32> to vector<8x1xf32>
    %42 = vector.broadcast %41 : vector<8x1xf32> to vector<8x128xf32>
    %c0_15 = arith.constant 0 : index
    %c0_16 = arith.constant 0 : index
    %43 = vector.load %arg4[%c0_15, %c0_16] : memref<128x128xf32, #tpu.memory_space<vmem>>, vector<128x128xf32>
    %cst_17 = arith.constant dense<0.000000e+00> : vector<8x128xf32>
    %44 = tpu.matmul %35, %43, %cst_17 {dimension_numbers = #tpu.dot_dimension_numbers<[1], [0], [0], [1], [0, 0, 1, 1], [], []>} : vector<8x128xf32>, vector<128x128xf32>, vector<8x128xf32> -> vector<8x128xf32>
    %c0_18 = arith.constant 0 : index
    %c0_19 = arith.constant 0 : index
    %45 = vector.load %arg5[%c0_18, %c0_19] : memref<1x128xf32, #tpu.memory_space<vmem>>, vector<1x128xf32>
    %46 = vector.broadcast %45 : vector<1x128xf32> to vector<8x128xf32>
    %47 = arith.addf %44, %46 : vector<8x128xf32>
    %48 = math.tanh %47 : vector<8x128xf32>
    %c0_20 = arith.constant 0 : index
    %c0_21 = arith.constant 0 : index
    %49 = vector.load %arg6[%c0_20, %c0_21] : memref<128x128xf32, #tpu.memory_space<vmem>>, vector<128x128xf32>
    %cst_22 = arith.constant dense<0.000000e+00> : vector<8x128xf32>
    %50 = tpu.matmul %48, %49, %cst_22 {dimension_numbers = #tpu.dot_dimension_numbers<[1], [0], [0], [1], [0, 0, 1, 1], [], []>} : vector<8x128xf32>, vector<128x128xf32>, vector<8x128xf32> -> vector<8x128xf32>
    %c0_23 = arith.constant 0 : index
    %c0_24 = arith.constant 0 : index
    %51 = vector.load %arg7[%c0_23, %c0_24] : memref<1x128xf32, #tpu.memory_space<vmem>>, vector<1x128xf32>
    %52 = vector.broadcast %51 : vector<1x128xf32> to vector<8x128xf32>
    %53 = arith.addf %50, %52 : vector<8x128xf32>
    %54 = arith.mulf %42, %53 : vector<8x128xf32>
    %55 = arith.addf %35, %54 : vector<8x128xf32>
    %c0_25 = arith.constant 0 : index
    %c0_26 = arith.constant 0 : index
    %56 = vector.load %arg4[%c0_25, %c0_26] : memref<128x128xf32, #tpu.memory_space<vmem>>, vector<128x128xf32>
    %cst_27 = arith.constant dense<0.000000e+00> : vector<8x128xf32>
    %57 = tpu.matmul %55, %56, %cst_27 {dimension_numbers = #tpu.dot_dimension_numbers<[1], [0], [0], [1], [0, 0, 1, 1], [], []>} : vector<8x128xf32>, vector<128x128xf32>, vector<8x128xf32> -> vector<8x128xf32>
    %c0_28 = arith.constant 0 : index
    %c0_29 = arith.constant 0 : index
    %58 = vector.load %arg5[%c0_28, %c0_29] : memref<1x128xf32, #tpu.memory_space<vmem>>, vector<1x128xf32>
    %59 = vector.broadcast %58 : vector<1x128xf32> to vector<8x128xf32>
    %60 = arith.addf %57, %59 : vector<8x128xf32>
    %61 = math.tanh %60 : vector<8x128xf32>
    %c0_30 = arith.constant 0 : index
    %c0_31 = arith.constant 0 : index
    %62 = vector.load %arg6[%c0_30, %c0_31] : memref<128x128xf32, #tpu.memory_space<vmem>>, vector<128x128xf32>
    %cst_32 = arith.constant dense<0.000000e+00> : vector<8x128xf32>
    %63 = tpu.matmul %61, %62, %cst_32 {dimension_numbers = #tpu.dot_dimension_numbers<[1], [0], [0], [1], [0, 0, 1, 1], [], []>} : vector<8x128xf32>, vector<128x128xf32>, vector<8x128xf32> -> vector<8x128xf32>
    %c0_33 = arith.constant 0 : index
    %c0_34 = arith.constant 0 : index
    %64 = vector.load %arg7[%c0_33, %c0_34] : memref<1x128xf32, #tpu.memory_space<vmem>>, vector<1x128xf32>
    %65 = vector.broadcast %64 : vector<1x128xf32> to vector<8x128xf32>
    %66 = arith.addf %63, %65 : vector<8x128xf32>
    %67 = arith.mulf %42, %66 : vector<8x128xf32>
    %68 = arith.addf %55, %67 : vector<8x128xf32>
    %c0_35 = arith.constant 0 : index
    %c0_36 = arith.constant 0 : index
    %69 = vector.load %arg4[%c0_35, %c0_36] : memref<128x128xf32, #tpu.memory_space<vmem>>, vector<128x128xf32>
    %cst_37 = arith.constant dense<0.000000e+00> : vector<8x128xf32>
    %70 = tpu.matmul %68, %69, %cst_37 {dimension_numbers = #tpu.dot_dimension_numbers<[1], [0], [0], [1], [0, 0, 1, 1], [], []>} : vector<8x128xf32>, vector<128x128xf32>, vector<8x128xf32> -> vector<8x128xf32>
    %c0_38 = arith.constant 0 : index
    %c0_39 = arith.constant 0 : index
    %71 = vector.load %arg5[%c0_38, %c0_39] : memref<1x128xf32, #tpu.memory_space<vmem>>, vector<1x128xf32>
    %72 = vector.broadcast %71 : vector<1x128xf32> to vector<8x128xf32>
    %73 = arith.addf %70, %72 : vector<8x128xf32>
    %74 = math.tanh %73 : vector<8x128xf32>
    %c0_40 = arith.constant 0 : index
    %c0_41 = arith.constant 0 : index
    %75 = vector.load %arg6[%c0_40, %c0_41] : memref<128x128xf32, #tpu.memory_space<vmem>>, vector<128x128xf32>
    %cst_42 = arith.constant dense<0.000000e+00> : vector<8x128xf32>
    %76 = tpu.matmul %74, %75, %cst_42 {dimension_numbers = #tpu.dot_dimension_numbers<[1], [0], [0], [1], [0, 0, 1, 1], [], []>} : vector<8x128xf32>, vector<128x128xf32>, vector<8x128xf32> -> vector<8x128xf32>
    %c0_43 = arith.constant 0 : index
    %c0_44 = arith.constant 0 : index
    %77 = vector.load %arg7[%c0_43, %c0_44] : memref<1x128xf32, #tpu.memory_space<vmem>>, vector<1x128xf32>
    %78 = vector.broadcast %77 : vector<1x128xf32> to vector<8x128xf32>
    %79 = arith.addf %76, %78 : vector<8x128xf32>
    %80 = arith.mulf %42, %79 : vector<8x128xf32>
    %81 = arith.addf %68, %80 : vector<8x128xf32>
    %82 = arith.index_cast %c0_i32_4 : i32 to index
    %c0_45 = arith.constant 0 : index
    %c0_46 = arith.constant 0 : index
    %83 = vector.load %arg8[%82, %c0_45, %c0_46] : memref<8x8x128xf32, #tpu.memory_space<vmem>>, vector<1x8x128xf32>
    %84 = vector.shape_cast %83 : vector<1x8x128xf32> to vector<8x128xf32>
    %85 = vector.shape_cast %81 : vector<8x128xf32> to vector<1x8x128xf32>
    tpu.vector_store %arg8[%82, %c0_45, %c0_46], %85 {strides = array<i32>} : memref<8x8x128xf32, #tpu.memory_space<vmem>>, vector<1x8x128xf32>,
    %c1_i32 = arith.constant 1 : i32
    %86 = arith.index_cast %c1_i32 : i32 to index
    %c0_47 = arith.constant 0 : index
    %c0_48 = arith.constant 0 : index
    %87 = vector.load %arg1[%86, %c0_47, %c0_48] : memref<8x8x512xf32, #tpu.memory_space<vmem>>, vector<1x8x512xf32>
    %88 = vector.shape_cast %87 : vector<1x8x512xf32> to vector<8x512xf32>
    %c0_49 = arith.constant 0 : index
    %c0_50 = arith.constant 0 : index
    %89 = vector.load %arg3[%c0_49, %c0_50] : memref<128x512xf32, #tpu.memory_space<vmem>>, vector<128x512xf32>
    %cst_51 = arith.constant dense<0.000000e+00> : vector<8x512xf32>
    %90 = tpu.matmul %81, %89, %cst_51 {dimension_numbers = #tpu.dot_dimension_numbers<[1], [0], [0], [1], [0, 0, 1, 1], [], []>} : vector<8x128xf32>, vector<128x512xf32>, vector<8x512xf32> -> vector<8x512xf32>
    %91 = arith.addf %88, %90 : vector<8x512xf32>
    %92 = vector.extract_strided_slice %91 {offsets = [0, 0], sizes = [8, 128], strides = [1, 1]} : vector<8x512xf32> to vector<8x128xf32>
    %93 = arith.negf %92 : vector<8x128xf32>
    %94 = math.exp %93 : vector<8x128xf32>
    %cst_52 = arith.constant 1.000000e+00 : f32
    %95 = vector.broadcast %cst_52 : f32 to vector<8x128xf32>
    %96 = arith.addf %95, %94 : vector<8x128xf32>
    %97 = arith.divf %95, %96 : vector<8x128xf32>
    %98 = vector.extract_strided_slice %91 {offsets = [0, 128], sizes = [8, 128], strides = [1, 1]} : vector<8x512xf32> to vector<8x128xf32>
    %99 = arith.negf %98 : vector<8x128xf32>
    %100 = math.exp %99 : vector<8x128xf32>
    %cst_53 = arith.constant 1.000000e+00 : f32
    %101 = vector.broadcast %cst_53 : f32 to vector<8x128xf32>
    %102 = arith.addf %101, %100 : vector<8x128xf32>
    %103 = arith.divf %101, %102 : vector<8x128xf32>
    %104 = vector.extract_strided_slice %91 {offsets = [0, 256], sizes = [8, 128], strides = [1, 1]} : vector<8x512xf32> to vector<8x128xf32>
    %105 = math.tanh %104 : vector<8x128xf32>
    %106 = vector.extract_strided_slice %91 {offsets = [0, 384], sizes = [8, 128], strides = [1, 1]} : vector<8x512xf32> to vector<8x128xf32>
    %107 = arith.negf %106 : vector<8x128xf32>
    %108 = math.exp %107 : vector<8x128xf32>
    %cst_54 = arith.constant 1.000000e+00 : f32
    %109 = vector.broadcast %cst_54 : f32 to vector<8x128xf32>
    %110 = arith.addf %109, %108 : vector<8x128xf32>
    %111 = arith.divf %109, %110 : vector<8x128xf32>
    %112 = arith.mulf %103, %33 : vector<8x128xf32>
    %113 = arith.mulf %97, %105 : vector<8x128xf32>
    %114 = arith.addf %112, %113 : vector<8x128xf32>
    %115 = math.tanh %114 : vector<8x128xf32>
    %116 = arith.mulf %111, %115 : vector<8x128xf32>
    %117 = arith.index_cast %c1_i32 : i32 to index
    %c0_55 = arith.constant 0 : index
    %c0_56 = arith.constant 0 : index
    %118 = vector.load %arg2[%117, %c0_55, %c0_56] : memref<8x8x1xf32, #tpu.memory_space<vmem>>, vector<1x8x1xf32>
    %119 = vector.shape_cast %118 : vector<1x8x1xf32> to vector<8x1xf32>
    %cst_57 = arith.constant 0.333333343 : f32
    %120 = vector.broadcast %cst_57 : f32 to vector<8x1xf32>
    %121 = arith.mulf %119, %120 : vector<8x1xf32>
    %122 = vector.shape_cast %121 : vector<8x1xf32> to vector<8x1xf32>
    %123 = vector.broadcast %122 : vector<8x1xf32> to vector<8x128xf32>
    %c0_58 = arith.constant 0 : index
    %c0_59 = arith.constant 0 : index
    %124 = vector.load %arg4[%c0_58, %c0_59] : memref<128x128xf32, #tpu.memory_space<vmem>>, vector<128x128xf32>
    %cst_60 = arith.constant dense<0.000000e+00> : vector<8x128xf32>
    %125 = tpu.matmul %116, %124, %cst_60 {dimension_numbers = #tpu.dot_dimension_numbers<[1], [0], [0], [1], [0, 0, 1, 1], [], []>} : vector<8x128xf32>, vector<128x128xf32>, vector<8x128xf32> -> vector<8x128xf32>
    %c0_61 = arith.constant 0 : index
    %c0_62 = arith.constant 0 : index
    %126 = vector.load %arg5[%c0_61, %c0_62] : memref<1x128xf32, #tpu.memory_space<vmem>>, vector<1x128xf32>
    %127 = vector.broadcast %126 : vector<1x128xf32> to vector<8x128xf32>
    %128 = arith.addf %125, %127 : vector<8x128xf32>
    %129 = math.tanh %128 : vector<8x128xf32>
    %c0_63 = arith.constant 0 : index
    %c0_64 = arith.constant 0 : index
    %130 = vector.load %arg6[%c0_63, %c0_64] : memref<128x128xf32, #tpu.memory_space<vmem>>, vector<128x128xf32>
    %cst_65 = arith.constant dense<0.000000e+00> : vector<8x128xf32>
    %131 = tpu.matmul %129, %130, %cst_65 {dimension_numbers = #tpu.dot_dimension_numbers<[1], [0], [0], [1], [0, 0, 1, 1], [], []>} : vector<8x128xf32>, vector<128x128xf32>, vector<8x128xf32> -> vector<8x128xf32>
    %c0_66 = arith.constant 0 : index
    %c0_67 = arith.constant 0 : index
    %132 = vector.load %arg7[%c0_66, %c0_67] : memref<1x128xf32, #tpu.memory_space<vmem>>, vector<1x128xf32>
    %133 = vector.broadcast %132 : vector<1x128xf32> to vector<8x128xf32>
    %134 = arith.addf %131, %133 : vector<8x128xf32>
    %135 = arith.mulf %123, %134 : vector<8x128xf32>
    %136 = arith.addf %116, %135 : vector<8x128xf32>
    %c0_68 = arith.constant 0 : index
    %c0_69 = arith.constant 0 : index
    %137 = vector.load %arg4[%c0_68, %c0_69] : memref<128x128xf32, #tpu.memory_space<vmem>>, vector<128x128xf32>
    %cst_70 = arith.constant dense<0.000000e+00> : vector<8x128xf32>
    %138 = tpu.matmul %136, %137, %cst_70 {dimension_numbers = #tpu.dot_dimension_numbers<[1], [0], [0], [1], [0, 0, 1, 1], [], []>} : vector<8x128xf32>, vector<128x128xf32>, vector<8x128xf32> -> vector<8x128xf32>
    %c0_71 = arith.constant 0 : index
    %c0_72 = arith.constant 0 : index
    %139 = vector.load %arg5[%c0_71, %c0_72] : memref<1x128xf32, #tpu.memory_space<vmem>>, vector<1x128xf32>
    %140 = vector.broadcast %139 : vector<1x128xf32> to vector<8x128xf32>
    %141 = arith.addf %138, %140 : vector<8x128xf32>
    %142 = math.tanh %141 : vector<8x128xf32>
    %c0_73 = arith.constant 0 : index
    %c0_74 = arith.constant 0 : index
    %143 = vector.load %arg6[%c0_73, %c0_74] : memref<128x128xf32, #tpu.memory_space<vmem>>, vector<128x128xf32>
    %cst_75 = arith.constant dense<0.000000e+00> : vector<8x128xf32>
    %144 = tpu.matmul %142, %143, %cst_75 {dimension_numbers = #tpu.dot_dimension_numbers<[1], [0], [0], [1], [0, 0, 1, 1], [], []>} : vector<8x128xf32>, vector<128x128xf32>, vector<8x128xf32> -> vector<8x128xf32>
    %c0_76 = arith.constant 0 : index
    %c0_77 = arith.constant 0 : index
    %145 = vector.load %arg7[%c0_76, %c0_77] : memref<1x128xf32, #tpu.memory_space<vmem>>, vector<1x128xf32>
    %146 = vector.broadcast %145 : vector<1x128xf32> to vector<8x128xf32>
    %147 = arith.addf %144, %146 : vector<8x128xf32>
    %148 = arith.mulf %123, %147 : vector<8x128xf32>
    %149 = arith.addf %136, %148 : vector<8x128xf32>
    %c0_78 = arith.constant 0 : index
    %c0_79 = arith.constant 0 : index
    %150 = vector.load %arg4[%c0_78, %c0_79] : memref<128x128xf32, #tpu.memory_space<vmem>>, vector<128x128xf32>
    %cst_80 = arith.constant dense<0.000000e+00> : vector<8x128xf32>
    %151 = tpu.matmul %149, %150, %cst_80 {dimension_numbers = #tpu.dot_dimension_numbers<[1], [0], [0], [1], [0, 0, 1, 1], [], []>} : vector<8x128xf32>, vector<128x128xf32>, vector<8x128xf32> -> vector<8x128xf32>
    %c0_81 = arith.constant 0 : index
    %c0_82 = arith.constant 0 : index
    %152 = vector.load %arg5[%c0_81, %c0_82] : memref<1x128xf32, #tpu.memory_space<vmem>>, vector<1x128xf32>
    %153 = vector.broadcast %152 : vector<1x128xf32> to vector<8x128xf32>
    %154 = arith.addf %151, %153 : vector<8x128xf32>
    %155 = math.tanh %154 : vector<8x128xf32>
    %c0_83 = arith.constant 0 : index
    %c0_84 = arith.constant 0 : index
    %156 = vector.load %arg6[%c0_83, %c0_84] : memref<128x128xf32, #tpu.memory_space<vmem>>, vector<128x128xf32>
    %cst_85 = arith.constant dense<0.000000e+00> : vector<8x128xf32>
    %157 = tpu.matmul %155, %156, %cst_85 {dimension_numbers = #tpu.dot_dimension_numbers<[1], [0], [0], [1], [0, 0, 1, 1], [], []>} : vector<8x128xf32>, vector<128x128xf32>, vector<8x128xf32> -> vector<8x128xf32>
    %c0_86 = arith.constant 0 : index
    %c0_87 = arith.constant 0 : index
    %158 = vector.load %arg7[%c0_86, %c0_87] : memref<1x128xf32, #tpu.memory_space<vmem>>, vector<1x128xf32>
    %159 = vector.broadcast %158 : vector<1x128xf32> to vector<8x128xf32>
    %160 = arith.addf %157, %159 : vector<8x128xf32>
    %161 = arith.mulf %123, %160 : vector<8x128xf32>
    %162 = arith.addf %149, %161 : vector<8x128xf32>
    %163 = arith.index_cast %c1_i32 : i32 to index
    %c0_88 = arith.constant 0 : index
    %c0_89 = arith.constant 0 : index
    %164 = vector.load %arg8[%163, %c0_88, %c0_89] : memref<8x8x128xf32, #tpu.memory_space<vmem>>, vector<1x8x128xf32>
    %165 = vector.shape_cast %164 : vector<1x8x128xf32> to vector<8x128xf32>
    %166 = vector.shape_cast %162 : vector<8x128xf32> to vector<1x8x128xf32>
    tpu.vector_store %arg8[%163, %c0_88, %c0_89], %166 {strides = array<i32>} : memref<8x8x128xf32, #tpu.memory_space<vmem>>, vector<1x8x128xf32>,
    %c2_i32 = arith.constant 2 : i32
    %167 = arith.index_cast %c2_i32 : i32 to index
    %c0_90 = arith.constant 0 : index
    %c0_91 = arith.constant 0 : index
    %168 = vector.load %arg1[%167, %c0_90, %c0_91] : memref<8x8x512xf32, #tpu.memory_space<vmem>>, vector<1x8x512xf32>
    %169 = vector.shape_cast %168 : vector<1x8x512xf32> to vector<8x512xf32>
    %c0_92 = arith.constant 0 : index
    %c0_93 = arith.constant 0 : index
    %170 = vector.load %arg3[%c0_92, %c0_93] : memref<128x512xf32, #tpu.memory_space<vmem>>, vector<128x512xf32>
    %cst_94 = arith.constant dense<0.000000e+00> : vector<8x512xf32>
    %171 = tpu.matmul %162, %170, %cst_94 {dimension_numbers = #tpu.dot_dimension_numbers<[1], [0], [0], [1], [0, 0, 1, 1], [], []>} : vector<8x128xf32>, vector<128x512xf32>, vector<8x512xf32> -> vector<8x512xf32>
    %172 = arith.addf %169, %171 : vector<8x512xf32>
    %173 = vector.extract_strided_slice %172 {offsets = [0, 0], sizes = [8, 128], strides = [1, 1]} : vector<8x512xf32> to vector<8x128xf32>
    %174 = arith.negf %173 : vector<8x128xf32>
    %175 = math.exp %174 : vector<8x128xf32>
    %cst_95 = arith.constant 1.000000e+00 : f32
    %176 = vector.broadcast %cst_95 : f32 to vector<8x128xf32>
    %177 = arith.addf %176, %175 : vector<8x128xf32>
    %178 = arith.divf %176, %177 : vector<8x128xf32>
    %179 = vector.extract_strided_slice %172 {offsets = [0, 128], sizes = [8, 128], strides = [1, 1]} : vector<8x512xf32> to vector<8x128xf32>
    %180 = arith.negf %179 : vector<8x128xf32>
    %181 = math.exp %180 : vector<8x128xf32>
    %cst_96 = arith.constant 1.000000e+00 : f32
    %182 = vector.broadcast %cst_96 : f32 to vector<8x128xf32>
    %183 = arith.addf %182, %181 : vector<8x128xf32>
    %184 = arith.divf %182, %183 : vector<8x128xf32>
    %185 = vector.extract_strided_slice %172 {offsets = [0, 256], sizes = [8, 128], strides = [1, 1]} : vector<8x512xf32> to vector<8x128xf32>
    %186 = math.tanh %185 : vector<8x128xf32>
    %187 = vector.extract_strided_slice %172 {offsets = [0, 384], sizes = [8, 128], strides = [1, 1]} : vector<8x512xf32> to vector<8x128xf32>
    %188 = arith.negf %187 : vector<8x128xf32>
    %189 = math.exp %188 : vector<8x128xf32>
    %cst_97 = arith.constant 1.000000e+00 : f32
    %190 = vector.broadcast %cst_97 : f32 to vector<8x128xf32>
    %191 = arith.addf %190, %189 : vector<8x128xf32>
    %192 = arith.divf %190, %191 : vector<8x128xf32>
    %193 = arith.mulf %184, %114 : vector<8x128xf32>
    %194 = arith.mulf %178, %186 : vector<8x128xf32>
    %195 = arith.addf %193, %194 : vector<8x128xf32>
    %196 = math.tanh %195 : vector<8x128xf32>
    %197 = arith.mulf %192, %196 : vector<8x128xf32>
    %198 = arith.index_cast %c2_i32 : i32 to index
    %c0_98 = arith.constant 0 : index
    %c0_99 = arith.constant 0 : index
    %199 = vector.load %arg2[%198, %c0_98, %c0_99] : memref<8x8x1xf32, #tpu.memory_space<vmem>>, vector<1x8x1xf32>
    %200 = vector.shape_cast %199 : vector<1x8x1xf32> to vector<8x1xf32>
    %cst_100 = arith.constant 0.333333343 : f32
    %201 = vector.broadcast %cst_100 : f32 to vector<8x1xf32>
    %202 = arith.mulf %200, %201 : vector<8x1xf32>
    %203 = vector.shape_cast %202 : vector<8x1xf32> to vector<8x1xf32>
    %204 = vector.broadcast %203 : vector<8x1xf32> to vector<8x128xf32>
    %c0_101 = arith.constant 0 : index
    %c0_102 = arith.constant 0 : index
    %205 = vector.load %arg4[%c0_101, %c0_102] : memref<128x128xf32, #tpu.memory_space<vmem>>, vector<128x128xf32>
    %cst_103 = arith.constant dense<0.000000e+00> : vector<8x128xf32>
    %206 = tpu.matmul %197, %205, %cst_103 {dimension_numbers = #tpu.dot_dimension_numbers<[1], [0], [0], [1], [0, 0, 1, 1], [], []>} : vector<8x128xf32>, vector<128x128xf32>, vector<8x128xf32> -> vector<8x128xf32>
    %c0_104 = arith.constant 0 : index
    %c0_105 = arith.constant 0 : index
    %207 = vector.load %arg5[%c0_104, %c0_105] : memref<1x128xf32, #tpu.memory_space<vmem>>, vector<1x128xf32>
    %208 = vector.broadcast %207 : vector<1x128xf32> to vector<8x128xf32>
    %209 = arith.addf %206, %208 : vector<8x128xf32>
    %210 = math.tanh %209 : vector<8x128xf32>
    %c0_106 = arith.constant 0 : index
    %c0_107 = arith.constant 0 : index
    %211 = vector.load %arg6[%c0_106, %c0_107] : memref<128x128xf32, #tpu.memory_space<vmem>>, vector<128x128xf32>
    %cst_108 = arith.constant dense<0.000000e+00> : vector<8x128xf32>
    %212 = tpu.matmul %210, %211, %cst_108 {dimension_numbers = #tpu.dot_dimension_numbers<[1], [0], [0], [1], [0, 0, 1, 1], [], []>} : vector<8x128xf32>, vector<128x128xf32>, vector<8x128xf32> -> vector<8x128xf32>
    %c0_109 = arith.constant 0 : index
    %c0_110 = arith.constant 0 : index
    %213 = vector.load %arg7[%c0_109, %c0_110] : memref<1x128xf32, #tpu.memory_space<vmem>>, vector<1x128xf32>
    %214 = vector.broadcast %213 : vector<1x128xf32> to vector<8x128xf32>
    %215 = arith.addf %212, %214 : vector<8x128xf32>
    %216 = arith.mulf %204, %215 : vector<8x128xf32>
    %217 = arith.addf %197, %216 : vector<8x128xf32>
    %c0_111 = arith.constant 0 : index
    %c0_112 = arith.constant 0 : index
    %218 = vector.load %arg4[%c0_111, %c0_112] : memref<128x128xf32, #tpu.memory_space<vmem>>, vector<128x128xf32>
    %cst_113 = arith.constant dense<0.000000e+00> : vector<8x128xf32>
    %219 = tpu.matmul %217, %218, %cst_113 {dimension_numbers = #tpu.dot_dimension_numbers<[1], [0], [0], [1], [0, 0, 1, 1], [], []>} : vector<8x128xf32>, vector<128x128xf32>, vector<8x128xf32> -> vector<8x128xf32>
    %c0_114 = arith.constant 0 : index
    %c0_115 = arith.constant 0 : index
    %220 = vector.load %arg5[%c0_114, %c0_115] : memref<1x128xf32, #tpu.memory_space<vmem>>, vector<1x128xf32>
    %221 = vector.broadcast %220 : vector<1x128xf32> to vector<8x128xf32>
    %222 = arith.addf %219, %221 : vector<8x128xf32>
    %223 = math.tanh %222 : vector<8x128xf32>
    %c0_116 = arith.constant 0 : index
    %c0_117 = arith.constant 0 : index
    %224 = vector.load %arg6[%c0_116, %c0_117] : memref<128x128xf32, #tpu.memory_space<vmem>>, vector<128x128xf32>
    %cst_118 = arith.constant dense<0.000000e+00> : vector<8x128xf32>
    %225 = tpu.matmul %223, %224, %cst_118 {dimension_numbers = #tpu.dot_dimension_numbers<[1], [0], [0], [1], [0, 0, 1, 1], [], []>} : vector<8x128xf32>, vector<128x128xf32>, vector<8x128xf32> -> vector<8x128xf32>
    %c0_119 = arith.constant 0 : index
    %c0_120 = arith.constant 0 : index
    %226 = vector.load %arg7[%c0_119, %c0_120] : memref<1x128xf32, #tpu.memory_space<vmem>>, vector<1x128xf32>
    %227 = vector.broadcast %226 : vector<1x128xf32> to vector<8x128xf32>
    %228 = arith.addf %225, %227 : vector<8x128xf32>
    %229 = arith.mulf %204, %228 : vector<8x128xf32>
    %230 = arith.addf %217, %229 : vector<8x128xf32>
    %c0_121 = arith.constant 0 : index
    %c0_122 = arith.constant 0 : index
    %231 = vector.load %arg4[%c0_121, %c0_122] : memref<128x128xf32, #tpu.memory_space<vmem>>, vector<128x128xf32>
    %cst_123 = arith.constant dense<0.000000e+00> : vector<8x128xf32>
    %232 = tpu.matmul %230, %231, %cst_123 {dimension_numbers = #tpu.dot_dimension_numbers<[1], [0], [0], [1], [0, 0, 1, 1], [], []>} : vector<8x128xf32>, vector<128x128xf32>, vector<8x128xf32> -> vector<8x128xf32>
    %c0_124 = arith.constant 0 : index
    %c0_125 = arith.constant 0 : index
    %233 = vector.load %arg5[%c0_124, %c0_125] : memref<1x128xf32, #tpu.memory_space<vmem>>, vector<1x128xf32>
    %234 = vector.broadcast %233 : vector<1x128xf32> to vector<8x128xf32>
    %235 = arith.addf %232, %234 : vector<8x128xf32>
    %236 = math.tanh %235 : vector<8x128xf32>
    %c0_126 = arith.constant 0 : index
    %c0_127 = arith.constant 0 : index
    %237 = vector.load %arg6[%c0_126, %c0_127] : memref<128x128xf32, #tpu.memory_space<vmem>>, vector<128x128xf32>
    %cst_128 = arith.constant dense<0.000000e+00> : vector<8x128xf32>
    %238 = tpu.matmul %236, %237, %cst_128 {dimension_numbers = #tpu.dot_dimension_numbers<[1], [0], [0], [1], [0, 0, 1, 1], [], []>} : vector<8x128xf32>, vector<128x128xf32>, vector<8x128xf32> -> vector<8x128xf32>
    %c0_129 = arith.constant 0 : index
    %c0_130 = arith.constant 0 : index
    %239 = vector.load %arg7[%c0_129, %c0_130] : memref<1x128xf32, #tpu.memory_space<vmem>>, vector<1x128xf32>
    %240 = vector.broadcast %239 : vector<1x128xf32> to vector<8x128xf32>
    %241 = arith.addf %238, %240 : vector<8x128xf32>
    %242 = arith.mulf %204, %241 : vector<8x128xf32>
    %243 = arith.addf %230, %242 : vector<8x128xf32>
    %244 = arith.index_cast %c2_i32 : i32 to index
    %c0_131 = arith.constant 0 : index
    %c0_132 = arith.constant 0 : index
    %245 = vector.load %arg8[%244, %c0_131, %c0_132] : memref<8x8x128xf32, #tpu.memory_space<vmem>>, vector<1x8x128xf32>
    %246 = vector.shape_cast %245 : vector<1x8x128xf32> to vector<8x128xf32>
    %247 = vector.shape_cast %243 : vector<8x128xf32> to vector<1x8x128xf32>
    tpu.vector_store %arg8[%244, %c0_131, %c0_132], %247 {strides = array<i32>} : memref<8x8x128xf32, #tpu.memory_space<vmem>>, vector<1x8x128xf32>,
    %c3_i32 = arith.constant 3 : i32
    %248 = arith.index_cast %c3_i32 : i32 to index
    %c0_133 = arith.constant 0 : index
    %c0_134 = arith.constant 0 : index
    %249 = vector.load %arg1[%248, %c0_133, %c0_134] : memref<8x8x512xf32, #tpu.memory_space<vmem>>, vector<1x8x512xf32>
    %250 = vector.shape_cast %249 : vector<1x8x512xf32> to vector<8x512xf32>
    %c0_135 = arith.constant 0 : index
    %c0_136 = arith.constant 0 : index
    %251 = vector.load %arg3[%c0_135, %c0_136] : memref<128x512xf32, #tpu.memory_space<vmem>>, vector<128x512xf32>
    %cst_137 = arith.constant dense<0.000000e+00> : vector<8x512xf32>
    %252 = tpu.matmul %243, %251, %cst_137 {dimension_numbers = #tpu.dot_dimension_numbers<[1], [0], [0], [1], [0, 0, 1, 1], [], []>} : vector<8x128xf32>, vector<128x512xf32>, vector<8x512xf32> -> vector<8x512xf32>
    %253 = arith.addf %250, %252 : vector<8x512xf32>
    %254 = vector.extract_strided_slice %253 {offsets = [0, 0], sizes = [8, 128], strides = [1, 1]} : vector<8x512xf32> to vector<8x128xf32>
    %255 = arith.negf %254 : vector<8x128xf32>
    %256 = math.exp %255 : vector<8x128xf32>
    %cst_138 = arith.constant 1.000000e+00 : f32
    %257 = vector.broadcast %cst_138 : f32 to vector<8x128xf32>
    %258 = arith.addf %257, %256 : vector<8x128xf32>
    %259 = arith.divf %257, %258 : vector<8x128xf32>
    %260 = vector.extract_strided_slice %253 {offsets = [0, 128], sizes = [8, 128], strides = [1, 1]} : vector<8x512xf32> to vector<8x128xf32>
    %261 = arith.negf %260 : vector<8x128xf32>
    %262 = math.exp %261 : vector<8x128xf32>
    %cst_139 = arith.constant 1.000000e+00 : f32
    %263 = vector.broadcast %cst_139 : f32 to vector<8x128xf32>
    %264 = arith.addf %263, %262 : vector<8x128xf32>
    %265 = arith.divf %263, %264 : vector<8x128xf32>
    %266 = vector.extract_strided_slice %253 {offsets = [0, 256], sizes = [8, 128], strides = [1, 1]} : vector<8x512xf32> to vector<8x128xf32>
    %267 = math.tanh %266 : vector<8x128xf32>
    %268 = vector.extract_strided_slice %253 {offsets = [0, 384], sizes = [8, 128], strides = [1, 1]} : vector<8x512xf32> to vector<8x128xf32>
    %269 = arith.negf %268 : vector<8x128xf32>
    %270 = math.exp %269 : vector<8x128xf32>
    %cst_140 = arith.constant 1.000000e+00 : f32
    %271 = vector.broadcast %cst_140 : f32 to vector<8x128xf32>
    %272 = arith.addf %271, %270 : vector<8x128xf32>
    %273 = arith.divf %271, %272 : vector<8x128xf32>
    %274 = arith.mulf %265, %195 : vector<8x128xf32>
    %275 = arith.mulf %259, %267 : vector<8x128xf32>
    %276 = arith.addf %274, %275 : vector<8x128xf32>
    %277 = math.tanh %276 : vector<8x128xf32>
    %278 = arith.mulf %273, %277 : vector<8x128xf32>
    %279 = arith.index_cast %c3_i32 : i32 to index
    %c0_141 = arith.constant 0 : index
    %c0_142 = arith.constant 0 : index
    %280 = vector.load %arg2[%279, %c0_141, %c0_142] : memref<8x8x1xf32, #tpu.memory_space<vmem>>, vector<1x8x1xf32>
    %281 = vector.shape_cast %280 : vector<1x8x1xf32> to vector<8x1xf32>
    %cst_143 = arith.constant 0.333333343 : f32
    %282 = vector.broadcast %cst_143 : f32 to vector<8x1xf32>
    %283 = arith.mulf %281, %282 : vector<8x1xf32>
    %284 = vector.shape_cast %283 : vector<8x1xf32> to vector<8x1xf32>
    %285 = vector.broadcast %284 : vector<8x1xf32> to vector<8x128xf32>
    %c0_144 = arith.constant 0 : index
    %c0_145 = arith.constant 0 : index
    %286 = vector.load %arg4[%c0_144, %c0_145] : memref<128x128xf32, #tpu.memory_space<vmem>>, vector<128x128xf32>
    %cst_146 = arith.constant dense<0.000000e+00> : vector<8x128xf32>
    %287 = tpu.matmul %278, %286, %cst_146 {dimension_numbers = #tpu.dot_dimension_numbers<[1], [0], [0], [1], [0, 0, 1, 1], [], []>} : vector<8x128xf32>, vector<128x128xf32>, vector<8x128xf32> -> vector<8x128xf32>
    %c0_147 = arith.constant 0 : index
    %c0_148 = arith.constant 0 : index
    %288 = vector.load %arg5[%c0_147, %c0_148] : memref<1x128xf32, #tpu.memory_space<vmem>>, vector<1x128xf32>
    %289 = vector.broadcast %288 : vector<1x128xf32> to vector<8x128xf32>
    %290 = arith.addf %287, %289 : vector<8x128xf32>
    %291 = math.tanh %290 : vector<8x128xf32>
    %c0_149 = arith.constant 0 : index
    %c0_150 = arith.constant 0 : index
    %292 = vector.load %arg6[%c0_149, %c0_150] : memref<128x128xf32, #tpu.memory_space<vmem>>, vector<128x128xf32>
    %cst_151 = arith.constant dense<0.000000e+00> : vector<8x128xf32>
    %293 = tpu.matmul %291, %292, %cst_151 {dimension_numbers = #tpu.dot_dimension_numbers<[1], [0], [0], [1], [0, 0, 1, 1], [], []>} : vector<8x128xf32>, vector<128x128xf32>, vector<8x128xf32> -> vector<8x128xf32>
    %c0_152 = arith.constant 0 : index
    %c0_153 = arith.constant 0 : index
    %294 = vector.load %arg7[%c0_152, %c0_153] : memref<1x128xf32, #tpu.memory_space<vmem>>, vector<1x128xf32>
    %295 = vector.broadcast %294 : vector<1x128xf32> to vector<8x128xf32>
    %296 = arith.addf %293, %295 : vector<8x128xf32>
    %297 = arith.mulf %285, %296 : vector<8x128xf32>
    %298 = arith.addf %278, %297 : vector<8x128xf32>
    %c0_154 = arith.constant 0 : index
    %c0_155 = arith.constant 0 : index
    %299 = vector.load %arg4[%c0_154, %c0_155] : memref<128x128xf32, #tpu.memory_space<vmem>>, vector<128x128xf32>
    %cst_156 = arith.constant dense<0.000000e+00> : vector<8x128xf32>
    %300 = tpu.matmul %298, %299, %cst_156 {dimension_numbers = #tpu.dot_dimension_numbers<[1], [0], [0], [1], [0, 0, 1, 1], [], []>} : vector<8x128xf32>, vector<128x128xf32>, vector<8x128xf32> -> vector<8x128xf32>
    %c0_157 = arith.constant 0 : index
    %c0_158 = arith.constant 0 : index
    %301 = vector.load %arg5[%c0_157, %c0_158] : memref<1x128xf32, #tpu.memory_space<vmem>>, vector<1x128xf32>
    %302 = vector.broadcast %301 : vector<1x128xf32> to vector<8x128xf32>
    %303 = arith.addf %300, %302 : vector<8x128xf32>
    %304 = math.tanh %303 : vector<8x128xf32>
    %c0_159 = arith.constant 0 : index
    %c0_160 = arith.constant 0 : index
    %305 = vector.load %arg6[%c0_159, %c0_160] : memref<128x128xf32, #tpu.memory_space<vmem>>, vector<128x128xf32>
    %cst_161 = arith.constant dense<0.000000e+00> : vector<8x128xf32>
    %306 = tpu.matmul %304, %305, %cst_161 {dimension_numbers = #tpu.dot_dimension_numbers<[1], [0], [0], [1], [0, 0, 1, 1], [], []>} : vector<8x128xf32>, vector<128x128xf32>, vector<8x128xf32> -> vector<8x128xf32>
    %c0_162 = arith.constant 0 : index
    %c0_163 = arith.constant 0 : index
    %307 = vector.load %arg7[%c0_162, %c0_163] : memref<1x128xf32, #tpu.memory_space<vmem>>, vector<1x128xf32>
    %308 = vector.broadcast %307 : vector<1x128xf32> to vector<8x128xf32>
    %309 = arith.addf %306, %308 : vector<8x128xf32>
    %310 = arith.mulf %285, %309 : vector<8x128xf32>
    %311 = arith.addf %298, %310 : vector<8x128xf32>
    %c0_164 = arith.constant 0 : index
    %c0_165 = arith.constant 0 : index
    %312 = vector.load %arg4[%c0_164, %c0_165] : memref<128x128xf32, #tpu.memory_space<vmem>>, vector<128x128xf32>
    %cst_166 = arith.constant dense<0.000000e+00> : vector<8x128xf32>
    %313 = tpu.matmul %311, %312, %cst_166 {dimension_numbers = #tpu.dot_dimension_numbers<[1], [0], [0], [1], [0, 0, 1, 1], [], []>} : vector<8x128xf32>, vector<128x128xf32>, vector<8x128xf32> -> vector<8x128xf32>
    %c0_167 = arith.constant 0 : index
    %c0_168 = arith.constant 0 : index
    %314 = vector.load %arg5[%c0_167, %c0_168] : memref<1x128xf32, #tpu.memory_space<vmem>>, vector<1x128xf32>
    %315 = vector.broadcast %314 : vector<1x128xf32> to vector<8x128xf32>
    %316 = arith.addf %313, %315 : vector<8x128xf32>
    %317 = math.tanh %316 : vector<8x128xf32>
    %c0_169 = arith.constant 0 : index
    %c0_170 = arith.constant 0 : index
    %318 = vector.load %arg6[%c0_169, %c0_170] : memref<128x128xf32, #tpu.memory_space<vmem>>, vector<128x128xf32>
    %cst_171 = arith.constant dense<0.000000e+00> : vector<8x128xf32>
    %319 = tpu.matmul %317, %318, %cst_171 {dimension_numbers = #tpu.dot_dimension_numbers<[1], [0], [0], [1], [0, 0, 1, 1], [], []>} : vector<8x128xf32>, vector<128x128xf32>, vector<8x128xf32> -> vector<8x128xf32>
    %c0_172 = arith.constant 0 : index
    %c0_173 = arith.constant 0 : index
    %320 = vector.load %arg7[%c0_172, %c0_173] : memref<1x128xf32, #tpu.memory_space<vmem>>, vector<1x128xf32>
    %321 = vector.broadcast %320 : vector<1x128xf32> to vector<8x128xf32>
    %322 = arith.addf %319, %321 : vector<8x128xf32>
    %323 = arith.mulf %285, %322 : vector<8x128xf32>
    %324 = arith.addf %311, %323 : vector<8x128xf32>
    %325 = arith.index_cast %c3_i32 : i32 to index
    %c0_174 = arith.constant 0 : index
    %c0_175 = arith.constant 0 : index
    %326 = vector.load %arg8[%325, %c0_174, %c0_175] : memref<8x8x128xf32, #tpu.memory_space<vmem>>, vector<1x8x128xf32>
    %327 = vector.shape_cast %326 : vector<1x8x128xf32> to vector<8x128xf32>
    %328 = vector.shape_cast %324 : vector<8x128xf32> to vector<1x8x128xf32>
    tpu.vector_store %arg8[%325, %c0_174, %c0_175], %328 {strides = array<i32>} : memref<8x8x128xf32, #tpu.memory_space<vmem>>, vector<1x8x128xf32>,
    %c4_i32 = arith.constant 4 : i32
    %329 = arith.index_cast %c4_i32 : i32 to index
    %c0_176 = arith.constant 0 : index
    %c0_177 = arith.constant 0 : index
    %330 = vector.load %arg1[%329, %c0_176, %c0_177] : memref<8x8x512xf32, #tpu.memory_space<vmem>>, vector<1x8x512xf32>
    %331 = vector.shape_cast %330 : vector<1x8x512xf32> to vector<8x512xf32>
    %c0_178 = arith.constant 0 : index
    %c0_179 = arith.constant 0 : index
    %332 = vector.load %arg3[%c0_178, %c0_179] : memref<128x512xf32, #tpu.memory_space<vmem>>, vector<128x512xf32>
    %cst_180 = arith.constant dense<0.000000e+00> : vector<8x512xf32>
    %333 = tpu.matmul %324, %332, %cst_180 {dimension_numbers = #tpu.dot_dimension_numbers<[1], [0], [0], [1], [0, 0, 1, 1], [], []>} : vector<8x128xf32>, vector<128x512xf32>, vector<8x512xf32> -> vector<8x512xf32>
    %334 = arith.addf %331, %333 : vector<8x512xf32>
    %335 = vector.extract_strided_slice %334 {offsets = [0, 0], sizes = [8, 128], strides = [1, 1]} : vector<8x512xf32> to vector<8x128xf32>
    %336 = arith.negf %335 : vector<8x128xf32>
    %337 = math.exp %336 : vector<8x128xf32>
    %cst_181 = arith.constant 1.000000e+00 : f32
    %338 = vector.broadcast %cst_181 : f32 to vector<8x128xf32>
    %339 = arith.addf %338, %337 : vector<8x128xf32>
    %340 = arith.divf %338, %339 : vector<8x128xf32>
    %341 = vector.extract_strided_slice %334 {offsets = [0, 128], sizes = [8, 128], strides = [1, 1]} : vector<8x512xf32> to vector<8x128xf32>
    %342 = arith.negf %341 : vector<8x128xf32>
    %343 = math.exp %342 : vector<8x128xf32>
    %cst_182 = arith.constant 1.000000e+00 : f32
    %344 = vector.broadcast %cst_182 : f32 to vector<8x128xf32>
    %345 = arith.addf %344, %343 : vector<8x128xf32>
    %346 = arith.divf %344, %345 : vector<8x128xf32>
    %347 = vector.extract_strided_slice %334 {offsets = [0, 256], sizes = [8, 128], strides = [1, 1]} : vector<8x512xf32> to vector<8x128xf32>
    %348 = math.tanh %347 : vector<8x128xf32>
    %349 = vector.extract_strided_slice %334 {offsets = [0, 384], sizes = [8, 128], strides = [1, 1]} : vector<8x512xf32> to vector<8x128xf32>
    %350 = arith.negf %349 : vector<8x128xf32>
    %351 = math.exp %350 : vector<8x128xf32>
    %cst_183 = arith.constant 1.000000e+00 : f32
    %352 = vector.broadcast %cst_183 : f32 to vector<8x128xf32>
    %353 = arith.addf %352, %351 : vector<8x128xf32>
    %354 = arith.divf %352, %353 : vector<8x128xf32>
    %355 = arith.mulf %346, %276 : vector<8x128xf32>
    %356 = arith.mulf %340, %348 : vector<8x128xf32>
    %357 = arith.addf %355, %356 : vector<8x128xf32>
    %358 = math.tanh %357 : vector<8x128xf32>
    %359 = arith.mulf %354, %358 : vector<8x128xf32>
    %360 = arith.index_cast %c4_i32 : i32 to index
    %c0_184 = arith.constant 0 : index
    %c0_185 = arith.constant 0 : index
    %361 = vector.load %arg2[%360, %c0_184, %c0_185] : memref<8x8x1xf32, #tpu.memory_space<vmem>>, vector<1x8x1xf32>
    %362 = vector.shape_cast %361 : vector<1x8x1xf32> to vector<8x1xf32>
    %cst_186 = arith.constant 0.333333343 : f32
    %363 = vector.broadcast %cst_186 : f32 to vector<8x1xf32>
    %364 = arith.mulf %362, %363 : vector<8x1xf32>
    %365 = vector.shape_cast %364 : vector<8x1xf32> to vector<8x1xf32>
    %366 = vector.broadcast %365 : vector<8x1xf32> to vector<8x128xf32>
    %c0_187 = arith.constant 0 : index
    %c0_188 = arith.constant 0 : index
    %367 = vector.load %arg4[%c0_187, %c0_188] : memref<128x128xf32, #tpu.memory_space<vmem>>, vector<128x128xf32>
    %cst_189 = arith.constant dense<0.000000e+00> : vector<8x128xf32>
    %368 = tpu.matmul %359, %367, %cst_189 {dimension_numbers = #tpu.dot_dimension_numbers<[1], [0], [0], [1], [0, 0, 1, 1], [], []>} : vector<8x128xf32>, vector<128x128xf32>, vector<8x128xf32> -> vector<8x128xf32>
    %c0_190 = arith.constant 0 : index
    %c0_191 = arith.constant 0 : index
    %369 = vector.load %arg5[%c0_190, %c0_191] : memref<1x128xf32, #tpu.memory_space<vmem>>, vector<1x128xf32>
    %370 = vector.broadcast %369 : vector<1x128xf32> to vector<8x128xf32>
    %371 = arith.addf %368, %370 : vector<8x128xf32>
    %372 = math.tanh %371 : vector<8x128xf32>
    %c0_192 = arith.constant 0 : index
    %c0_193 = arith.constant 0 : index
    %373 = vector.load %arg6[%c0_192, %c0_193] : memref<128x128xf32, #tpu.memory_space<vmem>>, vector<128x128xf32>
    %cst_194 = arith.constant dense<0.000000e+00> : vector<8x128xf32>
    %374 = tpu.matmul %372, %373, %cst_194 {dimension_numbers = #tpu.dot_dimension_numbers<[1], [0], [0], [1], [0, 0, 1, 1], [], []>} : vector<8x128xf32>, vector<128x128xf32>, vector<8x128xf32> -> vector<8x128xf32>
    %c0_195 = arith.constant 0 : index
    %c0_196 = arith.constant 0 : index
    %375 = vector.load %arg7[%c0_195, %c0_196] : memref<1x128xf32, #tpu.memory_space<vmem>>, vector<1x128xf32>
    %376 = vector.broadcast %375 : vector<1x128xf32> to vector<8x128xf32>
    %377 = arith.addf %374, %376 : vector<8x128xf32>
    %378 = arith.mulf %366, %377 : vector<8x128xf32>
    %379 = arith.addf %359, %378 : vector<8x128xf32>
    %c0_197 = arith.constant 0 : index
    %c0_198 = arith.constant 0 : index
    %380 = vector.load %arg4[%c0_197, %c0_198] : memref<128x128xf32, #tpu.memory_space<vmem>>, vector<128x128xf32>
    %cst_199 = arith.constant dense<0.000000e+00> : vector<8x128xf32>
    %381 = tpu.matmul %379, %380, %cst_199 {dimension_numbers = #tpu.dot_dimension_numbers<[1], [0], [0], [1], [0, 0, 1, 1], [], []>} : vector<8x128xf32>, vector<128x128xf32>, vector<8x128xf32> -> vector<8x128xf32>
    %c0_200 = arith.constant 0 : index
    %c0_201 = arith.constant 0 : index
    %382 = vector.load %arg5[%c0_200, %c0_201] : memref<1x128xf32, #tpu.memory_space<vmem>>, vector<1x128xf32>
    %383 = vector.broadcast %382 : vector<1x128xf32> to vector<8x128xf32>
    %384 = arith.addf %381, %383 : vector<8x128xf32>
    %385 = math.tanh %384 : vector<8x128xf32>
    %c0_202 = arith.constant 0 : index
    %c0_203 = arith.constant 0 : index
    %386 = vector.load %arg6[%c0_202, %c0_203] : memref<128x128xf32, #tpu.memory_space<vmem>>, vector<128x128xf32>
    %cst_204 = arith.constant dense<0.000000e+00> : vector<8x128xf32>
    %387 = tpu.matmul %385, %386, %cst_204 {dimension_numbers = #tpu.dot_dimension_numbers<[1], [0], [0], [1], [0, 0, 1, 1], [], []>} : vector<8x128xf32>, vector<128x128xf32>, vector<8x128xf32> -> vector<8x128xf32>
    %c0_205 = arith.constant 0 : index
    %c0_206 = arith.constant 0 : index
    %388 = vector.load %arg7[%c0_205, %c0_206] : memref<1x128xf32, #tpu.memory_space<vmem>>, vector<1x128xf32>
    %389 = vector.broadcast %388 : vector<1x128xf32> to vector<8x128xf32>
    %390 = arith.addf %387, %389 : vector<8x128xf32>
    %391 = arith.mulf %366, %390 : vector<8x128xf32>
    %392 = arith.addf %379, %391 : vector<8x128xf32>
    %c0_207 = arith.constant 0 : index
    %c0_208 = arith.constant 0 : index
    %393 = vector.load %arg4[%c0_207, %c0_208] : memref<128x128xf32, #tpu.memory_space<vmem>>, vector<128x128xf32>
    %cst_209 = arith.constant dense<0.000000e+00> : vector<8x128xf32>
    %394 = tpu.matmul %392, %393, %cst_209 {dimension_numbers = #tpu.dot_dimension_numbers<[1], [0], [0], [1], [0, 0, 1, 1], [], []>} : vector<8x128xf32>, vector<128x128xf32>, vector<8x128xf32> -> vector<8x128xf32>
    %c0_210 = arith.constant 0 : index
    %c0_211 = arith.constant 0 : index
    %395 = vector.load %arg5[%c0_210, %c0_211] : memref<1x128xf32, #tpu.memory_space<vmem>>, vector<1x128xf32>
    %396 = vector.broadcast %395 : vector<1x128xf32> to vector<8x128xf32>
    %397 = arith.addf %394, %396 : vector<8x128xf32>
    %398 = math.tanh %397 : vector<8x128xf32>
    %c0_212 = arith.constant 0 : index
    %c0_213 = arith.constant 0 : index
    %399 = vector.load %arg6[%c0_212, %c0_213] : memref<128x128xf32, #tpu.memory_space<vmem>>, vector<128x128xf32>
    %cst_214 = arith.constant dense<0.000000e+00> : vector<8x128xf32>
    %400 = tpu.matmul %398, %399, %cst_214 {dimension_numbers = #tpu.dot_dimension_numbers<[1], [0], [0], [1], [0, 0, 1, 1], [], []>} : vector<8x128xf32>, vector<128x128xf32>, vector<8x128xf32> -> vector<8x128xf32>
    %c0_215 = arith.constant 0 : index
    %c0_216 = arith.constant 0 : index
    %401 = vector.load %arg7[%c0_215, %c0_216] : memref<1x128xf32, #tpu.memory_space<vmem>>, vector<1x128xf32>
    %402 = vector.broadcast %401 : vector<1x128xf32> to vector<8x128xf32>
    %403 = arith.addf %400, %402 : vector<8x128xf32>
    %404 = arith.mulf %366, %403 : vector<8x128xf32>
    %405 = arith.addf %392, %404 : vector<8x128xf32>
    %406 = arith.index_cast %c4_i32 : i32 to index
    %c0_217 = arith.constant 0 : index
    %c0_218 = arith.constant 0 : index
    %407 = vector.load %arg8[%406, %c0_217, %c0_218] : memref<8x8x128xf32, #tpu.memory_space<vmem>>, vector<1x8x128xf32>
    %408 = vector.shape_cast %407 : vector<1x8x128xf32> to vector<8x128xf32>
    %409 = vector.shape_cast %405 : vector<8x128xf32> to vector<1x8x128xf32>
    tpu.vector_store %arg8[%406, %c0_217, %c0_218], %409 {strides = array<i32>} : memref<8x8x128xf32, #tpu.memory_space<vmem>>, vector<1x8x128xf32>,
    %c5_i32 = arith.constant 5 : i32
    %410 = arith.index_cast %c5_i32 : i32 to index
    %c0_219 = arith.constant 0 : index
    %c0_220 = arith.constant 0 : index
    %411 = vector.load %arg1[%410, %c0_219, %c0_220] : memref<8x8x512xf32, #tpu.memory_space<vmem>>, vector<1x8x512xf32>
    %412 = vector.shape_cast %411 : vector<1x8x512xf32> to vector<8x512xf32>
    %c0_221 = arith.constant 0 : index
    %c0_222 = arith.constant 0 : index
    %413 = vector.load %arg3[%c0_221, %c0_222] : memref<128x512xf32, #tpu.memory_space<vmem>>, vector<128x512xf32>
    %cst_223 = arith.constant dense<0.000000e+00> : vector<8x512xf32>
    %414 = tpu.matmul %405, %413, %cst_223 {dimension_numbers = #tpu.dot_dimension_numbers<[1], [0], [0], [1], [0, 0, 1, 1], [], []>} : vector<8x128xf32>, vector<128x512xf32>, vector<8x512xf32> -> vector<8x512xf32>
    %415 = arith.addf %412, %414 : vector<8x512xf32>
    %416 = vector.extract_strided_slice %415 {offsets = [0, 0], sizes = [8, 128], strides = [1, 1]} : vector<8x512xf32> to vector<8x128xf32>
    %417 = arith.negf %416 : vector<8x128xf32>
    %418 = math.exp %417 : vector<8x128xf32>
    %cst_224 = arith.constant 1.000000e+00 : f32
    %419 = vector.broadcast %cst_224 : f32 to vector<8x128xf32>
    %420 = arith.addf %419, %418 : vector<8x128xf32>
    %421 = arith.divf %419, %420 : vector<8x128xf32>
    %422 = vector.extract_strided_slice %415 {offsets = [0, 128], sizes = [8, 128], strides = [1, 1]} : vector<8x512xf32> to vector<8x128xf32>
    %423 = arith.negf %422 : vector<8x128xf32>
    %424 = math.exp %423 : vector<8x128xf32>
    %cst_225 = arith.constant 1.000000e+00 : f32
    %425 = vector.broadcast %cst_225 : f32 to vector<8x128xf32>
    %426 = arith.addf %425, %424 : vector<8x128xf32>
    %427 = arith.divf %425, %426 : vector<8x128xf32>
    %428 = vector.extract_strided_slice %415 {offsets = [0, 256], sizes = [8, 128], strides = [1, 1]} : vector<8x512xf32> to vector<8x128xf32>
    %429 = math.tanh %428 : vector<8x128xf32>
    %430 = vector.extract_strided_slice %415 {offsets = [0, 384], sizes = [8, 128], strides = [1, 1]} : vector<8x512xf32> to vector<8x128xf32>
    %431 = arith.negf %430 : vector<8x128xf32>
    %432 = math.exp %431 : vector<8x128xf32>
    %cst_226 = arith.constant 1.000000e+00 : f32
    %433 = vector.broadcast %cst_226 : f32 to vector<8x128xf32>
    %434 = arith.addf %433, %432 : vector<8x128xf32>
    %435 = arith.divf %433, %434 : vector<8x128xf32>
    %436 = arith.mulf %427, %357 : vector<8x128xf32>
    %437 = arith.mulf %421, %429 : vector<8x128xf32>
    %438 = arith.addf %436, %437 : vector<8x128xf32>
    %439 = math.tanh %438 : vector<8x128xf32>
    %440 = arith.mulf %435, %439 : vector<8x128xf32>
    %441 = arith.index_cast %c5_i32 : i32 to index
    %c0_227 = arith.constant 0 : index
    %c0_228 = arith.constant 0 : index
    %442 = vector.load %arg2[%441, %c0_227, %c0_228] : memref<8x8x1xf32, #tpu.memory_space<vmem>>, vector<1x8x1xf32>
    %443 = vector.shape_cast %442 : vector<1x8x1xf32> to vector<8x1xf32>
    %cst_229 = arith.constant 0.333333343 : f32
    %444 = vector.broadcast %cst_229 : f32 to vector<8x1xf32>
    %445 = arith.mulf %443, %444 : vector<8x1xf32>
    %446 = vector.shape_cast %445 : vector<8x1xf32> to vector<8x1xf32>
    %447 = vector.broadcast %446 : vector<8x1xf32> to vector<8x128xf32>
    %c0_230 = arith.constant 0 : index
    %c0_231 = arith.constant 0 : index
    %448 = vector.load %arg4[%c0_230, %c0_231] : memref<128x128xf32, #tpu.memory_space<vmem>>, vector<128x128xf32>
    %cst_232 = arith.constant dense<0.000000e+00> : vector<8x128xf32>
    %449 = tpu.matmul %440, %448, %cst_232 {dimension_numbers = #tpu.dot_dimension_numbers<[1], [0], [0], [1], [0, 0, 1, 1], [], []>} : vector<8x128xf32>, vector<128x128xf32>, vector<8x128xf32> -> vector<8x128xf32>
    %c0_233 = arith.constant 0 : index
    %c0_234 = arith.constant 0 : index
    %450 = vector.load %arg5[%c0_233, %c0_234] : memref<1x128xf32, #tpu.memory_space<vmem>>, vector<1x128xf32>
    %451 = vector.broadcast %450 : vector<1x128xf32> to vector<8x128xf32>
    %452 = arith.addf %449, %451 : vector<8x128xf32>
    %453 = math.tanh %452 : vector<8x128xf32>
    %c0_235 = arith.constant 0 : index
    %c0_236 = arith.constant 0 : index
    %454 = vector.load %arg6[%c0_235, %c0_236] : memref<128x128xf32, #tpu.memory_space<vmem>>, vector<128x128xf32>
    %cst_237 = arith.constant dense<0.000000e+00> : vector<8x128xf32>
    %455 = tpu.matmul %453, %454, %cst_237 {dimension_numbers = #tpu.dot_dimension_numbers<[1], [0], [0], [1], [0, 0, 1, 1], [], []>} : vector<8x128xf32>, vector<128x128xf32>, vector<8x128xf32> -> vector<8x128xf32>
    %c0_238 = arith.constant 0 : index
    %c0_239 = arith.constant 0 : index
    %456 = vector.load %arg7[%c0_238, %c0_239] : memref<1x128xf32, #tpu.memory_space<vmem>>, vector<1x128xf32>
    %457 = vector.broadcast %456 : vector<1x128xf32> to vector<8x128xf32>
    %458 = arith.addf %455, %457 : vector<8x128xf32>
    %459 = arith.mulf %447, %458 : vector<8x128xf32>
    %460 = arith.addf %440, %459 : vector<8x128xf32>
    %c0_240 = arith.constant 0 : index
    %c0_241 = arith.constant 0 : index
    %461 = vector.load %arg4[%c0_240, %c0_241] : memref<128x128xf32, #tpu.memory_space<vmem>>, vector<128x128xf32>
    %cst_242 = arith.constant dense<0.000000e+00> : vector<8x128xf32>
    %462 = tpu.matmul %460, %461, %cst_242 {dimension_numbers = #tpu.dot_dimension_numbers<[1], [0], [0], [1], [0, 0, 1, 1], [], []>} : vector<8x128xf32>, vector<128x128xf32>, vector<8x128xf32> -> vector<8x128xf32>
    %c0_243 = arith.constant 0 : index
    %c0_244 = arith.constant 0 : index
    %463 = vector.load %arg5[%c0_243, %c0_244] : memref<1x128xf32, #tpu.memory_space<vmem>>, vector<1x128xf32>
    %464 = vector.broadcast %463 : vector<1x128xf32> to vector<8x128xf32>
    %465 = arith.addf %462, %464 : vector<8x128xf32>
    %466 = math.tanh %465 : vector<8x128xf32>
    %c0_245 = arith.constant 0 : index
    %c0_246 = arith.constant 0 : index
    %467 = vector.load %arg6[%c0_245, %c0_246] : memref<128x128xf32, #tpu.memory_space<vmem>>, vector<128x128xf32>
    %cst_247 = arith.constant dense<0.000000e+00> : vector<8x128xf32>
    %468 = tpu.matmul %466, %467, %cst_247 {dimension_numbers = #tpu.dot_dimension_numbers<[1], [0], [0], [1], [0, 0, 1, 1], [], []>} : vector<8x128xf32>, vector<128x128xf32>, vector<8x128xf32> -> vector<8x128xf32>
    %c0_248 = arith.constant 0 : index
    %c0_249 = arith.constant 0 : index
    %469 = vector.load %arg7[%c0_248, %c0_249] : memref<1x128xf32, #tpu.memory_space<vmem>>, vector<1x128xf32>
    %470 = vector.broadcast %469 : vector<1x128xf32> to vector<8x128xf32>
    %471 = arith.addf %468, %470 : vector<8x128xf32>
    %472 = arith.mulf %447, %471 : vector<8x128xf32>
    %473 = arith.addf %460, %472 : vector<8x128xf32>
    %c0_250 = arith.constant 0 : index
    %c0_251 = arith.constant 0 : index
    %474 = vector.load %arg4[%c0_250, %c0_251] : memref<128x128xf32, #tpu.memory_space<vmem>>, vector<128x128xf32>
    %cst_252 = arith.constant dense<0.000000e+00> : vector<8x128xf32>
    %475 = tpu.matmul %473, %474, %cst_252 {dimension_numbers = #tpu.dot_dimension_numbers<[1], [0], [0], [1], [0, 0, 1, 1], [], []>} : vector<8x128xf32>, vector<128x128xf32>, vector<8x128xf32> -> vector<8x128xf32>
    %c0_253 = arith.constant 0 : index
    %c0_254 = arith.constant 0 : index
    %476 = vector.load %arg5[%c0_253, %c0_254] : memref<1x128xf32, #tpu.memory_space<vmem>>, vector<1x128xf32>
    %477 = vector.broadcast %476 : vector<1x128xf32> to vector<8x128xf32>
    %478 = arith.addf %475, %477 : vector<8x128xf32>
    %479 = math.tanh %478 : vector<8x128xf32>
    %c0_255 = arith.constant 0 : index
    %c0_256 = arith.constant 0 : index
    %480 = vector.load %arg6[%c0_255, %c0_256] : memref<128x128xf32, #tpu.memory_space<vmem>>, vector<128x128xf32>
    %cst_257 = arith.constant dense<0.000000e+00> : vector<8x128xf32>
    %481 = tpu.matmul %479, %480, %cst_257 {dimension_numbers = #tpu.dot_dimension_numbers<[1], [0], [0], [1], [0, 0, 1, 1], [], []>} : vector<8x128xf32>, vector<128x128xf32>, vector<8x128xf32> -> vector<8x128xf32>
    %c0_258 = arith.constant 0 : index
    %c0_259 = arith.constant 0 : index
    %482 = vector.load %arg7[%c0_258, %c0_259] : memref<1x128xf32, #tpu.memory_space<vmem>>, vector<1x128xf32>
    %483 = vector.broadcast %482 : vector<1x128xf32> to vector<8x128xf32>
    %484 = arith.addf %481, %483 : vector<8x128xf32>
    %485 = arith.mulf %447, %484 : vector<8x128xf32>
    %486 = arith.addf %473, %485 : vector<8x128xf32>
    %487 = arith.index_cast %c5_i32 : i32 to index
    %c0_260 = arith.constant 0 : index
    %c0_261 = arith.constant 0 : index
    %488 = vector.load %arg8[%487, %c0_260, %c0_261] : memref<8x8x128xf32, #tpu.memory_space<vmem>>, vector<1x8x128xf32>
    %489 = vector.shape_cast %488 : vector<1x8x128xf32> to vector<8x128xf32>
    %490 = vector.shape_cast %486 : vector<8x128xf32> to vector<1x8x128xf32>
    tpu.vector_store %arg8[%487, %c0_260, %c0_261], %490 {strides = array<i32>} : memref<8x8x128xf32, #tpu.memory_space<vmem>>, vector<1x8x128xf32>,
    %c6_i32 = arith.constant 6 : i32
    %491 = arith.index_cast %c6_i32 : i32 to index
    %c0_262 = arith.constant 0 : index
    %c0_263 = arith.constant 0 : index
    %492 = vector.load %arg1[%491, %c0_262, %c0_263] : memref<8x8x512xf32, #tpu.memory_space<vmem>>, vector<1x8x512xf32>
    %493 = vector.shape_cast %492 : vector<1x8x512xf32> to vector<8x512xf32>
    %c0_264 = arith.constant 0 : index
    %c0_265 = arith.constant 0 : index
    %494 = vector.load %arg3[%c0_264, %c0_265] : memref<128x512xf32, #tpu.memory_space<vmem>>, vector<128x512xf32>
    %cst_266 = arith.constant dense<0.000000e+00> : vector<8x512xf32>
    %495 = tpu.matmul %486, %494, %cst_266 {dimension_numbers = #tpu.dot_dimension_numbers<[1], [0], [0], [1], [0, 0, 1, 1], [], []>} : vector<8x128xf32>, vector<128x512xf32>, vector<8x512xf32> -> vector<8x512xf32>
    %496 = arith.addf %493, %495 : vector<8x512xf32>
    %497 = vector.extract_strided_slice %496 {offsets = [0, 0], sizes = [8, 128], strides = [1, 1]} : vector<8x512xf32> to vector<8x128xf32>
    %498 = arith.negf %497 : vector<8x128xf32>
    %499 = math.exp %498 : vector<8x128xf32>
    %cst_267 = arith.constant 1.000000e+00 : f32
    %500 = vector.broadcast %cst_267 : f32 to vector<8x128xf32>
    %501 = arith.addf %500, %499 : vector<8x128xf32>
    %502 = arith.divf %500, %501 : vector<8x128xf32>
    %503 = vector.extract_strided_slice %496 {offsets = [0, 128], sizes = [8, 128], strides = [1, 1]} : vector<8x512xf32> to vector<8x128xf32>
    %504 = arith.negf %503 : vector<8x128xf32>
    %505 = math.exp %504 : vector<8x128xf32>
    %cst_268 = arith.constant 1.000000e+00 : f32
    %506 = vector.broadcast %cst_268 : f32 to vector<8x128xf32>
    %507 = arith.addf %506, %505 : vector<8x128xf32>
    %508 = arith.divf %506, %507 : vector<8x128xf32>
    %509 = vector.extract_strided_slice %496 {offsets = [0, 256], sizes = [8, 128], strides = [1, 1]} : vector<8x512xf32> to vector<8x128xf32>
    %510 = math.tanh %509 : vector<8x128xf32>
    %511 = vector.extract_strided_slice %496 {offsets = [0, 384], sizes = [8, 128], strides = [1, 1]} : vector<8x512xf32> to vector<8x128xf32>
    %512 = arith.negf %511 : vector<8x128xf32>
    %513 = math.exp %512 : vector<8x128xf32>
    %cst_269 = arith.constant 1.000000e+00 : f32
    %514 = vector.broadcast %cst_269 : f32 to vector<8x128xf32>
    %515 = arith.addf %514, %513 : vector<8x128xf32>
    %516 = arith.divf %514, %515 : vector<8x128xf32>
    %517 = arith.mulf %508, %438 : vector<8x128xf32>
    %518 = arith.mulf %502, %510 : vector<8x128xf32>
    %519 = arith.addf %517, %518 : vector<8x128xf32>
    %520 = math.tanh %519 : vector<8x128xf32>
    %521 = arith.mulf %516, %520 : vector<8x128xf32>
    %522 = arith.index_cast %c6_i32 : i32 to index
    %c0_270 = arith.constant 0 : index
    %c0_271 = arith.constant 0 : index
    %523 = vector.load %arg2[%522, %c0_270, %c0_271] : memref<8x8x1xf32, #tpu.memory_space<vmem>>, vector<1x8x1xf32>
    %524 = vector.shape_cast %523 : vector<1x8x1xf32> to vector<8x1xf32>
    %cst_272 = arith.constant 0.333333343 : f32
    %525 = vector.broadcast %cst_272 : f32 to vector<8x1xf32>
    %526 = arith.mulf %524, %525 : vector<8x1xf32>
    %527 = vector.shape_cast %526 : vector<8x1xf32> to vector<8x1xf32>
    %528 = vector.broadcast %527 : vector<8x1xf32> to vector<8x128xf32>
    %c0_273 = arith.constant 0 : index
    %c0_274 = arith.constant 0 : index
    %529 = vector.load %arg4[%c0_273, %c0_274] : memref<128x128xf32, #tpu.memory_space<vmem>>, vector<128x128xf32>
    %cst_275 = arith.constant dense<0.000000e+00> : vector<8x128xf32>
    %530 = tpu.matmul %521, %529, %cst_275 {dimension_numbers = #tpu.dot_dimension_numbers<[1], [0], [0], [1], [0, 0, 1, 1], [], []>} : vector<8x128xf32>, vector<128x128xf32>, vector<8x128xf32> -> vector<8x128xf32>
    %c0_276 = arith.constant 0 : index
    %c0_277 = arith.constant 0 : index
    %531 = vector.load %arg5[%c0_276, %c0_277] : memref<1x128xf32, #tpu.memory_space<vmem>>, vector<1x128xf32>
    %532 = vector.broadcast %531 : vector<1x128xf32> to vector<8x128xf32>
    %533 = arith.addf %530, %532 : vector<8x128xf32>
    %534 = math.tanh %533 : vector<8x128xf32>
    %c0_278 = arith.constant 0 : index
    %c0_279 = arith.constant 0 : index
    %535 = vector.load %arg6[%c0_278, %c0_279] : memref<128x128xf32, #tpu.memory_space<vmem>>, vector<128x128xf32>
    %cst_280 = arith.constant dense<0.000000e+00> : vector<8x128xf32>
    %536 = tpu.matmul %534, %535, %cst_280 {dimension_numbers = #tpu.dot_dimension_numbers<[1], [0], [0], [1], [0, 0, 1, 1], [], []>} : vector<8x128xf32>, vector<128x128xf32>, vector<8x128xf32> -> vector<8x128xf32>
    %c0_281 = arith.constant 0 : index
    %c0_282 = arith.constant 0 : index
    %537 = vector.load %arg7[%c0_281, %c0_282] : memref<1x128xf32, #tpu.memory_space<vmem>>, vector<1x128xf32>
    %538 = vector.broadcast %537 : vector<1x128xf32> to vector<8x128xf32>
    %539 = arith.addf %536, %538 : vector<8x128xf32>
    %540 = arith.mulf %528, %539 : vector<8x128xf32>
    %541 = arith.addf %521, %540 : vector<8x128xf32>
    %c0_283 = arith.constant 0 : index
    %c0_284 = arith.constant 0 : index
    %542 = vector.load %arg4[%c0_283, %c0_284] : memref<128x128xf32, #tpu.memory_space<vmem>>, vector<128x128xf32>
    %cst_285 = arith.constant dense<0.000000e+00> : vector<8x128xf32>
    %543 = tpu.matmul %541, %542, %cst_285 {dimension_numbers = #tpu.dot_dimension_numbers<[1], [0], [0], [1], [0, 0, 1, 1], [], []>} : vector<8x128xf32>, vector<128x128xf32>, vector<8x128xf32> -> vector<8x128xf32>
    %c0_286 = arith.constant 0 : index
    %c0_287 = arith.constant 0 : index
    %544 = vector.load %arg5[%c0_286, %c0_287] : memref<1x128xf32, #tpu.memory_space<vmem>>, vector<1x128xf32>
    %545 = vector.broadcast %544 : vector<1x128xf32> to vector<8x128xf32>
    %546 = arith.addf %543, %545 : vector<8x128xf32>
    %547 = math.tanh %546 : vector<8x128xf32>
    %c0_288 = arith.constant 0 : index
    %c0_289 = arith.constant 0 : index
    %548 = vector.load %arg6[%c0_288, %c0_289] : memref<128x128xf32, #tpu.memory_space<vmem>>, vector<128x128xf32>
    %cst_290 = arith.constant dense<0.000000e+00> : vector<8x128xf32>
    %549 = tpu.matmul %547, %548, %cst_290 {dimension_numbers = #tpu.dot_dimension_numbers<[1], [0], [0], [1], [0, 0, 1, 1], [], []>} : vector<8x128xf32>, vector<128x128xf32>, vector<8x128xf32> -> vector<8x128xf32>
    %c0_291 = arith.constant 0 : index
    %c0_292 = arith.constant 0 : index
    %550 = vector.load %arg7[%c0_291, %c0_292] : memref<1x128xf32, #tpu.memory_space<vmem>>, vector<1x128xf32>
    %551 = vector.broadcast %550 : vector<1x128xf32> to vector<8x128xf32>
    %552 = arith.addf %549, %551 : vector<8x128xf32>
    %553 = arith.mulf %528, %552 : vector<8x128xf32>
    %554 = arith.addf %541, %553 : vector<8x128xf32>
    %c0_293 = arith.constant 0 : index
    %c0_294 = arith.constant 0 : index
    %555 = vector.load %arg4[%c0_293, %c0_294] : memref<128x128xf32, #tpu.memory_space<vmem>>, vector<128x128xf32>
    %cst_295 = arith.constant dense<0.000000e+00> : vector<8x128xf32>
    %556 = tpu.matmul %554, %555, %cst_295 {dimension_numbers = #tpu.dot_dimension_numbers<[1], [0], [0], [1], [0, 0, 1, 1], [], []>} : vector<8x128xf32>, vector<128x128xf32>, vector<8x128xf32> -> vector<8x128xf32>
    %c0_296 = arith.constant 0 : index
    %c0_297 = arith.constant 0 : index
    %557 = vector.load %arg5[%c0_296, %c0_297] : memref<1x128xf32, #tpu.memory_space<vmem>>, vector<1x128xf32>
    %558 = vector.broadcast %557 : vector<1x128xf32> to vector<8x128xf32>
    %559 = arith.addf %556, %558 : vector<8x128xf32>
    %560 = math.tanh %559 : vector<8x128xf32>
    %c0_298 = arith.constant 0 : index
    %c0_299 = arith.constant 0 : index
    %561 = vector.load %arg6[%c0_298, %c0_299] : memref<128x128xf32, #tpu.memory_space<vmem>>, vector<128x128xf32>
    %cst_300 = arith.constant dense<0.000000e+00> : vector<8x128xf32>
    %562 = tpu.matmul %560, %561, %cst_300 {dimension_numbers = #tpu.dot_dimension_numbers<[1], [0], [0], [1], [0, 0, 1, 1], [], []>} : vector<8x128xf32>, vector<128x128xf32>, vector<8x128xf32> -> vector<8x128xf32>
    %c0_301 = arith.constant 0 : index
    %c0_302 = arith.constant 0 : index
    %563 = vector.load %arg7[%c0_301, %c0_302] : memref<1x128xf32, #tpu.memory_space<vmem>>, vector<1x128xf32>
    %564 = vector.broadcast %563 : vector<1x128xf32> to vector<8x128xf32>
    %565 = arith.addf %562, %564 : vector<8x128xf32>
    %566 = arith.mulf %528, %565 : vector<8x128xf32>
    %567 = arith.addf %554, %566 : vector<8x128xf32>
    %568 = arith.index_cast %c6_i32 : i32 to index
    %c0_303 = arith.constant 0 : index
    %c0_304 = arith.constant 0 : index
    %569 = vector.load %arg8[%568, %c0_303, %c0_304] : memref<8x8x128xf32, #tpu.memory_space<vmem>>, vector<1x8x128xf32>
    %570 = vector.shape_cast %569 : vector<1x8x128xf32> to vector<8x128xf32>
    %571 = vector.shape_cast %567 : vector<8x128xf32> to vector<1x8x128xf32>
    tpu.vector_store %arg8[%568, %c0_303, %c0_304], %571 {strides = array<i32>} : memref<8x8x128xf32, #tpu.memory_space<vmem>>, vector<1x8x128xf32>,
    %c7_i32 = arith.constant 7 : i32
    %572 = arith.index_cast %c7_i32 : i32 to index
    %c0_305 = arith.constant 0 : index
    %c0_306 = arith.constant 0 : index
    %573 = vector.load %arg1[%572, %c0_305, %c0_306] : memref<8x8x512xf32, #tpu.memory_space<vmem>>, vector<1x8x512xf32>
    %574 = vector.shape_cast %573 : vector<1x8x512xf32> to vector<8x512xf32>
    %c0_307 = arith.constant 0 : index
    %c0_308 = arith.constant 0 : index
    %575 = vector.load %arg3[%c0_307, %c0_308] : memref<128x512xf32, #tpu.memory_space<vmem>>, vector<128x512xf32>
    %cst_309 = arith.constant dense<0.000000e+00> : vector<8x512xf32>
    %576 = tpu.matmul %567, %575, %cst_309 {dimension_numbers = #tpu.dot_dimension_numbers<[1], [0], [0], [1], [0, 0, 1, 1], [], []>} : vector<8x128xf32>, vector<128x512xf32>, vector<8x512xf32> -> vector<8x512xf32>
    %577 = arith.addf %574, %576 : vector<8x512xf32>
    %578 = vector.extract_strided_slice %577 {offsets = [0, 0], sizes = [8, 128], strides = [1, 1]} : vector<8x512xf32> to vector<8x128xf32>
    %579 = arith.negf %578 : vector<8x128xf32>
    %580 = math.exp %579 : vector<8x128xf32>
    %cst_310 = arith.constant 1.000000e+00 : f32
    %581 = vector.broadcast %cst_310 : f32 to vector<8x128xf32>
    %582 = arith.addf %581, %580 : vector<8x128xf32>
    %583 = arith.divf %581, %582 : vector<8x128xf32>
    %584 = vector.extract_strided_slice %577 {offsets = [0, 128], sizes = [8, 128], strides = [1, 1]} : vector<8x512xf32> to vector<8x128xf32>
    %585 = arith.negf %584 : vector<8x128xf32>
    %586 = math.exp %585 : vector<8x128xf32>
    %cst_311 = arith.constant 1.000000e+00 : f32
    %587 = vector.broadcast %cst_311 : f32 to vector<8x128xf32>
    %588 = arith.addf %587, %586 : vector<8x128xf32>
    %589 = arith.divf %587, %588 : vector<8x128xf32>
    %590 = vector.extract_strided_slice %577 {offsets = [0, 256], sizes = [8, 128], strides = [1, 1]} : vector<8x512xf32> to vector<8x128xf32>
    %591 = math.tanh %590 : vector<8x128xf32>
    %592 = vector.extract_strided_slice %577 {offsets = [0, 384], sizes = [8, 128], strides = [1, 1]} : vector<8x512xf32> to vector<8x128xf32>
    %593 = arith.negf %592 : vector<8x128xf32>
    %594 = math.exp %593 : vector<8x128xf32>
    %cst_312 = arith.constant 1.000000e+00 : f32
    %595 = vector.broadcast %cst_312 : f32 to vector<8x128xf32>
    %596 = arith.addf %595, %594 : vector<8x128xf32>
    %597 = arith.divf %595, %596 : vector<8x128xf32>
    %598 = arith.mulf %589, %519 : vector<8x128xf32>
    %599 = arith.mulf %583, %591 : vector<8x128xf32>
    %600 = arith.addf %598, %599 : vector<8x128xf32>
    %601 = math.tanh %600 : vector<8x128xf32>
    %602 = arith.mulf %597, %601 : vector<8x128xf32>
    %603 = arith.index_cast %c7_i32 : i32 to index
    %c0_313 = arith.constant 0 : index
    %c0_314 = arith.constant 0 : index
    %604 = vector.load %arg2[%603, %c0_313, %c0_314] : memref<8x8x1xf32, #tpu.memory_space<vmem>>, vector<1x8x1xf32>
    %605 = vector.shape_cast %604 : vector<1x8x1xf32> to vector<8x1xf32>
    %cst_315 = arith.constant 0.333333343 : f32
    %606 = vector.broadcast %cst_315 : f32 to vector<8x1xf32>
    %607 = arith.mulf %605, %606 : vector<8x1xf32>
    %608 = vector.shape_cast %607 : vector<8x1xf32> to vector<8x1xf32>
    %609 = vector.broadcast %608 : vector<8x1xf32> to vector<8x128xf32>
    %c0_316 = arith.constant 0 : index
    %c0_317 = arith.constant 0 : index
    %610 = vector.load %arg4[%c0_316, %c0_317] : memref<128x128xf32, #tpu.memory_space<vmem>>, vector<128x128xf32>
    %cst_318 = arith.constant dense<0.000000e+00> : vector<8x128xf32>
    %611 = tpu.matmul %602, %610, %cst_318 {dimension_numbers = #tpu.dot_dimension_numbers<[1], [0], [0], [1], [0, 0, 1, 1], [], []>} : vector<8x128xf32>, vector<128x128xf32>, vector<8x128xf32> -> vector<8x128xf32>
    %c0_319 = arith.constant 0 : index
    %c0_320 = arith.constant 0 : index
    %612 = vector.load %arg5[%c0_319, %c0_320] : memref<1x128xf32, #tpu.memory_space<vmem>>, vector<1x128xf32>
    %613 = vector.broadcast %612 : vector<1x128xf32> to vector<8x128xf32>
    %614 = arith.addf %611, %613 : vector<8x128xf32>
    %615 = math.tanh %614 : vector<8x128xf32>
    %c0_321 = arith.constant 0 : index
    %c0_322 = arith.constant 0 : index
    %616 = vector.load %arg6[%c0_321, %c0_322] : memref<128x128xf32, #tpu.memory_space<vmem>>, vector<128x128xf32>
    %cst_323 = arith.constant dense<0.000000e+00> : vector<8x128xf32>
    %617 = tpu.matmul %615, %616, %cst_323 {dimension_numbers = #tpu.dot_dimension_numbers<[1], [0], [0], [1], [0, 0, 1, 1], [], []>} : vector<8x128xf32>, vector<128x128xf32>, vector<8x128xf32> -> vector<8x128xf32>
    %c0_324 = arith.constant 0 : index
    %c0_325 = arith.constant 0 : index
    %618 = vector.load %arg7[%c0_324, %c0_325] : memref<1x128xf32, #tpu.memory_space<vmem>>, vector<1x128xf32>
    %619 = vector.broadcast %618 : vector<1x128xf32> to vector<8x128xf32>
    %620 = arith.addf %617, %619 : vector<8x128xf32>
    %621 = arith.mulf %609, %620 : vector<8x128xf32>
    %622 = arith.addf %602, %621 : vector<8x128xf32>
    %c0_326 = arith.constant 0 : index
    %c0_327 = arith.constant 0 : index
    %623 = vector.load %arg4[%c0_326, %c0_327] : memref<128x128xf32, #tpu.memory_space<vmem>>, vector<128x128xf32>
    %cst_328 = arith.constant dense<0.000000e+00> : vector<8x128xf32>
    %624 = tpu.matmul %622, %623, %cst_328 {dimension_numbers = #tpu.dot_dimension_numbers<[1], [0], [0], [1], [0, 0, 1, 1], [], []>} : vector<8x128xf32>, vector<128x128xf32>, vector<8x128xf32> -> vector<8x128xf32>
    %c0_329 = arith.constant 0 : index
    %c0_330 = arith.constant 0 : index
    %625 = vector.load %arg5[%c0_329, %c0_330] : memref<1x128xf32, #tpu.memory_space<vmem>>, vector<1x128xf32>
    %626 = vector.broadcast %625 : vector<1x128xf32> to vector<8x128xf32>
    %627 = arith.addf %624, %626 : vector<8x128xf32>
    %628 = math.tanh %627 : vector<8x128xf32>
    %c0_331 = arith.constant 0 : index
    %c0_332 = arith.constant 0 : index
    %629 = vector.load %arg6[%c0_331, %c0_332] : memref<128x128xf32, #tpu.memory_space<vmem>>, vector<128x128xf32>
    %cst_333 = arith.constant dense<0.000000e+00> : vector<8x128xf32>
    %630 = tpu.matmul %628, %629, %cst_333 {dimension_numbers = #tpu.dot_dimension_numbers<[1], [0], [0], [1], [0, 0, 1, 1], [], []>} : vector<8x128xf32>, vector<128x128xf32>, vector<8x128xf32> -> vector<8x128xf32>
    %c0_334 = arith.constant 0 : index
    %c0_335 = arith.constant 0 : index
    %631 = vector.load %arg7[%c0_334, %c0_335] : memref<1x128xf32, #tpu.memory_space<vmem>>, vector<1x128xf32>
    %632 = vector.broadcast %631 : vector<1x128xf32> to vector<8x128xf32>
    %633 = arith.addf %630, %632 : vector<8x128xf32>
    %634 = arith.mulf %609, %633 : vector<8x128xf32>
    %635 = arith.addf %622, %634 : vector<8x128xf32>
    %c0_336 = arith.constant 0 : index
    %c0_337 = arith.constant 0 : index
    %636 = vector.load %arg4[%c0_336, %c0_337] : memref<128x128xf32, #tpu.memory_space<vmem>>, vector<128x128xf32>
    %cst_338 = arith.constant dense<0.000000e+00> : vector<8x128xf32>
    %637 = tpu.matmul %635, %636, %cst_338 {dimension_numbers = #tpu.dot_dimension_numbers<[1], [0], [0], [1], [0, 0, 1, 1], [], []>} : vector<8x128xf32>, vector<128x128xf32>, vector<8x128xf32> -> vector<8x128xf32>
    %c0_339 = arith.constant 0 : index
    %c0_340 = arith.constant 0 : index
    %638 = vector.load %arg5[%c0_339, %c0_340] : memref<1x128xf32, #tpu.memory_space<vmem>>, vector<1x128xf32>
    %639 = vector.broadcast %638 : vector<1x128xf32> to vector<8x128xf32>
    %640 = arith.addf %637, %639 : vector<8x128xf32>
    %641 = math.tanh %640 : vector<8x128xf32>
    %c0_341 = arith.constant 0 : index
    %c0_342 = arith.constant 0 : index
    %642 = vector.load %arg6[%c0_341, %c0_342] : memref<128x128xf32, #tpu.memory_space<vmem>>, vector<128x128xf32>
    %cst_343 = arith.constant dense<0.000000e+00> : vector<8x128xf32>
    %643 = tpu.matmul %641, %642, %cst_343 {dimension_numbers = #tpu.dot_dimension_numbers<[1], [0], [0], [1], [0, 0, 1, 1], [], []>} : vector<8x128xf32>, vector<128x128xf32>, vector<8x128xf32> -> vector<8x128xf32>
    %c0_344 = arith.constant 0 : index
    %c0_345 = arith.constant 0 : index
    %644 = vector.load %arg7[%c0_344, %c0_345] : memref<1x128xf32, #tpu.memory_space<vmem>>, vector<1x128xf32>
    %645 = vector.broadcast %644 : vector<1x128xf32> to vector<8x128xf32>
    %646 = arith.addf %643, %645 : vector<8x128xf32>
    %647 = arith.mulf %609, %646 : vector<8x128xf32>
    %648 = arith.addf %635, %647 : vector<8x128xf32>
    %649 = arith.index_cast %c7_i32 : i32 to index
    %c0_346 = arith.constant 0 : index
    %c0_347 = arith.constant 0 : index
    %650 = vector.load %arg8[%649, %c0_346, %c0_347] : memref<8x8x128xf32, #tpu.memory_space<vmem>>, vector<1x8x128xf32>
    %651 = vector.shape_cast %650 : vector<1x8x128xf32> to vector<8x128xf32>
    %652 = vector.shape_cast %648 : vector<8x128xf32> to vector<1x8x128xf32>
    tpu.vector_store %arg8[%649, %c0_346, %c0_347], %652 {strides = array<i32>} : memref<8x8x128xf32, #tpu.memory_space<vmem>>, vector<1x8x128xf32>,
    %c8_i32 = arith.constant 8 : i32
    %c0_348 = arith.constant 0 : index
    %c0_349 = arith.constant 0 : index
    %653 = vector.load %arg9[%c0_348, %c0_349] : memref<8x128xf32, #tpu.memory_space<vmem>>, vector<8x128xf32>
    tpu.vector_store %arg9[%c0_348, %c0_349], %648 {strides = array<i32>} : memref<8x128xf32, #tpu.memory_space<vmem>>, vector<8x128xf32>,
    %c0_350 = arith.constant 0 : index
    %c0_351 = arith.constant 0 : index
    %654 = vector.load %arg10[%c0_350, %c0_351] : memref<8x128xf32, #tpu.memory_space<vmem>>, vector<8x128xf32>
    tpu.vector_store %arg10[%c0_350, %c0_351], %600 {strides = array<i32>} : memref<8x128xf32, #tpu.memory_space<vmem>>, vector<8x128xf32>,
    return
  }
  func.func @transform_0(%arg0: i32) -> (i32, i32, i32) {
    %c0_i32 = arith.constant 0 : i32
    %c0_i32_0 = arith.constant 0 : i32
    %c0_i32_1 = arith.constant 0 : i32
    return %arg0, %c0_i32, %c0_i32_0 : i32, i32, i32
  }
  func.func @transform_1(%arg0: i32) -> (i32, i32, i32) {
    %c0_i32 = arith.constant 0 : i32
    %c0_i32_0 = arith.constant 0 : i32
    %c0_i32_1 = arith.constant 0 : i32
    return %arg0, %c0_i32, %c0_i32_0 : i32, i32, i32
  }
  func.func @transform_2(%arg0: i32) -> (i32, i32) {
    %c0_i32 = arith.constant 0 : i32
    %c0_i32_0 = arith.constant 0 : i32
    %c0_i32_1 = arith.constant 0 : i32
    return %c0_i32, %c0_i32_0 : i32, i32
  }
  func.func @transform_3(%arg0: i32) -> (i32, i32) {
    %c0_i32 = arith.constant 0 : i32
    %c0_i32_0 = arith.constant 0 : i32
    %c0_i32_1 = arith.constant 0 : i32
    return %c0_i32, %c0_i32_0 : i32, i32
  }
  func.func @transform_4(%arg0: i32) -> (i32, i32) {
    %c0_i32 = arith.constant 0 : i32
    %c0_i32_0 = arith.constant 0 : i32
    %c0_i32_1 = arith.constant 0 : i32
    return %c0_i32, %c0_i32_0 : i32, i32
  }
  func.func @transform_5(%arg0: i32) -> (i32, i32) {
    %c0_i32 = arith.constant 0 : i32
    %c0_i32_0 = arith.constant 0 : i32
    %c0_i32_1 = arith.constant 0 : i32
    return %c0_i32, %c0_i32_0 : i32, i32
  }
  func.func @transform_6(%arg0: i32) -> (i32, i32) {
    %c0_i32 = arith.constant 0 : i32
    %c0_i32_0 = arith.constant 0 : i32
    %c0_i32_1 = arith.constant 0 : i32
    return %c0_i32, %c0_i32_0 : i32, i32
  }
  func.func @transform_7(%arg0: i32) -> (i32, i32, i32) {
    %c0_i32 = arith.constant 0 : i32
    %c0_i32_0 = arith.constant 0 : i32
    %c0_i32_1 = arith.constant 0 : i32
    return %arg0, %c0_i32, %c0_i32_0 : i32, i32, i32
  }
}

</mosaic_0001>

<llo_original>
// kernel: tpu_custom_call.1
$region0: #{tpu_custom_call.1}
  #allocation0 [shape = 'u32[]', space=smem, size = 0x4, offset = 0x4, fixed_abs, tag = 'smem constant byte address 0x4 - core index']
  #allocation1 [shape = 'u32[144,128]{1,0:T(1,128)}', space=vmem, size = 0x12000, scoped, tag = 'internal scratch']
  #allocation2 [shape = 'f32[8,128]{1,0:T(8,128)}', space=vmem, size = 0x1000, scoped, tag = 'scratch operand']
  #allocation3 [shape = 'f32[8,128]{1,0:T(8,128)}', space=vmem, size = 0x1000, scoped, tag = 'scratch operand']
  %s0 = inlined_call_operand.hbm [shape: f32[8,8,512], index: 0, kind: input, shape index: {}]
  %s1 = inlined_call_operand.vmem [shape: f32[8,8,1], index: 1, kind: input, shape index: {}]
  %s2 = inlined_call_operand.hbm [shape: f32[128,512], index: 2, kind: input, shape index: {}]
  %s3 = inlined_call_operand.hbm [shape: f32[128,128], index: 3, kind: input, shape index: {}]
  %s4 = inlined_call_operand.vmem [shape: f32[1,128], index: 4, kind: input, shape index: {}]
  %s5 = inlined_call_operand.hbm [shape: f32[128,128], index: 5, kind: input, shape index: {}]
  %s6 = inlined_call_operand.vmem [shape: f32[1,128], index: 6, kind: input, shape index: {}]
  %s7 = inlined_call_operand.hbm [shape: f32[8,8,128], index: 7, kind: output, shape index: {}]
  %s8 = sld [smem:[#allocation0]]
  $region58: #{tpu_custom_call.1} parent=0
    _
  %s10 = ssub.s32 1, %s8
  %s11 = scalar_select 0, %s10, %s8
  $region1: #{tpu_custom_call.1} parent=0
    #allocation4 [shape = 'u8[131072]{0}', space=vmem, size = 0x20000, scoped, tag = 'input window, operand 0, single buffered']
    #allocation5 [shape = 's32[1]{0}', space=sflag, size = 0x4, scoped, tag = 'scoped memory for tpu_custom_call.1']
    #allocation6 [shape = 's32[1]{0}', space=sflag, size = 0x4, scoped, tag = 'scoped memory for tpu_custom_call.1']
    #allocation7 [shape = 'u8[262144]{0}', space=vmem, size = 0x40000, scoped, tag = 'input window, operand 2, single buffered']
    #allocation8 [shape = 's32[1]{0}', space=sflag, size = 0x4, scoped, tag = 'scoped memory for tpu_custom_call.1']
    #allocation9 [shape = 'u8[65536]{0}', space=vmem, size = 0x10000, scoped, tag = 'input window, operand 3, single buffered']
    #allocation10 [shape = 'u8[65536]{0}', space=vmem, size = 0x10000, scoped, tag = 'input window, operand 5, single buffered']
    #allocation11 [shape = 's32[1]{0}', space=sflag, size = 0x4, scoped, tag = 'scoped memory for tpu_custom_call.1']
    #allocation12 [shape = 'u8[32768]{0}', space=vmem, size = 0x8000, scoped, tag = 'output window, operand 0, single buffered']
    %12 = vsyncpa [#allocation5], 0
    %13 = vsyncpa [#allocation8], 0
    %14 = vsyncpa [#allocation11], 0
    %15 = vsyncpa [#allocation6], 0
    // Predicated region
    $region2: #{tpu_custom_call.1} parent=1 // pred_check
      _
    $region3: #{tpu_custom_call.1} parent=1 // pred_check_branch
      %17 = sbr.rel (0) target = $region5
    $region4: #{tpu_custom_call.1} parent=1 // pred_region
      %s19 = ssub.s32 4096, 4096
      %20 = vsyncadd [#allocation5], %s19
      %s21 = sshll.u32 [#allocation4], 4
      %s22 = int_to_ptr.vmem [resolvable:$true] %s21
      %27 = dma.hbm_to_vmem [thread:$0]  %s0, 4096, %s22, [#allocation5], 512, 512, 32
    $region5: #{tpu_custom_call.1} parent=1 // pred_fallthru
      _
    // Predicated region
    $region6: #{tpu_custom_call.1} parent=1 // pred_check
      _
    $region7: #{tpu_custom_call.1} parent=1 // pred_check_branch
      %29 = sbr.rel (0) target = $region9
    $region8: #{tpu_custom_call.1} parent=1 // pred_region
      _
    $region9: #{tpu_custom_call.1} parent=1 // pred_fallthru
      _
    // Predicated region
    $region10: #{tpu_custom_call.1} parent=1 // pred_check
      _
    $region11: #{tpu_custom_call.1} parent=1 // pred_check_branch
      %31 = sbr.rel (0) target = $region13
    $region12: #{tpu_custom_call.1} parent=1 // pred_region
      %s33 = ssub.s32 8192, 8192
      %34 = vsyncadd [#allocation8], %s33
      %s35 = sshll.u32 [#allocation7], 4
      %s36 = int_to_ptr.vmem [resolvable:$true] %s35
      %41 = dma.hbm_to_vmem [thread:$0]  %s2, 8192, %s36, [#allocation8], 512, 512, 32
    $region13: #{tpu_custom_call.1} parent=1 // pred_fallthru
      _
    // Predicated region
    $region14: #{tpu_custom_call.1} parent=1 // pred_check
      _
    $region15: #{tpu_custom_call.1} parent=1 // pred_check_branch
      %43 = sbr.rel (0) target = $region17
    $region16: #{tpu_custom_call.1} parent=1 // pred_region
      %s45 = ssub.s32 2048, 2048
      %46 = vsyncadd [#allocation8], %s45
      %s47 = sshll.u32 [#allocation9], 4
      %s48 = int_to_ptr.vmem [resolvable:$true] %s47
      %53 = dma.hbm_to_vmem [thread:$0]  %s3, 2048, %s48, [#allocation8], 128, 128, 8
    $region17: #{tpu_custom_call.1} parent=1 // pred_fallthru
      _
    // Predicated region
    $region18: #{tpu_custom_call.1} parent=1 // pred_check
      _
    $region19: #{tpu_custom_call.1} parent=1 // pred_check_branch
      %55 = sbr.rel (0) target = $region21
    $region20: #{tpu_custom_call.1} parent=1 // pred_region
      _
    $region21: #{tpu_custom_call.1} parent=1 // pred_fallthru
      _
    // Predicated region
    $region22: #{tpu_custom_call.1} parent=1 // pred_check
      _
    $region23: #{tpu_custom_call.1} parent=1 // pred_check_branch
      %57 = sbr.rel (0) target = $region25
    $region24: #{tpu_custom_call.1} parent=1 // pred_region
      %s59 = ssub.s32 2048, 2048
      %60 = vsyncadd [#allocation11], %s59
      %s61 = sshll.u32 [#allocation10], 4
      %s62 = int_to_ptr.vmem [resolvable:$true] %s61
      %67 = dma.hbm_to_vmem [thread:$0]  %s5, 2048, %s62, [#allocation11], 128, 128, 8
    $region25: #{tpu_custom_call.1} parent=1 // pred_fallthru
      _
    // Predicated region
    $region26: #{tpu_custom_call.1} parent=1 // pred_check
      _
    $region27: #{tpu_custom_call.1} parent=1 // pred_check_branch
      %69 = sbr.rel (0) target = $region29
    $region28: #{tpu_custom_call.1} parent=1 // pred_region
      _
    $region29: #{tpu_custom_call.1} parent=1 // pred_fallthru
      _
    // Predicated region
    $region30: #{tpu_custom_call.1} parent=1 // pred_check
      _
    $region31: #{tpu_custom_call.1} parent=1 // pred_check_branch
      %71 = sbr.rel (0) target = $region33
    $region32: #{tpu_custom_call.1} parent=1 // pred_region
      %72 = dma.done [#allocation5], 4096
    $region33: #{tpu_custom_call.1} parent=1 // pred_fallthru
      _
    // Predicated region
    $region34: #{tpu_custom_call.1} parent=1 // pred_check
      _
    $region35: #{tpu_custom_call.1} parent=1 // pred_check_branch
      %74 = sbr.rel (0) target = $region37
    $region36: #{tpu_custom_call.1} parent=1 // pred_region
      %75 = dma.done [#allocation8], 8192
    $region37: #{tpu_custom_call.1} parent=1 // pred_fallthru
      _
    // Predicated region
    $region38: #{tpu_custom_call.1} parent=1 // pred_check
      _
    $region39: #{tpu_custom_call.1} parent=1 // pred_check_branch
      %77 = sbr.rel (0) target = $region41
    $region40: #{tpu_custom_call.1} parent=1 // pred_region
      %78 = dma.done [#allocation8], 2048
    $region41: #{tpu_custom_call.1} parent=1 // pred_fallthru
      _
    // Predicated region
    $region42: #{tpu_custom_call.1} parent=1 // pred_check
      _
    $region43: #{tpu_custom_call.1} parent=1 // pred_check_branch
      %80 = sbr.rel (0) target = $region45
    $region44: #{tpu_custom_call.1} parent=1 // pred_region
      %81 = dma.done [#allocation11], 2048
    $region45: #{tpu_custom_call.1} parent=1 // pred_fallthru
      _
    %p82 = scmp.eq.s32.totalorder 0, 0
    // Predicated region
    $region46: #{tpu_custom_call.1} parent=1 // pred_check
      %p83 = pneg %p82
    $region47: #{tpu_custom_call.1} parent=1 // pred_check_branch
      %85 = sbr.rel (%p83) target = $region49
    $region48: #{tpu_custom_call.1} parent=1 // pred_region
      %86 = vst [vmem:[#allocation2] sm:$0xff] 0.0
      %87 = vst [vmem:[#allocation3] sm:$0xff] 0.0
    $region49: #{tpu_custom_call.1} parent=1 // pred_fallthru
      _
    %v88 = vld [vmem:[#allocation2] sm:$0xff]
    %v89 = vld [vmem:[#allocation3] sm:$0xff]
    %v90 = vld [vmem:[#allocation4] sm:$0xff]
    %v91 = vld [vmem:[#allocation4 + $0x8] sm:$0xff]
    %v92 = vld [vmem:[#allocation4 + $0x10] sm:$0xff]
    %v93 = vld [vmem:[#allocation4 + $0x18] sm:$0xff]
    %v94 = vld [vmem:[#allocation7] sm:$0xff]
    %v95 = vld [vmem:[#allocation7 + $0x8] sm:$0xff]
    %v96 = vld [vmem:[#allocation7 + $0x10] sm:$0xff]
    %v97 = vld [vmem:[#allocation7 + $0x18] sm:$0xff]
    %v98 = vld [vmem:[#allocation7 + $0x20] sm:$0xff]
    %v99 = vld [vmem:[#allocation7 + $0x28] sm:$0xff]
    %v100 = vld [vmem:[#allocation7 + $0x30] sm:$0xff]
    %v101 = vld [vmem:[#allocation7 + $0x38] sm:$0xff]
    %v102 = vld [vmem:[#allocation7 + $0x40] sm:$0xff]
    %v103 = vld [vmem:[#allocation7 + $0x48] sm:$0xff]
    %v104 = vld [vmem:[#allocation7 + $0x50] sm:$0xff]
    %v105 = vld [vmem:[#allocation7 + $0x58] sm:$0xff]
    %v106 = vld [vmem:[#allocation7 + $0x60] sm:$0xff]
    %v107 = vld [vmem:[#allocation7 + $0x68] sm:$0xff]
    %v108 = vld [vmem:[#allocation7 + $0x70] sm:$0xff]
    %v109 = vld [vmem:[#allocation7 + $0x78] sm:$0xff]
    %v110 = vld [vmem:[#allocation7 + $0x80] sm:$0xff]
    %v111 = vld [vmem:[#allocation7 + $0x88] sm:$0xff]
    %v112 = vld [vmem:[#allocation7 + $0x90] sm:$0xff]
    %v113 = vld [vmem:[#allocation7 + $0x98] sm:$0xff]
    %v114 = vld [vmem:[#allocation7 + $0xa0] sm:$0xff]
    %v115 = vld [vmem:[#allocation7 + $0xa8] sm:$0xff]
    %v116 = vld [vmem:[#allocation7 + $0xb0] sm:$0xff]
    %v117 = vld [vmem:[#allocation7 + $0xb8] sm:$0xff]
    %v118 = vld [vmem:[#allocation7 + $0xc0] sm:$0xff]
    %v119 = vld [vmem:[#allocation7 + $0xc8] sm:$0xff]
    %v120 = vld [vmem:[#allocation7 + $0xd0] sm:$0xff]
    %v121 = vld [vmem:[#allocation7 + $0xd8] sm:$0xff]
    %v122 = vld [vmem:[#allocation7 + $0xe0] sm:$0xff]
    %v123 = vld [vmem:[#allocation7 + $0xe8] sm:$0xff]
    %v124 = vld [vmem:[#allocation7 + $0xf0] sm:$0xff]
    %v125 = vld [vmem:[#allocation7 + $0xf8] sm:$0xff]
    %v126 = vld [vmem:[#allocation7 + $0x100] sm:$0xff]
    %v127 = vld [vmem:[#allocation7 + $0x108] sm:$0xff]
    %v128 = vld [vmem:[#allocation7 + $0x110] sm:$0xff]
    %v129 = vld [vmem:[#allocation7 + $0x118] sm:$0xff]
    %v130 = vld [vmem:[#allocation7 + $0x120] sm:$0xff]
    %v131 = vld [vmem:[#allocation7 + $0x128] sm:$0xff]
    %v132 = vld [vmem:[#allocation7 + $0x130] sm:$0xff]
    %v133 = vld [vmem:[#allocation7 + $0x138] sm:$0xff]
    %v134 = vld [vmem:[#allocation7 + $0x140] sm:$0xff]
    %v135 = vld [vmem:[#allocation7 + $0x148] sm:$0xff]
    %v136 = vld [vmem:[#allocation7 + $0x150] sm:$0xff]
    %v137 = vld [vmem:[#allocation7 + $0x158] sm:$0xff]
    %v138 = vld [vmem:[#allocation7 + $0x160] sm:$0xff]
    %v139 = vld [vmem:[#allocation7 + $0x168] sm:$0xff]
    %v140 = vld [vmem:[#allocation7 + $0x170] sm:$0xff]
    %v141 = vld [vmem:[#allocation7 + $0x178] sm:$0xff]
    %v142 = vld [vmem:[#allocation7 + $0x180] sm:$0xff]
    %v143 = vld [vmem:[#allocation7 + $0x188] sm:$0xff]
    %v144 = vld [vmem:[#allocation7 + $0x190] sm:$0xff]
    %v145 = vld [vmem:[#allocation7 + $0x198] sm:$0xff]
    %v146 = vld [vmem:[#allocation7 + $0x1a0] sm:$0xff]
    %v147 = vld [vmem:[#allocation7 + $0x1a8] sm:$0xff]
    %v148 = vld [vmem:[#allocation7 + $0x1b0] sm:$0xff]
    %v149 = vld [vmem:[#allocation7 + $0x1b8] sm:$0xff]
    %v150 = vld [vmem:[#allocation7 + $0x1c0] sm:$0xff]
    %v151 = vld [vmem:[#allocation7 + $0x1c8] sm:$0xff]
    %v152 = vld [vmem:[#allocation7 + $0x1d0] sm:$0xff]
    %v153 = vld [vmem:[#allocation7 + $0x1d8] sm:$0xff]
    %v154 = vld [vmem:[#allocation7 + $0x1e0] sm:$0xff]
    %v155 = vld [vmem:[#allocation7 + $0x1e8] sm:$0xff]
    %v156 = vld [vmem:[#allocation7 + $0x1f0] sm:$0xff]
    %v157 = vld [vmem:[#allocation7 + $0x1f8] sm:$0xff]
    %158 = vmatprep.subr.mxu0 %v95
    %159 = vmatpush1.msra.mxu0 %v94
    %160 = vmatprep.subr.mxu0 %v99
    %161 = vmatpush1.msra.mxu0 %v98
    %162 = vmatprep.subr.mxu0 %v103
    %163 = vmatpush1.msra.mxu0 %v102
    %164 = vmatprep.subr.mxu0 %v107
    %165 = vmatpush1.msra.mxu0 %v106
    %166 = vmatprep.subr.mxu0 %v111
    %167 = vmatpush1.msra.mxu0 %v110
    %168 = vmatprep.subr.mxu0 %v115
    %169 = vmatpush1.msra.mxu0 %v114
    %170 = vmatprep.subr.mxu0 %v119
    %171 = vmatpush1.msra.mxu0 %v118
    %172 = vmatprep.subr.mxu0 %v123
    %173 = vmatpush1.msra.mxu0 %v122
    %174 = vmatprep.subr.mxu0 %v127
    %175 = vmatpush1.msra.mxu0 %v126
    %176 = vmatprep.subr.mxu0 %v131
    %177 = vmatpush1.msra.mxu0 %v130
    %178 = vmatprep.subr.mxu0 %v135
    %179 = vmatpush1.msra.mxu0 %v134
    %180 = vmatprep.subr.mxu0 %v139
    %181 = vmatpush1.msra.mxu0 %v138
    %182 = vmatprep.subr.mxu0 %v143
    %183 = vmatpush1.msra.mxu0 %v142
    %184 = vmatprep.subr.mxu0 %v147
    %185 = vmatpush1.msra.mxu0 %v146
    %186 = vmatprep.subr.mxu0 %v151
    %187 = vmatpush1.msra.mxu0 %v150
    %188 = vmatprep.subr.mxu0 %v155
    %189 = vmatpush1.msra.mxu0 %v154
    %190 = vmatprep.subr.mxu0 0.0
    %191 = vmatpush1.msra.mxu0 0.0
    %192 = vmatprep.subr.mxu0 0.0
    %193 = vmatpush1.msra.mxu0 0.0
    %194 = vmatprep.subr.mxu0 0.0
    %195 = vmatpush1.msra.mxu0 0.0
    %196 = vmatprep.subr.mxu0 0.0
    %197 = vmatpush1.msra.mxu0 0.0
    %198 = vmatprep.subr.mxu0 0.0
    %199 = vmatpush1.msra.mxu0 0.0
    %200 = vmatprep.subr.mxu0 0.0
    %201 = vmatpush1.msra.mxu0 0.0
    %202 = vmatprep.subr.mxu0 0.0
    %203 = vmatpush1.msra.mxu0 0.0
    %204 = vmatprep.subr.mxu0 0.0
    %205 = vmatpush1.msra.mxu0 0.0
    %206 = vmatprep.subr.mxu0 0.0
    %207 = vmatpush1.msra.mxu0 0.0
    %208 = vmatprep.subr.mxu0 0.0
    %209 = vmatpush1.msra.mxu0 0.0
    %210 = vmatprep.subr.mxu0 0.0
    %211 = vmatpush1.msra.mxu0 0.0
    %212 = vmatprep.subr.mxu0 0.0
    %213 = vmatpush1.msra.mxu0 0.0
    %214 = vmatprep.subr.mxu0 0.0
    %215 = vmatpush1.msra.mxu0 0.0
    %216 = vmatprep.subr.mxu0 0.0
    %217 = vmatpush1.msra.mxu0 0.0
    %218 = vmatprep.subr.mxu0 0.0
    %219 = vmatpush1.msra.mxu0 0.0
    %220 = vmatprep.subr.mxu0 0.0
    %221 = vmatpush1.msra.mxu0 0.0
    %222 = vmatprep.mubr.f32.mxu0 0.0
    %223 = vmatmul.mubr.f32.gmra.mrb[0].mxu0 %v88
    %v224 = vpop.f32.mrb[0].mxu0
    %v225 = vadd.f32 0.0, %v224
    %v226 = vpop.f32.mrb[0].mxu0
    %v227 = vadd.f32 0.0, %v226
    %228 = vdwg.mxu0
    %229 = vmatprep.subr.mxu0 %v97
    %230 = vmatpush1.msra.mxu0 %v96
    %231 = vmatprep.subr.mxu0 %v101
    %232 = vmatpush1.msra.mxu0 %v100
    %233 = vmatprep.subr.mxu0 %v105
    %234 = vmatpush1.msra.mxu0 %v104
    %235 = vmatprep.subr.mxu0 %v109
    %236 = vmatpush1.msra.mxu0 %v108
    %237 = vmatprep.subr.mxu0 %v113
    %238 = vmatpush1.msra.mxu0 %v112
    %239 = vmatprep.subr.mxu0 %v117
    %240 = vmatpush1.msra.mxu0 %v116
    %241 = vmatprep.subr.mxu0 %v121
    %242 = vmatpush1.msra.mxu0 %v120
    %243 = vmatprep.subr.mxu0 %v125
    %244 = vmatpush1.msra.mxu0 %v124
    %245 = vmatprep.subr.mxu0 %v129
    %246 = vmatpush1.msra.mxu0 %v128
    %247 = vmatprep.subr.mxu0 %v133
    %248 = vmatpush1.msra.mxu0 %v132
    %249 = vmatprep.subr.mxu0 %v137
    %250 = vmatpush1.msra.mxu0 %v136
    %251 = vmatprep.subr.mxu0 %v141
    %252 = vmatpush1.msra.mxu0 %v140
    %253 = vmatprep.subr.mxu0 %v145
    %254 = vmatpush1.msra.mxu0 %v144
    %255 = vmatprep.subr.mxu0 %v149
    %256 = vmatpush1.msra.mxu0 %v148
    %257 = vmatprep.subr.mxu0 %v153
    %258 = vmatpush1.msra.mxu0 %v152
    %259 = vmatprep.subr.mxu0 %v157
    %260 = vmatpush1.msra.mxu0 %v156
    %261 = vmatprep.subr.mxu0 0.0
    %262 = vmatpush1.msra.mxu0 0.0
    %263 = vmatprep.subr.mxu0 0.0
    %264 = vmatpush1.msra.mxu0 0.0
    %265 = vmatprep.subr.mxu0 0.0
    %266 = vmatpush1.msra.mxu0 0.0
    %267 = vmatprep.subr.mxu0 0.0
    %268 = vmatpush1.msra.mxu0 0.0
    %269 = vmatprep.subr.mxu0 0.0
    %270 = vmatpush1.msra.mxu0 0.0
    %271 = vmatprep.subr.mxu0 0.0
    %272 = vmatpush1.msra.mxu0 0.0
    %273 = vmatprep.subr.mxu0 0.0
    %274 = vmatpush1.msra.mxu0 0.0
    %275 = vmatprep.subr.mxu0 0.0
    %276 = vmatpush1.msra.mxu0 0.0
    %277 = vmatprep.subr.mxu0 0.0
    %278 = vmatpush1.msra.mxu0 0.0
    %279 = vmatprep.subr.mxu0 0.0
    %280 = vmatpush1.msra.mxu0 0.0
    %281 = vmatprep.subr.mxu0 0.0
    %282 = vmatpush1.msra.mxu0 0.0
    %283 = vmatprep.subr.mxu0 0.0
    %284 = vmatpush1.msra.mxu0 0.0
    %285 = vmatprep.subr.mxu0 0.0
    %286 = vmatpush1.msra.mxu0 0.0
    %287 = vmatprep.subr.mxu0 0.0
    %288 = vmatpush1.msra.mxu0 0.0
    %289 = vmatprep.subr.mxu0 0.0
    %290 = vmatpush1.msra.mxu0 0.0
    %291 = vmatprep.subr.mxu0 0.0
    %292 = vmatpush1.msra.mxu0 0.0
    %293 = vmatprep.mubr.f32.mxu0 0.0
    %294 = vmatmul.mubr.f32.gmra.mrb[0].mxu0 %v88
    %v295 = vpop.f32.mrb[0].mxu0
    %v296 = vadd.f32 0.0, %v295
    %v297 = vpop.f32.mrb[0].mxu0
    %v298 = vadd.f32 0.0, %v297
    %299 = vdwg.mxu0
    %v300 = vadd.f32 %v90, %v225
    %v301 = vadd.f32 %v91, %v227
    %v302 = vadd.f32 %v92, %v296
    %v303 = vadd.f32 %v93, %v298
    %v304 = vxor.u32 %v300, 2147483648
    %v305 = vmul.f32 %v304, 1.442695
    %v306 = vpow.pop %v305
    %v307 = vadd.f32 %v306, 1.0
    %v308 = vrcp.pop %v307
    %v309 = vmul.f32 1.0, %v308
    %v310 = vxor.u32 %v301, 2147483648
    %v311 = vmul.f32 %v310, 1.442695
    %v312 = vpow.pop %v311
    %v313 = vadd.f32 %v312, 1.0
    %v314 = vrcp.pop %v313
    %v315 = vmul.f32 1.0, %v314
    %v316 = vtanh.pop %v302
    %v317 = vxor.u32 %v303, 2147483648
    %v318 = vmul.f32 %v317, 1.442695
    %v319 = vpow.pop %v318
    %v320 = vadd.f32 %v319, 1.0
    %v321 = vrcp.pop %v320
    %v322 = vmul.f32 1.0, %v321
    %v323 = vmul.f32 %v315, %v89
    %v324 = vmul.f32 %v309, %v316
    %v325 = vadd.f32 %v323, %v324
    %v326 = vtanh.pop %v325
    %v327 = vmul.f32 %v322, %v326
    %v328 = vld [vmem:[%s1] sm:$0xff]
    %v329 = vmul.f32 %v328, 0.33333334
    %331 = vset.pattern.permute.xlu0 0
    %332 = vperm.xlu0 %331, %v329
    %v333 = vpop.permute.xlu0 %332
    %v335 = vld [vmem:[#allocation9] sm:$0xff]
    %v336 = vld [vmem:[#allocation9 + $0x8] sm:$0xff]
    %v337 = vld [vmem:[#allocation9 + $0x10] sm:$0xff]
    %v338 = vld [vmem:[#allocation9 + $0x18] sm:$0xff]
    %v339 = vld [vmem:[#allocation9 + $0x20] sm:$0xff]
    %v340 = vld [vmem:[#allocation9 + $0x28] sm:$0xff]
    %v341 = vld [vmem:[#allocation9 + $0x30] sm:$0xff]
    %v342 = vld [vmem:[#allocation9 + $0x38] sm:$0xff]
    %v343 = vld [vmem:[#allocation9 + $0x40] sm:$0xff]
    %v344 = vld [vmem:[#allocation9 + $0x48] sm:$0xff]
    %v345 = vld [vmem:[#allocation9 + $0x50] sm:$0xff]
    %v346 = vld [vmem:[#allocation9 + $0x58] sm:$0xff]
    %v347 = vld [vmem:[#allocation9 + $0x60] sm:$0xff]
    %v348 = vld [vmem:[#allocation9 + $0x68] sm:$0xff]
    %v349 = vld [vmem:[#allocation9 + $0x70] sm:$0xff]
    %v350 = vld [vmem:[#allocation9 + $0x78] sm:$0xff]
    %v351 = vld [vmem:[%s4] sm:$0x1]
    %v353 = vlaneseq
    %v354 = vshrl.u32 %v353, 7
    %v355 = vsub.s32 0, %v354
    %v356 = vrot.slane %v351, %v355
    %358 = vmatprep.subr.mxu0 0.0
    %359 = vmatpush1.msra.mxu0 %v335
    %360 = vmatprep.subr.mxu0 0.0
    %361 = vmatpush1.msra.mxu0 %v336
    %362 = vmatprep.subr.mxu0 0.0
    %363 = vmatpush1.msra.mxu0 %v337
    %364 = vmatprep.subr.mxu0 0.0
    %365 = vmatpush1.msra.mxu0 %v338
    %366 = vmatprep.subr.mxu0 0.0
    %367 = vmatpush1.msra.mxu0 %v339
    %368 = vmatprep.subr.mxu0 0.0
    %369 = vmatpush1.msra.mxu0 %v340
    %370 = vmatprep.subr.mxu0 0.0
    %371 = vmatpush1.msra.mxu0 %v341
    %372 = vmatprep.subr.mxu0 0.0
    %373 = vmatpush1.msra.mxu0 %v342
    %374 = vmatprep.subr.mxu0 0.0
    %375 = vmatpush1.msra.mxu0 %v343
    %376 = vmatprep.subr.mxu0 0.0
    %377 = vmatpush1.msra.mxu0 %v344
    %378 = vmatprep.subr.mxu0 0.0
    %379 = vmatpush1.msra.mxu0 %v345
    %380 = vmatprep.subr.mxu0 0.0
    %381 = vmatpush1.msra.mxu0 %v346
    %382 = vmatprep.subr.mxu0 0.0
    %383 = vmatpush1.msra.mxu0 %v347
    %384 = vmatprep.subr.mxu0 0.0
    %385 = vmatpush1.msra.mxu0 %v348
    %386 = vmatprep.subr.mxu0 0.0
    %387 = vmatpush1.msra.mxu0 %v349
    %388 = vmatprep.subr.mxu0 0.0
    %389 = vmatpush1.msra.mxu0 %v350
    %390 = vmatprep.subr.mxu0 0.0
    %391 = vmatpush1.msra.mxu0 0.0
    %392 = vmatprep.subr.mxu0 0.0
    %393 = vmatpush1.msra.mxu0 0.0
    %394 = vmatprep.subr.mxu0 0.0
    %395 = vmatpush1.msra.mxu0 0.0
    %396 = vmatprep.subr.mxu0 0.0
    %397 = vmatpush1.msra.mxu0 0.0
    %398 = vmatprep.subr.mxu0 0.0
    %399 = vmatpush1.msra.mxu0 0.0
    %400 = vmatprep.subr.mxu0 0.0
    %401 = vmatpush1.msra.mxu0 0.0
    %402 = vmatprep.subr.mxu0 0.0
    %403 = vmatpush1.msra.mxu0 0.0
    %404 = vmatprep.subr.mxu0 0.0
    %405 = vmatpush1.msra.mxu0 0.0
    %406 = vmatprep.subr.mxu0 0.0
    %407 = vmatpush1.msra.mxu0 0.0
    %408 = vmatprep.subr.mxu0 0.0
    %409 = vmatpush1.msra.mxu0 0.0
    %410 = vmatprep.subr.mxu0 0.0
    %411 = vmatpush1.msra.mxu0 0.0
    %412 = vmatprep.subr.mxu0 0.0
    %413 = vmatpush1.msra.mxu0 0.0
    %414 = vmatprep.subr.mxu0 0.0
    %415 = vmatpush1.msra.mxu0 0.0
    %416 = vmatprep.subr.mxu0 0.0
    %417 = vmatpush1.msra.mxu0 0.0
    %418 = vmatprep.subr.mxu0 0.0
    %419 = vmatpush1.msra.mxu0 0.0
    %420 = vmatprep.subr.mxu0 0.0
    %421 = vmatpush1.msra.mxu0 0.0
    %422 = vmatprep.mubr.f32.mxu0 0.0
    %423 = vmatmul.mubr.f32.gmra.mrb[0].mxu0 %v327
    %v424 = vpop.f32.mrb[0].mxu0
    %v425 = vadd.f32 %v356, %v424
    %v426 = vpop.f32.mrb[0].mxu0
    %427 = vdwg.mxu0
    %v428 = vtanh.pop %v425
    %v429 = vld [vmem:[#allocation10] sm:$0xff]
    %v430 = vld [vmem:[#allocation10 + $0x8] sm:$0xff]
    %v431 = vld [vmem:[#allocation10 + $0x10] sm:$0xff]
    %v432 = vld [vmem:[#allocation10 + $0x18] sm:$0xff]
    %v433 = vld [vmem:[#allocation10 + $0x20] sm:$0xff]
    %v434 = vld [vmem:[#allocation10 + $0x28] sm:$0xff]
    %v435 = vld [vmem:[#allocation10 + $0x30] sm:$0xff]
    %v436 = vld [vmem:[#allocation10 + $0x38] sm:$0xff]
    %v437 = vld [vmem:[#allocation10 + $0x40] sm:$0xff]
    %v438 = vld [vmem:[#allocation10 + $0x48] sm:$0xff]
    %v439 = vld [vmem:[#allocation10 + $0x50] sm:$0xff]
    %v440 = vld [vmem:[#allocation10 + $0x58] sm:$0xff]
    %v441 = vld [vmem:[#allocation10 + $0x60] sm:$0xff]
    %v442 = vld [vmem:[#allocation10 + $0x68] sm:$0xff]
    %v443 = vld [vmem:[#allocation10 + $0x70] sm:$0xff]
    %v444 = vld [vmem:[#allocation10 + $0x78] sm:$0xff]
    %v445 = vld [vmem:[%s6] sm:$0x1]
    %v447 = vlaneseq
    %v448 = vshrl.u32 %v447, 7
    %v449 = vsub.s32 0, %v448
    %v450 = vrot.slane %v445, %v449
    %452 = vmatprep.subr.mxu0 0.0
    %453 = vmatpush1.msra.mxu0 %v429
    %454 = vmatprep.subr.mxu0 0.0
    %455 = vmatpush1.msra.mxu0 %v430
    %456 = vmatprep.subr.mxu0 0.0
    %457 = vmatpush1.msra.mxu0 %v431
    %458 = vmatprep.subr.mxu0 0.0
    %459 = vmatpush1.msra.mxu0 %v432
    %460 = vmatprep.subr.mxu0 0.0
    %461 = vmatpush1.msra.mxu0 %v433
    %462 = vmatprep.subr.mxu0 0.0
    %463 = vmatpush1.msra.mxu0 %v434
    %464 = vmatprep.subr.mxu0 0.0
    %465 = vmatpush1.msra.mxu0 %v435
    %466 = vmatprep.subr.mxu0 0.0
    %467 = vmatpush1.msra.mxu0 %v436
    %468 = vmatprep.subr.mxu0 0.0
    %469 = vmatpush1.msra.mxu0 %v437
    %470 = vmatprep.subr.mxu0 0.0
    %471 = vmatpush1.msra.mxu0 %v438
    %472 = vmatprep.subr.mxu0 0.0
    %473 = vmatpush1.msra.mxu0 %v439
    %474 = vmatprep.subr.mxu0 0.0
    %475 = vmatpush1.msra.mxu0 %v440
    %476 = vmatprep.subr.mxu0 0.0
    %477 = vmatpush1.msra.mxu0 %v441
    %478 = vmatprep.subr.mxu0 0.0
    %479 = vmatpush1.msra.mxu0 %v442
    %480 = vmatprep.subr.mxu0 0.0
    %481 = vmatpush1.msra.mxu0 %v443
    %482 = vmatprep.subr.mxu0 0.0
    %483 = vmatpush1.msra.mxu0 %v444
    %484 = vmatprep.subr.mxu0 0.0
    %485 = vmatpush1.msra.mxu0 0.0
    %486 = vmatprep.subr.mxu0 0.0
    %487 = vmatpush1.msra.mxu0 0.0
    %488 = vmatprep.subr.mxu0 0.0
    %489 = vmatpush1.msra.mxu0 0.0
    %490 = vmatprep.subr.mxu0 0.0
    %491 = vmatpush1.msra.mxu0 0.0
    %492 = vmatprep.subr.mxu0 0.0
    %493 = vmatpush1.msra.mxu0 0.0
    %494 = vmatprep.subr.mxu0 0.0
    %495 = vmatpush1.msra.mxu0 0.0
    %496 = vmatprep.subr.mxu0 0.0
    %497 = vmatpush1.msra.mxu0 0.0
    %498 = vmatprep.subr.mxu0 0.0
    %499 = vmatpush1.msra.mxu0 0.0
    %500 = vmatprep.subr.mxu0 0.0
    %501 = vmatpush1.msra.mxu0 0.0
    %502 = vmatprep.subr.mxu0 0.0
    %503 = vmatpush1.msra.mxu0 0.0
    %504 = vmatprep.subr.mxu0 0.0
    %505 = vmatpush1.msra.mxu0 0.0
    %506 = vmatprep.subr.mxu0 0.0
    %507 = vmatpush1.msra.mxu0 0.0
    %508 = vmatprep.subr.mxu0 0.0
    %509 = vmatpush1.msra.mxu0 0.0
    %510 = vmatprep.subr.mxu0 0.0
    %511 = vmatpush1.msra.mxu0 0.0
    %512 = vmatprep.subr.mxu0 0.0
    %513 = vmatpush1.msra.mxu0 0.0
    %514 = vmatprep.subr.mxu0 0.0
    %515 = vmatpush1.msra.mxu0 0.0
    %516 = vmatprep.mubr.f32.mxu0 0.0
    %517 = vmatmul.mubr.f32.gmra.mrb[0].mxu0 %v428
    %v518 = vpop.f32.mrb[0].mxu0
    %v519 = vadd.f32 %v450, %v518
    %v520 = vpop.f32.mrb[0].mxu0
    %521 = vdwg.mxu0
    %v522 = vmul.f32 %v333, %v519
    %v523 = vadd.f32 %v327, %v522
    %524 = vmatprep.subr.mxu0 0.0
    %525 = vmatpush1.msra.mxu0 %v335
    %526 = vmatprep.subr.mxu0 0.0
    %527 = vmatpush1.msra.mxu0 %v336
    %528 = vmatprep.subr.mxu0 0.0
    %529 = vmatpush1.msra.mxu0 %v337
    %530 = vmatprep.subr.mxu0 0.0
    %531 = vmatpush1.msra.mxu0 %v338
    %532 = vmatprep.subr.mxu0 0.0
    %533 = vmatpush1.msra.mxu0 %v339
    %534 = vmatprep.subr.mxu0 0.0
    %535 = vmatpush1.msra.mxu0 %v340
    %536 = vmatprep.subr.mxu0 0.0
    %537 = vmatpush1.msra.mxu0 %v341
    %538 = vmatprep.subr.mxu0 0.0
    %539 = vmatpush1.msra.mxu0 %v342
    %540 = vmatprep.subr.mxu0 0.0
    %541 = vmatpush1.msra.mxu0 %v343
    %542 = vmatprep.subr.mxu0 0.0
    %543 = vmatpush1.msra.mxu0 %v344
    %544 = vmatprep.subr.mxu0 0.0
    %545 = vmatpush1.msra.mxu0 %v345
    %546 = vmatprep.subr.mxu0 0.0
    %547 = vmatpush1.msra.mxu0 %v346
    %548 = vmatprep.subr.mxu0 0.0
    %549 = vmatpush1.msra.mxu0 %v347
    %550 = vmatprep.subr.mxu0 0.0
    %551 = vmatpush1.msra.mxu0 %v348
    %552 = vmatprep.subr.mxu0 0.0
    %553 = vmatpush1.msra.mxu0 %v349
    %554 = vmatprep.subr.mxu0 0.0
    %555 = vmatpush1.msra.mxu0 %v350
    %556 = vmatprep.subr.mxu0 0.0
    %557 = vmatpush1.msra.mxu0 0.0
    %558 = vmatprep.subr.mxu0 0.0
    %559 = vmatpush1.msra.mxu0 0.0
    %560 = vmatprep.subr.mxu0 0.0
    %561 = vmatpush1.msra.mxu0 0.0
    %562 = vmatprep.subr.mxu0 0.0
    %563 = vmatpush1.msra.mxu0 0.0
    %564 = vmatprep.subr.mxu0 0.0
    %565 = vmatpush1.msra.mxu0 0.0
    %566 = vmatprep.subr.mxu0 0.0
    %567 = vmatpush1.msra.mxu0 0.0
    %568 = vmatprep.subr.mxu0 0.0
    %569 = vmatpush1.msra.mxu0 0.0
    %570 = vmatprep.subr.mxu0 0.0
    %571 = vmatpush1.msra.mxu0 0.0
    %572 = vmatprep.subr.mxu0 0.0
    %573 = vmatpush1.msra.mxu0 0.0
    %574 = vmatprep.subr.mxu0 0.0
    %575 = vmatpush1.msra.mxu0 0.0
    %576 = vmatprep.subr.mxu0 0.0
    %577 = vmatpush1.msra.mxu0 0.0
    %578 = vmatprep.subr.mxu0 0.0
    %579 = vmatpush1.msra.mxu0 0.0
    %580 = vmatprep.subr.mxu0 0.0
    %581 = vmatpush1.msra.mxu0 0.0
    %582 = vmatprep.subr.mxu0 0.0
    %583 = vmatpush1.msra.mxu0 0.0
    %584 = vmatprep.subr.mxu0 0.0
    %585 = vmatpush1.msra.mxu0 0.0
    %586 = vmatprep.subr.mxu0 0.0
    %587 = vmatpush1.msra.mxu0 0.0
    %588 = vmatprep.mubr.f32.mxu0 0.0
    %589 = vmatmul.mubr.f32.gmra.mrb[0].mxu0 %v523
    %v590 = vpop.f32.mrb[0].mxu0
    %v591 = vadd.f32 %v356, %v590
    %v592 = vpop.f32.mrb[0].mxu0
    %593 = vdwg.mxu0
    %v594 = vtanh.pop %v591
    %595 = vmatprep.subr.mxu0 0.0
    %596 = vmatpush1.msra.mxu0 %v429
    %597 = vmatprep.subr.mxu0 0.0
    %598 = vmatpush1.msra.mxu0 %v430
    %599 = vmatprep.subr.mxu0 0.0
    %600 = vmatpush1.msra.mxu0 %v431
    %601 = vmatprep.subr.mxu0 0.0
    %602 = vmatpush1.msra.mxu0 %v432
    %603 = vmatprep.subr.mxu0 0.0
    %604 = vmatpush1.msra.mxu0 %v433
    %605 = vmatprep.subr.mxu0 0.0
    %606 = vmatpush1.msra.mxu0 %v434
    %607 = vmatprep.subr.mxu0 0.0
    %608 = vmatpush1.msra.mxu0 %v435
    %609 = vmatprep.subr.mxu0 0.0
    %610 = vmatpush1.msra.mxu0 %v436
    %611 = vmatprep.subr.mxu0 0.0
    %612 = vmatpush1.msra.mxu0 %v437
    %613 = vmatprep.subr.mxu0 0.0
    %614 = vmatpush1.msra.mxu0 %v438
    %615 = vmatprep.subr.mxu0 0.0
    %616 = vmatpush1.msra.mxu0 %v439
    %617 = vmatprep.subr.mxu0 0.0
    %618 = vmatpush1.msra.mxu0 %v440
    %619 = vmatprep.subr.mxu0 0.0
    %620 = vmatpush1.msra.mxu0 %v441
    %621 = vmatprep.subr.mxu0 0.0
    %622 = vmatpush1.msra.mxu0 %v442
    %623 = vmatprep.subr.mxu0 0.0
    %624 = vmatpush1.msra.mxu0 %v443
    %625 = vmatprep.subr.mxu0 0.0
    %626 = vmatpush1.msra.mxu0 %v444
    %627 = vmatprep.subr.mxu0 0.0
    %628 = vmatpush1.msra.mxu0 0.0
    %629 = vmatprep.subr.mxu0 0.0
    %630 = vmatpush1.msra.mxu0 0.0
    %631 = vmatprep.subr.mxu0 0.0
    %632 = vmatpush1.msra.mxu0 0.0
    %633 = vmatprep.subr.mxu0 0.0
    %634 = vmatpush1.msra.mxu0 0.0
    %635 = vmatprep.subr.mxu0 0.0
    %636 = vmatpush1.msra.mxu0 0.0
    %637 = vmatprep.subr.mxu0 0.0
    %638 = vmatpush1.msra.mxu0 0.0
    %639 = vmatprep.subr.mxu0 0.0
    %640 = vmatpush1.msra.mxu0 0.0
    %641 = vmatprep.subr.mxu0 0.0
    %642 = vmatpush1.msra.mxu0 0.0
    %643 = vmatprep.subr.mxu0 0.0
    %644 = vmatpush1.msra.mxu0 0.0
    %645 = vmatprep.subr.mxu0 0.0
    %646 = vmatpush1.msra.mxu0 0.0
    %647 = vmatprep.subr.mxu0 0.0
    %648 = vmatpush1.msra.mxu0 0.0
    %649 = vmatprep.subr.mxu0 0.0
    %650 = vmatpush1.msra.mxu0 0.0
    %651 = vmatprep.subr.mxu0 0.0
    %652 = vmatpush1.msra.mxu0 0.0
    %653 = vmatprep.subr.mxu0 0.0
    %654 = vmatpush1.msra.mxu0 0.0
    %655 = vmatprep.subr.mxu0 0.0
    %656 = vmatpush1.msra.mxu0 0.0
    %657 = vmatprep.subr.mxu0 0.0
    %658 = vmatpush1.msra.mxu0 0.0
    %659 = vmatprep.mubr.f32.mxu0 0.0
    %660 = vmatmul.mubr.f32.gmra.mrb[0].mxu0 %v594
    %v661 = vpop.f32.mrb[0].mxu0
    %v662 = vadd.f32 %v450, %v661
    %v663 = vpop.f32.mrb[0].mxu0
    %664 = vdwg.mxu0
    %v665 = vmul.f32 %v333, %v662
    %v666 = vadd.f32 %v523, %v665
    %667 = vmatprep.subr.mxu0 0.0
    %668 = vmatpush1.msra.mxu0 %v335
    %669 = vmatprep.subr.mxu0 0.0
    %670 = vmatpush1.msra.mxu0 %v336
    %671 = vmatprep.subr.mxu0 0.0
    %672 = vmatpush1.msra.mxu0 %v337
    %673 = vmatprep.subr.mxu0 0.0
    %674 = vmatpush1.msra.mxu0 %v338
    %675 = vmatprep.subr.mxu0 0.0
    %676 = vmatpush1.msra.mxu0 %v339
    %677 = vmatprep.subr.mxu0 0.0
    %678 = vmatpush1.msra.mxu0 %v340
    %679 = vmatprep.subr.mxu0 0.0
    %680 = vmatpush1.msra.mxu0 %v341
    %681 = vmatprep.subr.mxu0 0.0
    %682 = vmatpush1.msra.mxu0 %v342
    %683 = vmatprep.subr.mxu0 0.0
    %684 = vmatpush1.msra.mxu0 %v343
    %685 = vmatprep.subr.mxu0 0.0
    %686 = vmatpush1.msra.mxu0 %v344
    %687 = vmatprep.subr.mxu0 0.0
    %688 = vmatpush1.msra.mxu0 %v345
    %689 = vmatprep.subr.mxu0 0.0
    %690 = vmatpush1.msra.mxu0 %v346
    %691 = vmatprep.subr.mxu0 0.0
    %692 = vmatpush1.msra.mxu0 %v347
    %693 = vmatprep.subr.mxu0 0.0
    %694 = vmatpush1.msra.mxu0 %v348
    %695 = vmatprep.subr.mxu0 0.0
    %696 = vmatpush1.msra.mxu0 %v349
    %697 = vmatprep.subr.mxu0 0.0
    %698 = vmatpush1.msra.mxu0 %v350
    %699 = vmatprep.subr.mxu0 0.0
    %700 = vmatpush1.msra.mxu0 0.0
    %701 = vmatprep.subr.mxu0 0.0
    %702 = vmatpush1.msra.mxu0 0.0
    %703 = vmatprep.subr.mxu0 0.0
    %704 = vmatpush1.msra.mxu0 0.0
    %705 = vmatprep.subr.mxu0 0.0
    %706 = vmatpush1.msra.mxu0 0.0
    %707 = vmatprep.subr.mxu0 0.0
    %708 = vmatpush1.msra.mxu0 0.0
    %709 = vmatprep.subr.mxu0 0.0
    %710 = vmatpush1.msra.mxu0 0.0
    %711 = vmatprep.subr.mxu0 0.0
    %712 = vmatpush1.msra.mxu0 0.0
    %713 = vmatprep.subr.mxu0 0.0
    %714 = vmatpush1.msra.mxu0 0.0
    %715 = vmatprep.subr.mxu0 0.0
    %716 = vmatpush1.msra.mxu0 0.0
    %717 = vmatprep.subr.mxu0 0.0
    %718 = vmatpush1.msra.mxu0 0.0
    %719 = vmatprep.subr.mxu0 0.0
    %720 = vmatpush1.msra.mxu0 0.0
    %721 = vmatprep.subr.mxu0 0.0
    %722 = vmatpush1.msra.mxu0 0.0
    %723 = vmatprep.subr.mxu0 0.0
    %724 = vmatpush1.msra.mxu0 0.0
    %725 = vmatprep.subr.mxu0 0.0
    %726 = vmatpush1.msra.mxu0 0.0
    %727 = vmatprep.subr.mxu0 0.0
    %728 = vmatpush1.msra.mxu0 0.0
    %729 = vmatprep.subr.mxu0 0.0
    %730 = vmatpush1.msra.mxu0 0.0
    %731 = vmatprep.mubr.f32.mxu0 0.0
    %732 = vmatmul.mubr.f32.gmra.mrb[0].mxu0 %v666
    %v733 = vpop.f32.mrb[0].mxu0
    %v734 = vadd.f32 %v356, %v733
    %v735 = vpop.f32.mrb[0].mxu0
    %736 = vdwg.mxu0
    %v737 = vtanh.pop %v734
    %738 = vmatprep.subr.mxu0 0.0
    %739 = vmatpush1.msra.mxu0 %v429
    %740 = vmatprep.subr.mxu0 0.0
    %741 = vmatpush1.msra.mxu0 %v430
    %742 = vmatprep.subr.mxu0 0.0
    %743 = vmatpush1.msra.mxu0 %v431
    %744 = vmatprep.subr.mxu0 0.0
    %745 = vmatpush1.msra.mxu0 %v432
    %746 = vmatprep.subr.mxu0 0.0
    %747 = vmatpush1.msra.mxu0 %v433
    %748 = vmatprep.subr.mxu0 0.0
    %749 = vmatpush1.msra.mxu0 %v434
    %750 = vmatprep.subr.mxu0 0.0
    %751 = vmatpush1.msra.mxu0 %v435
    %752 = vmatprep.subr.mxu0 0.0
    %753 = vmatpush1.msra.mxu0 %v436
    %754 = vmatprep.subr.mxu0 0.0
    %755 = vmatpush1.msra.mxu0 %v437
    %756 = vmatprep.subr.mxu0 0.0
    %757 = vmatpush1.msra.mxu0 %v438
    %758 = vmatprep.subr.mxu0 0.0
    %759 = vmatpush1.msra.mxu0 %v439
    %760 = vmatprep.subr.mxu0 0.0
    %761 = vmatpush1.msra.mxu0 %v440
    %762 = vmatprep.subr.mxu0 0.0
    %763 = vmatpush1.msra.mxu0 %v441
    %764 = vmatprep.subr.mxu0 0.0
    %765 = vmatpush1.msra.mxu0 %v442
    %766 = vmatprep.subr.mxu0 0.0
    %767 = vmatpush1.msra.mxu0 %v443
    %768 = vmatprep.subr.mxu0 0.0
    %769 = vmatpush1.msra.mxu0 %v444
    %770 = vmatprep.subr.mxu0 0.0
    %771 = vmatpush1.msra.mxu0 0.0
    %772 = vmatprep.subr.mxu0 0.0
    %773 = vmatpush1.msra.mxu0 0.0
    %774 = vmatprep.subr.mxu0 0.0
    %775 = vmatpush1.msra.mxu0 0.0
    %776 = vmatprep.subr.mxu0 0.0
    %777 = vmatpush1.msra.mxu0 0.0
    %778 = vmatprep.subr.mxu0 0.0
    %779 = vmatpush1.msra.mxu0 0.0
    %780 = vmatprep.subr.mxu0 0.0
    %781 = vmatpush1.msra.mxu0 0.0
    %782 = vmatprep.subr.mxu0 0.0
    %783 = vmatpush1.msra.mxu0 0.0
    %784 = vmatprep.subr.mxu0 0.0
    %785 = vmatpush1.msra.mxu0 0.0
    %786 = vmatprep.subr.mxu0 0.0
    %787 = vmatpush1.msra.mxu0 0.0
    %788 = vmatprep.subr.mxu0 0.0
    %789 = vmatpush1.msra.mxu0 0.0
    %790 = vmatprep.subr.mxu0 0.0
    %791 = vmatpush1.msra.mxu0 0.0
    %792 = vmatprep.subr.mxu0 0.0
    %793 = vmatpush1.msra.mxu0 0.0
    %794 = vmatprep.subr.mxu0 0.0
    %795 = vmatpush1.msra.mxu0 0.0
    %796 = vmatprep.subr.mxu0 0.0
    %797 = vmatpush1.msra.mxu0 0.0
    %798 = vmatprep.subr.mxu0 0.0
    %799 = vmatpush1.msra.mxu0 0.0
    %800 = vmatprep.subr.mxu0 0.0
    %801 = vmatpush1.msra.mxu0 0.0
    %802 = vmatprep.mubr.f32.mxu0 0.0
    %803 = vmatmul.mubr.f32.gmra.mrb[0].mxu0 %v737
    %v804 = vpop.f32.mrb[0].mxu0
    %v805 = vadd.f32 %v450, %v804
    %v806 = vpop.f32.mrb[0].mxu0
    %807 = vdwg.mxu0
    %v808 = vmul.f32 %v333, %v805
    %v809 = vadd.f32 %v666, %v808
    %810 = vst [vmem:[#allocation12] sm:$0xff] %v809
    %s811 = scalar_lea.vmem [#allocation4], 32
    %v812 = vld [vmem:[%s811] sm:$0xff]
    %v813 = vld [vmem:[%s811 + $0x8] sm:$0xff]
    %v814 = vld [vmem:[%s811 + $0x10] sm:$0xff]
    %v815 = vld [vmem:[%s811 + $0x18] sm:$0xff]
    %v816 = vld [vmem:[#allocation7] sm:$0xff]
    %v817 = vld [vmem:[#allocation7 + $0x8] sm:$0xff]
    %v818 = vld [vmem:[#allocation7 + $0x10] sm:$0xff]
    %v819 = vld [vmem:[#allocation7 + $0x18] sm:$0xff]
    %v820 = vld [vmem:[#allocation7 + $0x20] sm:$0xff]
    %v821 = vld [vmem:[#allocation7 + $0x28] sm:$0xff]
    %v822 = vld [vmem:[#allocation7 + $0x30] sm:$0xff]
    %v823 = vld [vmem:[#allocation7 + $0x38] sm:$0xff]
    %v824 = vld [vmem:[#allocation7 + $0x40] sm:$0xff]
    %v825 = vld [vmem:[#allocation7 + $0x48] sm:$0xff]
    %v826 = vld [vmem:[#allocation7 + $0x50] sm:$0xff]
    %v827 = vld [vmem:[#allocation7 + $0x58] sm:$0xff]
    %v828 = vld [vmem:[#allocation7 + $0x60] sm:$0xff]
    %v829 = vld [vmem:[#allocation7 + $0x68] sm:$0xff]
    %v830 = vld [vmem:[#allocation7 + $0x70] sm:$0xff]
    %v831 = vld [vmem:[#allocation7 + $0x78] sm:$0xff]
    %v832 = vld [vmem:[#allocation7 + $0x80] sm:$0xff]
    %v833 = vld [vmem:[#allocation7 + $0x88] sm:$0xff]
    %v834 = vld [vmem:[#allocation7 + $0x90] sm:$0xff]
    %v835 = vld [vmem:[#allocation7 + $0x98] sm:$0xff]
    %v836 = vld [vmem:[#allocation7 + $0xa0] sm:$0xff]
    %v837 = vld [vmem:[#allocation7 + $0xa8] sm:$0xff]
    %v838 = vld [vmem:[#allocation7 + $0xb0] sm:$0xff]
    %v839 = vld [vmem:[#allocation7 + $0xb8] sm:$0xff]
    %v840 = vld [vmem:[#allocation7 + $0xc0] sm:$0xff]
    %v841 = vld [vmem:[#allocation7 + $0xc8] sm:$0xff]
    %v842 = vld [vmem:[#allocation7 + $0xd0] sm:$0xff]
    %v843 = vld [vmem:[#allocation7 + $0xd8] sm:$0xff]
    %v844 = vld [vmem:[#allocation7 + $0xe0] sm:$0xff]
    %v845 = vld [vmem:[#allocation7 + $0xe8] sm:$0xff]
    %v846 = vld [vmem:[#allocation7 + $0xf0] sm:$0xff]
    %v847 = vld [vmem:[#allocation7 + $0xf8] sm:$0xff]
    %v848 = vld [vmem:[#allocation7 + $0x100] sm:$0xff]
    %v849 = vld [vmem:[#allocation7 + $0x108] sm:$0xff]
    %v850 = vld [vmem:[#allocation7 + $0x110] sm:$0xff]
    %v851 = vld [vmem:[#allocation7 + $0x118] sm:$0xff]
    %v852 = vld [vmem:[#allocation7 + $0x120] sm:$0xff]
    %v853 = vld [vmem:[#allocation7 + $0x128] sm:$0xff]
    %v854 = vld [vmem:[#allocation7 + $0x130] sm:$0xff]
    %v855 = vld [vmem:[#allocation7 + $0x138] sm:$0xff]
    %v856 = vld [vmem:[#allocation7 + $0x140] sm:$0xff]
    %v857 = vld [vmem:[#allocation7 + $0x148] sm:$0xff]
    %v858 = vld [vmem:[#allocation7 + $0x150] sm:$0xff]
    %v859 = vld [vmem:[#allocation7 + $0x158] sm:$0xff]
    %v860 = vld [vmem:[#allocation7 + $0x160] sm:$0xff]
    %v861 = vld [vmem:[#allocation7 + $0x168] sm:$0xff]
    %v862 = vld [vmem:[#allocation7 + $0x170] sm:$0xff]
    %v863 = vld [vmem:[#allocation7 + $0x178] sm:$0xff]
    %v864 = vld [vmem:[#allocation7 + $0x180] sm:$0xff]
    %v865 = vld [vmem:[#allocation7 + $0x188] sm:$0xff]
    %v866 = vld [vmem:[#allocation7 + $0x190] sm:$0xff]
    %v867 = vld [vmem:[#allocation7 + $0x198] sm:$0xff]
    %v868 = vld [vmem:[#allocation7 + $0x1a0] sm:$0xff]
    %v869 = vld [vmem:[#allocation7 + $0x1a8] sm:$0xff]
    %v870 = vld [vmem:[#allocation7 + $0x1b0] sm:$0xff]
    %v871 = vld [vmem:[#allocation7 + $0x1b8] sm:$0xff]
    %v872 = vld [vmem:[#allocation7 + $0x1c0] sm:$0xff]
    %v873 = vld [vmem:[#allocation7 + $0x1c8] sm:$0xff]
    %v874 = vld [vmem:[#allocation7 + $0x1d0] sm:$0xff]
    %v875 = vld [vmem:[#allocation7 + $0x1d8] sm:$0xff]
    %v876 = vld [vmem:[#allocation7 + $0x1e0] sm:$0xff]
    %v877 = vld [vmem:[#allocation7 + $0x1e8] sm:$0xff]
    %v878 = vld [vmem:[#allocation7 + $0x1f0] sm:$0xff]
    %v879 = vld [vmem:[#allocation7 + $0x1f8] sm:$0xff]
    %880 = vmatprep.subr.mxu0 %v817
    %881 = vmatpush1.msra.mxu0 %v816
    %882 = vmatprep.subr.mxu0 %v821
    %883 = vmatpush1.msra.mxu0 %v820
    %884 = vmatprep.subr.mxu0 %v825
    %885 = vmatpush1.msra.mxu0 %v824
    %886 = vmatprep.subr.mxu0 %v829
    %887 = vmatpush1.msra.mxu0 %v828
    %888 = vmatprep.subr.mxu0 %v833
    %889 = vmatpush1.msra.mxu0 %v832
    %890 = vmatprep.subr.mxu0 %v837
    %891 = vmatpush1.msra.mxu0 %v836
    %892 = vmatprep.subr.mxu0 %v841
    %893 = vmatpush1.msra.mxu0 %v840
    %894 = vmatprep.subr.mxu0 %v845
    %895 = vmatpush1.msra.mxu0 %v844
    %896 = vmatprep.subr.mxu0 %v849
    %897 = vmatpush1.msra.mxu0 %v848
    %898 = vmatprep.subr.mxu0 %v853
    %899 = vmatpush1.msra.mxu0 %v852
    %900 = vmatprep.subr.mxu0 %v857
    %901 = vmatpush1.msra.mxu0 %v856
    %902 = vmatprep.subr.mxu0 %v861
    %903 = vmatpush1.msra.mxu0 %v860
    %904 = vmatprep.subr.mxu0 %v865
    %905 = vmatpush1.msra.mxu0 %v864
    %906 = vmatprep.subr.mxu0 %v869
    %907 = vmatpush1.msra.mxu0 %v868
    %908 = vmatprep.subr.mxu0 %v873
    %909 = vmatpush1.msra.mxu0 %v872
    %910 = vmatprep.subr.mxu0 %v877
    %911 = vmatpush1.msra.mxu0 %v876
    %912 = vmatprep.subr.mxu0 0.0
    %913 = vmatpush1.msra.mxu0 0.0
    %914 = vmatprep.subr.mxu0 0.0
    %915 = vmatpush1.msra.mxu0 0.0
    %916 = vmatprep.subr.mxu0 0.0
    %917 = vmatpush1.msra.mxu0 0.0
    %918 = vmatprep.subr.mxu0 0.0
    %919 = vmatpush1.msra.mxu0 0.0
    %920 = vmatprep.subr.mxu0 0.0
    %921 = vmatpush1.msra.mxu0 0.0
    %922 = vmatprep.subr.mxu0 0.0
    %923 = vmatpush1.msra.mxu0 0.0
    %924 = vmatprep.subr.mxu0 0.0
    %925 = vmatpush1.msra.mxu0 0.0
    %926 = vmatprep.subr.mxu0 0.0
    %927 = vmatpush1.msra.mxu0 0.0
    %928 = vmatprep.subr.mxu0 0.0
    %929 = vmatpush1.msra.mxu0 0.0
    %930 = vmatprep.subr.mxu0 0.0
    %931 = vmatpush1.msra.mxu0 0.0
    %932 = vmatprep.subr.mxu0 0.0
    %933 = vmatpush1.msra.mxu0 0.0
    %934 = vmatprep.subr.mxu0 0.0
    %935 = vmatpush1.msra.mxu0 0.0
    %936 = vmatprep.subr.mxu0 0.0
    %937 = vmatpush1.msra.mxu0 0.0
    %938 = vmatprep.subr.mxu0 0.0
    %939 = vmatpush1.msra.mxu0 0.0
    %940 = vmatprep.subr.mxu0 0.0
    %941 = vmatpush1.msra.mxu0 0.0
    %942 = vmatprep.subr.mxu0 0.0
    %943 = vmatpush1.msra.mxu0 0.0
    %944 = vmatprep.mubr.f32.mxu0 0.0
    %945 = vmatmul.mubr.f32.gmra.mrb[0].mxu0 %v809
    %v946 = vpop.f32.mrb[0].mxu0
    %v947 = vadd.f32 0.0, %v946
    %v948 = vpop.f32.mrb[0].mxu0
    %v949 = vadd.f32 0.0, %v948
    %950 = vdwg.mxu0
    %951 = vmatprep.subr.mxu0 %v819
    %952 = vmatpush1.msra.mxu0 %v818
    %953 = vmatprep.subr.mxu0 %v823
    %954 = vmatpush1.msra.mxu0 %v822
    %955 = vmatprep.subr.mxu0 %v827
    %956 = vmatpush1.msra.mxu0 %v826
    %957 = vmatprep.subr.mxu0 %v831
    %958 = vmatpush1.msra.mxu0 %v830
    %959 = vmatprep.subr.mxu0 %v835
    %960 = vmatpush1.msra.mxu0 %v834
    %961 = vmatprep.subr.mxu0 %v839
    %962 = vmatpush1.msra.mxu0 %v838
    %963 = vmatprep.subr.mxu0 %v843
    %964 = vmatpush1.msra.mxu0 %v842
    %965 = vmatprep.subr.mxu0 %v847
    %966 = vmatpush1.msra.mxu0 %v846
    %967 = vmatprep.subr.mxu0 %v851
    %968 = vmatpush1.msra.mxu0 %v850
    %969 = vmatprep.subr.mxu0 %v855
    %970 = vmatpush1.msra.mxu0 %v854
    %971 = vmatprep.subr.mxu0 %v859
    %972 = vmatpush1.msra.mxu0 %v858
    %973 = vmatprep.subr.mxu0 %v863
    %974 = vmatpush1.msra.mxu0 %v862
    %975 = vmatprep.subr.mxu0 %v867
    %976 = vmatpush1.msra.mxu0 %v866
    %977 = vmatprep.subr.mxu0 %v871
    %978 = vmatpush1.msra.mxu0 %v870
    %979 = vmatprep.subr.mxu0 %v875
    %980 = vmatpush1.msra.mxu0 %v874
    %981 = vmatprep.subr.mxu0 %v879
    %982 = vmatpush1.msra.mxu0 %v878
    %983 = vmatprep.subr.mxu0 0.0
    %984 = vmatpush1.msra.mxu0 0.0
    %985 = vmatprep.subr.mxu0 0.0
    %986 = vmatpush1.msra.mxu0 0.0
    %987 = vmatprep.subr.mxu0 0.0
    %988 = vmatpush1.msra.mxu0 0.0
    %989 = vmatprep.subr.mxu0 0.0
    %990 = vmatpush1.msra.mxu0 0.0
    %991 = vmatprep.subr.mxu0 0.0
    %992 = vmatpush1.msra.mxu0 0.0
    %993 = vmatprep.subr.mxu0 0.0
    %994 = vmatpush1.msra.mxu0 0.0
    %995 = vmatprep.subr.mxu0 0.0
    %996 = vmatpush1.msra.mxu0 0.0
    %997 = vmatprep.subr.mxu0 0.0
    %998 = vmatpush1.msra.mxu0 0.0
    %999 = vmatprep.subr.mxu0 0.0
    %1000 = vmatpush1.msra.mxu0 0.0
    %1001 = vmatprep.subr.mxu0 0.0
    %1002 = vmatpush1.msra.mxu0 0.0
    %1003 = vmatprep.subr.mxu0 0.0
    %1004 = vmatpush1.msra.mxu0 0.0
    %1005 = vmatprep.subr.mxu0 0.0
    %1006 = vmatpush1.msra.mxu0 0.0
    %1007 = vmatprep.subr.mxu0 0.0
    %1008 = vmatpush1.msra.mxu0 0.0
    %1009 = vmatprep.subr.mxu0 0.0
    %1010 = vmatpush1.msra.mxu0 0.0
    %1011 = vmatprep.subr.mxu0 0.0
    %1012 = vmatpush1.msra.mxu0 0.0
    %1013 = vmatprep.subr.mxu0 0.0
    %1014 = vmatpush1.msra.mxu0 0.0
    %1015 = vmatprep.mubr.f32.mxu0 0.0
    %1016 = vmatmul.mubr.f32.gmra.mrb[0].mxu0 %v809
    %v1017 = vpop.f32.mrb[0].mxu0
    %v1018 = vadd.f32 0.0, %v1017
    %v1019 = vpop.f32.mrb[0].mxu0
    %v1020 = vadd.f32 0.0, %v1019
    %1021 = vdwg.mxu0
    %v1022 = vadd.f32 %v812, %v947
    %v1023 = vadd.f32 %v813, %v949
    %v1024 = vadd.f32 %v814, %v1018
    %v1025 = vadd.f32 %v815, %v1020
    %v1026 = vxor.u32 %v1022, 2147483648
    %v1027 = vmul.f32 %v1026, 1.442695
    %v1028 = vpow.pop %v1027
    %v1029 = vadd.f32 %v1028, 1.0
    %v1030 = vrcp.pop %v1029
    %v1031 = vmul.f32 1.0, %v1030
    %v1032 = vxor.u32 %v1023, 2147483648
    %v1033 = vmul.f32 %v1032, 1.442695
    %v1034 = vpow.pop %v1033
    %v1035 = vadd.f32 %v1034, 1.0
    %v1036 = vrcp.pop %v1035
    %v1037 = vmul.f32 1.0, %v1036
    %v1038 = vtanh.pop %v1024
    %v1039 = vxor.u32 %v1025, 2147483648
    %v1040 = vmul.f32 %v1039, 1.442695
    %v1041 = vpow.pop %v1040
    %v1042 = vadd.f32 %v1041, 1.0
    %v1043 = vrcp.pop %v1042
    %v1044 = vmul.f32 1.0, %v1043
    %v1045 = vmul.f32 %v1037, %v325
    %v1046 = vmul.f32 %v1031, %v1038
    %v1047 = vadd.f32 %v1045, %v1046
    %v1048 = vtanh.pop %v1047
    %v1049 = vmul.f32 %v1044, %v1048
    %s1050 = scalar_lea.vmem %s1, 8
    %v1051 = vld [vmem:[%s1050] sm:$0xff]
    %v1052 = vmul.f32 %v1051, 0.33333334
    %1054 = vset.pattern.permute.xlu0 0
    %1055 = vperm.xlu0 %1054, %v1052
    %v1056 = vpop.permute.xlu0 %1055
    %v1058 = vld [vmem:[#allocation9] sm:$0xff]
    %v1059 = vld [vmem:[#allocation9 + $0x8] sm:$0xff]
    %v1060 = vld [vmem:[#allocation9 + $0x10] sm:$0xff]
    %v1061 = vld [vmem:[#allocation9 + $0x18] sm:$0xff]
    %v1062 = vld [vmem:[#allocation9 + $0x20] sm:$0xff]
    %v1063 = vld [vmem:[#allocation9 + $0x28] sm:$0xff]
    %v1064 = vld [vmem:[#allocation9 + $0x30] sm:$0xff]
    %v1065 = vld [vmem:[#allocation9 + $0x38] sm:$0xff]
    %v1066 = vld [vmem:[#allocation9 + $0x40] sm:$0xff]
    %v1067 = vld [vmem:[#allocation9 + $0x48] sm:$0xff]
    %v1068 = vld [vmem:[#allocation9 + $0x50] sm:$0xff]
    %v1069 = vld [vmem:[#allocation9 + $0x58] sm:$0xff]
    %v1070 = vld [vmem:[#allocation9 + $0x60] sm:$0xff]
    %v1071 = vld [vmem:[#allocation9 + $0x68] sm:$0xff]
    %v1072 = vld [vmem:[#allocation9 + $0x70] sm:$0xff]
    %v1073 = vld [vmem:[#allocation9 + $0x78] sm:$0xff]
    %v1074 = vld [vmem:[%s4] sm:$0x1]
    %v1076 = vlaneseq
    %v1077 = vshrl.u32 %v1076, 7
    %v1078 = vsub.s32 0, %v1077
    %v1079 = vrot.slane %v1074, %v1078
    %1081 = vmatprep.subr.mxu0 0.0
    %1082 = vmatpush1.msra.mxu0 %v1058
    %1083 = vmatprep.subr.mxu0 0.0
    %1084 = vmatpush1.msra.mxu0 %v1059
    %1085 = vmatprep.subr.mxu0 0.0
    %1086 = vmatpush1.msra.mxu0 %v1060
    %1087 = vmatprep.subr.mxu0 0.0
    %1088 = vmatpush1.msra.mxu0 %v1061
    %1089 = vmatprep.subr.mxu0 0.0
    %1090 = vmatpush1.msra.mxu0 %v1062
    %1091 = vmatprep.subr.mxu0 0.0
    %1092 = vmatpush1.msra.mxu0 %v1063
    %1093 = vmatprep.subr.mxu0 0.0
    %1094 = vmatpush1.msra.mxu0 %v1064
    %1095 = vmatprep.subr.mxu0 0.0
    %1096 = vmatpush1.msra.mxu0 %v1065
    %1097 = vmatprep.subr.mxu0 0.0
    %1098 = vmatpush1.msra.mxu0 %v1066
    %1099 = vmatprep.subr.mxu0 0.0
    %1100 = vmatpush1.msra.mxu0 %v1067
    %1101 = vmatprep.subr.mxu0 0.0
    %1102 = vmatpush1.msra.mxu0 %v1068
    %1103 = vmatprep.subr.mxu0 0.0
    %1104 = vmatpush1.msra.mxu0 %v1069
    %1105 = vmatprep.subr.mxu0 0.0
    %1106 = vmatpush1.msra.mxu0 %v1070
    %1107 = vmatprep.subr.mxu0 0.0
    %1108 = vmatpush1.msra.mxu0 %v1071
    %1109 = vmatprep.subr.mxu0 0.0
    %1110 = vmatpush1.msra.mxu0 %v1072
    %1111 = vmatprep.subr.mxu0 0.0
    %1112 = vmatpush1.msra.mxu0 %v1073
    %1113 = vmatprep.subr.mxu0 0.0
    %1114 = vmatpush1.msra.mxu0 0.0
    %1115 = vmatprep.subr.mxu0 0.0
    %1116 = vmatpush1.msra.mxu0 0.0
    %1117 = vmatprep.subr.mxu0 0.0
    %1118 = vmatpush1.msra.mxu0 0.0
    %1119 = vmatprep.subr.mxu0 0.0
    %1120 = vmatpush1.msra.mxu0 0.0
    %1121 = vmatprep.subr.mxu0 0.0
    %1122 = vmatpush1.msra.mxu0 0.0
    %1123 = vmatprep.subr.mxu0 0.0
    %1124 = vmatpush1.msra.mxu0 0.0
    %1125 = vmatprep.subr.mxu0 0.0
    %1126 = vmatpush1.msra.mxu0 0.0
    %1127 = vmatprep.subr.mxu0 0.0
    %1128 = vmatpush1.msra.mxu0 0.0
    %1129 = vmatprep.subr.mxu0 0.0
    %1130 = vmatpush1.msra.mxu0 0.0
    %1131 = vmatprep.subr.mxu0 0.0
    %1132 = vmatpush1.msra.mxu0 0.0
    %1133 = vmatprep.subr.mxu0 0.0
    %1134 = vmatpush1.msra.mxu0 0.0
    %1135 = vmatprep.subr.mxu0 0.0
    %1136 = vmatpush1.msra.mxu0 0.0
    %1137 = vmatprep.subr.mxu0 0.0
    %1138 = vmatpush1.msra.mxu0 0.0
    %1139 = vmatprep.subr.mxu0 0.0
    %1140 = vmatpush1.msra.mxu0 0.0
    %1141 = vmatprep.subr.mxu0 0.0
    %1142 = vmatpush1.msra.mxu0 0.0
    %1143 = vmatprep.subr.mxu0 0.0
    %1144 = vmatpush1.msra.mxu0 0.0
    %1145 = vmatprep.mubr.f32.mxu0 0.0
    %1146 = vmatmul.mubr.f32.gmra.mrb[0].mxu0 %v1049
    %v1147 = vpop.f32.mrb[0].mxu0
    %v1148 = vadd.f32 %v1079, %v1147
    %v1149 = vpop.f32.mrb[0].mxu0
    %1150 = vdwg.mxu0
    %v1151 = vtanh.pop %v1148
    %v1152 = vld [vmem:[#allocation10] sm:$0xff]
    %v1153 = vld [vmem:[#allocation10 + $0x8] sm:$0xff]
    %v1154 = vld [vmem:[#allocation10 + $0x10] sm:$0xff]
    %v1155 = vld [vmem:[#allocation10 + $0x18] sm:$0xff]
    %v1156 = vld [vmem:[#allocation10 + $0x20] sm:$0xff]
    %v1157 = vld [vmem:[#allocation10 + $0x28] sm:$0xff]
    %v1158 = vld [vmem:[#allocation10 + $0x30] sm:$0xff]
    %v1159 = vld [vmem:[#allocation10 + $0x38] sm:$0xff]
    %v1160 = vld [vmem:[#allocation10 + $0x40] sm:$0xff]
    %v1161 = vld [vmem:[#allocation10 + $0x48] sm:$0xff]
    %v1162 = vld [vmem:[#allocation10 + $0x50] sm:$0xff]
    %v1163 = vld [vmem:[#allocation10 + $0x58] sm:$0xff]
    %v1164 = vld [vmem:[#allocation10 + $0x60] sm:$0xff]
    %v1165 = vld [vmem:[#allocation10 + $0x68] sm:$0xff]
    %v1166 = vld [vmem:[#allocation10 + $0x70] sm:$0xff]
    %v1167 = vld [vmem:[#allocation10 + $0x78] sm:$0xff]
    %v1168 = vld [vmem:[%s6] sm:$0x1]
    %v1170 = vlaneseq
    %v1171 = vshrl.u32 %v1170, 7
    %v1172 = vsub.s32 0, %v1171
    %v1173 = vrot.slane %v1168, %v1172
    %1175 = vmatprep.subr.mxu0 0.0
    %1176 = vmatpush1.msra.mxu0 %v1152
    %1177 = vmatprep.subr.mxu0 0.0
    %1178 = vmatpush1.msra.mxu0 %v1153
    %1179 = vmatprep.subr.mxu0 0.0
    %1180 = vmatpush1.msra.mxu0 %v1154
    %1181 = vmatprep.subr.mxu0 0.0
    %1182 = vmatpush1.msra.mxu0 %v1155
    %1183 = vmatprep.subr.mxu0 0.0
    %1184 = vmatpush1.msra.mxu0 %v1156
    %1185 = vmatprep.subr.mxu0 0.0
    %1186 = vmatpush1.msra.mxu0 %v1157
    %1187 = vmatprep.subr.mxu0 0.0
    %1188 = vmatpush1.msra.mxu0 %v1158
    %1189 = vmatprep.subr.mxu0 0.0
    %1190 = vmatpush1.msra.mxu0 %v1159
    %1191 = vmatprep.subr.mxu0 0.0
    %1192 = vmatpush1.msra.mxu0 %v1160
    %1193 = vmatprep.subr.mxu0 0.0
    %1194 = vmatpush1.msra.mxu0 %v1161
    %1195 = vmatprep.subr.mxu0 0.0
    %1196 = vmatpush1.msra.mxu0 %v1162
    %1197 = vmatprep.subr.mxu0 0.0
    %1198 = vmatpush1.msra.mxu0 %v1163
    %1199 = vmatprep.subr.mxu0 0.0
    %1200 = vmatpush1.msra.mxu0 %v1164
    %1201 = vmatprep.subr.mxu0 0.0
    %1202 = vmatpush1.msra.mxu0 %v1165
    %1203 = vmatprep.subr.mxu0 0.0
    %1204 = vmatpush1.msra.mxu0 %v1166
    %1205 = vmatprep.subr.mxu0 0.0
    %1206 = vmatpush1.msra.mxu0 %v1167
    %1207 = vmatprep.subr.mxu0 0.0
    %1208 = vmatpush1.msra.mxu0 0.0
    %1209 = vmatprep.subr.mxu0 0.0
    %1210 = vmatpush1.msra.mxu0 0.0
    %1211 = vmatprep.subr.mxu0 0.0
    %1212 = vmatpush1.msra.mxu0 0.0
    %1213 = vmatprep.subr.mxu0 0.0
    %1214 = vmatpush1.msra.mxu0 0.0
    %1215 = vmatprep.subr.mxu0 0.0
    %1216 = vmatpush1.msra.mxu0 0.0
    %1217 = vmatprep.subr.mxu0 0.0
    %1218 = vmatpush1.msra.mxu0 0.0
    %1219 = vmatprep.subr.mxu0 0.0
    %1220 = vmatpush1.msra.mxu0 0.0
    %1221 = vmatprep.subr.mxu0 0.0
    %1222 = vmatpush1.msra.mxu0 0.0
    %1223 = vmatprep.subr.mxu0 0.0
    %1224 = vmatpush1.msra.mxu0 0.0
    %1225 = vmatprep.subr.mxu0 0.0
    %1226 = vmatpush1.msra.mxu0 0.0
    %1227 = vmatprep.subr.mxu0 0.0
    %1228 = vmatpush1.msra.mxu0 0.0
    %1229 = vmatprep.subr.mxu0 0.0
    %1230 = vmatpush1.msra.mxu0 0.0
    %1231 = vmatprep.subr.mxu0 0.0
    %1232 = vmatpush1.msra.mxu0 0.0
    %1233 = vmatprep.subr.mxu0 0.0
    %1234 = vmatpush1.msra.mxu0 0.0
    %1235 = vmatprep.subr.mxu0 0.0
    %1236 = vmatpush1.msra.mxu0 0.0
    %1237 = vmatprep.subr.mxu0 0.0
    %1238 = vmatpush1.msra.mxu0 0.0
    %1239 = vmatprep.mubr.f32.mxu0 0.0
    %1240 = vmatmul.mubr.f32.gmra.mrb[0].mxu0 %v1151
    %v1241 = vpop.f32.mrb[0].mxu0
    %v1242 = vadd.f32 %v1173, %v1241
    %v1243 = vpop.f32.mrb[0].mxu0
    %1244 = vdwg.mxu0
    %v1245 = vmul.f32 %v1056, %v1242
    %v1246 = vadd.f32 %v1049, %v1245
    %1247 = vmatprep.subr.mxu0 0.0
    %1248 = vmatpush1.msra.mxu0 %v1058
    %1249 = vmatprep.subr.mxu0 0.0
    %1250 = vmatpush1.msra.mxu0 %v1059
    %1251 = vmatprep.subr.mxu0 0.0
    %1252 = vmatpush1.msra.mxu0 %v1060
    %1253 = vmatprep.subr.mxu0 0.0
    %1254 = vmatpush1.msra.mxu0 %v1061
    %1255 = vmatprep.subr.mxu0 0.0
    %1256 = vmatpush1.msra.mxu0 %v1062
    %1257 = vmatprep.subr.mxu0 0.0
    %1258 = vmatpush1.msra.mxu0 %v1063
    %1259 = vmatprep.subr.mxu0 0.0
    %1260 = vmatpush1.msra.mxu0 %v1064
    %1261 = vmatprep.subr.mxu0 0.0
    %1262 = vmatpush1.msra.mxu0 %v1065
    %1263 = vmatprep.subr.mxu0 0.0
    %1264 = vmatpush1.msra.mxu0 %v1066
    %1265 = vmatprep.subr.mxu0 0.0
    %1266 = vmatpush1.msra.mxu0 %v1067
    %1267 = vmatprep.subr.mxu0 0.0
    %1268 = vmatpush1.msra.mxu0 %v1068
    %1269 = vmatprep.subr.mxu0 0.0
    %1270 = vmatpush1.msra.mxu0 %v1069
    %1271 = vmatprep.subr.mxu0 0.0
    %1272 = vmatpush1.msra.mxu0 %v1070
    %1273 = vmatprep.subr.mxu0 0.0
    %1274 = vmatpush1.msra.mxu0 %v1071
    %1275 = vmatprep.subr.mxu0 0.0
    %1276 = vmatpush1.msra.mxu0 %v1072
    %1277 = vmatprep.subr.mxu0 0.0
    %1278 = vmatpush1.msra.mxu0 %v1073
    %1279 = vmatprep.subr.mxu0 0.0
    %1280 = vmatpush1.msra.mxu0 0.0
    %1281 = vmatprep.subr.mxu0 0.0
    %1282 = vmatpush1.msra.mxu0 0.0
    %1283 = vmatprep.subr.mxu0 0.0
    %1284 = vmatpush1.msra.mxu0 0.0
    %1285 = vmatprep.subr.mxu0 0.0
    %1286 = vmatpush1.msra.mxu0 0.0
    %1287 = vmatprep.subr.mxu0 0.0
    %1288 = vmatpush1.msra.mxu0 0.0
    %1289 = vmatprep.subr.mxu0 0.0
    %1290 = vmatpush1.msra.mxu0 0.0
    %1291 = vmatprep.subr.mxu0 0.0
    %1292 = vmatpush1.msra.mxu0 0.0
    %1293 = vmatprep.subr.mxu0 0.0
    %1294 = vmatpush1.msra.mxu0 0.0
    %1295 = vmatprep.subr.mxu0 0.0
    %1296 = vmatpush1.msra.mxu0 0.0
    %1297 = vmatprep.subr.mxu0 0.0
    %1298 = vmatpush1.msra.mxu0 0.0
    %1299 = vmatprep.subr.mxu0 0.0
    %1300 = vmatpush1.msra.mxu0 0.0
    %1301 = vmatprep.subr.mxu0 0.0
    %1302 = vmatpush1.msra.mxu0 0.0
    %1303 = vmatprep.subr.mxu0 0.0
    %1304 = vmatpush1.msra.mxu0 0.0
    %1305 = vmatprep.subr.mxu0 0.0
    %1306 = vmatpush1.msra.mxu0 0.0
    %1307 = vmatprep.subr.mxu0 0.0
    %1308 = vmatpush1.msra.mxu0 0.0
    %1309 = vmatprep.subr.mxu0 0.0
    %1310 = vmatpush1.msra.mxu0 0.0
    %1311 = vmatprep.mubr.f32.mxu0 0.0
    %1312 = vmatmul.mubr.f32.gmra.mrb[0].mxu0 %v1246
    %v1313 = vpop.f32.mrb[0].mxu0
    %v1314 = vadd.f32 %v1079, %v1313
    %v1315 = vpop.f32.mrb[0].mxu0
    %1316 = vdwg.mxu0
    %v1317 = vtanh.pop %v1314
    %1318 = vmatprep.subr.mxu0 0.0
    %1319 = vmatpush1.msra.mxu0 %v1152
    %1320 = vmatprep.subr.mxu0 0.0
    %1321 = vmatpush1.msra.mxu0 %v1153
    %1322 = vmatprep.subr.mxu0 0.0
    %1323 = vmatpush1.msra.mxu0 %v1154
    %1324 = vmatprep.subr.mxu0 0.0
    %1325 = vmatpush1.msra.mxu0 %v1155
    %1326 = vmatprep.subr.mxu0 0.0
    %1327 = vmatpush1.msra.mxu0 %v1156
    %1328 = vmatprep.subr.mxu0 0.0
    %1329 = vmatpush1.msra.mxu0 %v1157
    %1330 = vmatprep.subr.mxu0 0.0
    %1331 = vmatpush1.msra.mxu0 %v1158
    %1332 = vmatprep.subr.mxu0 0.0
    %1333 = vmatpush1.msra.mxu0 %v1159
    %1334 = vmatprep.subr.mxu0 0.0
    %1335 = vmatpush1.msra.mxu0 %v1160
    %1336 = vmatprep.subr.mxu0 0.0
    %1337 = vmatpush1.msra.mxu0 %v1161
    %1338 = vmatprep.subr.mxu0 0.0
    %1339 = vmatpush1.msra.mxu0 %v1162
    %1340 = vmatprep.subr.mxu0 0.0
    %1341 = vmatpush1.msra.mxu0 %v1163
    %1342 = vmatprep.subr.mxu0 0.0
    %1343 = vmatpush1.msra.mxu0 %v1164
    %1344 = vmatprep.subr.mxu0 0.0
    %1345 = vmatpush1.msra.mxu0 %v1165
    %1346 = vmatprep.subr.mxu0 0.0
    %1347 = vmatpush1.msra.mxu0 %v1166
    %1348 = vmatprep.subr.mxu0 0.0
    %1349 = vmatpush1.msra.mxu0 %v1167
    %1350 = vmatprep.subr.mxu0 0.0
    %1351 = vmatpush1.msra.mxu0 0.0
    %1352 = vmatprep.subr.mxu0 0.0
    %1353 = vmatpush1.msra.mxu0 0.0
    %1354 = vmatprep.subr.mxu0 0.0
    %1355 = vmatpush1.msra.mxu0 0.0
    %1356 = vmatprep.subr.mxu0 0.0
    %1357 = vmatpush1.msra.mxu0 0.0
    %1358 = vmatprep.subr.mxu0 0.0
    %1359 = vmatpush1.msra.mxu0 0.0
    %1360 = vmatprep.subr.mxu0 0.0
    %1361 = vmatpush1.msra.mxu0 0.0
    %1362 = vmatprep.subr.mxu0 0.0
    %1363 = vmatpush1.msra.mxu0 0.0
    %1364 = vmatprep.subr.mxu0 0.0
    %1365 = vmatpush1.msra.mxu0 0.0
    %1366 = vmatprep.subr.mxu0 0.0
    %1367 = vmatpush1.msra.mxu0 0.0
    %1368 = vmatprep.subr.mxu0 0.0
    %1369 = vmatpush1.msra.mxu0 0.0
    %1370 = vmatprep.subr.mxu0 0.0
    %1371 = vmatpush1.msra.mxu0 0.0
    %1372 = vmatprep.subr.mxu0 0.0
    %1373 = vmatpush1.msra.mxu0 0.0
    %1374 = vmatprep.subr.mxu0 0.0
    %1375 = vmatpush1.msra.mxu0 0.0
    %1376 = vmatprep.subr.mxu0 0.0
    %1377 = vmatpush1.msra.mxu0 0.0
    %1378 = vmatprep.subr.mxu0 0.0
    %1379 = vmatpush1.msra.mxu0 0.0
    %1380 = vmatprep.subr.mxu0 0.0
    %1381 = vmatpush1.msra.mxu0 0.0
    %1382 = vmatprep.mubr.f32.mxu0 0.0
    %1383 = vmatmul.mubr.f32.gmra.mrb[0].mxu0 %v1317
    %v1384 = vpop.f32.mrb[0].mxu0
    %v1385 = vadd.f32 %v1173, %v1384
    %v1386 = vpop.f32.mrb[0].mxu0
    %1387 = vdwg.mxu0
    %v1388 = vmul.f32 %v1056, %v1385
    %v1389 = vadd.f32 %v1246, %v1388
    %1390 = vmatprep.subr.mxu0 0.0
    %1391 = vmatpush1.msra.mxu0 %v1058
    %1392 = vmatprep.subr.mxu0 0.0
    %1393 = vmatpush1.msra.mxu0 %v1059
    %1394 = vmatprep.subr.mxu0 0.0
    %1395 = vmatpush1.msra.mxu0 %v1060
    %1396 = vmatprep.subr.mxu0 0.0
    %1397 = vmatpush1.msra.mxu0 %v1061
    %1398 = vmatprep.subr.mxu0 0.0
    %1399 = vmatpush1.msra.mxu0 %v1062
    %1400 = vmatprep.subr.mxu0 0.0
    %1401 = vmatpush1.msra.mxu0 %v1063
    %1402 = vmatprep.subr.mxu0 0.0
    %1403 = vmatpush1.msra.mxu0 %v1064
    %1404 = vmatprep.subr.mxu0 0.0
    %1405 = vmatpush1.msra.mxu0 %v1065
    %1406 = vmatprep.subr.mxu0 0.0
    %1407 = vmatpush1.msra.mxu0 %v1066
    %1408 = vmatprep.subr.mxu0 0.0
    %1409 = vmatpush1.msra.mxu0 %v1067
    %1410 = vmatprep.subr.mxu0 0.0
    %1411 = vmatpush1.msra.mxu0 %v1068
    %1412 = vmatprep.subr.mxu0 0.0
    %1413 = vmatpush1.msra.mxu0 %v1069
    %1414 = vmatprep.subr.mxu0 0.0
    %1415 = vmatpush1.msra.mxu0 %v1070
    %1416 = vmatprep.subr.mxu0 0.0
    %1417 = vmatpush1.msra.mxu0 %v1071
    %1418 = vmatprep.subr.mxu0 0.0
    %1419 = vmatpush1.msra.mxu0 %v1072
    %1420 = vmatprep.subr.mxu0 0.0
    %1421 = vmatpush1.msra.mxu0 %v1073
    %1422 = vmatprep.subr.mxu0 0.0
    %1423 = vmatpush1.msra.mxu0 0.0
    %1424 = vmatprep.subr.mxu0 0.0
    %1425 = vmatpush1.msra.mxu0 0.0
    %1426 = vmatprep.subr.mxu0 0.0
    %1427 = vmatpush1.msra.mxu0 0.0
    %1428 = vmatprep.subr.mxu0 0.0
    %1429 = vmatpush1.msra.mxu0 0.0
    %1430 = vmatprep.subr.mxu0 0.0
    %1431 = vmatpush1.msra.mxu0 0.0
    %1432 = vmatprep.subr.mxu0 0.0
    %1433 = vmatpush1.msra.mxu0 0.0
    %1434 = vmatprep.subr.mxu0 0.0
    %1435 = vmatpush1.msra.mxu0 0.0
    %1436 = vmatprep.subr.mxu0 0.0
    %1437 = vmatpush1.msra.mxu0 0.0
    %1438 = vmatprep.subr.mxu0 0.0
    %1439 = vmatpush1.msra.mxu0 0.0
    %1440 = vmatprep.subr.mxu0 0.0
    %1441 = vmatpush1.msra.mxu0 0.0
    %1442 = vmatprep.subr.mxu0 0.0
    %1443 = vmatpush1.msra.mxu0 0.0
    %1444 = vmatprep.subr.mxu0 0.0
    %1445 = vmatpush1.msra.mxu0 0.0
    %1446 = vmatprep.subr.mxu0 0.0
    %1447 = vmatpush1.msra.mxu0 0.0
    %1448 = vmatprep.subr.mxu0 0.0
    %1449 = vmatpush1.msra.mxu0 0.0
    %1450 = vmatprep.subr.mxu0 0.0
    %1451 = vmatpush1.msra.mxu0 0.0
    %1452 = vmatprep.subr.mxu0 0.0
    %1453 = vmatpush1.msra.mxu0 0.0
    %1454 = vmatprep.mubr.f32.mxu0 0.0
    %1455 = vmatmul.mubr.f32.gmra.mrb[0].mxu0 %v1389
    %v1456 = vpop.f32.mrb[0].mxu0
    %v1457 = vadd.f32 %v1079, %v1456
    %v1458 = vpop.f32.mrb[0].mxu0
    %1459 = vdwg.mxu0
    %v1460 = vtanh.pop %v1457
    %1461 = vmatprep.subr.mxu0 0.0
    %1462 = vmatpush1.msra.mxu0 %v1152
    %1463 = vmatprep.subr.mxu0 0.0
    %1464 = vmatpush1.msra.mxu0 %v1153
    %1465 = vmatprep.subr.mxu0 0.0
    %1466 = vmatpush1.msra.mxu0 %v1154
    %1467 = vmatprep.subr.mxu0 0.0
    %1468 = vmatpush1.msra.mxu0 %v1155
    %1469 = vmatprep.subr.mxu0 0.0
    %1470 = vmatpush1.msra.mxu0 %v1156
    %1471 = vmatprep.subr.mxu0 0.0
    %1472 = vmatpush1.msra.mxu0 %v1157
    %1473 = vmatprep.subr.mxu0 0.0
    %1474 = vmatpush1.msra.mxu0 %v1158
    %1475 = vmatprep.subr.mxu0 0.0
    %1476 = vmatpush1.msra.mxu0 %v1159
    %1477 = vmatprep.subr.mxu0 0.0
    %1478 = vmatpush1.msra.mxu0 %v1160
    %1479 = vmatprep.subr.mxu0 0.0
    %1480 = vmatpush1.msra.mxu0 %v1161
    %1481 = vmatprep.subr.mxu0 0.0
    %1482 = vmatpush1.msra.mxu0 %v1162
    %1483 = vmatprep.subr.mxu0 0.0
    %1484 = vmatpush1.msra.mxu0 %v1163
    %1485 = vmatprep.subr.mxu0 0.0
    %1486 = vmatpush1.msra.mxu0 %v1164
    %1487 = vmatprep.subr.mxu0 0.0
    %1488 = vmatpush1.msra.mxu0 %v1165
    %1489 = vmatprep.subr.mxu0 0.0
    %1490 = vmatpush1.msra.mxu0 %v1166
    %1491 = vmatprep.subr.mxu0 0.0
    %1492 = vmatpush1.msra.mxu0 %v1167
    %1493 = vmatprep.subr.mxu0 0.0
    %1494 = vmatpush1.msra.mxu0 0.0
    %1495 = vmatprep.subr.mxu0 0.0
    %1496 = vmatpush1.msra.mxu0 0.0
    %1497 = vmatprep.subr.mxu0 0.0
    %1498 = vmatpush1.msra.mxu0 0.0
    %1499 = vmatprep.subr.mxu0 0.0
    %1500 = vmatpush1.msra.mxu0 0.0
    %1501 = vmatprep.subr.mxu0 0.0
    %1502 = vmatpush1.msra.mxu0 0.0
    %1503 = vmatprep.subr.mxu0 0.0
    %1504 = vmatpush1.msra.mxu0 0.0
    %1505 = vmatprep.subr.mxu0 0.0
    %1506 = vmatpush1.msra.mxu0 0.0
    %1507 = vmatprep.subr.mxu0 0.0
    %1508 = vmatpush1.msra.mxu0 0.0
    %1509 = vmatprep.subr.mxu0 0.0
    %1510 = vmatpush1.msra.mxu0 0.0
    %1511 = vmatprep.subr.mxu0 0.0
    %1512 = vmatpush1.msra.mxu0 0.0
    %1513 = vmatprep.subr.mxu0 0.0
    %1514 = vmatpush1.msra.mxu0 0.0
    %1515 = vmatprep.subr.mxu0 0.0
    %1516 = vmatpush1.msra.mxu0 0.0
    %1517 = vmatprep.subr.mxu0 0.0
    %1518 = vmatpush1.msra.mxu0 0.0
    %1519 = vmatprep.subr.mxu0 0.0
    %1520 = vmatpush1.msra.mxu0 0.0
    %1521 = vmatprep.subr.mxu0 0.0
    %1522 = vmatpush1.msra.mxu0 0.0
    %1523 = vmatprep.subr.mxu0 0.0
    %1524 = vmatpush1.msra.mxu0 0.0
    %1525 = vmatprep.mubr.f32.mxu0 0.0
    %1526 = vmatmul.mubr.f32.gmra.mrb[0].mxu0 %v1460
    %v1527 = vpop.f32.mrb[0].mxu0
    %v1528 = vadd.f32 %v1173, %v1527
    %v1529 = vpop.f32.mrb[0].mxu0
    %1530 = vdwg.mxu0
    %v1531 = vmul.f32 %v1056, %v1528
    %v1532 = vadd.f32 %v1389, %v1531
    %s1533 = scalar_lea.vmem [#allocation12], 8
    %1534 = vst [vmem:[%s1533] sm:$0xff] %v1532
    %s1535 = scalar_lea.vmem [#allocation4], 64
    %v1536 = vld [vmem:[%s1535] sm:$0xff]
    %v1537 = vld [vmem:[%s1535 + $0x8] sm:$0xff]
    %v1538 = vld [vmem:[%s1535 + $0x10] sm:$0xff]
    %v1539 = vld [vmem:[%s1535 + $0x18] sm:$0xff]
    %v1540 = vld [vmem:[#allocation7] sm:$0xff]
    %v1541 = vld [vmem:[#allocation7 + $0x8] sm:$0xff]
    %v1542 = vld [vmem:[#allocation7 + $0x10] sm:$0xff]
    %v1543 = vld [vmem:[#allocation7 + $0x18] sm:$0xff]
    %v1544 = vld [vmem:[#allocation7 + $0x20] sm:$0xff]
    %v1545 = vld [vmem:[#allocation7 + $0x28] sm:$0xff]
    %v1546 = vld [vmem:[#allocation7 + $0x30] sm:$0xff]
    %v1547 = vld [vmem:[#allocation7 + $0x38] sm:$0xff]
    %v1548 = vld [vmem:[#allocation7 + $0x40] sm:$0xff]
    %v1549 = vld [vmem:[#allocation7 + $0x48] sm:$0xff]
    %v1550 = vld [vmem:[#allocation7 + $0x50] sm:$0xff]
    %v1551 = vld [vmem:[#allocation7 + $0x58] sm:$0xff]
    %v1552 = vld [vmem:[#allocation7 + $0x60] sm:$0xff]
    %v1553 = vld [vmem:[#allocation7 + $0x68] sm:$0xff]
    %v1554 = vld [vmem:[#allocation7 + $0x70] sm:$0xff]
    %v1555 = vld [vmem:[#allocation7 + $0x78] sm:$0xff]
    %v1556 = vld [vmem:[#allocation7 + $0x80] sm:$0xff]
    %v1557 = vld [vmem:[#allocation7 + $0x88] sm:$0xff]
    %v1558 = vld [vmem:[#allocation7 + $0x90] sm:$0xff]
    %v1559 = vld [vmem:[#allocation7 + $0x98] sm:$0xff]
    %v1560 = vld [vmem:[#allocation7 + $0xa0] sm:$0xff]
    %v1561 = vld [vmem:[#allocation7 + $0xa8] sm:$0xff]
    %v1562 = vld [vmem:[#allocation7 + $0xb0] sm:$0xff]
    %v1563 = vld [vmem:[#allocation7 + $0xb8] sm:$0xff]
    %v1564 = vld [vmem:[#allocation7 + $0xc0] sm:$0xff]
    %v1565 = vld [vmem:[#allocation7 + $0xc8] sm:$0xff]
    %v1566 = vld [vmem:[#allocation7 + $0xd0] sm:$0xff]
    %v1567 = vld [vmem:[#allocation7 + $0xd8] sm:$0xff]
    %v1568 = vld [vmem:[#allocation7 + $0xe0] sm:$0xff]
    %v1569 = vld [vmem:[#allocation7 + $0xe8] sm:$0xff]
    %v1570 = vld [vmem:[#allocation7 + $0xf0] sm:$0xff]
    %v1571 = vld [vmem:[#allocation7 + $0xf8] sm:$0xff]
    %v1572 = vld [vmem:[#allocation7 + $0x100] sm:$0xff]
    %v1573 = vld [vmem:[#allocation7 + $0x108] sm:$0xff]
    %v1574 = vld [vmem:[#allocation7 + $0x110] sm:$0xff]
    %v1575 = vld [vmem:[#allocation7 + $0x118] sm:$0xff]
    %v1576 = vld [vmem:[#allocation7 + $0x120] sm:$0xff]
    %v1577 = vld [vmem:[#allocation7 + $0x128] sm:$0xff]
    %v1578 = vld [vmem:[#allocation7 + $0x130] sm:$0xff]
    %v1579 = vld [vmem:[#allocation7 + $0x138] sm:$0xff]
    %v1580 = vld [vmem:[#allocation7 + $0x140] sm:$0xff]
    %v1581 = vld [vmem:[#allocation7 + $0x148] sm:$0xff]
    %v1582 = vld [vmem:[#allocation7 + $0x150] sm:$0xff]
    %v1583 = vld [vmem:[#allocation7 + $0x158] sm:$0xff]
    %v1584 = vld [vmem:[#allocation7 + $0x160] sm:$0xff]
    %v1585 = vld [vmem:[#allocation7 + $0x168] sm:$0xff]
    %v1586 = vld [vmem:[#allocation7 + $0x170] sm:$0xff]
    %v1587 = vld [vmem:[#allocation7 + $0x178] sm:$0xff]
    %v1588 = vld [vmem:[#allocation7 + $0x180] sm:$0xff]
    %v1589 = vld [vmem:[#allocation7 + $0x188] sm:$0xff]
    %v1590 = vld [vmem:[#allocation7 + $0x190] sm:$0xff]
    %v1591 = vld [vmem:[#allocation7 + $0x198] sm:$0xff]
    %v1592 = vld [vmem:[#allocation7 + $0x1a0] sm:$0xff]
    %v1593 = vld [vmem:[#allocation7 + $0x1a8] sm:$0xff]
    %v1594 = vld [vmem:[#allocation7 + $0x1b0] sm:$0xff]
    %v1595 = vld [vmem:[#allocation7 + $0x1b8] sm:$0xff]
    %v1596 = vld [vmem:[#allocation7 + $0x1c0] sm:$0xff]
    %v1597 = vld [vmem:[#allocation7 + $0x1c8] sm:$0xff]
    %v1598 = vld [vmem:[#allocation7 + $0x1d0] sm:$0xff]
    %v1599 = vld [vmem:[#allocation7 + $0x1d8] sm:$0xff]
    %v1600 = vld [vmem:[#allocation7 + $0x1e0] sm:$0xff]
    %v1601 = vld [vmem:[#allocation7 + $0x1e8] sm:$0xff]
    %v1602 = vld [vmem:[#allocation7 + $0x1f0] sm:$0xff]
    %v1603 = vld [vmem:[#allocation7 + $0x1f8] sm:$0xff]
    %1604 = vmatprep.subr.mxu0 %v1541
    %1605 = vmatpush1.msra.mxu0 %v1540
    %1606 = vmatprep.subr.mxu0 %v1545
    %1607 = vmatpush1.msra.mxu0 %v1544
    %1608 = vmatprep.subr.mxu0 %v1549
    %1609 = vmatpush1.msra.mxu0 %v1548
    %1610 = vmatprep.subr.mxu0 %v1553
    %1611 = vmatpush1.msra.mxu0 %v1552
    %1612 = vmatprep.subr.mxu0 %v1557
    %1613 = vmatpush1.msra.mxu0 %v1556
    %1614 = vmatprep.subr.mxu0 %v1561
    %1615 = vmatpush1.msra.mxu0 %v1560
    %1616 = vmatprep.subr.mxu0 %v1565
    %1617 = vmatpush1.msra.mxu0 %v1564
    %1618 = vmatprep.subr.mxu0 %v1569
    %1619 = vmatpush1.msra.mxu0 %v1568
    %1620 = vmatprep.subr.mxu0 %v1573
    %1621 = vmatpush1.msra.mxu0 %v1572
    %1622 = vmatprep.subr.mxu0 %v1577
    %1623 = vmatpush1.msra.mxu0 %v1576
    %1624 = vmatprep.subr.mxu0 %v1581
    %1625 = vmatpush1.msra.mxu0 %v1580
    %1626 = vmatprep.subr.mxu0 %v1585
    %1627 = vmatpush1.msra.mxu0 %v1584
    %1628 = vmatprep.subr.mxu0 %v1589
    %1629 = vmatpush1.msra.mxu0 %v1588
    %1630 = vmatprep.subr.mxu0 %v1593
    %1631 = vmatpush1.msra.mxu0 %v1592
    %1632 = vmatprep.subr.mxu0 %v1597
    %1633 = vmatpush1.msra.mxu0 %v1596
    %1634 = vmatprep.subr.mxu0 %v1601
    %1635 = vmatpush1.msra.mxu0 %v1600
    %1636 = vmatprep.subr.mxu0 0.0
    %1637 = vmatpush1.msra.mxu0 0.0
    %1638 = vmatprep.subr.mxu0 0.0
    %1639 = vmatpush1.msra.mxu0 0.0
    %1640 = vmatprep.subr.mxu0 0.0
    %1641 = vmatpush1.msra.mxu0 0.0
    %1642 = vmatprep.subr.mxu0 0.0
    %1643 = vmatpush1.msra.mxu0 0.0
    %1644 = vmatprep.subr.mxu0 0.0
    %1645 = vmatpush1.msra.mxu0 0.0
    %1646 = vmatprep.subr.mxu0 0.0
    %1647 = vmatpush1.msra.mxu0 0.0
    %1648 = vmatprep.subr.mxu0 0.0
    %1649 = vmatpush1.msra.mxu0 0.0
    %1650 = vmatprep.subr.mxu0 0.0
    %1651 = vmatpush1.msra.mxu0 0.0
    %1652 = vmatprep.subr.mxu0 0.0
    %1653 = vmatpush1.msra.mxu0 0.0
    %1654 = vmatprep.subr.mxu0 0.0
    %1655 = vmatpush1.msra.mxu0 0.0
    %1656 = vmatprep.subr.mxu0 0.0
    %1657 = vmatpush1.msra.mxu0 0.0
    %1658 = vmatprep.subr.mxu0 0.0
    %1659 = vmatpush1.msra.mxu0 0.0
    %1660 = vmatprep.subr.mxu0 0.0
    %1661 = vmatpush1.msra.mxu0 0.0
    %1662 = vmatprep.subr.mxu0 0.0
    %1663 = vmatpush1.msra.mxu0 0.0
    %1664 = vmatprep.subr.mxu0 0.0
    %1665 = vmatpush1.msra.mxu0 0.0
    %1666 = vmatprep.subr.mxu0 0.0
    %1667 = vmatpush1.msra.mxu0 0.0
    %1668 = vmatprep.mubr.f32.mxu0 0.0
    %1669 = vmatmul.mubr.f32.gmra.mrb[0].mxu0 %v1532
    %v1670 = vpop.f32.mrb[0].mxu0
    %v1671 = vadd.f32 0.0, %v1670
    %v1672 = vpop.f32.mrb[0].mxu0
    %v1673 = vadd.f32 0.0, %v1672
    %1674 = vdwg.mxu0
    %1675 = vmatprep.subr.mxu0 %v1543
    %1676 = vmatpush1.msra.mxu0 %v1542
    %1677 = vmatprep.subr.mxu0 %v1547
    %1678 = vmatpush1.msra.mxu0 %v1546
    %1679 = vmatprep.subr.mxu0 %v1551
    %1680 = vmatpush1.msra.mxu0 %v1550
    %1681 = vmatprep.subr.mxu0 %v1555
    %1682 = vmatpush1.msra.mxu0 %v1554
    %1683 = vmatprep.subr.mxu0 %v1559
    %1684 = vmatpush1.msra.mxu0 %v1558
    %1685 = vmatprep.subr.mxu0 %v1563
    %1686 = vmatpush1.msra.mxu0 %v1562
    %1687 = vmatprep.subr.mxu0 %v1567
    %1688 = vmatpush1.msra.mxu0 %v1566
    %1689 = vmatprep.subr.mxu0 %v1571
    %1690 = vmatpush1.msra.mxu0 %v1570
    %1691 = vmatprep.subr.mxu0 %v1575
    %1692 = vmatpush1.msra.mxu0 %v1574
    %1693 = vmatprep.subr.mxu0 %v1579
    %1694 = vmatpush1.msra.mxu0 %v1578
    %1695 = vmatprep.subr.mxu0 %v1583
    %1696 = vmatpush1.msra.mxu0 %v1582
    %1697 = vmatprep.subr.mxu0 %v1587
    %1698 = vmatpush1.msra.mxu0 %v1586
    %1699 = vmatprep.subr.mxu0 %v1591
    %1700 = vmatpush1.msra.mxu0 %v1590
    %1701 = vmatprep.subr.mxu0 %v1595
    %1702 = vmatpush1.msra.mxu0 %v1594
    %1703 = vmatprep.subr.mxu0 %v1599
    %1704 = vmatpush1.msra.mxu0 %v1598
    %1705 = vmatprep.subr.mxu0 %v1603
    %1706 = vmatpush1.msra.mxu0 %v1602
    %1707 = vmatprep.subr.mxu0 0.0
    %1708 = vmatpush1.msra.mxu0 0.0
    %1709 = vmatprep.subr.mxu0 0.0
    %1710 = vmatpush1.msra.mxu0 0.0
    %1711 = vmatprep.subr.mxu0 0.0
    %1712 = vmatpush1.msra.mxu0 0.0
    %1713 = vmatprep.subr.mxu0 0.0
    %1714 = vmatpush1.msra.mxu0 0.0
    %1715 = vmatprep.subr.mxu0 0.0
    %1716 = vmatpush1.msra.mxu0 0.0
    %1717 = vmatprep.subr.mxu0 0.0
    %1718 = vmatpush1.msra.mxu0 0.0
    %1719 = vmatprep.subr.mxu0 0.0
    %1720 = vmatpush1.msra.mxu0 0.0
    %1721 = vmatprep.subr.mxu0 0.0
    %1722 = vmatpush1.msra.mxu0 0.0
    %1723 = vmatprep.subr.mxu0 0.0
    %1724 = vmatpush1.msra.mxu0 0.0
    %1725 = vmatprep.subr.mxu0 0.0
    %1726 = vmatpush1.msra.mxu0 0.0
    %1727 = vmatprep.subr.mxu0 0.0
    %1728 = vmatpush1.msra.mxu0 0.0
    %1729 = vmatprep.subr.mxu0 0.0
    %1730 = vmatpush1.msra.mxu0 0.0
    %1731 = vmatprep.subr.mxu0 0.0
    %1732 = vmatpush1.msra.mxu0 0.0
    %1733 = vmatprep.subr.mxu0 0.0
    %1734 = vmatpush1.msra.mxu0 0.0
    %1735 = vmatprep.subr.mxu0 0.0
    %1736 = vmatpush1.msra.mxu0 0.0
    %1737 = vmatprep.subr.mxu0 0.0
    %1738 = vmatpush1.msra.mxu0 0.0
    %1739 = vmatprep.mubr.f32.mxu0 0.0
    %1740 = vmatmul.mubr.f32.gmra.mrb[0].mxu0 %v1532
    %v1741 = vpop.f32.mrb[0].mxu0
    %v1742 = vadd.f32 0.0, %v1741
    %v1743 = vpop.f32.mrb[0].mxu0
    %v1744 = vadd.f32 0.0, %v1743
    %1745 = vdwg.mxu0
    %v1746 = vadd.f32 %v1536, %v1671
    %v1747 = vadd.f32 %v1537, %v1673
    %v1748 = vadd.f32 %v1538, %v1742
    %v1749 = vadd.f32 %v1539, %v1744
    %v1750 = vxor.u32 %v1746, 2147483648
    %v1751 = vmul.f32 %v1750, 1.442695
    %v1752 = vpow.pop %v1751
    %v1753 = vadd.f32 %v1752, 1.0
    %v1754 = vrcp.pop %v1753
    %v1755 = vmul.f32 1.0, %v1754
    %v1756 = vxor.u32 %v1747, 2147483648
    %v1757 = vmul.f32 %v1756, 1.442695
    %v1758 = vpow.pop %v1757
    %v1759 = vadd.f32 %v1758, 1.0
    %v1760 = vrcp.pop %v1759
    %v1761 = vmul.f32 1.0, %v1760
    %v1762 = vtanh.pop %v1748
    %v1763 = vxor.u32 %v1749, 2147483648
    %v1764 = vmul.f32 %v1763, 1.442695
    %v1765 = vpow.pop %v1764
    %v1766 = vadd.f32 %v1765, 1.0
    %v1767 = vrcp.pop %v1766
    %v1768 = vmul.f32 1.0, %v1767
    %v1769 = vmul.f32 %v1761, %v1047
    %v1770 = vmul.f32 %v1755, %v1762
    %v1771 = vadd.f32 %v1769, %v1770
    %v1772 = vtanh.pop %v1771
    %v1773 = vmul.f32 %v1768, %v1772
    %s1774 = scalar_lea.vmem %s1, 16
    %v1775 = vld [vmem:[%s1774] sm:$0xff]
    %v1776 = vmul.f32 %v1775, 0.33333334
    %1778 = vset.pattern.permute.xlu0 0
    %1779 = vperm.xlu0 %1778, %v1776
    %v1780 = vpop.permute.xlu0 %1779
    %v1782 = vld [vmem:[#allocation9] sm:$0xff]
    %v1783 = vld [vmem:[#allocation9 + $0x8] sm:$0xff]
    %v1784 = vld [vmem:[#allocation9 + $0x10] sm:$0xff]
    %v1785 = vld [vmem:[#allocation9 + $0x18] sm:$0xff]
    %v1786 = vld [vmem:[#allocation9 + $0x20] sm:$0xff]
    %v1787 = vld [vmem:[#allocation9 + $0x28] sm:$0xff]
    %v1788 = vld [vmem:[#allocation9 + $0x30] sm:$0xff]
    %v1789 = vld [vmem:[#allocation9 + $0x38] sm:$0xff]
    %v1790 = vld [vmem:[#allocation9 + $0x40] sm:$0xff]
    %v1791 = vld [vmem:[#allocation9 + $0x48] sm:$0xff]
    %v1792 = vld [vmem:[#allocation9 + $0x50] sm:$0xff]
    %v1793 = vld [vmem:[#allocation9 + $0x58] sm:$0xff]
    %v1794 = vld [vmem:[#allocation9 + $0x60] sm:$0xff]
    %v1795 = vld [vmem:[#allocation9 + $0x68] sm:$0xff]
    %v1796 = vld [vmem:[#allocation9 + $0x70] sm:$0xff]
    %v1797 = vld [vmem:[#allocation9 + $0x78] sm:$0xff]
    %v1798 = vld [vmem:[%s4] sm:$0x1]
    %v1800 = vlaneseq
    %v1801 = vshrl.u32 %v1800, 7
    %v1802 = vsub.s32 0, %v1801
    %v1803 = vrot.slane %v1798, %v1802
    %1805 = vmatprep.subr.mxu0 0.0
    %1806 = vmatpush1.msra.mxu0 %v1782
    %1807 = vmatprep.subr.mxu0 0.0
    %1808 = vmatpush1.msra.mxu0 %v1783
    %1809 = vmatprep.subr.mxu0 0.0
    %1810 = vmatpush1.msra.mxu0 %v1784
    %1811 = vmatprep.subr.mxu0 0.0
    %1812 = vmatpush1.msra.mxu0 %v1785
    %1813 = vmatprep.subr.mxu0 0.0
    %1814 = vmatpush1.msra.mxu0 %v1786
    %1815 = vmatprep.subr.mxu0 0.0
    %1816 = vmatpush1.msra.mxu0 %v1787
    %1817 = vmatprep.subr.mxu0 0.0
    %1818 = vmatpush1.msra.mxu0 %v1788
    %1819 = vmatprep.subr.mxu0 0.0
    %1820 = vmatpush1.msra.mxu0 %v1789
    %1821 = vmatprep.subr.mxu0 0.0
    %1822 = vmatpush1.msra.mxu0 %v1790
    %1823 = vmatprep.subr.mxu0 0.0
    %1824 = vmatpush1.msra.mxu0 %v1791
    %1825 = vmatprep.subr.mxu0 0.0
    %1826 = vmatpush1.msra.mxu0 %v1792
    %1827 = vmatprep.subr.mxu0 0.0
    %1828 = vmatpush1.msra.mxu0 %v1793
    %1829 = vmatprep.subr.mxu0 0.0
    %1830 = vmatpush1.msra.mxu0 %v1794
    %1831 = vmatprep.subr.mxu0 0.0
    %1832 = vmatpush1.msra.mxu0 %v1795
    %1833 = vmatprep.subr.mxu0 0.0
    %1834 = vmatpush1.msra.mxu0 %v1796
    %1835 = vmatprep.subr.mxu0 0.0
    %1836 = vmatpush1.msra.mxu0 %v1797
    %1837 = vmatprep.subr.mxu0 0.0
    %1838 = vmatpush1.msra.mxu0 0.0
    %1839 = vmatprep.subr.mxu0 0.0
    %1840 = vmatpush1.msra.mxu0 0.0
    %1841 = vmatprep.subr.mxu0 0.0
    %1842 = vmatpush1.msra.mxu0 0.0
    %1843 = vmatprep.subr.mxu0 0.0
    %1844 = vmatpush1.msra.mxu0 0.0
    %1845 = vmatprep.subr.mxu0 0.0
    %1846 = vmatpush1.msra.mxu0 0.0
    %1847 = vmatprep.subr.mxu0 0.0
    %1848 = vmatpush1.msra.mxu0 0.0
    %1849 = vmatprep.subr.mxu0 0.0
    %1850 = vmatpush1.msra.mxu0 0.0
    %1851 = vmatprep.subr.mxu0 0.0
    %1852 = vmatpush1.msra.mxu0 0.0
    %1853 = vmatprep.subr.mxu0 0.0
    %1854 = vmatpush1.msra.mxu0 0.0
    %1855 = vmatprep.subr.mxu0 0.0
    %1856 = vmatpush1.msra.mxu0 0.0
    %1857 = vmatprep.subr.mxu0 0.0
    %1858 = vmatpush1.msra.mxu0 0.0
    %1859 = vmatprep.subr.mxu0 0.0
    %1860 = vmatpush1.msra.mxu0 0.0
    %1861 = vmatprep.subr.mxu0 0.0
    %1862 = vmatpush1.msra.mxu0 0.0
    %1863 = vmatprep.subr.mxu0 0.0
    %1864 = vmatpush1.msra.mxu0 0.0
    %1865 = vmatprep.subr.mxu0 0.0
    %1866 = vmatpush1.msra.mxu0 0.0
    %1867 = vmatprep.subr.mxu0 0.0
    %1868 = vmatpush1.msra.mxu0 0.0
    %1869 = vmatprep.mubr.f32.mxu0 0.0
    %1870 = vmatmul.mubr.f32.gmra.mrb[0].mxu0 %v1773
    %v1871 = vpop.f32.mrb[0].mxu0
    %v1872 = vadd.f32 %v1803, %v1871
    %v1873 = vpop.f32.mrb[0].mxu0
    %1874 = vdwg.mxu0
    %v1875 = vtanh.pop %v1872
    %v1876 = vld [vmem:[#allocation10] sm:$0xff]
    %v1877 = vld [vmem:[#allocation10 + $0x8] sm:$0xff]
    %v1878 = vld [vmem:[#allocation10 + $0x10] sm:$0xff]
    %v1879 = vld [vmem:[#allocation10 + $0x18] sm:$0xff]
    %v1880 = vld [vmem:[#allocation10 + $0x20] sm:$0xff]
    %v1881 = vld [vmem:[#allocation10 + $0x28] sm:$0xff]
    %v1882 = vld [vmem:[#allocation10 + $0x30] sm:$0xff]
    %v1883 = vld [vmem:[#allocation10 + $0x38] sm:$0xff]
    %v1884 = vld [vmem:[#allocation10 + $0x40] sm:$0xff]
    %v1885 = vld [vmem:[#allocation10 + $0x48] sm:$0xff]
    %v1886 = vld [vmem:[#allocation10 + $0x50] sm:$0xff]
    %v1887 = vld [vmem:[#allocation10 + $0x58] sm:$0xff]
    %v1888 = vld [vmem:[#allocation10 + $0x60] sm:$0xff]
    %v1889 = vld [vmem:[#allocation10 + $0x68] sm:$0xff]
    %v1890 = vld [vmem:[#allocation10 + $0x70] sm:$0xff]
    %v1891 = vld [vmem:[#allocation10 + $0x78] sm:$0xff]
    %v1892 = vld [vmem:[%s6] sm:$0x1]
    %v1894 = vlaneseq
    %v1895 = vshrl.u32 %v1894, 7
    %v1896 = vsub.s32 0, %v1895
    %v1897 = vrot.slane %v1892, %v1896
    %1899 = vmatprep.subr.mxu0 0.0
    %1900 = vmatpush1.msra.mxu0 %v1876
    %1901 = vmatprep.subr.mxu0 0.0
    %1902 = vmatpush1.msra.mxu0 %v1877
    %1903 = vmatprep.subr.mxu0 0.0
    %1904 = vmatpush1.msra.mxu0 %v1878
    %1905 = vmatprep.subr.mxu0 0.0
    %1906 = vmatpush1.msra.mxu0 %v1879
    %1907 = vmatprep.subr.mxu0 0.0
    %1908 = vmatpush1.msra.mxu0 %v1880
    %1909 = vmatprep.subr.mxu0 0.0
    %1910 = vmatpush1.msra.mxu0 %v1881
    %1911 = vmatprep.subr.mxu0 0.0
    %1912 = vmatpush1.msra.mxu0 %v1882
    %1913 = vmatprep.subr.mxu0 0.0
    %1914 = vmatpush1.msra.mxu0 %v1883
    %1915 = vmatprep.subr.mxu0 0.0
    %1916 = vmatpush1.msra.mxu0 %v1884
    %1917 = vmatprep.subr.mxu0 0.0
    %1918 = vmatpush1.msra.mxu0 %v1885
    %1919 = vmatprep.subr.mxu0 0.0
    %1920 = vmatpush1.msra.mxu0 %v1886
    %1921 = vmatprep.subr.mxu0 0.0
    %1922 = vmatpush1.msra.mxu0 %v1887
    %1923 = vmatprep.subr.mxu0 0.0
    %1924 = vmatpush1.msra.mxu0 %v1888
    %1925 = vmatprep.subr.mxu0 0.0
    %1926 = vmatpush1.msra.mxu0 %v1889
    %1927 = vmatprep.subr.mxu0 0.0
    %1928 = vmatpush1.msra.mxu0 %v1890
    %1929 = vmatprep.subr.mxu0 0.0
    %1930 = vmatpush1.msra.mxu0 %v1891
    %1931 = vmatprep.subr.mxu0 0.0
    %1932 = vmatpush1.msra.mxu0 0.0
    %1933 = vmatprep.subr.mxu0 0.0
    %1934 = vmatpush1.msra.mxu0 0.0
    %1935 = vmatprep.subr.mxu0 0.0
    %1936 = vmatpush1.msra.mxu0 0.0
    %1937 = vmatprep.subr.mxu0 0.0
    %1938 = vmatpush1.msra.mxu0 0.0
    %1939 = vmatprep.subr.mxu0 0.0
    %1940 = vmatpush1.msra.mxu0 0.0
    %1941 = vmatprep.subr.mxu0 0.0
    %1942 = vmatpush1.msra.mxu0 0.0
    %1943 = vmatprep.subr.mxu0 0.0
    %1944 = vmatpush1.msra.mxu0 0.0
    %1945 = vmatprep.subr.mxu0 0.0
    %1946 = vmatpush1.msra.mxu0 0.0
    %1947 = vmatprep.subr.mxu0 0.0
    %1948 = vmatpush1.msra.mxu0 0.0
    %1949 = vmatprep.subr.mxu0 0.0
    %1950 = vmatpush1.msra.mxu0 0.0
    %1951 = vmatprep.subr.mxu0 0.0
    %1952 = vmatpush1.msra.mxu0 0.0
    %1953 = vmatprep.subr.mxu0 0.0
    %1954 = vmatpush1.msra.mxu0 0.0
    %1955 = vmatprep.subr.mxu0 0.0
    %1956 = vmatpush1.msra.mxu0 0.0
    %1957 = vmatprep.subr.mxu0 0.0
    %1958 = vmatpush1.msra.mxu0 0.0
    %1959 = vmatprep.subr.mxu0 0.0
    %1960 = vmatpush1.msra.mxu0 0.0
    %1961 = vmatprep.subr.mxu0 0.0
    %1962 = vmatpush1.msra.mxu0 0.0
    %1963 = vmatprep.mubr.f32.mxu0 0.0
    %1964 = vmatmul.mubr.f32.gmra.mrb[0].mxu0 %v1875
    %v1965 = vpop.f32.mrb[0].mxu0
    %v1966 = vadd.f32 %v1897, %v1965
    %v1967 = vpop.f32.mrb[0].mxu0
    %1968 = vdwg.mxu0
    %v1969 = vmul.f32 %v1780, %v1966
    %v1970 = vadd.f32 %v1773, %v1969
    %1971 = vmatprep.subr.mxu0 0.0
    %1972 = vmatpush1.msra.mxu0 %v1782
    %1973 = vmatprep.subr.mxu0 0.0
    %1974 = vmatpush1.msra.mxu0 %v1783
    %1975 = vmatprep.subr.mxu0 0.0
    %1976 = vmatpush1.msra.mxu0 %v1784
    %1977 = vmatprep.subr.mxu0 0.0
    %1978 = vmatpush1.msra.mxu0 %v1785
    %1979 = vmatprep.subr.mxu0 0.0
    %1980 = vmatpush1.msra.mxu0 %v1786
    %1981 = vmatprep.subr.mxu0 0.0
    %1982 = vmatpush1.msra.mxu0 %v1787
    %1983 = vmatprep.subr.mxu0 0.0
    %1984 = vmatpush1.msra.mxu0 %v1788
    %1985 = vmatprep.subr.mxu0 0.0
    %1986 = vmatpush1.msra.mxu0 %v1789
    %1987 = vmatprep.subr.mxu0 0.0
    %1988 = vmatpush1.msra.mxu0 %v1790
    %1989 = vmatprep.subr.mxu0 0.0
    %1990 = vmatpush1.msra.mxu0 %v1791
    %1991 = vmatprep.subr.mxu0 0.0
    %1992 = vmatpush1.msra.mxu0 %v1792
    %1993 = vmatprep.subr.mxu0 0.0
    %1994 = vmatpush1.msra.mxu0 %v1793
    %1995 = vmatprep.subr.mxu0 0.0
    %1996 = vmatpush1.msra.mxu0 %v1794
    %1997 = vmatprep.subr.mxu0 0.0
    %1998 = vmatpush1.msra.mxu0 %v1795
    %1999 = vmatprep.subr.mxu0 0.0
    %2000 = vmatpush1.msra.mxu0 %v1796
    %2001 = vmatprep.subr.mxu0 0.0
    %2002 = vmatpush1.msra.mxu0 %v1797
    %2003 = vmatprep.subr.mxu0 0.0
    %2004 = vmatpush1.msra.mxu0 0.0
    %2005 = vmatprep.subr.mxu0 0.0
    %2006 = vmatpush1.msra.mxu0 0.0
    %2007 = vmatprep.subr.mxu0 0.0
    %2008 = vmatpush1.msra.mxu0 0.0
    %2009 = vmatprep.subr.mxu0 0.0
    %2010 = vmatpush1.msra.mxu0 0.0
    %2011 = vmatprep.subr.mxu0 0.0
    %2012 = vmatpush1.msra.mxu0 0.0
    %2013 = vmatprep.subr.mxu0 0.0
    %2014 = vmatpush1.msra.mxu0 0.0
    %2015 = vmatprep.subr.mxu0 0.0
    %2016 = vmatpush1.msra.mxu0 0.0
    %2017 = vmatprep.subr.mxu0 0.0
    %2018 = vmatpush1.msra.mxu0 0.0
    %2019 = vmatprep.subr.mxu0 0.0
    %2020 = vmatpush1.msra.mxu0 0.0
    %2021 = vmatprep.subr.mxu0 0.0
    %2022 = vmatpush1.msra.mxu0 0.0
    %2023 = vmatprep.subr.mxu0 0.0
    %2024 = vmatpush1.msra.mxu0 0.0
    %2025 = vmatprep.subr.mxu0 0.0
    %2026 = vmatpush1.msra.mxu0 0.0
    %2027 = vmatprep.subr.mxu0 0.0
    %2028 = vmatpush1.msra.mxu0 0.0
    %2029 = vmatprep.subr.mxu0 0.0
    %2030 = vmatpush1.msra.mxu0 0.0
    %2031 = vmatprep.subr.mxu0 0.0
    %2032 = vmatpush1.msra.mxu0 0.0
    %2033 = vmatprep.subr.mxu0 0.0
    %2034 = vmatpush1.msra.mxu0 0.0
    %2035 = vmatprep.mubr.f32.mxu0 0.0
    %2036 = vmatmul.mubr.f32.gmra.mrb[0].mxu0 %v1970
    %v2037 = vpop.f32.mrb[0].mxu0
    %v2038 = vadd.f32 %v1803, %v2037
    %v2039 = vpop.f32.mrb[0].mxu0
    %2040 = vdwg.mxu0
    %v2041 = vtanh.pop %v2038
    %2042 = vmatprep.subr.mxu0 0.0
    %2043 = vmatpush1.msra.mxu0 %v1876
    %2044 = vmatprep.subr.mxu0 0.0
    %2045 = vmatpush1.msra.mxu0 %v1877
    %2046 = vmatprep.subr.mxu0 0.0
    %2047 = vmatpush1.msra.mxu0 %v1878
    %2048 = vmatprep.subr.mxu0 0.0
    %2049 = vmatpush1.msra.mxu0 %v1879
    %2050 = vmatprep.subr.mxu0 0.0
    %2051 = vmatpush1.msra.mxu0 %v1880
    %2052 = vmatprep.subr.mxu0 0.0
    %2053 = vmatpush1.msra.mxu0 %v1881
    %2054 = vmatprep.subr.mxu0 0.0
    %2055 = vmatpush1.msra.mxu0 %v1882
    %2056 = vmatprep.subr.mxu0 0.0
    %2057 = vmatpush1.msra.mxu0 %v1883
    %2058 = vmatprep.subr.mxu0 0.0
    %2059 = vmatpush1.msra.mxu0 %v1884
    %2060 = vmatprep.subr.mxu0 0.0
    %2061 = vmatpush1.msra.mxu0 %v1885
    %2062 = vmatprep.subr.mxu0 0.0
    %2063 = vmatpush1.msra.mxu0 %v1886
    %2064 = vmatprep.subr.mxu0 0.0
    %2065 = vmatpush1.msra.mxu0 %v1887
    %2066 = vmatprep.subr.mxu0 0.0
    %2067 = vmatpush1.msra.mxu0 %v1888
    %2068 = vmatprep.subr.mxu0 0.0
    %2069 = vmatpush1.msra.mxu0 %v1889
    %2070 = vmatprep.subr.mxu0 0.0
    %2071 = vmatpush1.msra.mxu0 %v1890
    %2072 = vmatprep.subr.mxu0 0.0
    %2073 = vmatpush1.msra.mxu0 %v1891
    %2074 = vmatprep.subr.mxu0 0.0
    %2075 = vmatpush1.msra.mxu0 0.0
    %2076 = vmatprep.subr.mxu0 0.0
    %2077 = vmatpush1.msra.mxu0 0.0
    %2078 = vmatprep.subr.mxu0 0.0
    %2079 = vmatpush1.msra.mxu0 0.0
    %2080 = vmatprep.subr.mxu0 0.0
    %2081 = vmatpush1.msra.mxu0 0.0
    %2082 = vmatprep.subr.mxu0 0.0
    %2083 = vmatpush1.msra.mxu0 0.0
    %2084 = vmatprep.subr.mxu0 0.0
    %2085 = vmatpush1.msra.mxu0 0.0
    %2086 = vmatprep.subr.mxu0 0.0
    %2087 = vmatpush1.msra.mxu0 0.0
    %2088 = vmatprep.subr.mxu0 0.0
    %2089 = vmatpush1.msra.mxu0 0.0
    %2090 = vmatprep.subr.mxu0 0.0
    %2091 = vmatpush1.msra.mxu0 0.0
    %2092 = vmatprep.subr.mxu0 0.0
    %2093 = vmatpush1.msra.mxu0 0.0
    %2094 = vmatprep.subr.mxu0 0.0
    %2095 = vmatpush1.msra.mxu0 0.0
    %2096 = vmatprep.subr.mxu0 0.0
    %2097 = vmatpush1.msra.mxu0 0.0
    %2098 = vmatprep.subr.mxu0 0.0
    %2099 = vmatpush1.msra.mxu0 0.0
    %2100 = vmatprep.subr.mxu0 0.0
    %2101 = vmatpush1.msra.mxu0 0.0
    %2102 = vmatprep.subr.mxu0 0.0
    %2103 = vmatpush1.msra.mxu0 0.0
    %2104 = vmatprep.subr.mxu0 0.0
    %2105 = vmatpush1.msra.mxu0 0.0
    %2106 = vmatprep.mubr.f32.mxu0 0.0
    %2107 = vmatmul.mubr.f32.gmra.mrb[0].mxu0 %v2041
    %v2108 = vpop.f32.mrb[0].mxu0
    %v2109 = vadd.f32 %v1897, %v2108
    %v2110 = vpop.f32.mrb[0].mxu0
    %2111 = vdwg.mxu0
    %v2112 = vmul.f32 %v1780, %v2109
    %v2113 = vadd.f32 %v1970, %v2112
    %2114 = vmatprep.subr.mxu0 0.0
    %2115 = vmatpush1.msra.mxu0 %v1782
    %2116 = vmatprep.subr.mxu0 0.0
    %2117 = vmatpush1.msra.mxu0 %v1783
    %2118 = vmatprep.subr.mxu0 0.0
    %2119 = vmatpush1.msra.mxu0 %v1784
    %2120 = vmatprep.subr.mxu0 0.0
    %2121 = vmatpush1.msra.mxu0 %v1785
    %2122 = vmatprep.subr.mxu0 0.0
    %2123 = vmatpush1.msra.mxu0 %v1786
    %2124 = vmatprep.subr.mxu0 0.0
    %2125 = vmatpush1.msra.mxu0 %v1787
    %2126 = vmatprep.subr.mxu0 0.0
    %2127 = vmatpush1.msra.mxu0 %v1788
    %2128 = vmatprep.subr.mxu0 0.0
    %2129 = vmatpush1.msra.mxu0 %v1789
    %2130 = vmatprep.subr.mxu0 0.0
    %2131 = vmatpush1.msra.mxu0 %v1790
    %2132 = vmatprep.subr.mxu0 0.0
    %2133 = vmatpush1.msra.mxu0 %v1791
    %2134 = vmatprep.subr.mxu0 0.0
    %2135 = vmatpush1.msra.mxu0 %v1792
    %2136 = vmatprep.subr.mxu0 0.0
    %2137 = vmatpush1.msra.mxu0 %v1793
    %2138 = vmatprep.subr.mxu0 0.0
    %2139 = vmatpush1.msra.mxu0 %v1794
    %2140 = vmatprep.subr.mxu0 0.0
    %2141 = vmatpush1.msra.mxu0 %v1795
    %2142 = vmatprep.subr.mxu0 0.0
    %2143 = vmatpush1.msra.mxu0 %v1796
    %2144 = vmatprep.subr.mxu0 0.0
    %2145 = vmatpush1.msra.mxu0 %v1797
    %2146 = vmatprep.subr.mxu0 0.0
    %2147 = vmatpush1.msra.mxu0 0.0
    %2148 = vmatprep.subr.mxu0 0.0
    %2149 = vmatpush1.msra.mxu0 0.0
    %2150 = vmatprep.subr.mxu0 0.0
    %2151 = vmatpush1.msra.mxu0 0.0
    %2152 = vmatprep.subr.mxu0 0.0
    %2153 = vmatpush1.msra.mxu0 0.0
    %2154 = vmatprep.subr.mxu0 0.0
    %2155 = vmatpush1.msra.mxu0 0.0
    %2156 = vmatprep.subr.mxu0 0.0
    %2157 = vmatpush1.msra.mxu0 0.0
    %2158 = vmatprep.subr.mxu0 0.0
    %2159 = vmatpush1.msra.mxu0 0.0
    %2160 = vmatprep.subr.mxu0 0.0
    %2161 = vmatpush1.msra.mxu0 0.0
    %2162 = vmatprep.subr.mxu0 0.0
    %2163 = vmatpush1.msra.mxu0 0.0
    %2164 = vmatprep.subr.mxu0 0.0
    %2165 = vmatpush1.msra.mxu0 0.0
    %2166 = vmatprep.subr.mxu0 0.0
    %2167 = vmatpush1.msra.mxu0 0.0
    %2168 = vmatprep.subr.mxu0 0.0
    %2169 = vmatpush1.msra.mxu0 0.0
    %2170 = vmatprep.subr.mxu0 0.0
    %2171 = vmatpush1.msra.mxu0 0.0
    %2172 = vmatprep.subr.mxu0 0.0
    %2173 = vmatpush1.msra.mxu0 0.0
    %2174 = vmatprep.subr.mxu0 0.0
    %2175 = vmatpush1.msra.mxu0 0.0
    %2176 = vmatprep.subr.mxu0 0.0
    %2177 = vmatpush1.msra.mxu0 0.0
    %2178 = vmatprep.mubr.f32.mxu0 0.0
    %2179 = vmatmul.mubr.f32.gmra.mrb[0].mxu0 %v2113
    %v2180 = vpop.f32.mrb[0].mxu0
    %v2181 = vadd.f32 %v1803, %v2180
    %v2182 = vpop.f32.mrb[0].mxu0
    %2183 = vdwg.mxu0
    %v2184 = vtanh.pop %v2181
    %2185 = vmatprep.subr.mxu0 0.0
    %2186 = vmatpush1.msra.mxu0 %v1876
    %2187 = vmatprep.subr.mxu0 0.0
    %2188 = vmatpush1.msra.mxu0 %v1877
    %2189 = vmatprep.subr.mxu0 0.0
    %2190 = vmatpush1.msra.mxu0 %v1878
    %2191 = vmatprep.subr.mxu0 0.0
    %2192 = vmatpush1.msra.mxu0 %v1879
    %2193 = vmatprep.subr.mxu0 0.0
    %2194 = vmatpush1.msra.mxu0 %v1880
    %2195 = vmatprep.subr.mxu0 0.0
    %2196 = vmatpush1.msra.mxu0 %v1881
    %2197 = vmatprep.subr.mxu0 0.0
    %2198 = vmatpush1.msra.mxu0 %v1882
    %2199 = vmatprep.subr.mxu0 0.0
    %2200 = vmatpush1.msra.mxu0 %v1883
    %2201 = vmatprep.subr.mxu0 0.0
    %2202 = vmatpush1.msra.mxu0 %v1884
    %2203 = vmatprep.subr.mxu0 0.0
    %2204 = vmatpush1.msra.mxu0 %v1885
    %2205 = vmatprep.subr.mxu0 0.0
    %2206 = vmatpush1.msra.mxu0 %v1886
    %2207 = vmatprep.subr.mxu0 0.0
    %2208 = vmatpush1.msra.mxu0 %v1887
    %2209 = vmatprep.subr.mxu0 0.0
    %2210 = vmatpush1.msra.mxu0 %v1888
    %2211 = vmatprep.subr.mxu0 0.0
    %2212 = vmatpush1.msra.mxu0 %v1889
    %2213 = vmatprep.subr.mxu0 0.0
    %2214 = vmatpush1.msra.mxu0 %v1890
    %2215 = vmatprep.subr.mxu0 0.0
    %2216 = vmatpush1.msra.mxu0 %v1891
    %2217 = vmatprep.subr.mxu0 0.0
    %2218 = vmatpush1.msra.mxu0 0.0
    %2219 = vmatprep.subr.mxu0 0.0
    %2220 = vmatpush1.msra.mxu0 0.0
    %2221 = vmatprep.subr.mxu0 0.0
    %2222 = vmatpush1.msra.mxu0 0.0
    %2223 = vmatprep.subr.mxu0 0.0
    %2224 = vmatpush1.msra.mxu0 0.0
    %2225 = vmatprep.subr.mxu0 0.0
    %2226 = vmatpush1.msra.mxu0 0.0
    %2227 = vmatprep.subr.mxu0 0.0
    %2228 = vmatpush1.msra.mxu0 0.0
    %2229 = vmatprep.subr.mxu0 0.0
    %2230 = vmatpush1.msra.mxu0 0.0
    %2231 = vmatprep.subr.mxu0 0.0
    %2232 = vmatpush1.msra.mxu0 0.0
    %2233 = vmatprep.subr.mxu0 0.0
    %2234 = vmatpush1.msra.mxu0 0.0
    %2235 = vmatprep.subr.mxu0 0.0
    %2236 = vmatpush1.msra.mxu0 0.0
    %2237 = vmatprep.subr.mxu0 0.0
    %2238 = vmatpush1.msra.mxu0 0.0
    %2239 = vmatprep.subr.mxu0 0.0
    %2240 = vmatpush1.msra.mxu0 0.0
    %2241 = vmatprep.subr.mxu0 0.0
    %2242 = vmatpush1.msra.mxu0 0.0
    %2243 = vmatprep.subr.mxu0 0.0
    %2244 = vmatpush1.msra.mxu0 0.0
    %2245 = vmatprep.subr.mxu0 0.0
    %2246 = vmatpush1.msra.mxu0 0.0
    %2247 = vmatprep.subr.mxu0 0.0
    %2248 = vmatpush1.msra.mxu0 0.0
    %2249 = vmatprep.mubr.f32.mxu0 0.0
    %2250 = vmatmul.mubr.f32.gmra.mrb[0].mxu0 %v2184
    %v2251 = vpop.f32.mrb[0].mxu0
    %v2252 = vadd.f32 %v1897, %v2251
    %v2253 = vpop.f32.mrb[0].mxu0
    %2254 = vdwg.mxu0
    %v2255 = vmul.f32 %v1780, %v2252
    %v2256 = vadd.f32 %v2113, %v2255
    %s2257 = scalar_lea.vmem [#allocation12], 16
    %2258 = vst [vmem:[%s2257] sm:$0xff] %v2256
    %s2259 = scalar_lea.vmem [#allocation4], 96
    %v2260 = vld [vmem:[%s2259] sm:$0xff]
    %v2261 = vld [vmem:[%s2259 + $0x8] sm:$0xff]
    %v2262 = vld [vmem:[%s2259 + $0x10] sm:$0xff]
    %v2263 = vld [vmem:[%s2259 + $0x18] sm:$0xff]
    %v2264 = vld [vmem:[#allocation7] sm:$0xff]
    %v2265 = vld [vmem:[#allocation7 + $0x8] sm:$0xff]
    %v2266 = vld [vmem:[#allocation7 + $0x10] sm:$0xff]
    %v2267 = vld [vmem:[#allocation7 + $0x18] sm:$0xff]
    %v2268 = vld [vmem:[#allocation7 + $0x20] sm:$0xff]
    %v2269 = vld [vmem:[#allocation7 + $0x28] sm:$0xff]
    %v2270 = vld [vmem:[#allocation7 + $0x30] sm:$0xff]
    %v2271 = vld [vmem:[#allocation7 + $0x38] sm:$0xff]
    %v2272 = vld [vmem:[#allocation7 + $0x40] sm:$0xff]
    %v2273 = vld [vmem:[#allocation7 + $0x48] sm:$0xff]
    %v2274 = vld [vmem:[#allocation7 + $0x50] sm:$0xff]
    %v2275 = vld [vmem:[#allocation7 + $0x58] sm:$0xff]
    %v2276 = vld [vmem:[#allocation7 + $0x60] sm:$0xff]
    %v2277 = vld [vmem:[#allocation7 + $0x68] sm:$0xff]
    %v2278 = vld [vmem:[#allocation7 + $0x70] sm:$0xff]
    %v2279 = vld [vmem:[#allocation7 + $0x78] sm:$0xff]
    %v2280 = vld [vmem:[#allocation7 + $0x80] sm:$0xff]
    %v2281 = vld [vmem:[#allocation7 + $0x88] sm:$0xff]
    %v2282 = vld [vmem:[#allocation7 + $0x90] sm:$0xff]
    %v2283 = vld [vmem:[#allocation7 + $0x98] sm:$0xff]
    %v2284 = vld [vmem:[#allocation7 + $0xa0] sm:$0xff]
    %v2285 = vld [vmem:[#allocation7 + $0xa8] sm:$0xff]
    %v2286 = vld [vmem:[#allocation7 + $0xb0] sm:$0xff]
    %v2287 = vld [vmem:[#allocation7 + $0xb8] sm:$0xff]
    %v2288 = vld [vmem:[#allocation7 + $0xc0] sm:$0xff]
    %v2289 = vld [vmem:[#allocation7 + $0xc8] sm:$0xff]
    %v2290 = vld [vmem:[#allocation7 + $0xd0] sm:$0xff]
    %v2291 = vld [vmem:[#allocation7 + $0xd8] sm:$0xff]
    %v2292 = vld [vmem:[#allocation7 + $0xe0] sm:$0xff]
    %v2293 = vld [vmem:[#allocation7 + $0xe8] sm:$0xff]
    %v2294 = vld [vmem:[#allocation7 + $0xf0] sm:$0xff]
    %v2295 = vld [vmem:[#allocation7 + $0xf8] sm:$0xff]
    %v2296 = vld [vmem:[#allocation7 + $0x100] sm:$0xff]
    %v2297 = vld [vmem:[#allocation7 + $0x108] sm:$0xff]
    %v2298 = vld [vmem:[#allocation7 + $0x110] sm:$0xff]
    %v2299 = vld [vmem:[#allocation7 + $0x118] sm:$0xff]
    %v2300 = vld [vmem:[#allocation7 + $0x120] sm:$0xff]
    %v2301 = vld [vmem:[#allocation7 + $0x128] sm:$0xff]
    %v2302 = vld [vmem:[#allocation7 + $0x130] sm:$0xff]
    %v2303 = vld [vmem:[#allocation7 + $0x138] sm:$0xff]
    %v2304 = vld [vmem:[#allocation7 + $0x140] sm:$0xff]
    %v2305 = vld [vmem:[#allocation7 + $0x148] sm:$0xff]
    %v2306 = vld [vmem:[#allocation7 + $0x150] sm:$0xff]
    %v2307 = vld [vmem:[#allocation7 + $0x158] sm:$0xff]
    %v2308 = vld [vmem:[#allocation7 + $0x160] sm:$0xff]
    %v2309 = vld [vmem:[#allocation7 + $0x168] sm:$0xff]
    %v2310 = vld [vmem:[#allocation7 + $0x170] sm:$0xff]
    %v2311 = vld [vmem:[#allocation7 + $0x178] sm:$0xff]
    %v2312 = vld [vmem:[#allocation7 + $0x180] sm:$0xff]
    %v2313 = vld [vmem:[#allocation7 + $0x188] sm:$0xff]
    %v2314 = vld [vmem:[#allocation7 + $0x190] sm:$0xff]
    %v2315 = vld [vmem:[#allocation7 + $0x198] sm:$0xff]
    %v2316 = vld [vmem:[#allocation7 + $0x1a0] sm:$0xff]
    %v2317 = vld [vmem:[#allocation7 + $0x1a8] sm:$0xff]
    %v2318 = vld [vmem:[#allocation7 + $0x1b0] sm:$0xff]
    %v2319 = vld [vmem:[#allocation7 + $0x1b8] sm:$0xff]
    %v2320 = vld [vmem:[#allocation7 + $0x1c0] sm:$0xff]
    %v2321 = vld [vmem:[#allocation7 + $0x1c8] sm:$0xff]
    %v2322 = vld [vmem:[#allocation7 + $0x1d0] sm:$0xff]
    %v2323 = vld [vmem:[#allocation7 + $0x1d8] sm:$0xff]
    %v2324 = vld [vmem:[#allocation7 + $0x1e0] sm:$0xff]
    %v2325 = vld [vmem:[#allocation7 + $0x1e8] sm:$0xff]
    %v2326 = vld [vmem:[#allocation7 + $0x1f0] sm:$0xff]
    %v2327 = vld [vmem:[#allocation7 + $0x1f8] sm:$0xff]
    %2328 = vmatprep.subr.mxu0 %v2265
    %2329 = vmatpush1.msra.mxu0 %v2264
    %2330 = vmatprep.subr.mxu0 %v2269
    %2331 = vmatpush1.msra.mxu0 %v2268
    %2332 = vmatprep.subr.mxu0 %v2273
    %2333 = vmatpush1.msra.mxu0 %v2272
    %2334 = vmatprep.subr.mxu0 %v2277
    %2335 = vmatpush1.msra.mxu0 %v2276
    %2336 = vmatprep.subr.mxu0 %v2281
    %2337 = vmatpush1.msra.mxu0 %v2280
    %2338 = vmatprep.subr.mxu0 %v2285
    %2339 = vmatpush1.msra.mxu0 %v2284
    %2340 = vmatprep.subr.mxu0 %v2289
    %2341 = vmatpush1.msra.mxu0 %v2288
    %2342 = vmatprep.subr.mxu0 %v2293
    %2343 = vmatpush1.msra.mxu0 %v2292
    %2344 = vmatprep.subr.mxu0 %v2297
    %2345 = vmatpush1.msra.mxu0 %v2296
    %2346 = vmatprep.subr.mxu0 %v2301
    %2347 = vmatpush1.msra.mxu0 %v2300
    %2348 = vmatprep.subr.mxu0 %v2305
    %2349 = vmatpush1.msra.mxu0 %v2304
    %2350 = vmatprep.subr.mxu0 %v2309
    %2351 = vmatpush1.msra.mxu0 %v2308
    %2352 = vmatprep.subr.mxu0 %v2313
    %2353 = vmatpush1.msra.mxu0 %v2312
    %2354 = vmatprep.subr.mxu0 %v2317
    %2355 = vmatpush1.msra.mxu0 %v2316
    %2356 = vmatprep.subr.mxu0 %v2321
    %2357 = vmatpush1.msra.mxu0 %v2320
    %2358 = vmatprep.subr.mxu0 %v2325
    %2359 = vmatpush1.msra.mxu0 %v2324
    %2360 = vmatprep.subr.mxu0 0.0
    %2361 = vmatpush1.msra.mxu0 0.0
    %2362 = vmatprep.subr.mxu0 0.0
    %2363 = vmatpush1.msra.mxu0 0.0
    %2364 = vmatprep.subr.mxu0 0.0
    %2365 = vmatpush1.msra.mxu0 0.0
    %2366 = vmatprep.subr.mxu0 0.0
    %2367 = vmatpush1.msra.mxu0 0.0
    %2368 = vmatprep.subr.mxu0 0.0
    %2369 = vmatpush1.msra.mxu0 0.0
    %2370 = vmatprep.subr.mxu0 0.0
    %2371 = vmatpush1.msra.mxu0 0.0
    %2372 = vmatprep.subr.mxu0 0.0
    %2373 = vmatpush1.msra.mxu0 0.0
    %2374 = vmatprep.subr.mxu0 0.0
    %2375 = vmatpush1.msra.mxu0 0.0
    %2376 = vmatprep.subr.mxu0 0.0
    %2377 = vmatpush1.msra.mxu0 0.0
    %2378 = vmatprep.subr.mxu0 0.0
    %2379 = vmatpush1.msra.mxu0 0.0
    %2380 = vmatprep.subr.mxu0 0.0
    %2381 = vmatpush1.msra.mxu0 0.0
    %2382 = vmatprep.subr.mxu0 0.0
    %2383 = vmatpush1.msra.mxu0 0.0
    %2384 = vmatprep.subr.mxu0 0.0
    %2385 = vmatpush1.msra.mxu0 0.0
    %2386 = vmatprep.subr.mxu0 0.0
    %2387 = vmatpush1.msra.mxu0 0.0
    %2388 = vmatprep.subr.mxu0 0.0
    %2389 = vmatpush1.msra.mxu0 0.0
    %2390 = vmatprep.subr.mxu0 0.0
    %2391 = vmatpush1.msra.mxu0 0.0
    %2392 = vmatprep.mubr.f32.mxu0 0.0
    %2393 = vmatmul.mubr.f32.gmra.mrb[0].mxu0 %v2256
    %v2394 = vpop.f32.mrb[0].mxu0
    %v2395 = vadd.f32 0.0, %v2394
    %v2396 = vpop.f32.mrb[0].mxu0
    %v2397 = vadd.f32 0.0, %v2396
    %2398 = vdwg.mxu0
    %2399 = vmatprep.subr.mxu0 %v2267
    %2400 = vmatpush1.msra.mxu0 %v2266
    %2401 = vmatprep.subr.mxu0 %v2271
    %2402 = vmatpush1.msra.mxu0 %v2270
    %2403 = vmatprep.subr.mxu0 %v2275
    %2404 = vmatpush1.msra.mxu0 %v2274
    %2405 = vmatprep.subr.mxu0 %v2279
    %2406 = vmatpush1.msra.mxu0 %v2278
    %2407 = vmatprep.subr.mxu0 %v2283
    %2408 = vmatpush1.msra.mxu0 %v2282
    %2409 = vmatprep.subr.mxu0 %v2287
    %2410 = vmatpush1.msra.mxu0 %v2286
    %2411 = vmatprep.subr.mxu0 %v2291
    %2412 = vmatpush1.msra.mxu0 %v2290
    %2413 = vmatprep.subr.mxu0 %v2295
    %2414 = vmatpush1.msra.mxu0 %v2294
    %2415 = vmatprep.subr.mxu0 %v2299
    %2416 = vmatpush1.msra.mxu0 %v2298
    %2417 = vmatprep.subr.mxu0 %v2303
    %2418 = vmatpush1.msra.mxu0 %v2302
    %2419 = vmatprep.subr.mxu0 %v2307
    %2420 = vmatpush1.msra.mxu0 %v2306
    %2421 = vmatprep.subr.mxu0 %v2311
    %2422 = vmatpush1.msra.mxu0 %v2310
    %2423 = vmatprep.subr.mxu0 %v2315
    %2424 = vmatpush1.msra.mxu0 %v2314
    %2425 = vmatprep.subr.mxu0 %v2319
    %2426 = vmatpush1.msra.mxu0 %v2318
    %2427 = vmatprep.subr.mxu0 %v2323
    %2428 = vmatpush1.msra.mxu0 %v2322
    %2429 = vmatprep.subr.mxu0 %v2327
    %2430 = vmatpush1.msra.mxu0 %v2326
    %2431 = vmatprep.subr.mxu0 0.0
    %2432 = vmatpush1.msra.mxu0 0.0
    %2433 = vmatprep.subr.mxu0 0.0
    %2434 = vmatpush1.msra.mxu0 0.0
    %2435 = vmatprep.subr.mxu0 0.0
    %2436 = vmatpush1.msra.mxu0 0.0
    %2437 = vmatprep.subr.mxu0 0.0
    %2438 = vmatpush1.msra.mxu0 0.0
    %2439 = vmatprep.subr.mxu0 0.0
    %2440 = vmatpush1.msra.mxu0 0.0
    %2441 = vmatprep.subr.mxu0 0.0
    %2442 = vmatpush1.msra.mxu0 0.0
    %2443 = vmatprep.subr.mxu0 0.0
    %2444 = vmatpush1.msra.mxu0 0.0
    %2445 = vmatprep.subr.mxu0 0.0
    %2446 = vmatpush1.msra.mxu0 0.0
    %2447 = vmatprep.subr.mxu0 0.0
    %2448 = vmatpush1.msra.mxu0 0.0
    %2449 = vmatprep.subr.mxu0 0.0
    %2450 = vmatpush1.msra.mxu0 0.0
    %2451 = vmatprep.subr.mxu0 0.0
    %2452 = vmatpush1.msra.mxu0 0.0
    %2453 = vmatprep.subr.mxu0 0.0
    %2454 = vmatpush1.msra.mxu0 0.0
    %2455 = vmatprep.subr.mxu0 0.0
    %2456 = vmatpush1.msra.mxu0 0.0
    %2457 = vmatprep.subr.mxu0 0.0
    %2458 = vmatpush1.msra.mxu0 0.0
    %2459 = vmatprep.subr.mxu0 0.0
    %2460 = vmatpush1.msra.mxu0 0.0
    %2461 = vmatprep.subr.mxu0 0.0
    %2462 = vmatpush1.msra.mxu0 0.0
    %2463 = vmatprep.mubr.f32.mxu0 0.0
    %2464 = vmatmul.mubr.f32.gmra.mrb[0].mxu0 %v2256
    %v2465 = vpop.f32.mrb[0].mxu0
    %v2466 = vadd.f32 0.0, %v2465
    %v2467 = vpop.f32.mrb[0].mxu0
    %v2468 = vadd.f32 0.0, %v2467
    %2469 = vdwg.mxu0
    %v2470 = vadd.f32 %v2260, %v2395
    %v2471 = vadd.f32 %v2261, %v2397
    %v2472 = vadd.f32 %v2262, %v2466
    %v2473 = vadd.f32 %v2263, %v2468
    %v2474 = vxor.u32 %v2470, 2147483648
    %v2475 = vmul.f32 %v2474, 1.442695
    %v2476 = vpow.pop %v2475
    %v2477 = vadd.f32 %v2476, 1.0
    %v2478 = vrcp.pop %v2477
    %v2479 = vmul.f32 1.0, %v2478
    %v2480 = vxor.u32 %v2471, 2147483648
    %v2481 = vmul.f32 %v2480, 1.442695
    %v2482 = vpow.pop %v2481
    %v2483 = vadd.f32 %v2482, 1.0
    %v2484 = vrcp.pop %v2483
    %v2485 = vmul.f32 1.0, %v2484
    %v2486 = vtanh.pop %v2472
    %v2487 = vxor.u32 %v2473, 2147483648
    %v2488 = vmul.f32 %v2487, 1.442695
    %v2489 = vpow.pop %v2488
    %v2490 = vadd.f32 %v2489, 1.0
    %v2491 = vrcp.pop %v2490
    %v2492 = vmul.f32 1.0, %v2491
    %v2493 = vmul.f32 %v2485, %v1771
    %v2494 = vmul.f32 %v2479, %v2486
    %v2495 = vadd.f32 %v2493, %v2494
    %v2496 = vtanh.pop %v2495
    %v2497 = vmul.f32 %v2492, %v2496
    %s2498 = scalar_lea.vmem %s1, 24
    %v2499 = vld [vmem:[%s2498] sm:$0xff]
    %v2500 = vmul.f32 %v2499, 0.33333334
    %2502 = vset.pattern.permute.xlu0 0
    %2503 = vperm.xlu0 %2502, %v2500
    %v2504 = vpop.permute.xlu0 %2503
    %v2506 = vld [vmem:[#allocation9] sm:$0xff]
    %v2507 = vld [vmem:[#allocation9 + $0x8] sm:$0xff]
    %v2508 = vld [vmem:[#allocation9 + $0x10] sm:$0xff]
    %v2509 = vld [vmem:[#allocation9 + $0x18] sm:$0xff]
    %v2510 = vld [vmem:[#allocation9 + $0x20] sm:$0xff]
    %v2511 = vld [vmem:[#allocation9 + $0x28] sm:$0xff]
    %v2512 = vld [vmem:[#allocation9 + $0x30] sm:$0xff]
    %v2513 = vld [vmem:[#allocation9 + $0x38] sm:$0xff]
    %v2514 = vld [vmem:[#allocation9 + $0x40] sm:$0xff]
    %v2515 = vld [vmem:[#allocation9 + $0x48] sm:$0xff]
    %v2516 = vld [vmem:[#allocation9 + $0x50] sm:$0xff]
    %v2517 = vld [vmem:[#allocation9 + $0x58] sm:$0xff]
    %v2518 = vld [vmem:[#allocation9 + $0x60] sm:$0xff]
    %v2519 = vld [vmem:[#allocation9 + $0x68] sm:$0xff]
    %v2520 = vld [vmem:[#allocation9 + $0x70] sm:$0xff]
    %v2521 = vld [vmem:[#allocation9 + $0x78] sm:$0xff]
    %v2522 = vld [vmem:[%s4] sm:$0x1]
    %v2524 = vlaneseq
    %v2525 = vshrl.u32 %v2524, 7
    %v2526 = vsub.s32 0, %v2525
    %v2527 = vrot.slane %v2522, %v2526
    %2529 = vmatprep.subr.mxu0 0.0
    %2530 = vmatpush1.msra.mxu0 %v2506
    %2531 = vmatprep.subr.mxu0 0.0
    %2532 = vmatpush1.msra.mxu0 %v2507
    %2533 = vmatprep.subr.mxu0 0.0
    %2534 = vmatpush1.msra.mxu0 %v2508
    %2535 = vmatprep.subr.mxu0 0.0
    %2536 = vmatpush1.msra.mxu0 %v2509
    %2537 = vmatprep.subr.mxu0 0.0
    %2538 = vmatpush1.msra.mxu0 %v2510
    %2539 = vmatprep.subr.mxu0 0.0
    %2540 = vmatpush1.msra.mxu0 %v2511
    %2541 = vmatprep.subr.mxu0 0.0
    %2542 = vmatpush1.msra.mxu0 %v2512
    %2543 = vmatprep.subr.mxu0 0.0
    %2544 = vmatpush1.msra.mxu0 %v2513
    %2545 = vmatprep.subr.mxu0 0.0
    %2546 = vmatpush1.msra.mxu0 %v2514
    %2547 = vmatprep.subr.mxu0 0.0
    %2548 = vmatpush1.msra.mxu0 %v2515
    %2549 = vmatprep.subr.mxu0 0.0
    %2550 = vmatpush1.msra.mxu0 %v2516
    %2551 = vmatprep.subr.mxu0 0.0
    %2552 = vmatpush1.msra.mxu0 %v2517
    %2553 = vmatprep.subr.mxu0 0.0
    %2554 = vmatpush1.msra.mxu0 %v2518
    %2555 = vmatprep.subr.mxu0 0.0
    %2556 = vmatpush1.msra.mxu0 %v2519
    %2557 = vmatprep.subr.mxu0 0.0
    %2558 = vmatpush1.msra.mxu0 %v2520
    %2559 = vmatprep.subr.mxu0 0.0
    %2560 = vmatpush1.msra.mxu0 %v2521
    %2561 = vmatprep.subr.mxu0 0.0
    %2562 = vmatpush1.msra.mxu0 0.0
    %2563 = vmatprep.subr.mxu0 0.0
    %2564 = vmatpush1.msra.mxu0 0.0
    %2565 = vmatprep.subr.mxu0 0.0
    %2566 = vmatpush1.msra.mxu0 0.0
    %2567 = vmatprep.subr.mxu0 0.0
    %2568 = vmatpush1.msra.mxu0 0.0
    %2569 = vmatprep.subr.mxu0 0.0
    %2570 = vmatpush1.msra.mxu0 0.0
    %2571 = vmatprep.subr.mxu0 0.0
    %2572 = vmatpush1.msra.mxu0 0.0
    %2573 = vmatprep.subr.mxu0 0.0
    %2574 = vmatpush1.msra.mxu0 0.0
    %2575 = vmatprep.subr.mxu0 0.0
    %2576 = vmatpush1.msra.mxu0 0.0
    %2577 = vmatprep.subr.mxu0 0.0
    %2578 = vmatpush1.msra.mxu0 0.0
    %2579 = vmatprep.subr.mxu0 0.0
    %2580 = vmatpush1.msra.mxu0 0.0
    %2581 = vmatprep.subr.mxu0 0.0
    %2582 = vmatpush1.msra.mxu0 0.0
    %2583 = vmatprep.subr.mxu0 0.0
    %2584 = vmatpush1.msra.mxu0 0.0
    %2585 = vmatprep.subr.mxu0 0.0
    %2586 = vmatpush1.msra.mxu0 0.0
    %2587 = vmatprep.subr.mxu0 0.0
    %2588 = vmatpush1.msra.mxu0 0.0
    %2589 = vmatprep.subr.mxu0 0.0
    %2590 = vmatpush1.msra.mxu0 0.0
    %2591 = vmatprep.subr.mxu0 0.0
    %2592 = vmatpush1.msra.mxu0 0.0
    %2593 = vmatprep.mubr.f32.mxu0 0.0
    %2594 = vmatmul.mubr.f32.gmra.mrb[0].mxu0 %v2497
    %v2595 = vpop.f32.mrb[0].mxu0
    %v2596 = vadd.f32 %v2527, %v2595
    %v2597 = vpop.f32.mrb[0].mxu0
    %2598 = vdwg.mxu0
    %v2599 = vtanh.pop %v2596
    %v2600 = vld [vmem:[#allocation10] sm:$0xff]
    %v2601 = vld [vmem:[#allocation10 + $0x8] sm:$0xff]
    %v2602 = vld [vmem:[#allocation10 + $0x10] sm:$0xff]
    %v2603 = vld [vmem:[#allocation10 + $0x18] sm:$0xff]
    %v2604 = vld [vmem:[#allocation10 + $0x20] sm:$0xff]
    %v2605 = vld [vmem:[#allocation10 + $0x28] sm:$0xff]
    %v2606 = vld [vmem:[#allocation10 + $0x30] sm:$0xff]
    %v2607 = vld [vmem:[#allocation10 + $0x38] sm:$0xff]
    %v2608 = vld [vmem:[#allocation10 + $0x40] sm:$0xff]
    %v2609 = vld [vmem:[#allocation10 + $0x48] sm:$0xff]
    %v2610 = vld [vmem:[#allocation10 + $0x50] sm:$0xff]
    %v2611 = vld [vmem:[#allocation10 + $0x58] sm:$0xff]
    %v2612 = vld [vmem:[#allocation10 + $0x60] sm:$0xff]
    %v2613 = vld [vmem:[#allocation10 + $0x68] sm:$0xff]
    %v2614 = vld [vmem:[#allocation10 + $0x70] sm:$0xff]
    %v2615 = vld [vmem:[#allocation10 + $0x78] sm:$0xff]
    %v2616 = vld [vmem:[%s6] sm:$0x1]
    %v2618 = vlaneseq
    %v2619 = vshrl.u32 %v2618, 7
    %v2620 = vsub.s32 0, %v2619
    %v2621 = vrot.slane %v2616, %v2620
    %2623 = vmatprep.subr.mxu0 0.0
    %2624 = vmatpush1.msra.mxu0 %v2600
    %2625 = vmatprep.subr.mxu0 0.0
    %2626 = vmatpush1.msra.mxu0 %v2601
    %2627 = vmatprep.subr.mxu0 0.0
    %2628 = vmatpush1.msra.mxu0 %v2602
    %2629 = vmatprep.subr.mxu0 0.0
    %2630 = vmatpush1.msra.mxu0 %v2603
    %2631 = vmatprep.subr.mxu0 0.0
    %2632 = vmatpush1.msra.mxu0 %v2604
    %2633 = vmatprep.subr.mxu0 0.0
    %2634 = vmatpush1.msra.mxu0 %v2605
    %2635 = vmatprep.subr.mxu0 0.0
    %2636 = vmatpush1.msra.mxu0 %v2606
    %2637 = vmatprep.subr.mxu0 0.0
    %2638 = vmatpush1.msra.mxu0 %v2607
    %2639 = vmatprep.subr.mxu0 0.0
    %2640 = vmatpush1.msra.mxu0 %v2608
    %2641 = vmatprep.subr.mxu0 0.0
    %2642 = vmatpush1.msra.mxu0 %v2609
    %2643 = vmatprep.subr.mxu0 0.0
    %2644 = vmatpush1.msra.mxu0 %v2610
    %2645 = vmatprep.subr.mxu0 0.0
    %2646 = vmatpush1.msra.mxu0 %v2611
    %2647 = vmatprep.subr.mxu0 0.0
    %2648 = vmatpush1.msra.mxu0 %v2612
    %2649 = vmatprep.subr.mxu0 0.0
    %2650 = vmatpush1.msra.mxu0 %v2613
    %2651 = vmatprep.subr.mxu0 0.0
    %2652 = vmatpush1.msra.mxu0 %v2614
    %2653 = vmatprep.subr.mxu0 0.0
    %2654 = vmatpush1.msra.mxu0 %v2615
    %2655 = vmatprep.subr.mxu0 0.0
    %2656 = vmatpush1.msra.mxu0 0.0
    %2657 = vmatprep.subr.mxu0 0.0
    %2658 = vmatpush1.msra.mxu0 0.0
    %2659 = vmatprep.subr.mxu0 0.0
    %2660 = vmatpush1.msra.mxu0 0.0
    %2661 = vmatprep.subr.mxu0 0.0
    %2662 = vmatpush1.msra.mxu0 0.0
    %2663 = vmatprep.subr.mxu0 0.0
    %2664 = vmatpush1.msra.mxu0 0.0
    %2665 = vmatprep.subr.mxu0 0.0
    %2666 = vmatpush1.msra.mxu0 0.0
    %2667 = vmatprep.subr.mxu0 0.0
    %2668 = vmatpush1.msra.mxu0 0.0
    %2669 = vmatprep.subr.mxu0 0.0
    %2670 = vmatpush1.msra.mxu0 0.0
    %2671 = vmatprep.subr.mxu0 0.0
    %2672 = vmatpush1.msra.mxu0 0.0
    %2673 = vmatprep.subr.mxu0 0.0
    %2674 = vmatpush1.msra.mxu0 0.0
    %2675 = vmatprep.subr.mxu0 0.0
    %2676 = vmatpush1.msra.mxu0 0.0
    %2677 = vmatprep.subr.mxu0 0.0
    %2678 = vmatpush1.msra.mxu0 0.0
    %2679 = vmatprep.subr.mxu0 0.0
    %2680 = vmatpush1.msra.mxu0 0.0
    %2681 = vmatprep.subr.mxu0 0.0
    %2682 = vmatpush1.msra.mxu0 0.0
    %2683 = vmatprep.subr.mxu0 0.0
    %2684 = vmatpush1.msra.mxu0 0.0
    %2685 = vmatprep.subr.mxu0 0.0
    %2686 = vmatpush1.msra.mxu0 0.0
    %2687 = vmatprep.mubr.f32.mxu0 0.0
    %2688 = vmatmul.mubr.f32.gmra.mrb[0].mxu0 %v2599
    %v2689 = vpop.f32.mrb[0].mxu0
    %v2690 = vadd.f32 %v2621, %v2689
    %v2691 = vpop.f32.mrb[0].mxu0
    %2692 = vdwg.mxu0
    %v2693 = vmul.f32 %v2504, %v2690
    %v2694 = vadd.f32 %v2497, %v2693
    %2695 = vmatprep.subr.mxu0 0.0
    %2696 = vmatpush1.msra.mxu0 %v2506
    %2697 = vmatprep.subr.mxu0 0.0
    %2698 = vmatpush1.msra.mxu0 %v2507
    %2699 = vmatprep.subr.mxu0 0.0
    %2700 = vmatpush1.msra.mxu0 %v2508
    %2701 = vmatprep.subr.mxu0 0.0
    %2702 = vmatpush1.msra.mxu0 %v2509
    %2703 = vmatprep.subr.mxu0 0.0
    %2704 = vmatpush1.msra.mxu0 %v2510
    %2705 = vmatprep.subr.mxu0 0.0
    %2706 = vmatpush1.msra.mxu0 %v2511
    %2707 = vmatprep.subr.mxu0 0.0
    %2708 = vmatpush1.msra.mxu0 %v2512
    %2709 = vmatprep.subr.mxu0 0.0
    %2710 = vmatpush1.msra.mxu0 %v2513
    %2711 = vmatprep.subr.mxu0 0.0
    %2712 = vmatpush1.msra.mxu0 %v2514
    %2713 = vmatprep.subr.mxu0 0.0
    %2714 = vmatpush1.msra.mxu0 %v2515
    %2715 = vmatprep.subr.mxu0 0.0
    %2716 = vmatpush1.msra.mxu0 %v2516
    %2717 = vmatprep.subr.mxu0 0.0
    %2718 = vmatpush1.msra.mxu0 %v2517
    %2719 = vmatprep.subr.mxu0 0.0
    %2720 = vmatpush1.msra.mxu0 %v2518
    %2721 = vmatprep.subr.mxu0 0.0
    %2722 = vmatpush1.msra.mxu0 %v2519
    %2723 = vmatprep.subr.mxu0 0.0
    %2724 = vmatpush1.msra.mxu0 %v2520
    %2725 = vmatprep.subr.mxu0 0.0
    %2726 = vmatpush1.msra.mxu0 %v2521
    %2727 = vmatprep.subr.mxu0 0.0
    %2728 = vmatpush1.msra.mxu0 0.0
    %2729 = vmatprep.subr.mxu0 0.0
    %2730 = vmatpush1.msra.mxu0 0.0
    %2731 = vmatprep.subr.mxu0 0.0
    %2732 = vmatpush1.msra.mxu0 0.0
    %2733 = vmatprep.subr.mxu0 0.0
    %2734 = vmatpush1.msra.mxu0 0.0
    %2735 = vmatprep.subr.mxu0 0.0
    %2736 = vmatpush1.msra.mxu0 0.0
    %2737 = vmatprep.subr.mxu0 0.0
    %2738 = vmatpush1.msra.mxu0 0.0
    %2739 = vmatprep.subr.mxu0 0.0
    %2740 = vmatpush1.msra.mxu0 0.0
    %2741 = vmatprep.subr.mxu0 0.0
    %2742 = vmatpush1.msra.mxu0 0.0
    %2743 = vmatprep.subr.mxu0 0.0
    %2744 = vmatpush1.msra.mxu0 0.0
    %2745 = vmatprep.subr.mxu0 0.0
    %2746 = vmatpush1.msra.mxu0 0.0
    %2747 = vmatprep.subr.mxu0 0.0
    %2748 = vmatpush1.msra.mxu0 0.0
    %2749 = vmatprep.subr.mxu0 0.0
    %2750 = vmatpush1.msra.mxu0 0.0
    %2751 = vmatprep.subr.mxu0 0.0
    %2752 = vmatpush1.msra.mxu0 0.0
    %2753 = vmatprep.subr.mxu0 0.0
    %2754 = vmatpush1.msra.mxu0 0.0
    %2755 = vmatprep.subr.mxu0 0.0
    %2756 = vmatpush1.msra.mxu0 0.0
    %2757 = vmatprep.subr.mxu0 0.0
    %2758 = vmatpush1.msra.mxu0 0.0
    %2759 = vmatprep.mubr.f32.mxu0 0.0
    %2760 = vmatmul.mubr.f32.gmra.mrb[0].mxu0 %v2694
    %v2761 = vpop.f32.mrb[0].mxu0
    %v2762 = vadd.f32 %v2527, %v2761
    %v2763 = vpop.f32.mrb[0].mxu0
    %2764 = vdwg.mxu0
    %v2765 = vtanh.pop %v2762
    %2766 = vmatprep.subr.mxu0 0.0
    %2767 = vmatpush1.msra.mxu0 %v2600
    %2768 = vmatprep.subr.mxu0 0.0
    %2769 = vmatpush1.msra.mxu0 %v2601
    %2770 = vmatprep.subr.mxu0 0.0
    %2771 = vmatpush1.msra.mxu0 %v2602
    %2772 = vmatprep.subr.mxu0 0.0
    %2773 = vmatpush1.msra.mxu0 %v2603
    %2774 = vmatprep.subr.mxu0 0.0
    %2775 = vmatpush1.msra.mxu0 %v2604
    %2776 = vmatprep.subr.mxu0 0.0
    %2777 = vmatpush1.msra.mxu0 %v2605
    %2778 = vmatprep.subr.mxu0 0.0
    %2779 = vmatpush1.msra.mxu0 %v2606
    %2780 = vmatprep.subr.mxu0 0.0
    %2781 = vmatpush1.msra.mxu0 %v2607
    %2782 = vmatprep.subr.mxu0 0.0
    %2783 = vmatpush1.msra.mxu0 %v2608
    %2784 = vmatprep.subr.mxu0 0.0
    %2785 = vmatpush1.msra.mxu0 %v2609
    %2786 = vmatprep.subr.mxu0 0.0
    %2787 = vmatpush1.msra.mxu0 %v2610
    %2788 = vmatprep.subr.mxu0 0.0
    %2789 = vmatpush1.msra.mxu0 %v2611
    %2790 = vmatprep.subr.mxu0 0.0
    %2791 = vmatpush1.msra.mxu0 %v2612
    %2792 = vmatprep.subr.mxu0 0.0
    %2793 = vmatpush1.msra.mxu0 %v2613
    %2794 = vmatprep.subr.mxu0 0.0
    %2795 = vmatpush1.msra.mxu0 %v2614
    %2796 = vmatprep.subr.mxu0 0.0
    %2797 = vmatpush1.msra.mxu0 %v2615
    %2798 = vmatprep.subr.mxu0 0.0
    %2799 = vmatpush1.msra.mxu0 0.0
    %2800 = vmatprep.subr.mxu0 0.0
    %2801 = vmatpush1.msra.mxu0 0.0
    %2802 = vmatprep.subr.mxu0 0.0
    %2803 = vmatpush1.msra.mxu0 0.0
    %2804 = vmatprep.subr.mxu0 0.0
    %2805 = vmatpush1.msra.mxu0 0.0
    %2806 = vmatprep.subr.mxu0 0.0
    %2807 = vmatpush1.msra.mxu0 0.0
    %2808 = vmatprep.subr.mxu0 0.0
    %2809 = vmatpush1.msra.mxu0 0.0
    %2810 = vmatprep.subr.mxu0 0.0
    %2811 = vmatpush1.msra.mxu0 0.0
    %2812 = vmatprep.subr.mxu0 0.0
    %2813 = vmatpush1.msra.mxu0 0.0
    %2814 = vmatprep.subr.mxu0 0.0
    %2815 = vmatpush1.msra.mxu0 0.0
    %2816 = vmatprep.subr.mxu0 0.0
    %2817 = vmatpush1.msra.mxu0 0.0
    %2818 = vmatprep.subr.mxu0 0.0
    %2819 = vmatpush1.msra.mxu0 0.0
    %2820 = vmatprep.subr.mxu0 0.0
    %2821 = vmatpush1.msra.mxu0 0.0
    %2822 = vmatprep.subr.mxu0 0.0
    %2823 = vmatpush1.msra.mxu0 0.0
    %2824 = vmatprep.subr.mxu0 0.0
    %2825 = vmatpush1.msra.mxu0 0.0
    %2826 = vmatprep.subr.mxu0 0.0
    %2827 = vmatpush1.msra.mxu0 0.0
    %2828 = vmatprep.subr.mxu0 0.0
    %2829 = vmatpush1.msra.mxu0 0.0
    %2830 = vmatprep.mubr.f32.mxu0 0.0
    %2831 = vmatmul.mubr.f32.gmra.mrb[0].mxu0 %v2765
    %v2832 = vpop.f32.mrb[0].mxu0
    %v2833 = vadd.f32 %v2621, %v2832
    %v2834 = vpop.f32.mrb[0].mxu0
    %2835 = vdwg.mxu0
    %v2836 = vmul.f32 %v2504, %v2833
    %v2837 = vadd.f32 %v2694, %v2836
    %2838 = vmatprep.subr.mxu0 0.0
    %2839 = vmatpush1.msra.mxu0 %v2506
    %2840 = vmatprep.subr.mxu0 0.0
    %2841 = vmatpush1.msra.mxu0 %v2507
    %2842 = vmatprep.subr.mxu0 0.0
    %2843 = vmatpush1.msra.mxu0 %v2508
    %2844 = vmatprep.subr.mxu0 0.0
    %2845 = vmatpush1.msra.mxu0 %v2509
    %2846 = vmatprep.subr.mxu0 0.0
    %2847 = vmatpush1.msra.mxu0 %v2510
    %2848 = vmatprep.subr.mxu0 0.0
    %2849 = vmatpush1.msra.mxu0 %v2511
    %2850 = vmatprep.subr.mxu0 0.0
    %2851 = vmatpush1.msra.mxu0 %v2512
    %2852 = vmatprep.subr.mxu0 0.0
    %2853 = vmatpush1.msra.mxu0 %v2513
    %2854 = vmatprep.subr.mxu0 0.0
    %2855 = vmatpush1.msra.mxu0 %v2514
    %2856 = vmatprep.subr.mxu0 0.0
    %2857 = vmatpush1.msra.mxu0 %v2515
    %2858 = vmatprep.subr.mxu0 0.0
    %2859 = vmatpush1.msra.mxu0 %v2516
    %2860 = vmatprep.subr.mxu0 0.0
    %2861 = vmatpush1.msra.mxu0 %v2517
    %2862 = vmatprep.subr.mxu0 0.0
    %2863 = vmatpush1.msra.mxu0 %v2518
    %2864 = vmatprep.subr.mxu0 0.0
    %2865 = vmatpush1.msra.mxu0 %v2519
    %2866 = vmatprep.subr.mxu0 0.0
    %2867 = vmatpush1.msra.mxu0 %v2520
    %2868 = vmatprep.subr.mxu0 0.0
    %2869 = vmatpush1.msra.mxu0 %v2521
    %2870 = vmatprep.subr.mxu0 0.0
    %2871 = vmatpush1.msra.mxu0 0.0
    %2872 = vmatprep.subr.mxu0 0.0
    %2873 = vmatpush1.msra.mxu0 0.0
    %2874 = vmatprep.subr.mxu0 0.0
    %2875 = vmatpush1.msra.mxu0 0.0
    %2876 = vmatprep.subr.mxu0 0.0
    %2877 = vmatpush1.msra.mxu0 0.0
    %2878 = vmatprep.subr.mxu0 0.0
    %2879 = vmatpush1.msra.mxu0 0.0
    %2880 = vmatprep.subr.mxu0 0.0
    %2881 = vmatpush1.msra.mxu0 0.0
    %2882 = vmatprep.subr.mxu0 0.0
    %2883 = vmatpush1.msra.mxu0 0.0
    %2884 = vmatprep.subr.mxu0 0.0
    %2885 = vmatpush1.msra.mxu0 0.0
    %2886 = vmatprep.subr.mxu0 0.0
    %2887 = vmatpush1.msra.mxu0 0.0
    %2888 = vmatprep.subr.mxu0 0.0
    %2889 = vmatpush1.msra.mxu0 0.0
    %2890 = vmatprep.subr.mxu0 0.0
    %2891 = vmatpush1.msra.mxu0 0.0
    %2892 = vmatprep.subr.mxu0 0.0
    %2893 = vmatpush1.msra.mxu0 0.0
    %2894 = vmatprep.subr.mxu0 0.0
    %2895 = vmatpush1.msra.mxu0 0.0
    %2896 = vmatprep.subr.mxu0 0.0
    %2897 = vmatpush1.msra.mxu0 0.0
    %2898 = vmatprep.subr.mxu0 0.0
    %2899 = vmatpush1.msra.mxu0 0.0
    %2900 = vmatprep.subr.mxu0 0.0
    %2901 = vmatpush1.msra.mxu0 0.0
    %2902 = vmatprep.mubr.f32.mxu0 0.0
    %2903 = vmatmul.mubr.f32.gmra.mrb[0].mxu0 %v2837
    %v2904 = vpop.f32.mrb[0].mxu0
    %v2905 = vadd.f32 %v2527, %v2904
    %v2906 = vpop.f32.mrb[0].mxu0
    %2907 = vdwg.mxu0
    %v2908 = vtanh.pop %v2905
    %2909 = vmatprep.subr.mxu0 0.0
    %2910 = vmatpush1.msra.mxu0 %v2600
    %2911 = vmatprep.subr.mxu0 0.0
    %2912 = vmatpush1.msra.mxu0 %v2601
    %2913 = vmatprep.subr.mxu0 0.0
    %2914 = vmatpush1.msra.mxu0 %v2602
    %2915 = vmatprep.subr.mxu0 0.0
    %2916 = vmatpush1.msra.mxu0 %v2603
    %2917 = vmatprep.subr.mxu0 0.0
    %2918 = vmatpush1.msra.mxu0 %v2604
    %2919 = vmatprep.subr.mxu0 0.0
    %2920 = vmatpush1.msra.mxu0 %v2605
    %2921 = vmatprep.subr.mxu0 0.0
    %2922 = vmatpush1.msra.mxu0 %v2606
    %2923 = vmatprep.subr.mxu0 0.0
    %2924 = vmatpush1.msra.mxu0 %v2607
    %2925 = vmatprep.subr.mxu0 0.0
    %2926 = vmatpush1.msra.mxu0 %v2608
    %2927 = vmatprep.subr.mxu0 0.0
    %2928 = vmatpush1.msra.mxu0 %v2609
    %2929 = vmatprep.subr.mxu0 0.0
    %2930 = vmatpush1.msra.mxu0 %v2610
    %2931 = vmatprep.subr.mxu0 0.0
    %2932 = vmatpush1.msra.mxu0 %v2611
    %2933 = vmatprep.subr.mxu0 0.0
    %2934 = vmatpush1.msra.mxu0 %v2612
    %2935 = vmatprep.subr.mxu0 0.0
    %2936 = vmatpush1.msra.mxu0 %v2613
    %2937 = vmatprep.subr.mxu0 0.0
    %2938 = vmatpush1.msra.mxu0 %v2614
    %2939 = vmatprep.subr.mxu0 0.0
    %2940 = vmatpush1.msra.mxu0 %v2615
    %2941 = vmatprep.subr.mxu0 0.0
    %2942 = vmatpush1.msra.mxu0 0.0
    %2943 = vmatprep.subr.mxu0 0.0
    %2944 = vmatpush1.msra.mxu0 0.0
    %2945 = vmatprep.subr.mxu0 0.0
    %2946 = vmatpush1.msra.mxu0 0.0
    %2947 = vmatprep.subr.mxu0 0.0
    %2948 = vmatpush1.msra.mxu0 0.0
    %2949 = vmatprep.subr.mxu0 0.0
    %2950 = vmatpush1.msra.mxu0 0.0
    %2951 = vmatprep.subr.mxu0 0.0
    %2952 = vmatpush1.msra.mxu0 0.0
    %2953 = vmatprep.subr.mxu0 0.0
    %2954 = vmatpush1.msra.mxu0 0.0
    %2955 = vmatprep.subr.mxu0 0.0
    %2956 = vmatpush1.msra.mxu0 0.0
    %2957 = vmatprep.subr.mxu0 0.0
    %2958 = vmatpush1.msra.mxu0 0.0
    %2959 = vmatprep.subr.mxu0 0.0
    %2960 = vmatpush1.msra.mxu0 0.0
    %2961 = vmatprep.subr.mxu0 0.0
    %2962 = vmatpush1.msra.mxu0 0.0
    %2963 = vmatprep.subr.mxu0 0.0
    %2964 = vmatpush1.msra.mxu0 0.0
    %2965 = vmatprep.subr.mxu0 0.0
    %2966 = vmatpush1.msra.mxu0 0.0
    %2967 = vmatprep.subr.mxu0 0.0
    %2968 = vmatpush1.msra.mxu0 0.0
    %2969 = vmatprep.subr.mxu0 0.0
    %2970 = vmatpush1.msra.mxu0 0.0
    %2971 = vmatprep.subr.mxu0 0.0
    %2972 = vmatpush1.msra.mxu0 0.0
    %2973 = vmatprep.mubr.f32.mxu0 0.0
    %2974 = vmatmul.mubr.f32.gmra.mrb[0].mxu0 %v2908
    %v2975 = vpop.f32.mrb[0].mxu0
    %v2976 = vadd.f32 %v2621, %v2975
    %v2977 = vpop.f32.mrb[0].mxu0
    %2978 = vdwg.mxu0
    %v2979 = vmul.f32 %v2504, %v2976
    %v2980 = vadd.f32 %v2837, %v2979
    %s2981 = scalar_lea.vmem [#allocation12], 24
    %2982 = vst [vmem:[%s2981] sm:$0xff] %v2980
    %s2983 = scalar_lea.vmem [#allocation4], 128
    %v2984 = vld [vmem:[%s2983] sm:$0xff]
    %v2985 = vld [vmem:[%s2983 + $0x8] sm:$0xff]
    %v2986 = vld [vmem:[%s2983 + $0x10] sm:$0xff]
    %v2987 = vld [vmem:[%s2983 + $0x18] sm:$0xff]
    %v2988 = vld [vmem:[#allocation7] sm:$0xff]
    %v2989 = vld [vmem:[#allocation7 + $0x8] sm:$0xff]
    %v2990 = vld [vmem:[#allocation7 + $0x10] sm:$0xff]
    %v2991 = vld [vmem:[#allocation7 + $0x18] sm:$0xff]
    %v2992 = vld [vmem:[#allocation7 + $0x20] sm:$0xff]
    %v2993 = vld [vmem:[#allocation7 + $0x28] sm:$0xff]
    %v2994 = vld [vmem:[#allocation7 + $0x30] sm:$0xff]
    %v2995 = vld [vmem:[#allocation7 + $0x38] sm:$0xff]
    %v2996 = vld [vmem:[#allocation7 + $0x40] sm:$0xff]
    %v2997 = vld [vmem:[#allocation7 + $0x48] sm:$0xff]
    %v2998 = vld [vmem:[#allocation7 + $0x50] sm:$0xff]
    %v2999 = vld [vmem:[#allocation7 + $0x58] sm:$0xff]
    %v3000 = vld [vmem:[#allocation7 + $0x60] sm:$0xff]
    %v3001 = vld [vmem:[#allocation7 + $0x68] sm:$0xff]
    %v3002 = vld [vmem:[#allocation7 + $0x70] sm:$0xff]
    %v3003 = vld [vmem:[#allocation7 + $0x78] sm:$0xff]
    %v3004 = vld [vmem:[#allocation7 + $0x80] sm:$0xff]
    %v3005 = vld [vmem:[#allocation7 + $0x88] sm:$0xff]
    %v3006 = vld [vmem:[#allocation7 + $0x90] sm:$0xff]
    %v3007 = vld [vmem:[#allocation7 + $0x98] sm:$0xff]
    %v3008 = vld [vmem:[#allocation7 + $0xa0] sm:$0xff]
    %v3009 = vld [vmem:[#allocation7 + $0xa8] sm:$0xff]
    %v3010 = vld [vmem:[#allocation7 + $0xb0] sm:$0xff]
    %v3011 = vld [vmem:[#allocation7 + $0xb8] sm:$0xff]
    %v3012 = vld [vmem:[#allocation7 + $0xc0] sm:$0xff]
    %v3013 = vld [vmem:[#allocation7 + $0xc8] sm:$0xff]
    %v3014 = vld [vmem:[#allocation7 + $0xd0] sm:$0xff]
    %v3015 = vld [vmem:[#allocation7 + $0xd8] sm:$0xff]
    %v3016 = vld [vmem:[#allocation7 + $0xe0] sm:$0xff]
    %v3017 = vld [vmem:[#allocation7 + $0xe8] sm:$0xff]
    %v3018 = vld [vmem:[#allocation7 + $0xf0] sm:$0xff]
    %v3019 = vld [vmem:[#allocation7 + $0xf8] sm:$0xff]
    %v3020 = vld [vmem:[#allocation7 + $0x100] sm:$0xff]
    %v3021 = vld [vmem:[#allocation7 + $0x108] sm:$0xff]
    %v3022 = vld [vmem:[#allocation7 + $0x110] sm:$0xff]
    %v3023 = vld [vmem:[#allocation7 + $0x118] sm:$0xff]
    %v3024 = vld [vmem:[#allocation7 + $0x120] sm:$0xff]
    %v3025 = vld [vmem:[#allocation7 + $0x128] sm:$0xff]
    %v3026 = vld [vmem:[#allocation7 + $0x130] sm:$0xff]
    %v3027 = vld [vmem:[#allocation7 + $0x138] sm:$0xff]
    %v3028 = vld [vmem:[#allocation7 + $0x140] sm:$0xff]
    %v3029 = vld [vmem:[#allocation7 + $0x148] sm:$0xff]
    %v3030 = vld [vmem:[#allocation7 + $0x150] sm:$0xff]
    %v3031 = vld [vmem:[#allocation7 + $0x158] sm:$0xff]
    %v3032 = vld [vmem:[#allocation7 + $0x160] sm:$0xff]
    %v3033 = vld [vmem:[#allocation7 + $0x168] sm:$0xff]
    %v3034 = vld [vmem:[#allocation7 + $0x170] sm:$0xff]
    %v3035 = vld [vmem:[#allocation7 + $0x178] sm:$0xff]
    %v3036 = vld [vmem:[#allocation7 + $0x180] sm:$0xff]
    %v3037 = vld [vmem:[#allocation7 + $0x188] sm:$0xff]
    %v3038 = vld [vmem:[#allocation7 + $0x190] sm:$0xff]
    %v3039 = vld [vmem:[#allocation7 + $0x198] sm:$0xff]
    %v3040 = vld [vmem:[#allocation7 + $0x1a0] sm:$0xff]
    %v3041 = vld [vmem:[#allocation7 + $0x1a8] sm:$0xff]
    %v3042 = vld [vmem:[#allocation7 + $0x1b0] sm:$0xff]
    %v3043 = vld [vmem:[#allocation7 + $0x1b8] sm:$0xff]
    %v3044 = vld [vmem:[#allocation7 + $0x1c0] sm:$0xff]
    %v3045 = vld [vmem:[#allocation7 + $0x1c8] sm:$0xff]
    %v3046 = vld [vmem:[#allocation7 + $0x1d0] sm:$0xff]
    %v3047 = vld [vmem:[#allocation7 + $0x1d8] sm:$0xff]
    %v3048 = vld [vmem:[#allocation7 + $0x1e0] sm:$0xff]
    %v3049 = vld [vmem:[#allocation7 + $0x1e8] sm:$0xff]
    %v3050 = vld [vmem:[#allocation7 + $0x1f0] sm:$0xff]
    %v3051 = vld [vmem:[#allocation7 + $0x1f8] sm:$0xff]
    %3052 = vmatprep.subr.mxu0 %v2989
    %3053 = vmatpush1.msra.mxu0 %v2988
    %3054 = vmatprep.subr.mxu0 %v2993
    %3055 = vmatpush1.msra.mxu0 %v2992
    %3056 = vmatprep.subr.mxu0 %v2997
    %3057 = vmatpush1.msra.mxu0 %v2996
    %3058 = vmatprep.subr.mxu0 %v3001
    %3059 = vmatpush1.msra.mxu0 %v3000
    %3060 = vmatprep.subr.mxu0 %v3005
    %3061 = vmatpush1.msra.mxu0 %v3004
    %3062 = vmatprep.subr.mxu0 %v3009
    %3063 = vmatpush1.msra.mxu0 %v3008
    %3064 = vmatprep.subr.mxu0 %v3013
    %3065 = vmatpush1.msra.mxu0 %v3012
    %3066 = vmatprep.subr.mxu0 %v3017
    %3067 = vmatpush1.msra.mxu0 %v3016
    %3068 = vmatprep.subr.mxu0 %v3021
    %3069 = vmatpush1.msra.mxu0 %v3020
    %3070 = vmatprep.subr.mxu0 %v3025
    %3071 = vmatpush1.msra.mxu0 %v3024
    %3072 = vmatprep.subr.mxu0 %v3029
    %3073 = vmatpush1.msra.mxu0 %v3028
    %3074 = vmatprep.subr.mxu0 %v3033
    %3075 = vmatpush1.msra.mxu0 %v3032
    %3076 = vmatprep.subr.mxu0 %v3037
    %3077 = vmatpush1.msra.mxu0 %v3036
    %3078 = vmatprep.subr.mxu0 %v3041
    %3079 = vmatpush1.msra.mxu0 %v3040
    %3080 = vmatprep.subr.mxu0 %v3045
    %3081 = vmatpush1.msra.mxu0 %v3044
    %3082 = vmatprep.subr.mxu0 %v3049
    %3083 = vmatpush1.msra.mxu0 %v3048
    %3084 = vmatprep.subr.mxu0 0.0
    %3085 = vmatpush1.msra.mxu0 0.0
    %3086 = vmatprep.subr.mxu0 0.0
    %3087 = vmatpush1.msra.mxu0 0.0
    %3088 = vmatprep.subr.mxu0 0.0
    %3089 = vmatpush1.msra.mxu0 0.0
    %3090 = vmatprep.subr.mxu0 0.0
    %3091 = vmatpush1.msra.mxu0 0.0
    %3092 = vmatprep.subr.mxu0 0.0
    %3093 = vmatpush1.msra.mxu0 0.0
    %3094 = vmatprep.subr.mxu0 0.0
    %3095 = vmatpush1.msra.mxu0 0.0
    %3096 = vmatprep.subr.mxu0 0.0
    %3097 = vmatpush1.msra.mxu0 0.0
    %3098 = vmatprep.subr.mxu0 0.0
    %3099 = vmatpush1.msra.mxu0 0.0
    %3100 = vmatprep.subr.mxu0 0.0
    %3101 = vmatpush1.msra.mxu0 0.0
    %3102 = vmatprep.subr.mxu0 0.0
    %3103 = vmatpush1.msra.mxu0 0.0
    %3104 = vmatprep.subr.mxu0 0.0
    %3105 = vmatpush1.msra.mxu0 0.0
    %3106 = vmatprep.subr.mxu0 0.0
    %3107 = vmatpush1.msra.mxu0 0.0
    %3108 = vmatprep.subr.mxu0 0.0
    %3109 = vmatpush1.msra.mxu0 0.0
    %3110 = vmatprep.subr.mxu0 0.0
    %3111 = vmatpush1.msra.mxu0 0.0
    %3112 = vmatprep.subr.mxu0 0.0
    %3113 = vmatpush1.msra.mxu0 0.0
    %3114 = vmatprep.subr.mxu0 0.0
    %3115 = vmatpush1.msra.mxu0 0.0
    %3116 = vmatprep.mubr.f32.mxu0 0.0
    %3117 = vmatmul.mubr.f32.gmra.mrb[0].mxu0 %v2980
    %v3118 = vpop.f32.mrb[0].mxu0
    %v3119 = vadd.f32 0.0, %v3118
    %v3120 = vpop.f32.mrb[0].mxu0
    %v3121 = vadd.f32 0.0, %v3120
    %3122 = vdwg.mxu0
    %3123 = vmatprep.subr.mxu0 %v2991
    %3124 = vmatpush1.msra.mxu0 %v2990
    %3125 = vmatprep.subr.mxu0 %v2995
    %3126 = vmatpush1.msra.mxu0 %v2994
    %3127 = vmatprep.subr.mxu0 %v2999
    %3128 = vmatpush1.msra.mxu0 %v2998
    %3129 = vmatprep.subr.mxu0 %v3003
    %3130 = vmatpush1.msra.mxu0 %v3002
    %3131 = vmatprep.subr.mxu0 %v3007
    %3132 = vmatpush1.msra.mxu0 %v3006
    %3133 = vmatprep.subr.mxu0 %v3011
    %3134 = vmatpush1.msra.mxu0 %v3010
    %3135 = vmatprep.subr.mxu0 %v3015
    %3136 = vmatpush1.msra.mxu0 %v3014
    %3137 = vmatprep.subr.mxu0 %v3019
    %3138 = vmatpush1.msra.mxu0 %v3018
    %3139 = vmatprep.subr.mxu0 %v3023
    %3140 = vmatpush1.msra.mxu0 %v3022
    %3141 = vmatprep.subr.mxu0 %v3027
    %3142 = vmatpush1.msra.mxu0 %v3026
    %3143 = vmatprep.subr.mxu0 %v3031
    %3144 = vmatpush1.msra.mxu0 %v3030
    %3145 = vmatprep.subr.mxu0 %v3035
    %3146 = vmatpush1.msra.mxu0 %v3034
    %3147 = vmatprep.subr.mxu0 %v3039
    %3148 = vmatpush1.msra.mxu0 %v3038
    %3149 = vmatprep.subr.mxu0 %v3043
    %3150 = vmatpush1.msra.mxu0 %v3042
    %3151 = vmatprep.subr.mxu0 %v3047
    %3152 = vmatpush1.msra.mxu0 %v3046
    %3153 = vmatprep.subr.mxu0 %v3051
    %3154 = vmatpush1.msra.mxu0 %v3050
    %3155 = vmatprep.subr.mxu0 0.0
    %3156 = vmatpush1.msra.mxu0 0.0
    %3157 = vmatprep.subr.mxu0 0.0
    %3158 = vmatpush1.msra.mxu0 0.0
    %3159 = vmatprep.subr.mxu0 0.0
    %3160 = vmatpush1.msra.mxu0 0.0
    %3161 = vmatprep.subr.mxu0 0.0
    %3162 = vmatpush1.msra.mxu0 0.0
    %3163 = vmatprep.subr.mxu0 0.0
    %3164 = vmatpush1.msra.mxu0 0.0
    %3165 = vmatprep.subr.mxu0 0.0
    %3166 = vmatpush1.msra.mxu0 0.0
    %3167 = vmatprep.subr.mxu0 0.0
    %3168 = vmatpush1.msra.mxu0 0.0
    %3169 = vmatprep.subr.mxu0 0.0
    %3170 = vmatpush1.msra.mxu0 0.0
    %3171 = vmatprep.subr.mxu0 0.0
    %3172 = vmatpush1.msra.mxu0 0.0
    %3173 = vmatprep.subr.mxu0 0.0
    %3174 = vmatpush1.msra.mxu0 0.0
    %3175 = vmatprep.subr.mxu0 0.0
    %3176 = vmatpush1.msra.mxu0 0.0
    %3177 = vmatprep.subr.mxu0 0.0
    %3178 = vmatpush1.msra.mxu0 0.0
    %3179 = vmatprep.subr.mxu0 0.0
    %3180 = vmatpush1.msra.mxu0 0.0
    %3181 = vmatprep.subr.mxu0 0.0
    %3182 = vmatpush1.msra.mxu0 0.0
    %3183 = vmatprep.subr.mxu0 0.0
    %3184 = vmatpush1.msra.mxu0 0.0
    %3185 = vmatprep.subr.mxu0 0.0
    %3186 = vmatpush1.msra.mxu0 0.0
    %3187 = vmatprep.mubr.f32.mxu0 0.0
    %3188 = vmatmul.mubr.f32.gmra.mrb[0].mxu0 %v2980
    %v3189 = vpop.f32.mrb[0].mxu0
    %v3190 = vadd.f32 0.0, %v3189
    %v3191 = vpop.f32.mrb[0].mxu0
    %v3192 = vadd.f32 0.0, %v3191
    %3193 = vdwg.mxu0
    %v3194 = vadd.f32 %v2984, %v3119
    %v3195 = vadd.f32 %v2985, %v3121
    %v3196 = vadd.f32 %v2986, %v3190
    %v3197 = vadd.f32 %v2987, %v3192
    %v3198 = vxor.u32 %v3194, 2147483648
    %v3199 = vmul.f32 %v3198, 1.442695
    %v3200 = vpow.pop %v3199
    %v3201 = vadd.f32 %v3200, 1.0
    %v3202 = vrcp.pop %v3201
    %v3203 = vmul.f32 1.0, %v3202
    %v3204 = vxor.u32 %v3195, 2147483648
    %v3205 = vmul.f32 %v3204, 1.442695
    %v3206 = vpow.pop %v3205
    %v3207 = vadd.f32 %v3206, 1.0
    %v3208 = vrcp.pop %v3207
    %v3209 = vmul.f32 1.0, %v3208
    %v3210 = vtanh.pop %v3196
    %v3211 = vxor.u32 %v3197, 2147483648
    %v3212 = vmul.f32 %v3211, 1.442695
    %v3213 = vpow.pop %v3212
    %v3214 = vadd.f32 %v3213, 1.0
    %v3215 = vrcp.pop %v3214
    %v3216 = vmul.f32 1.0, %v3215
    %v3217 = vmul.f32 %v3209, %v2495
    %v3218 = vmul.f32 %v3203, %v3210
    %v3219 = vadd.f32 %v3217, %v3218
    %v3220 = vtanh.pop %v3219
    %v3221 = vmul.f32 %v3216, %v3220
    %s3222 = scalar_lea.vmem %s1, 32
    %v3223 = vld [vmem:[%s3222] sm:$0xff]
    %v3224 = vmul.f32 %v3223, 0.33333334
    %3226 = vset.pattern.permute.xlu0 0
    %3227 = vperm.xlu0 %3226, %v3224
    %v3228 = vpop.permute.xlu0 %3227
    %v3230 = vld [vmem:[#allocation9] sm:$0xff]
    %v3231 = vld [vmem:[#allocation9 + $0x8] sm:$0xff]
    %v3232 = vld [vmem:[#allocation9 + $0x10] sm:$0xff]
    %v3233 = vld [vmem:[#allocation9 + $0x18] sm:$0xff]
    %v3234 = vld [vmem:[#allocation9 + $0x20] sm:$0xff]
    %v3235 = vld [vmem:[#allocation9 + $0x28] sm:$0xff]
    %v3236 = vld [vmem:[#allocation9 + $0x30] sm:$0xff]
    %v3237 = vld [vmem:[#allocation9 + $0x38] sm:$0xff]
    %v3238 = vld [vmem:[#allocation9 + $0x40] sm:$0xff]
    %v3239 = vld [vmem:[#allocation9 + $0x48] sm:$0xff]
    %v3240 = vld [vmem:[#allocation9 + $0x50] sm:$0xff]
    %v3241 = vld [vmem:[#allocation9 + $0x58] sm:$0xff]
    %v3242 = vld [vmem:[#allocation9 + $0x60] sm:$0xff]
    %v3243 = vld [vmem:[#allocation9 + $0x68] sm:$0xff]
    %v3244 = vld [vmem:[#allocation9 + $0x70] sm:$0xff]
    %v3245 = vld [vmem:[#allocation9 + $0x78] sm:$0xff]
    %v3246 = vld [vmem:[%s4] sm:$0x1]
    %v3248 = vlaneseq
    %v3249 = vshrl.u32 %v3248, 7
    %v3250 = vsub.s32 0, %v3249
    %v3251 = vrot.slane %v3246, %v3250
    %3253 = vmatprep.subr.mxu0 0.0
    %3254 = vmatpush1.msra.mxu0 %v3230
    %3255 = vmatprep.subr.mxu0 0.0
    %3256 = vmatpush1.msra.mxu0 %v3231
    %3257 = vmatprep.subr.mxu0 0.0
    %3258 = vmatpush1.msra.mxu0 %v3232
    %3259 = vmatprep.subr.mxu0 0.0
    %3260 = vmatpush1.msra.mxu0 %v3233
    %3261 = vmatprep.subr.mxu0 0.0
    %3262 = vmatpush1.msra.mxu0 %v3234
    %3263 = vmatprep.subr.mxu0 0.0
    %3264 = vmatpush1.msra.mxu0 %v3235
    %3265 = vmatprep.subr.mxu0 0.0
    %3266 = vmatpush1.msra.mxu0 %v3236
    %3267 = vmatprep.subr.mxu0 0.0
    %3268 = vmatpush1.msra.mxu0 %v3237
    %3269 = vmatprep.subr.mxu0 0.0
    %3270 = vmatpush1.msra.mxu0 %v3238
    %3271 = vmatprep.subr.mxu0 0.0
    %3272 = vmatpush1.msra.mxu0 %v3239
    %3273 = vmatprep.subr.mxu0 0.0
    %3274 = vmatpush1.msra.mxu0 %v3240
    %3275 = vmatprep.subr.mxu0 0.0
    %3276 = vmatpush1.msra.mxu0 %v3241
    %3277 = vmatprep.subr.mxu0 0.0
    %3278 = vmatpush1.msra.mxu0 %v3242
    %3279 = vmatprep.subr.mxu0 0.0
    %3280 = vmatpush1.msra.mxu0 %v3243
    %3281 = vmatprep.subr.mxu0 0.0
    %3282 = vmatpush1.msra.mxu0 %v3244
    %3283 = vmatprep.subr.mxu0 0.0
    %3284 = vmatpush1.msra.mxu0 %v3245
    %3285 = vmatprep.subr.mxu0 0.0
    %3286 = vmatpush1.msra.mxu0 0.0
    %3287 = vmatprep.subr.mxu0 0.0
    %3288 = vmatpush1.msra.mxu0 0.0
    %3289 = vmatprep.subr.mxu0 0.0
    %3290 = vmatpush1.msra.mxu0 0.0
    %3291 = vmatprep.subr.mxu0 0.0
    %3292 = vmatpush1.msra.mxu0 0.0
    %3293 = vmatprep.subr.mxu0 0.0
    %3294 = vmatpush1.msra.mxu0 0.0
    %3295 = vmatprep.subr.mxu0 0.0
    %3296 = vmatpush1.msra.mxu0 0.0
    %3297 = vmatprep.subr.mxu0 0.0
    %3298 = vmatpush1.msra.mxu0 0.0
    %3299 = vmatprep.subr.mxu0 0.0
    %3300 = vmatpush1.msra.mxu0 0.0
    %3301 = vmatprep.subr.mxu0 0.0
    %3302 = vmatpush1.msra.mxu0 0.0
    %3303 = vmatprep.subr.mxu0 0.0
    %3304 = vmatpush1.msra.mxu0 0.0
    %3305 = vmatprep.subr.mxu0 0.0
    %3306 = vmatpush1.msra.mxu0 0.0
    %3307 = vmatprep.subr.mxu0 0.0
    %3308 = vmatpush1.msra.mxu0 0.0
    %3309 = vmatprep.subr.mxu0 0.0
    %3310 = vmatpush1.msra.mxu0 0.0
    %3311 = vmatprep.subr.mxu0 0.0
    %3312 = vmatpush1.msra.mxu0 0.0
    %3313 = vmatprep.subr.mxu0 0.0
    %3314 = vmatpush1.msra.mxu0 0.0
    %3315 = vmatprep.subr.mxu0 0.0
    %3316 = vmatpush1.msra.mxu0 0.0
    %3317 = vmatprep.mubr.f32.mxu0 0.0
    %3318 = vmatmul.mubr.f32.gmra.mrb[0].mxu0 %v3221
    %v3319 = vpop.f32.mrb[0].mxu0
    %v3320 = vadd.f32 %v3251, %v3319
    %v3321 = vpop.f32.mrb[0].mxu0
    %3322 = vdwg.mxu0
    %v3323 = vtanh.pop %v3320
    %v3324 = vld [vmem:[#allocation10] sm:$0xff]
    %v3325 = vld [vmem:[#allocation10 + $0x8] sm:$0xff]
    %v3326 = vld [vmem:[#allocation10 + $0x10] sm:$0xff]
    %v3327 = vld [vmem:[#allocation10 + $0x18] sm:$0xff]
    %v3328 = vld [vmem:[#allocation10 + $0x20] sm:$0xff]
    %v3329 = vld [vmem:[#allocation10 + $0x28] sm:$0xff]
    %v3330 = vld [vmem:[#allocation10 + $0x30] sm:$0xff]
    %v3331 = vld [vmem:[#allocation10 + $0x38] sm:$0xff]
    %v3332 = vld [vmem:[#allocation10 + $0x40] sm:$0xff]
    %v3333 = vld [vmem:[#allocation10 + $0x48] sm:$0xff]
    %v3334 = vld [vmem:[#allocation10 + $0x50] sm:$0xff]
    %v3335 = vld [vmem:[#allocation10 + $0x58] sm:$0xff]
    %v3336 = vld [vmem:[#allocation10 + $0x60] sm:$0xff]
    %v3337 = vld [vmem:[#allocation10 + $0x68] sm:$0xff]
    %v3338 = vld [vmem:[#allocation10 + $0x70] sm:$0xff]
    %v3339 = vld [vmem:[#allocation10 + $0x78] sm:$0xff]
    %v3340 = vld [vmem:[%s6] sm:$0x1]
    %v3342 = vlaneseq
    %v3343 = vshrl.u32 %v3342, 7
    %v3344 = vsub.s32 0, %v3343
    %v3345 = vrot.slane %v3340, %v3344
    %3347 = vmatprep.subr.mxu0 0.0
    %3348 = vmatpush1.msra.mxu0 %v3324
    %3349 = vmatprep.subr.mxu0 0.0
    %3350 = vmatpush1.msra.mxu0 %v3325
    %3351 = vmatprep.subr.mxu0 0.0
    %3352 = vmatpush1.msra.mxu0 %v3326
    %3353 = vmatprep.subr.mxu0 0.0
    %3354 = vmatpush1.msra.mxu0 %v3327
    %3355 = vmatprep.subr.mxu0 0.0
    %3356 = vmatpush1.msra.mxu0 %v3328
    %3357 = vmatprep.subr.mxu0 0.0
    %3358 = vmatpush1.msra.mxu0 %v3329
    %3359 = vmatprep.subr.mxu0 0.0
    %3360 = vmatpush1.msra.mxu0 %v3330
    %3361 = vmatprep.subr.mxu0 0.0
    %3362 = vmatpush1.msra.mxu0 %v3331
    %3363 = vmatprep.subr.mxu0 0.0
    %3364 = vmatpush1.msra.mxu0 %v3332
    %3365 = vmatprep.subr.mxu0 0.0
    %3366 = vmatpush1.msra.mxu0 %v3333
    %3367 = vmatprep.subr.mxu0 0.0
    %3368 = vmatpush1.msra.mxu0 %v3334
    %3369 = vmatprep.subr.mxu0 0.0
    %3370 = vmatpush1.msra.mxu0 %v3335
    %3371 = vmatprep.subr.mxu0 0.0
    %3372 = vmatpush1.msra.mxu0 %v3336
    %3373 = vmatprep.subr.mxu0 0.0
    %3374 = vmatpush1.msra.mxu0 %v3337
    %3375 = vmatprep.subr.mxu0 0.0
    %3376 = vmatpush1.msra.mxu0 %v3338
    %3377 = vmatprep.subr.mxu0 0.0
    %3378 = vmatpush1.msra.mxu0 %v3339
    %3379 = vmatprep.subr.mxu0 0.0
    %3380 = vmatpush1.msra.mxu0 0.0
    %3381 = vmatprep.subr.mxu0 0.0
    %3382 = vmatpush1.msra.mxu0 0.0
    %3383 = vmatprep.subr.mxu0 0.0
    %3384 = vmatpush1.msra.mxu0 0.0
    %3385 = vmatprep.subr.mxu0 0.0
    %3386 = vmatpush1.msra.mxu0 0.0
    %3387 = vmatprep.subr.mxu0 0.0
    %3388 = vmatpush1.msra.mxu0 0.0
    %3389 = vmatprep.subr.mxu0 0.0
    %3390 = vmatpush1.msra.mxu0 0.0
    %3391 = vmatprep.subr.mxu0 0.0
    %3392 = vmatpush1.msra.mxu0 0.0
    %3393 = vmatprep.subr.mxu0 0.0
    %3394 = vmatpush1.msra.mxu0 0.0
    %3395 = vmatprep.subr.mxu0 0.0
    %3396 = vmatpush1.msra.mxu0 0.0
    %3397 = vmatprep.subr.mxu0 0.0
    %3398 = vmatpush1.msra.mxu0 0.0
    %3399 = vmatprep.subr.mxu0 0.0
    %3400 = vmatpush1.msra.mxu0 0.0
    %3401 = vmatprep.subr.mxu0 0.0
    %3402 = vmatpush1.msra.mxu0 0.0
    %3403 = vmatprep.subr.mxu0 0.0
    %3404 = vmatpush1.msra.mxu0 0.0
    %3405 = vmatprep.subr.mxu0 0.0
    %3406 = vmatpush1.msra.mxu0 0.0
    %3407 = vmatprep.subr.mxu0 0.0
    %3408 = vmatpush1.msra.mxu0 0.0
    %3409 = vmatprep.subr.mxu0 0.0
    %3410 = vmatpush1.msra.mxu0 0.0
    %3411 = vmatprep.mubr.f32.mxu0 0.0
    %3412 = vmatmul.mubr.f32.gmra.mrb[0].mxu0 %v3323
    %v3413 = vpop.f32.mrb[0].mxu0
    %v3414 = vadd.f32 %v3345, %v3413
    %v3415 = vpop.f32.mrb[0].mxu0
    %3416 = vdwg.mxu0
    %v3417 = vmul.f32 %v3228, %v3414
    %v3418 = vadd.f32 %v3221, %v3417
    %3419 = vmatprep.subr.mxu0 0.0
    %3420 = vmatpush1.msra.mxu0 %v3230
    %3421 = vmatprep.subr.mxu0 0.0
    %3422 = vmatpush1.msra.mxu0 %v3231
    %3423 = vmatprep.subr.mxu0 0.0
    %3424 = vmatpush1.msra.mxu0 %v3232
    %3425 = vmatprep.subr.mxu0 0.0
    %3426 = vmatpush1.msra.mxu0 %v3233
    %3427 = vmatprep.subr.mxu0 0.0
    %3428 = vmatpush1.msra.mxu0 %v3234
    %3429 = vmatprep.subr.mxu0 0.0
    %3430 = vmatpush1.msra.mxu0 %v3235
    %3431 = vmatprep.subr.mxu0 0.0
    %3432 = vmatpush1.msra.mxu0 %v3236
    %3433 = vmatprep.subr.mxu0 0.0
    %3434 = vmatpush1.msra.mxu0 %v3237
    %3435 = vmatprep.subr.mxu0 0.0
    %3436 = vmatpush1.msra.mxu0 %v3238
    %3437 = vmatprep.subr.mxu0 0.0
    %3438 = vmatpush1.msra.mxu0 %v3239
    %3439 = vmatprep.subr.mxu0 0.0
    %3440 = vmatpush1.msra.mxu0 %v3240
    %3441 = vmatprep.subr.mxu0 0.0
    %3442 = vmatpush1.msra.mxu0 %v3241
    %3443 = vmatprep.subr.mxu0 0.0
    %3444 = vmatpush1.msra.mxu0 %v3242
    %3445 = vmatprep.subr.mxu0 0.0
    %3446 = vmatpush1.msra.mxu0 %v3243
    %3447 = vmatprep.subr.mxu0 0.0
    %3448 = vmatpush1.msra.mxu0 %v3244
    %3449 = vmatprep.subr.mxu0 0.0
    %3450 = vmatpush1.msra.mxu0 %v3245
    %3451 = vmatprep.subr.mxu0 0.0
    %3452 = vmatpush1.msra.mxu0 0.0
    %3453 = vmatprep.subr.mxu0 0.0
    %3454 = vmatpush1.msra.mxu0 0.0
    %3455 = vmatprep.subr.mxu0 0.0
    %3456 = vmatpush1.msra.mxu0 0.0
    %3457 = vmatprep.subr.mxu0 0.0
    %3458 = vmatpush1.msra.mxu0 0.0
    %3459 = vmatprep.subr.mxu0 0.0
    %3460 = vmatpush1.msra.mxu0 0.0
    %3461 = vmatprep.subr.mxu0 0.0
    %3462 = vmatpush1.msra.mxu0 0.0
    %3463 = vmatprep.subr.mxu0 0.0
    %3464 = vmatpush1.msra.mxu0 0.0
    %3465 = vmatprep.subr.mxu0 0.0
    %3466 = vmatpush1.msra.mxu0 0.0
    %3467 = vmatprep.subr.mxu0 0.0
    %3468 = vmatpush1.msra.mxu0 0.0
    %3469 = vmatprep.subr.mxu0 0.0
    %3470 = vmatpush1.msra.mxu0 0.0
    %3471 = vmatprep.subr.mxu0 0.0
    %3472 = vmatpush1.msra.mxu0 0.0
    %3473 = vmatprep.subr.mxu0 0.0
    %3474 = vmatpush1.msra.mxu0 0.0
    %3475 = vmatprep.subr.mxu0 0.0
    %3476 = vmatpush1.msra.mxu0 0.0
    %3477 = vmatprep.subr.mxu0 0.0
    %3478 = vmatpush1.msra.mxu0 0.0
    %3479 = vmatprep.subr.mxu0 0.0
    %3480 = vmatpush1.msra.mxu0 0.0
    %3481 = vmatprep.subr.mxu0 0.0
    %3482 = vmatpush1.msra.mxu0 0.0
    %3483 = vmatprep.mubr.f32.mxu0 0.0
    %3484 = vmatmul.mubr.f32.gmra.mrb[0].mxu0 %v3418
    %v3485 = vpop.f32.mrb[0].mxu0
    %v3486 = vadd.f32 %v3251, %v3485
    %v3487 = vpop.f32.mrb[0].mxu0
    %3488 = vdwg.mxu0
    %v3489 = vtanh.pop %v3486
    %3490 = vmatprep.subr.mxu0 0.0
    %3491 = vmatpush1.msra.mxu0 %v3324
    %3492 = vmatprep.subr.mxu0 0.0
    %3493 = vmatpush1.msra.mxu0 %v3325
    %3494 = vmatprep.subr.mxu0 0.0
    %3495 = vmatpush1.msra.mxu0 %v3326
    %3496 = vmatprep.subr.mxu0 0.0
    %3497 = vmatpush1.msra.mxu0 %v3327
    %3498 = vmatprep.subr.mxu0 0.0
    %3499 = vmatpush1.msra.mxu0 %v3328
    %3500 = vmatprep.subr.mxu0 0.0
    %3501 = vmatpush1.msra.mxu0 %v3329
    %3502 = vmatprep.subr.mxu0 0.0
    %3503 = vmatpush1.msra.mxu0 %v3330
    %3504 = vmatprep.subr.mxu0 0.0
    %3505 = vmatpush1.msra.mxu0 %v3331
    %3506 = vmatprep.subr.mxu0 0.0
    %3507 = vmatpush1.msra.mxu0 %v3332
    %3508 = vmatprep.subr.mxu0 0.0
    %3509 = vmatpush1.msra.mxu0 %v3333
    %3510 = vmatprep.subr.mxu0 0.0
    %3511 = vmatpush1.msra.mxu0 %v3334
    %3512 = vmatprep.subr.mxu0 0.0
    %3513 = vmatpush1.msra.mxu0 %v3335
    %3514 = vmatprep.subr.mxu0 0.0
    %3515 = vmatpush1.msra.mxu0 %v3336
    %3516 = vmatprep.subr.mxu0 0.0
    %3517 = vmatpush1.msra.mxu0 %v3337
    %3518 = vmatprep.subr.mxu0 0.0
    %3519 = vmatpush1.msra.mxu0 %v3338
    %3520 = vmatprep.subr.mxu0 0.0
    %3521 = vmatpush1.msra.mxu0 %v3339
    %3522 = vmatprep.subr.mxu0 0.0
    %3523 = vmatpush1.msra.mxu0 0.0
    %3524 = vmatprep.subr.mxu0 0.0
    %3525 = vmatpush1.msra.mxu0 0.0
    %3526 = vmatprep.subr.mxu0 0.0
    %3527 = vmatpush1.msra.mxu0 0.0
    %3528 = vmatprep.subr.mxu0 0.0
    %3529 = vmatpush1.msra.mxu0 0.0
    %3530 = vmatprep.subr.mxu0 0.0
    %3531 = vmatpush1.msra.mxu0 0.0
    %3532 = vmatprep.subr.mxu0 0.0
    %3533 = vmatpush1.msra.mxu0 0.0
    %3534 = vmatprep.subr.mxu0 0.0
    %3535 = vmatpush1.msra.mxu0 0.0
    %3536 = vmatprep.subr.mxu0 0.0
    %3537 = vmatpush1.msra.mxu0 0.0
    %3538 = vmatprep.subr.mxu0 0.0
    %3539 = vmatpush1.msra.mxu0 0.0
    %3540 = vmatprep.subr.mxu0 0.0
    %3541 = vmatpush1.msra.mxu0 0.0
    %3542 = vmatprep.subr.mxu0 0.0
    %3543 = vmatpush1.msra.mxu0 0.0
    %3544 = vmatprep.subr.mxu0 0.0
    %3545 = vmatpush1.msra.mxu0 0.0
    %3546 = vmatprep.subr.mxu0 0.0
    %3547 = vmatpush1.msra.mxu0 0.0
    %3548 = vmatprep.subr.mxu0 0.0
    %3549 = vmatpush1.msra.mxu0 0.0
    %3550 = vmatprep.subr.mxu0 0.0
    %3551 = vmatpush1.msra.mxu0 0.0
    %3552 = vmatprep.subr.mxu0 0.0
    %3553 = vmatpush1.msra.mxu0 0.0
    %3554 = vmatprep.mubr.f32.mxu0 0.0
    %3555 = vmatmul.mubr.f32.gmra.mrb[0].mxu0 %v3489
    %v3556 = vpop.f32.mrb[0].mxu0
    %v3557 = vadd.f32 %v3345, %v3556
    %v3558 = vpop.f32.mrb[0].mxu0
    %3559 = vdwg.mxu0
    %v3560 = vmul.f32 %v3228, %v3557
    %v3561 = vadd.f32 %v3418, %v3560
    %3562 = vmatprep.subr.mxu0 0.0
    %3563 = vmatpush1.msra.mxu0 %v3230
    %3564 = vmatprep.subr.mxu0 0.0
    %3565 = vmatpush1.msra.mxu0 %v3231
    %3566 = vmatprep.subr.mxu0 0.0
    %3567 = vmatpush1.msra.mxu0 %v3232
    %3568 = vmatprep.subr.mxu0 0.0
    %3569 = vmatpush1.msra.mxu0 %v3233
    %3570 = vmatprep.subr.mxu0 0.0
    %3571 = vmatpush1.msra.mxu0 %v3234
    %3572 = vmatprep.subr.mxu0 0.0
    %3573 = vmatpush1.msra.mxu0 %v3235
    %3574 = vmatprep.subr.mxu0 0.0
    %3575 = vmatpush1.msra.mxu0 %v3236
    %3576 = vmatprep.subr.mxu0 0.0
    %3577 = vmatpush1.msra.mxu0 %v3237
    %3578 = vmatprep.subr.mxu0 0.0
    %3579 = vmatpush1.msra.mxu0 %v3238
    %3580 = vmatprep.subr.mxu0 0.0
    %3581 = vmatpush1.msra.mxu0 %v3239
    %3582 = vmatprep.subr.mxu0 0.0
    %3583 = vmatpush1.msra.mxu0 %v3240
    %3584 = vmatprep.subr.mxu0 0.0
    %3585 = vmatpush1.msra.mxu0 %v3241
    %3586 = vmatprep.subr.mxu0 0.0
    %3587 = vmatpush1.msra.mxu0 %v3242
    %3588 = vmatprep.subr.mxu0 0.0
    %3589 = vmatpush1.msra.mxu0 %v3243
    %3590 = vmatprep.subr.mxu0 0.0
    %3591 = vmatpush1.msra.mxu0 %v3244
    %3592 = vmatprep.subr.mxu0 0.0
    %3593 = vmatpush1.msra.mxu0 %v3245
    %3594 = vmatprep.subr.mxu0 0.0
    %3595 = vmatpush1.msra.mxu0 0.0
    %3596 = vmatprep.subr.mxu0 0.0
    %3597 = vmatpush1.msra.mxu0 0.0
    %3598 = vmatprep.subr.mxu0 0.0
    %3599 = vmatpush1.msra.mxu0 0.0
    %3600 = vmatprep.subr.mxu0 0.0
    %3601 = vmatpush1.msra.mxu0 0.0
    %3602 = vmatprep.subr.mxu0 0.0
    %3603 = vmatpush1.msra.mxu0 0.0
    %3604 = vmatprep.subr.mxu0 0.0
    %3605 = vmatpush1.msra.mxu0 0.0
    %3606 = vmatprep.subr.mxu0 0.0
    %3607 = vmatpush1.msra.mxu0 0.0
    %3608 = vmatprep.subr.mxu0 0.0
    %3609 = vmatpush1.msra.mxu0 0.0
    %3610 = vmatprep.subr.mxu0 0.0
    %3611 = vmatpush1.msra.mxu0 0.0
    %3612 = vmatprep.subr.mxu0 0.0
    %3613 = vmatpush1.msra.mxu0 0.0
    %3614 = vmatprep.subr.mxu0 0.0
    %3615 = vmatpush1.msra.mxu0 0.0
    %3616 = vmatprep.subr.mxu0 0.0
    %3617 = vmatpush1.msra.mxu0 0.0
    %3618 = vmatprep.subr.mxu0 0.0
    %3619 = vmatpush1.msra.mxu0 0.0
    %3620 = vmatprep.subr.mxu0 0.0
    %3621 = vmatpush1.msra.mxu0 0.0
    %3622 = vmatprep.subr.mxu0 0.0
    %3623 = vmatpush1.msra.mxu0 0.0
    %3624 = vmatprep.subr.mxu0 0.0
    %3625 = vmatpush1.msra.mxu0 0.0
    %3626 = vmatprep.mubr.f32.mxu0 0.0
    %3627 = vmatmul.mubr.f32.gmra.mrb[0].mxu0 %v3561
    %v3628 = vpop.f32.mrb[0].mxu0
    %v3629 = vadd.f32 %v3251, %v3628
    %v3630 = vpop.f32.mrb[0].mxu0
    %3631 = vdwg.mxu0
    %v3632 = vtanh.pop %v3629
    %3633 = vmatprep.subr.mxu0 0.0
    %3634 = vmatpush1.msra.mxu0 %v3324
    %3635 = vmatprep.subr.mxu0 0.0
    %3636 = vmatpush1.msra.mxu0 %v3325
    %3637 = vmatprep.subr.mxu0 0.0
    %3638 = vmatpush1.msra.mxu0 %v3326
    %3639 = vmatprep.subr.mxu0 0.0
    %3640 = vmatpush1.msra.mxu0 %v3327
    %3641 = vmatprep.subr.mxu0 0.0
    %3642 = vmatpush1.msra.mxu0 %v3328
    %3643 = vmatprep.subr.mxu0 0.0
    %3644 = vmatpush1.msra.mxu0 %v3329
    %3645 = vmatprep.subr.mxu0 0.0
    %3646 = vmatpush1.msra.mxu0 %v3330
    %3647 = vmatprep.subr.mxu0 0.0
    %3648 = vmatpush1.msra.mxu0 %v3331
    %3649 = vmatprep.subr.mxu0 0.0
    %3650 = vmatpush1.msra.mxu0 %v3332
    %3651 = vmatprep.subr.mxu0 0.0
    %3652 = vmatpush1.msra.mxu0 %v3333
    %3653 = vmatprep.subr.mxu0 0.0
    %3654 = vmatpush1.msra.mxu0 %v3334
    %3655 = vmatprep.subr.mxu0 0.0
    %3656 = vmatpush1.msra.mxu0 %v3335
    %3657 = vmatprep.subr.mxu0 0.0
    %3658 = vmatpush1.msra.mxu0 %v3336
    %3659 = vmatprep.subr.mxu0 0.0
    %3660 = vmatpush1.msra.mxu0 %v3337
    %3661 = vmatprep.subr.mxu0 0.0
    %3662 = vmatpush1.msra.mxu0 %v3338
    %3663 = vmatprep.subr.mxu0 0.0
    %3664 = vmatpush1.msra.mxu0 %v3339
    %3665 = vmatprep.subr.mxu0 0.0
    %3666 = vmatpush1.msra.mxu0 0.0
    %3667 = vmatprep.subr.mxu0 0.0
    %3668 = vmatpush1.msra.mxu0 0.0
    %3669 = vmatprep.subr.mxu0 0.0
    %3670 = vmatpush1.msra.mxu0 0.0
    %3671 = vmatprep.subr.mxu0 0.0
    %3672 = vmatpush1.msra.mxu0 0.0
    %3673 = vmatprep.subr.mxu0 0.0
    %3674 = vmatpush1.msra.mxu0 0.0
    %3675 = vmatprep.subr.mxu0 0.0
    %3676 = vmatpush1.msra.mxu0 0.0
    %3677 = vmatprep.subr.mxu0 0.0
    %3678 = vmatpush1.msra.mxu0 0.0
    %3679 = vmatprep.subr.mxu0 0.0
    %3680 = vmatpush1.msra.mxu0 0.0
    %3681 = vmatprep.subr.mxu0 0.0
    %3682 = vmatpush1.msra.mxu0 0.0
    %3683 = vmatprep.subr.mxu0 0.0
    %3684 = vmatpush1.msra.mxu0 0.0
    %3685 = vmatprep.subr.mxu0 0.0
    %3686 = vmatpush1.msra.mxu0 0.0
    %3687 = vmatprep.subr.mxu0 0.0
    %3688 = vmatpush1.msra.mxu0 0.0
    %3689 = vmatprep.subr.mxu0 0.0
    %3690 = vmatpush1.msra.mxu0 0.0
    %3691 = vmatprep.subr.mxu0 0.0
    %3692 = vmatpush1.msra.mxu0 0.0
    %3693 = vmatprep.subr.mxu0 0.0
    %3694 = vmatpush1.msra.mxu0 0.0
    %3695 = vmatprep.subr.mxu0 0.0
    %3696 = vmatpush1.msra.mxu0 0.0
    %3697 = vmatprep.mubr.f32.mxu0 0.0
    %3698 = vmatmul.mubr.f32.gmra.mrb[0].mxu0 %v3632
    %v3699 = vpop.f32.mrb[0].mxu0
    %v3700 = vadd.f32 %v3345, %v3699
    %v3701 = vpop.f32.mrb[0].mxu0
    %3702 = vdwg.mxu0
    %v3703 = vmul.f32 %v3228, %v3700
    %v3704 = vadd.f32 %v3561, %v3703
    %s3705 = scalar_lea.vmem [#allocation12], 32
    %3706 = vst [vmem:[%s3705] sm:$0xff] %v3704
    %s3707 = scalar_lea.vmem [#allocation4], 160
    %v3708 = vld [vmem:[%s3707] sm:$0xff]
    %v3709 = vld [vmem:[%s3707 + $0x8] sm:$0xff]
    %v3710 = vld [vmem:[%s3707 + $0x10] sm:$0xff]
    %v3711 = vld [vmem:[%s3707 + $0x18] sm:$0xff]
    %v3712 = vld [vmem:[#allocation7] sm:$0xff]
    %v3713 = vld [vmem:[#allocation7 + $0x8] sm:$0xff]
    %v3714 = vld [vmem:[#allocation7 + $0x10] sm:$0xff]
    %v3715 = vld [vmem:[#allocation7 + $0x18] sm:$0xff]
    %v3716 = vld [vmem:[#allocation7 + $0x20] sm:$0xff]
    %v3717 = vld [vmem:[#allocation7 + $0x28] sm:$0xff]
    %v3718 = vld [vmem:[#allocation7 + $0x30] sm:$0xff]
    %v3719 = vld [vmem:[#allocation7 + $0x38] sm:$0xff]
    %v3720 = vld [vmem:[#allocation7 + $0x40] sm:$0xff]
    %v3721 = vld [vmem:[#allocation7 + $0x48] sm:$0xff]
    %v3722 = vld [vmem:[#allocation7 + $0x50] sm:$0xff]
    %v3723 = vld [vmem:[#allocation7 + $0x58] sm:$0xff]
    %v3724 = vld [vmem:[#allocation7 + $0x60] sm:$0xff]
    %v3725 = vld [vmem:[#allocation7 + $0x68] sm:$0xff]
    %v3726 = vld [vmem:[#allocation7 + $0x70] sm:$0xff]
    %v3727 = vld [vmem:[#allocation7 + $0x78] sm:$0xff]
    %v3728 = vld [vmem:[#allocation7 + $0x80] sm:$0xff]
    %v3729 = vld [vmem:[#allocation7 + $0x88] sm:$0xff]
    %v3730 = vld [vmem:[#allocation7 + $0x90] sm:$0xff]
    %v3731 = vld [vmem:[#allocation7 + $0x98] sm:$0xff]
    %v3732 = vld [vmem:[#allocation7 + $0xa0] sm:$0xff]
    %v3733 = vld [vmem:[#allocation7 + $0xa8] sm:$0xff]
    %v3734 = vld [vmem:[#allocation7 + $0xb0] sm:$0xff]
    %v3735 = vld [vmem:[#allocation7 + $0xb8] sm:$0xff]
    %v3736 = vld [vmem:[#allocation7 + $0xc0] sm:$0xff]
    %v3737 = vld [vmem:[#allocation7 + $0xc8] sm:$0xff]
    %v3738 = vld [vmem:[#allocation7 + $0xd0] sm:$0xff]
    %v3739 = vld [vmem:[#allocation7 + $0xd8] sm:$0xff]
    %v3740 = vld [vmem:[#allocation7 + $0xe0] sm:$0xff]
    %v3741 = vld [vmem:[#allocation7 + $0xe8] sm:$0xff]
    %v3742 = vld [vmem:[#allocation7 + $0xf0] sm:$0xff]
    %v3743 = vld [vmem:[#allocation7 + $0xf8] sm:$0xff]
    %v3744 = vld [vmem:[#allocation7 + $0x100] sm:$0xff]
    %v3745 = vld [vmem:[#allocation7 + $0x108] sm:$0xff]
    %v3746 = vld [vmem:[#allocation7 + $0x110] sm:$0xff]
    %v3747 = vld [vmem:[#allocation7 + $0x118] sm:$0xff]
    %v3748 = vld [vmem:[#allocation7 + $0x120] sm:$0xff]
    %v3749 = vld [vmem:[#allocation7 + $0x128] sm:$0xff]
    %v3750 = vld [vmem:[#allocation7 + $0x130] sm:$0xff]
    %v3751 = vld [vmem:[#allocation7 + $0x138] sm:$0xff]
    %v3752 = vld [vmem:[#allocation7 + $0x140] sm:$0xff]
    %v3753 = vld [vmem:[#allocation7 + $0x148] sm:$0xff]
    %v3754 = vld [vmem:[#allocation7 + $0x150] sm:$0xff]
    %v3755 = vld [vmem:[#allocation7 + $0x158] sm:$0xff]
    %v3756 = vld [vmem:[#allocation7 + $0x160] sm:$0xff]
    %v3757 = vld [vmem:[#allocation7 + $0x168] sm:$0xff]
    %v3758 = vld [vmem:[#allocation7 + $0x170] sm:$0xff]
    %v3759 = vld [vmem:[#allocation7 + $0x178] sm:$0xff]
    %v3760 = vld [vmem:[#allocation7 + $0x180] sm:$0xff]
    %v3761 = vld [vmem:[#allocation7 + $0x188] sm:$0xff]
    %v3762 = vld [vmem:[#allocation7 + $0x190] sm:$0xff]
    %v3763 = vld [vmem:[#allocation7 + $0x198] sm:$0xff]
    %v3764 = vld [vmem:[#allocation7 + $0x1a0] sm:$0xff]
    %v3765 = vld [vmem:[#allocation7 + $0x1a8] sm:$0xff]
    %v3766 = vld [vmem:[#allocation7 + $0x1b0] sm:$0xff]
    %v3767 = vld [vmem:[#allocation7 + $0x1b8] sm:$0xff]
    %v3768 = vld [vmem:[#allocation7 + $0x1c0] sm:$0xff]
    %v3769 = vld [vmem:[#allocation7 + $0x1c8] sm:$0xff]
    %v3770 = vld [vmem:[#allocation7 + $0x1d0] sm:$0xff]
    %v3771 = vld [vmem:[#allocation7 + $0x1d8] sm:$0xff]
    %v3772 = vld [vmem:[#allocation7 + $0x1e0] sm:$0xff]
    %v3773 = vld [vmem:[#allocation7 + $0x1e8] sm:$0xff]
    %v3774 = vld [vmem:[#allocation7 + $0x1f0] sm:$0xff]
    %v3775 = vld [vmem:[#allocation7 + $0x1f8] sm:$0xff]
    %3776 = vmatprep.subr.mxu0 %v3713
    %3777 = vmatpush1.msra.mxu0 %v3712
    %3778 = vmatprep.subr.mxu0 %v3717
    %3779 = vmatpush1.msra.mxu0 %v3716
    %3780 = vmatprep.subr.mxu0 %v3721
    %3781 = vmatpush1.msra.mxu0 %v3720
    %3782 = vmatprep.subr.mxu0 %v3725
    %3783 = vmatpush1.msra.mxu0 %v3724
    %3784 = vmatprep.subr.mxu0 %v3729
    %3785 = vmatpush1.msra.mxu0 %v3728
    %3786 = vmatprep.subr.mxu0 %v3733
    %3787 = vmatpush1.msra.mxu0 %v3732
    %3788 = vmatprep.subr.mxu0 %v3737
    %3789 = vmatpush1.msra.mxu0 %v3736
    %3790 = vmatprep.subr.mxu0 %v3741
    %3791 = vmatpush1.msra.mxu0 %v3740
    %3792 = vmatprep.subr.mxu0 %v3745
    %3793 = vmatpush1.msra.mxu0 %v3744
    %3794 = vmatprep.subr.mxu0 %v3749
    %3795 = vmatpush1.msra.mxu0 %v3748
    %3796 = vmatprep.subr.mxu0 %v3753
    %3797 = vmatpush1.msra.mxu0 %v3752
    %3798 = vmatprep.subr.mxu0 %v3757
    %3799 = vmatpush1.msra.mxu0 %v3756
    %3800 = vmatprep.subr.mxu0 %v3761
    %3801 = vmatpush1.msra.mxu0 %v3760
    %3802 = vmatprep.subr.mxu0 %v3765
    %3803 = vmatpush1.msra.mxu0 %v3764
    %3804 = vmatprep.subr.mxu0 %v3769
    %3805 = vmatpush1.msra.mxu0 %v3768
    %3806 = vmatprep.subr.mxu0 %v3773
    %3807 = vmatpush1.msra.mxu0 %v3772
    %3808 = vmatprep.subr.mxu0 0.0
    %3809 = vmatpush1.msra.mxu0 0.0
    %3810 = vmatprep.subr.mxu0 0.0
    %3811 = vmatpush1.msra.mxu0 0.0
    %3812 = vmatprep.subr.mxu0 0.0
    %3813 = vmatpush1.msra.mxu0 0.0
    %3814 = vmatprep.subr.mxu0 0.0
    %3815 = vmatpush1.msra.mxu0 0.0
    %3816 = vmatprep.subr.mxu0 0.0
    %3817 = vmatpush1.msra.mxu0 0.0
    %3818 = vmatprep.subr.mxu0 0.0
    %3819 = vmatpush1.msra.mxu0 0.0
    %3820 = vmatprep.subr.mxu0 0.0
    %3821 = vmatpush1.msra.mxu0 0.0
    %3822 = vmatprep.subr.mxu0 0.0
    %3823 = vmatpush1.msra.mxu0 0.0
    %3824 = vmatprep.subr.mxu0 0.0
    %3825 = vmatpush1.msra.mxu0 0.0
    %3826 = vmatprep.subr.mxu0 0.0
    %3827 = vmatpush1.msra.mxu0 0.0
    %3828 = vmatprep.subr.mxu0 0.0
    %3829 = vmatpush1.msra.mxu0 0.0
    %3830 = vmatprep.subr.mxu0 0.0
    %3831 = vmatpush1.msra.mxu0 0.0
    %3832 = vmatprep.subr.mxu0 0.0
    %3833 = vmatpush1.msra.mxu0 0.0
    %3834 = vmatprep.subr.mxu0 0.0
    %3835 = vmatpush1.msra.mxu0 0.0
    %3836 = vmatprep.subr.mxu0 0.0
    %3837 = vmatpush1.msra.mxu0 0.0
    %3838 = vmatprep.subr.mxu0 0.0
    %3839 = vmatpush1.msra.mxu0 0.0
    %3840 = vmatprep.mubr.f32.mxu0 0.0
    %3841 = vmatmul.mubr.f32.gmra.mrb[0].mxu0 %v3704
    %v3842 = vpop.f32.mrb[0].mxu0
    %v3843 = vadd.f32 0.0, %v3842
    %v3844 = vpop.f32.mrb[0].mxu0
    %v3845 = vadd.f32 0.0, %v3844
    %3846 = vdwg.mxu0
    %3847 = vmatprep.subr.mxu0 %v3715
    %3848 = vmatpush1.msra.mxu0 %v3714
    %3849 = vmatprep.subr.mxu0 %v3719
    %3850 = vmatpush1.msra.mxu0 %v3718
    %3851 = vmatprep.subr.mxu0 %v3723
    %3852 = vmatpush1.msra.mxu0 %v3722
    %3853 = vmatprep.subr.mxu0 %v3727
    %3854 = vmatpush1.msra.mxu0 %v3726
    %3855 = vmatprep.subr.mxu0 %v3731
    %3856 = vmatpush1.msra.mxu0 %v3730
    %3857 = vmatprep.subr.mxu0 %v3735
    %3858 = vmatpush1.msra.mxu0 %v3734
    %3859 = vmatprep.subr.mxu0 %v3739
    %3860 = vmatpush1.msra.mxu0 %v3738
    %3861 = vmatprep.subr.mxu0 %v3743
    %3862 = vmatpush1.msra.mxu0 %v3742
    %3863 = vmatprep.subr.mxu0 %v3747
    %3864 = vmatpush1.msra.mxu0 %v3746
    %3865 = vmatprep.subr.mxu0 %v3751
    %3866 = vmatpush1.msra.mxu0 %v3750
    %3867 = vmatprep.subr.mxu0 %v3755
    %3868 = vmatpush1.msra.mxu0 %v3754
    %3869 = vmatprep.subr.mxu0 %v3759
    %3870 = vmatpush1.msra.mxu0 %v3758
    %3871 = vmatprep.subr.mxu0 %v3763
    %3872 = vmatpush1.msra.mxu0 %v3762
    %3873 = vmatprep.subr.mxu0 %v3767
    %3874 = vmatpush1.msra.mxu0 %v3766
    %3875 = vmatprep.subr.mxu0 %v3771
    %3876 = vmatpush1.msra.mxu0 %v3770
    %3877 = vmatprep.subr.mxu0 %v3775
    %3878 = vmatpush1.msra.mxu0 %v3774
    %3879 = vmatprep.subr.mxu0 0.0
    %3880 = vmatpush1.msra.mxu0 0.0
    %3881 = vmatprep.subr.mxu0 0.0
    %3882 = vmatpush1.msra.mxu0 0.0
    %3883 = vmatprep.subr.mxu0 0.0
    %3884 = vmatpush1.msra.mxu0 0.0
    %3885 = vmatprep.subr.mxu0 0.0
    %3886 = vmatpush1.msra.mxu0 0.0
    %3887 = vmatprep.subr.mxu0 0.0
    %3888 = vmatpush1.msra.mxu0 0.0
    %3889 = vmatprep.subr.mxu0 0.0
    %3890 = vmatpush1.msra.mxu0 0.0
    %3891 = vmatprep.subr.mxu0 0.0
    %3892 = vmatpush1.msra.mxu0 0.0
    %3893 = vmatprep.subr.mxu0 0.0
    %3894 = vmatpush1.msra.mxu0 0.0
    %3895 = vmatprep.subr.mxu0 0.0
    %3896 = vmatpush1.msra.mxu0 0.0
    %3897 = vmatprep.subr.mxu0 0.0
    %3898 = vmatpush1.msra.mxu0 0.0
    %3899 = vmatprep.subr.mxu0 0.0
    %3900 = vmatpush1.msra.mxu0 0.0
    %3901 = vmatprep.subr.mxu0 0.0
    %3902 = vmatpush1.msra.mxu0 0.0
    %3903 = vmatprep.subr.mxu0 0.0
    %3904 = vmatpush1.msra.mxu0 0.0
    %3905 = vmatprep.subr.mxu0 0.0
    %3906 = vmatpush1.msra.mxu0 0.0
    %3907 = vmatprep.subr.mxu0 0.0
    %3908 = vmatpush1.msra.mxu0 0.0
    %3909 = vmatprep.subr.mxu0 0.0
    %3910 = vmatpush1.msra.mxu0 0.0
    %3911 = vmatprep.mubr.f32.mxu0 0.0
    %3912 = vmatmul.mubr.f32.gmra.mrb[0].mxu0 %v3704
    %v3913 = vpop.f32.mrb[0].mxu0
    %v3914 = vadd.f32 0.0, %v3913
    %v3915 = vpop.f32.mrb[0].mxu0
    %v3916 = vadd.f32 0.0, %v3915
    %3917 = vdwg.mxu0
    %v3918 = vadd.f32 %v3708, %v3843
    %v3919 = vadd.f32 %v3709, %v3845
    %v3920 = vadd.f32 %v3710, %v3914
    %v3921 = vadd.f32 %v3711, %v3916
    %v3922 = vxor.u32 %v3918, 2147483648
    %v3923 = vmul.f32 %v3922, 1.442695
    %v3924 = vpow.pop %v3923
    %v3925 = vadd.f32 %v3924, 1.0
    %v3926 = vrcp.pop %v3925
    %v3927 = vmul.f32 1.0, %v3926
    %v3928 = vxor.u32 %v3919, 2147483648
    %v3929 = vmul.f32 %v3928, 1.442695
    %v3930 = vpow.pop %v3929
    %v3931 = vadd.f32 %v3930, 1.0
    %v3932 = vrcp.pop %v3931
    %v3933 = vmul.f32 1.0, %v3932
    %v3934 = vtanh.pop %v3920
    %v3935 = vxor.u32 %v3921, 2147483648
    %v3936 = vmul.f32 %v3935, 1.442695
    %v3937 = vpow.pop %v3936
    %v3938 = vadd.f32 %v3937, 1.0
    %v3939 = vrcp.pop %v3938
    %v3940 = vmul.f32 1.0, %v3939
    %v3941 = vmul.f32 %v3933, %v3219
    %v3942 = vmul.f32 %v3927, %v3934
    %v3943 = vadd.f32 %v3941, %v3942
    %v3944 = vtanh.pop %v3943
    %v3945 = vmul.f32 %v3940, %v3944
    %s3946 = scalar_lea.vmem %s1, 40
    %v3947 = vld [vmem:[%s3946] sm:$0xff]
    %v3948 = vmul.f32 %v3947, 0.33333334
    %3950 = vset.pattern.permute.xlu0 0
    %3951 = vperm.xlu0 %3950, %v3948
    %v3952 = vpop.permute.xlu0 %3951
    %v3954 = vld [vmem:[#allocation9] sm:$0xff]
    %v3955 = vld [vmem:[#allocation9 + $0x8] sm:$0xff]
    %v3956 = vld [vmem:[#allocation9 + $0x10] sm:$0xff]
    %v3957 = vld [vmem:[#allocation9 + $0x18] sm:$0xff]
    %v3958 = vld [vmem:[#allocation9 + $0x20] sm:$0xff]
    %v3959 = vld [vmem:[#allocation9 + $0x28] sm:$0xff]
    %v3960 = vld [vmem:[#allocation9 + $0x30] sm:$0xff]
    %v3961 = vld [vmem:[#allocation9 + $0x38] sm:$0xff]
    %v3962 = vld [vmem:[#allocation9 + $0x40] sm:$0xff]
    %v3963 = vld [vmem:[#allocation9 + $0x48] sm:$0xff]
    %v3964 = vld [vmem:[#allocation9 + $0x50] sm:$0xff]
    %v3965 = vld [vmem:[#allocation9 + $0x58] sm:$0xff]
    %v3966 = vld [vmem:[#allocation9 + $0x60] sm:$0xff]
    %v3967 = vld [vmem:[#allocation9 + $0x68] sm:$0xff]
    %v3968 = vld [vmem:[#allocation9 + $0x70] sm:$0xff]
    %v3969 = vld [vmem:[#allocation9 + $0x78] sm:$0xff]
    %v3970 = vld [vmem:[%s4] sm:$0x1]
    %v3972 = vlaneseq
    %v3973 = vshrl.u32 %v3972, 7
    %v3974 = vsub.s32 0, %v3973
    %v3975 = vrot.slane %v3970, %v3974
    %3977 = vmatprep.subr.mxu0 0.0
    %3978 = vmatpush1.msra.mxu0 %v3954
    %3979 = vmatprep.subr.mxu0 0.0
    %3980 = vmatpush1.msra.mxu0 %v3955
    %3981 = vmatprep.subr.mxu0 0.0
    %3982 = vmatpush1.msra.mxu0 %v3956
    %3983 = vmatprep.subr.mxu0 0.0
    %3984 = vmatpush1.msra.mxu0 %v3957
    %3985 = vmatprep.subr.mxu0 0.0
    %3986 = vmatpush1.msra.mxu0 %v3958
    %3987 = vmatprep.subr.mxu0 0.0
    %3988 = vmatpush1.msra.mxu0 %v3959
    %3989 = vmatprep.subr.mxu0 0.0
    %3990 = vmatpush1.msra.mxu0 %v3960
    %3991 = vmatprep.subr.mxu0 0.0
    %3992 = vmatpush1.msra.mxu0 %v3961
    %3993 = vmatprep.subr.mxu0 0.0
    %3994 = vmatpush1.msra.mxu0 %v3962
    %3995 = vmatprep.subr.mxu0 0.0
    %3996 = vmatpush1.msra.mxu0 %v3963
    %3997 = vmatprep.subr.mxu0 0.0
    %3998 = vmatpush1.msra.mxu0 %v3964
    %3999 = vmatprep.subr.mxu0 0.0
    %4000 = vmatpush1.msra.mxu0 %v3965
    %4001 = vmatprep.subr.mxu0 0.0
    %4002 = vmatpush1.msra.mxu0 %v3966
    %4003 = vmatprep.subr.mxu0 0.0
    %4004 = vmatpush1.msra.mxu0 %v3967
    %4005 = vmatprep.subr.mxu0 0.0
    %4006 = vmatpush1.msra.mxu0 %v3968
    %4007 = vmatprep.subr.mxu0 0.0
    %4008 = vmatpush1.msra.mxu0 %v3969
    %4009 = vmatprep.subr.mxu0 0.0
    %4010 = vmatpush1.msra.mxu0 0.0
    %4011 = vmatprep.subr.mxu0 0.0
    %4012 = vmatpush1.msra.mxu0 0.0
    %4013 = vmatprep.subr.mxu0 0.0
    %4014 = vmatpush1.msra.mxu0 0.0
    %4015 = vmatprep.subr.mxu0 0.0
    %4016 = vmatpush1.msra.mxu0 0.0
    %4017 = vmatprep.subr.mxu0 0.0
    %4018 = vmatpush1.msra.mxu0 0.0
    %4019 = vmatprep.subr.mxu0 0.0
    %4020 = vmatpush1.msra.mxu0 0.0
    %4021 = vmatprep.subr.mxu0 0.0
    %4022 = vmatpush1.msra.mxu0 0.0
    %4023 = vmatprep.subr.mxu0 0.0
    %4024 = vmatpush1.msra.mxu0 0.0
    %4025 = vmatprep.subr.mxu0 0.0
    %4026 = vmatpush1.msra.mxu0 0.0
    %4027 = vmatprep.subr.mxu0 0.0
    %4028 = vmatpush1.msra.mxu0 0.0
    %4029 = vmatprep.subr.mxu0 0.0
    %4030 = vmatpush1.msra.mxu0 0.0
    %4031 = vmatprep.subr.mxu0 0.0
    %4032 = vmatpush1.msra.mxu0 0.0
    %4033 = vmatprep.subr.mxu0 0.0
    %4034 = vmatpush1.msra.mxu0 0.0
    %4035 = vmatprep.subr.mxu0 0.0
    %4036 = vmatpush1.msra.mxu0 0.0
    %4037 = vmatprep.subr.mxu0 0.0
    %4038 = vmatpush1.msra.mxu0 0.0
    %4039 = vmatprep.subr.mxu0 0.0
    %4040 = vmatpush1.msra.mxu0 0.0
    %4041 = vmatprep.mubr.f32.mxu0 0.0
    %4042 = vmatmul.mubr.f32.gmra.mrb[0].mxu0 %v3945
    %v4043 = vpop.f32.mrb[0].mxu0
    %v4044 = vadd.f32 %v3975, %v4043
    %v4045 = vpop.f32.mrb[0].mxu0
    %4046 = vdwg.mxu0
    %v4047 = vtanh.pop %v4044
    %v4048 = vld [vmem:[#allocation10] sm:$0xff]
    %v4049 = vld [vmem:[#allocation10 + $0x8] sm:$0xff]
    %v4050 = vld [vmem:[#allocation10 + $0x10] sm:$0xff]
    %v4051 = vld [vmem:[#allocation10 + $0x18] sm:$0xff]
    %v4052 = vld [vmem:[#allocation10 + $0x20] sm:$0xff]
    %v4053 = vld [vmem:[#allocation10 + $0x28] sm:$0xff]
    %v4054 = vld [vmem:[#allocation10 + $0x30] sm:$0xff]
    %v4055 = vld [vmem:[#allocation10 + $0x38] sm:$0xff]
    %v4056 = vld [vmem:[#allocation10 + $0x40] sm:$0xff]
    %v4057 = vld [vmem:[#allocation10 + $0x48] sm:$0xff]
    %v4058 = vld [vmem:[#allocation10 + $0x50] sm:$0xff]
    %v4059 = vld [vmem:[#allocation10 + $0x58] sm:$0xff]
    %v4060 = vld [vmem:[#allocation10 + $0x60] sm:$0xff]
    %v4061 = vld [vmem:[#allocation10 + $0x68] sm:$0xff]
    %v4062 = vld [vmem:[#allocation10 + $0x70] sm:$0xff]
    %v4063 = vld [vmem:[#allocation10 + $0x78] sm:$0xff]
    %v4064 = vld [vmem:[%s6] sm:$0x1]
    %v4066 = vlaneseq
    %v4067 = vshrl.u32 %v4066, 7
    %v4068 = vsub.s32 0, %v4067
    %v4069 = vrot.slane %v4064, %v4068
    %4071 = vmatprep.subr.mxu0 0.0
    %4072 = vmatpush1.msra.mxu0 %v4048
    %4073 = vmatprep.subr.mxu0 0.0
    %4074 = vmatpush1.msra.mxu0 %v4049
    %4075 = vmatprep.subr.mxu0 0.0
    %4076 = vmatpush1.msra.mxu0 %v4050
    %4077 = vmatprep.subr.mxu0 0.0
    %4078 = vmatpush1.msra.mxu0 %v4051
    %4079 = vmatprep.subr.mxu0 0.0
    %4080 = vmatpush1.msra.mxu0 %v4052
    %4081 = vmatprep.subr.mxu0 0.0
    %4082 = vmatpush1.msra.mxu0 %v4053
    %4083 = vmatprep.subr.mxu0 0.0
    %4084 = vmatpush1.msra.mxu0 %v4054
    %4085 = vmatprep.subr.mxu0 0.0
    %4086 = vmatpush1.msra.mxu0 %v4055
    %4087 = vmatprep.subr.mxu0 0.0
    %4088 = vmatpush1.msra.mxu0 %v4056
    %4089 = vmatprep.subr.mxu0 0.0
    %4090 = vmatpush1.msra.mxu0 %v4057
    %4091 = vmatprep.subr.mxu0 0.0
    %4092 = vmatpush1.msra.mxu0 %v4058
    %4093 = vmatprep.subr.mxu0 0.0
    %4094 = vmatpush1.msra.mxu0 %v4059
    %4095 = vmatprep.subr.mxu0 0.0
    %4096 = vmatpush1.msra.mxu0 %v4060
    %4097 = vmatprep.subr.mxu0 0.0
    %4098 = vmatpush1.msra.mxu0 %v4061
    %4099 = vmatprep.subr.mxu0 0.0
    %4100 = vmatpush1.msra.mxu0 %v4062
    %4101 = vmatprep.subr.mxu0 0.0
    %4102 = vmatpush1.msra.mxu0 %v4063
    %4103 = vmatprep.subr.mxu0 0.0
    %4104 = vmatpush1.msra.mxu0 0.0
    %4105 = vmatprep.subr.mxu0 0.0
    %4106 = vmatpush1.msra.mxu0 0.0
    %4107 = vmatprep.subr.mxu0 0.0
    %4108 = vmatpush1.msra.mxu0 0.0
    %4109 = vmatprep.subr.mxu0 0.0
    %4110 = vmatpush1.msra.mxu0 0.0
    %4111 = vmatprep.subr.mxu0 0.0
    %4112 = vmatpush1.msra.mxu0 0.0
    %4113 = vmatprep.subr.mxu0 0.0
    %4114 = vmatpush1.msra.mxu0 0.0
    %4115 = vmatprep.subr.mxu0 0.0
    %4116 = vmatpush1.msra.mxu0 0.0
    %4117 = vmatprep.subr.mxu0 0.0
    %4118 = vmatpush1.msra.mxu0 0.0
    %4119 = vmatprep.subr.mxu0 0.0
    %4120 = vmatpush1.msra.mxu0 0.0
    %4121 = vmatprep.subr.mxu0 0.0
    %4122 = vmatpush1.msra.mxu0 0.0
    %4123 = vmatprep.subr.mxu0 0.0
    %4124 = vmatpush1.msra.mxu0 0.0
    %4125 = vmatprep.subr.mxu0 0.0
    %4126 = vmatpush1.msra.mxu0 0.0
    %4127 = vmatprep.subr.mxu0 0.0
    %4128 = vmatpush1.msra.mxu0 0.0
    %4129 = vmatprep.subr.mxu0 0.0
    %4130 = vmatpush1.msra.mxu0 0.0
    %4131 = vmatprep.subr.mxu0 0.0
    %4132 = vmatpush1.msra.mxu0 0.0
    %4133 = vmatprep.subr.mxu0 0.0
    %4134 = vmatpush1.msra.mxu0 0.0
    %4135 = vmatprep.mubr.f32.mxu0 0.0
    %4136 = vmatmul.mubr.f32.gmra.mrb[0].mxu0 %v4047
    %v4137 = vpop.f32.mrb[0].mxu0
    %v4138 = vadd.f32 %v4069, %v4137
    %v4139 = vpop.f32.mrb[0].mxu0
    %4140 = vdwg.mxu0
    %v4141 = vmul.f32 %v3952, %v4138
    %v4142 = vadd.f32 %v3945, %v4141
    %4143 = vmatprep.subr.mxu0 0.0
    %4144 = vmatpush1.msra.mxu0 %v3954
    %4145 = vmatprep.subr.mxu0 0.0
    %4146 = vmatpush1.msra.mxu0 %v3955
    %4147 = vmatprep.subr.mxu0 0.0
    %4148 = vmatpush1.msra.mxu0 %v3956
    %4149 = vmatprep.subr.mxu0 0.0
    %4150 = vmatpush1.msra.mxu0 %v3957
    %4151 = vmatprep.subr.mxu0 0.0
    %4152 = vmatpush1.msra.mxu0 %v3958
    %4153 = vmatprep.subr.mxu0 0.0
    %4154 = vmatpush1.msra.mxu0 %v3959
    %4155 = vmatprep.subr.mxu0 0.0
    %4156 = vmatpush1.msra.mxu0 %v3960
    %4157 = vmatprep.subr.mxu0 0.0
    %4158 = vmatpush1.msra.mxu0 %v3961
    %4159 = vmatprep.subr.mxu0 0.0
    %4160 = vmatpush1.msra.mxu0 %v3962
    %4161 = vmatprep.subr.mxu0 0.0
    %4162 = vmatpush1.msra.mxu0 %v3963
    %4163 = vmatprep.subr.mxu0 0.0
    %4164 = vmatpush1.msra.mxu0 %v3964
    %4165 = vmatprep.subr.mxu0 0.0
    %4166 = vmatpush1.msra.mxu0 %v3965
    %4167 = vmatprep.subr.mxu0 0.0
    %4168 = vmatpush1.msra.mxu0 %v3966
    %4169 = vmatprep.subr.mxu0 0.0
    %4170 = vmatpush1.msra.mxu0 %v3967
    %4171 = vmatprep.subr.mxu0 0.0
    %4172 = vmatpush1.msra.mxu0 %v3968
    %4173 = vmatprep.subr.mxu0 0.0
    %4174 = vmatpush1.msra.mxu0 %v3969
    %4175 = vmatprep.subr.mxu0 0.0
    %4176 = vmatpush1.msra.mxu0 0.0
    %4177 = vmatprep.subr.mxu0 0.0
    %4178 = vmatpush1.msra.mxu0 0.0
    %4179 = vmatprep.subr.mxu0 0.0
    %4180 = vmatpush1.msra.mxu0 0.0
    %4181 = vmatprep.subr.mxu0 0.0
    %4182 = vmatpush1.msra.mxu0 0.0
    %4183 = vmatprep.subr.mxu0 0.0
    %4184 = vmatpush1.msra.mxu0 0.0
    %4185 = vmatprep.subr.mxu0 0.0
    %4186 = vmatpush1.msra.mxu0 0.0
    %4187 = vmatprep.subr.mxu0 0.0
    %4188 = vmatpush1.msra.mxu0 0.0
    %4189 = vmatprep.subr.mxu0 0.0
    %4190 = vmatpush1.msra.mxu0 0.0
    %4191 = vmatprep.subr.mxu0 0.0
    %4192 = vmatpush1.msra.mxu0 0.0
    %4193 = vmatprep.subr.mxu0 0.0
    %4194 = vmatpush1.msra.mxu0 0.0
    %4195 = vmatprep.subr.mxu0 0.0
    %4196 = vmatpush1.msra.mxu0 0.0
    %4197 = vmatprep.subr.mxu0 0.0
    %4198 = vmatpush1.msra.mxu0 0.0
    %4199 = vmatprep.subr.mxu0 0.0
    %4200 = vmatpush1.msra.mxu0 0.0
    %4201 = vmatprep.subr.mxu0 0.0
    %4202 = vmatpush1.msra.mxu0 0.0
    %4203 = vmatprep.subr.mxu0 0.0
    %4204 = vmatpush1.msra.mxu0 0.0
    %4205 = vmatprep.subr.mxu0 0.0
    %4206 = vmatpush1.msra.mxu0 0.0
    %4207 = vmatprep.mubr.f32.mxu0 0.0
    %4208 = vmatmul.mubr.f32.gmra.mrb[0].mxu0 %v4142
    %v4209 = vpop.f32.mrb[0].mxu0
    %v4210 = vadd.f32 %v3975, %v4209
    %v4211 = vpop.f32.mrb[0].mxu0
    %4212 = vdwg.mxu0
    %v4213 = vtanh.pop %v4210
    %4214 = vmatprep.subr.mxu0 0.0
    %4215 = vmatpush1.msra.mxu0 %v4048
    %4216 = vmatprep.subr.mxu0 0.0
    %4217 = vmatpush1.msra.mxu0 %v4049
    %4218 = vmatprep.subr.mxu0 0.0
    %4219 = vmatpush1.msra.mxu0 %v4050
    %4220 = vmatprep.subr.mxu0 0.0
    %4221 = vmatpush1.msra.mxu0 %v4051
    %4222 = vmatprep.subr.mxu0 0.0
    %4223 = vmatpush1.msra.mxu0 %v4052
    %4224 = vmatprep.subr.mxu0 0.0
    %4225 = vmatpush1.msra.mxu0 %v4053
    %4226 = vmatprep.subr.mxu0 0.0
    %4227 = vmatpush1.msra.mxu0 %v4054
    %4228 = vmatprep.subr.mxu0 0.0
    %4229 = vmatpush1.msra.mxu0 %v4055
    %4230 = vmatprep.subr.mxu0 0.0
    %4231 = vmatpush1.msra.mxu0 %v4056
    %4232 = vmatprep.subr.mxu0 0.0
    %4233 = vmatpush1.msra.mxu0 %v4057
    %4234 = vmatprep.subr.mxu0 0.0
    %4235 = vmatpush1.msra.mxu0 %v4058
    %4236 = vmatprep.subr.mxu0 0.0
    %4237 = vmatpush1.msra.mxu0 %v4059
    %4238 = vmatprep.subr.mxu0 0.0
    %4239 = vmatpush1.msra.mxu0 %v4060
    %4240 = vmatprep.subr.mxu0 0.0
    %4241 = vmatpush1.msra.mxu0 %v4061
    %4242 = vmatprep.subr.mxu0 0.0
    %4243 = vmatpush1.msra.mxu0 %v4062
    %4244 = vmatprep.subr.mxu0 0.0
    %4245 = vmatpush1.msra.mxu0 %v4063
    %4246 = vmatprep.subr.mxu0 0.0
    %4247 = vmatpush1.msra.mxu0 0.0
    %4248 = vmatprep.subr.mxu0 0.0
    %4249 = vmatpush1.msra.mxu0 0.0
    %4250 = vmatprep.subr.mxu0 0.0
    %4251 = vmatpush1.msra.mxu0 0.0
    %4252 = vmatprep.subr.mxu0 0.0
    %4253 = vmatpush1.msra.mxu0 0.0
    %4254 = vmatprep.subr.mxu0 0.0
    %4255 = vmatpush1.msra.mxu0 0.0
    %4256 = vmatprep.subr.mxu0 0.0
    %4257 = vmatpush1.msra.mxu0 0.0
    %4258 = vmatprep.subr.mxu0 0.0
    %4259 = vmatpush1.msra.mxu0 0.0
    %4260 = vmatprep.subr.mxu0 0.0
    %4261 = vmatpush1.msra.mxu0 0.0
    %4262 = vmatprep.subr.mxu0 0.0
    %4263 = vmatpush1.msra.mxu0 0.0
    %4264 = vmatprep.subr.mxu0 0.0
    %4265 = vmatpush1.msra.mxu0 0.0
    %4266 = vmatprep.subr.mxu0 0.0
    %4267 = vmatpush1.msra.mxu0 0.0
    %4268 = vmatprep.subr.mxu0 0.0
    %4269 = vmatpush1.msra.mxu0 0.0
    %4270 = vmatprep.subr.mxu0 0.0
    %4271 = vmatpush1.msra.mxu0 0.0
    %4272 = vmatprep.subr.mxu0 0.0
    %4273 = vmatpush1.msra.mxu0 0.0
    %4274 = vmatprep.subr.mxu0 0.0
    %4275 = vmatpush1.msra.mxu0 0.0
    %4276 = vmatprep.subr.mxu0 0.0
    %4277 = vmatpush1.msra.mxu0 0.0
    %4278 = vmatprep.mubr.f32.mxu0 0.0
    %4279 = vmatmul.mubr.f32.gmra.mrb[0].mxu0 %v4213
    %v4280 = vpop.f32.mrb[0].mxu0
    %v4281 = vadd.f32 %v4069, %v4280
    %v4282 = vpop.f32.mrb[0].mxu0
    %4283 = vdwg.mxu0
    %v4284 = vmul.f32 %v3952, %v4281
    %v4285 = vadd.f32 %v4142, %v4284
    %4286 = vmatprep.subr.mxu0 0.0
    %4287 = vmatpush1.msra.mxu0 %v3954
    %4288 = vmatprep.subr.mxu0 0.0
    %4289 = vmatpush1.msra.mxu0 %v3955
    %4290 = vmatprep.subr.mxu0 0.0
    %4291 = vmatpush1.msra.mxu0 %v3956
    %4292 = vmatprep.subr.mxu0 0.0
    %4293 = vmatpush1.msra.mxu0 %v3957
    %4294 = vmatprep.subr.mxu0 0.0
    %4295 = vmatpush1.msra.mxu0 %v3958
    %4296 = vmatprep.subr.mxu0 0.0
    %4297 = vmatpush1.msra.mxu0 %v3959
    %4298 = vmatprep.subr.mxu0 0.0
    %4299 = vmatpush1.msra.mxu0 %v3960
    %4300 = vmatprep.subr.mxu0 0.0
    %4301 = vmatpush1.msra.mxu0 %v3961
    %4302 = vmatprep.subr.mxu0 0.0
    %4303 = vmatpush1.msra.mxu0 %v3962
    %4304 = vmatprep.subr.mxu0 0.0
    %4305 = vmatpush1.msra.mxu0 %v3963
    %4306 = vmatprep.subr.mxu0 0.0
    %4307 = vmatpush1.msra.mxu0 %v3964
    %4308 = vmatprep.subr.mxu0 0.0
    %4309 = vmatpush1.msra.mxu0 %v3965
    %4310 = vmatprep.subr.mxu0 0.0
    %4311 = vmatpush1.msra.mxu0 %v3966
    %4312 = vmatprep.subr.mxu0 0.0
    %4313 = vmatpush1.msra.mxu0 %v3967
    %4314 = vmatprep.subr.mxu0 0.0
    %4315 = vmatpush1.msra.mxu0 %v3968
    %4316 = vmatprep.subr.mxu0 0.0
    %4317 = vmatpush1.msra.mxu0 %v3969
    %4318 = vmatprep.subr.mxu0 0.0
    %4319 = vmatpush1.msra.mxu0 0.0
    %4320 = vmatprep.subr.mxu0 0.0
    %4321 = vmatpush1.msra.mxu0 0.0
    %4322 = vmatprep.subr.mxu0 0.0
    %4323 = vmatpush1.msra.mxu0 0.0
    %4324 = vmatprep.subr.mxu0 0.0
    %4325 = vmatpush1.msra.mxu0 0.0
    %4326 = vmatprep.subr.mxu0 0.0
    %4327 = vmatpush1.msra.mxu0 0.0
    %4328 = vmatprep.subr.mxu0 0.0
    %4329 = vmatpush1.msra.mxu0 0.0
    %4330 = vmatprep.subr.mxu0 0.0
    %4331 = vmatpush1.msra.mxu0 0.0
    %4332 = vmatprep.subr.mxu0 0.0
    %4333 = vmatpush1.msra.mxu0 0.0
    %4334 = vmatprep.subr.mxu0 0.0
    %4335 = vmatpush1.msra.mxu0 0.0
    %4336 = vmatprep.subr.mxu0 0.0
    %4337 = vmatpush1.msra.mxu0 0.0
    %4338 = vmatprep.subr.mxu0 0.0
    %4339 = vmatpush1.msra.mxu0 0.0
    %4340 = vmatprep.subr.mxu0 0.0
    %4341 = vmatpush1.msra.mxu0 0.0
    %4342 = vmatprep.subr.mxu0 0.0
    %4343 = vmatpush1.msra.mxu0 0.0
    %4344 = vmatprep.subr.mxu0 0.0
    %4345 = vmatpush1.msra.mxu0 0.0
    %4346 = vmatprep.subr.mxu0 0.0
    %4347 = vmatpush1.msra.mxu0 0.0
    %4348 = vmatprep.subr.mxu0 0.0
    %4349 = vmatpush1.msra.mxu0 0.0
    %4350 = vmatprep.mubr.f32.mxu0 0.0
    %4351 = vmatmul.mubr.f32.gmra.mrb[0].mxu0 %v4285
    %v4352 = vpop.f32.mrb[0].mxu0
    %v4353 = vadd.f32 %v3975, %v4352
    %v4354 = vpop.f32.mrb[0].mxu0
    %4355 = vdwg.mxu0
    %v4356 = vtanh.pop %v4353
    %4357 = vmatprep.subr.mxu0 0.0
    %4358 = vmatpush1.msra.mxu0 %v4048
    %4359 = vmatprep.subr.mxu0 0.0
    %4360 = vmatpush1.msra.mxu0 %v4049
    %4361 = vmatprep.subr.mxu0 0.0
    %4362 = vmatpush1.msra.mxu0 %v4050
    %4363 = vmatprep.subr.mxu0 0.0
    %4364 = vmatpush1.msra.mxu0 %v4051
    %4365 = vmatprep.subr.mxu0 0.0
    %4366 = vmatpush1.msra.mxu0 %v4052
    %4367 = vmatprep.subr.mxu0 0.0
    %4368 = vmatpush1.msra.mxu0 %v4053
    %4369 = vmatprep.subr.mxu0 0.0
    %4370 = vmatpush1.msra.mxu0 %v4054
    %4371 = vmatprep.subr.mxu0 0.0
    %4372 = vmatpush1.msra.mxu0 %v4055
    %4373 = vmatprep.subr.mxu0 0.0
    %4374 = vmatpush1.msra.mxu0 %v4056
    %4375 = vmatprep.subr.mxu0 0.0
    %4376 = vmatpush1.msra.mxu0 %v4057
    %4377 = vmatprep.subr.mxu0 0.0
    %4378 = vmatpush1.msra.mxu0 %v4058
    %4379 = vmatprep.subr.mxu0 0.0
    %4380 = vmatpush1.msra.mxu0 %v4059
    %4381 = vmatprep.subr.mxu0 0.0
    %4382 = vmatpush1.msra.mxu0 %v4060
    %4383 = vmatprep.subr.mxu0 0.0
    %4384 = vmatpush1.msra.mxu0 %v4061
    %4385 = vmatprep.subr.mxu0 0.0
    %4386 = vmatpush1.msra.mxu0 %v4062
    %4387 = vmatprep.subr.mxu0 0.0
    %4388 = vmatpush1.msra.mxu0 %v4063
    %4389 = vmatprep.subr.mxu0 0.0
    %4390 = vmatpush1.msra.mxu0 0.0
    %4391 = vmatprep.subr.mxu0 0.0
    %4392 = vmatpush1.msra.mxu0 0.0
    %4393 = vmatprep.subr.mxu0 0.0
    %4394 = vmatpush1.msra.mxu0 0.0
    %4395 = vmatprep.subr.mxu0 0.0
    %4396 = vmatpush1.msra.mxu0 0.0
    %4397 = vmatprep.subr.mxu0 0.0
    %4398 = vmatpush1.msra.mxu0 0.0
    %4399 = vmatprep.subr.mxu0 0.0
    %4400 = vmatpush1.msra.mxu0 0.0
    %4401 = vmatprep.subr.mxu0 0.0
    %4402 = vmatpush1.msra.mxu0 0.0
    %4403 = vmatprep.subr.mxu0 0.0
    %4404 = vmatpush1.msra.mxu0 0.0
    %4405 = vmatprep.subr.mxu0 0.0
    %4406 = vmatpush1.msra.mxu0 0.0
    %4407 = vmatprep.subr.mxu0 0.0
    %4408 = vmatpush1.msra.mxu0 0.0
    %4409 = vmatprep.subr.mxu0 0.0
    %4410 = vmatpush1.msra.mxu0 0.0
    %4411 = vmatprep.subr.mxu0 0.0
    %4412 = vmatpush1.msra.mxu0 0.0
    %4413 = vmatprep.subr.mxu0 0.0
    %4414 = vmatpush1.msra.mxu0 0.0
    %4415 = vmatprep.subr.mxu0 0.0
    %4416 = vmatpush1.msra.mxu0 0.0
    %4417 = vmatprep.subr.mxu0 0.0
    %4418 = vmatpush1.msra.mxu0 0.0
    %4419 = vmatprep.subr.mxu0 0.0
    %4420 = vmatpush1.msra.mxu0 0.0
    %4421 = vmatprep.mubr.f32.mxu0 0.0
    %4422 = vmatmul.mubr.f32.gmra.mrb[0].mxu0 %v4356
    %v4423 = vpop.f32.mrb[0].mxu0
    %v4424 = vadd.f32 %v4069, %v4423
    %v4425 = vpop.f32.mrb[0].mxu0
    %4426 = vdwg.mxu0
    %v4427 = vmul.f32 %v3952, %v4424
    %v4428 = vadd.f32 %v4285, %v4427
    %s4429 = scalar_lea.vmem [#allocation12], 40
    %4430 = vst [vmem:[%s4429] sm:$0xff] %v4428
    %s4431 = scalar_lea.vmem [#allocation4], 192
    %v4432 = vld [vmem:[%s4431] sm:$0xff]
    %v4433 = vld [vmem:[%s4431 + $0x8] sm:$0xff]
    %v4434 = vld [vmem:[%s4431 + $0x10] sm:$0xff]
    %v4435 = vld [vmem:[%s4431 + $0x18] sm:$0xff]
    %v4436 = vld [vmem:[#allocation7] sm:$0xff]
    %v4437 = vld [vmem:[#allocation7 + $0x8] sm:$0xff]
    %v4438 = vld [vmem:[#allocation7 + $0x10] sm:$0xff]
    %v4439 = vld [vmem:[#allocation7 + $0x18] sm:$0xff]
    %v4440 = vld [vmem:[#allocation7 + $0x20] sm:$0xff]
    %v4441 = vld [vmem:[#allocation7 + $0x28] sm:$0xff]
    %v4442 = vld [vmem:[#allocation7 + $0x30] sm:$0xff]
    %v4443 = vld [vmem:[#allocation7 + $0x38] sm:$0xff]
    %v4444 = vld [vmem:[#allocation7 + $0x40] sm:$0xff]
    %v4445 = vld [vmem:[#allocation7 + $0x48] sm:$0xff]
    %v4446 = vld [vmem:[#allocation7 + $0x50] sm:$0xff]
    %v4447 = vld [vmem:[#allocation7 + $0x58] sm:$0xff]
    %v4448 = vld [vmem:[#allocation7 + $0x60] sm:$0xff]
    %v4449 = vld [vmem:[#allocation7 + $0x68] sm:$0xff]
    %v4450 = vld [vmem:[#allocation7 + $0x70] sm:$0xff]
    %v4451 = vld [vmem:[#allocation7 + $0x78] sm:$0xff]
    %v4452 = vld [vmem:[#allocation7 + $0x80] sm:$0xff]
    %v4453 = vld [vmem:[#allocation7 + $0x88] sm:$0xff]
    %v4454 = vld [vmem:[#allocation7 + $0x90] sm:$0xff]
    %v4455 = vld [vmem:[#allocation7 + $0x98] sm:$0xff]
    %v4456 = vld [vmem:[#allocation7 + $0xa0] sm:$0xff]
    %v4457 = vld [vmem:[#allocation7 + $0xa8] sm:$0xff]
    %v4458 = vld [vmem:[#allocation7 + $0xb0] sm:$0xff]
    %v4459 = vld [vmem:[#allocation7 + $0xb8] sm:$0xff]
    %v4460 = vld [vmem:[#allocation7 + $0xc0] sm:$0xff]
    %v4461 = vld [vmem:[#allocation7 + $0xc8] sm:$0xff]
    %v4462 = vld [vmem:[#allocation7 + $0xd0] sm:$0xff]
    %v4463 = vld [vmem:[#allocation7 + $0xd8] sm:$0xff]
    %v4464 = vld [vmem:[#allocation7 + $0xe0] sm:$0xff]
    %v4465 = vld [vmem:[#allocation7 + $0xe8] sm:$0xff]
    %v4466 = vld [vmem:[#allocation7 + $0xf0] sm:$0xff]
    %v4467 = vld [vmem:[#allocation7 + $0xf8] sm:$0xff]
    %v4468 = vld [vmem:[#allocation7 + $0x100] sm:$0xff]
    %v4469 = vld [vmem:[#allocation7 + $0x108] sm:$0xff]
    %v4470 = vld [vmem:[#allocation7 + $0x110] sm:$0xff]
    %v4471 = vld [vmem:[#allocation7 + $0x118] sm:$0xff]
    %v4472 = vld [vmem:[#allocation7 + $0x120] sm:$0xff]
    %v4473 = vld [vmem:[#allocation7 + $0x128] sm:$0xff]
    %v4474 = vld [vmem:[#allocation7 + $0x130] sm:$0xff]
    %v4475 = vld [vmem:[#allocation7 + $0x138] sm:$0xff]
    %v4476 = vld [vmem:[#allocation7 + $0x140] sm:$0xff]
    %v4477 = vld [vmem:[#allocation7 + $0x148] sm:$0xff]
    %v4478 = vld [vmem:[#allocation7 + $0x150] sm:$0xff]
    %v4479 = vld [vmem:[#allocation7 + $0x158] sm:$0xff]
    %v4480 = vld [vmem:[#allocation7 + $0x160] sm:$0xff]
    %v4481 = vld [vmem:[#allocation7 + $0x168] sm:$0xff]
    %v4482 = vld [vmem:[#allocation7 + $0x170] sm:$0xff]
    %v4483 = vld [vmem:[#allocation7 + $0x178] sm:$0xff]
    %v4484 = vld [vmem:[#allocation7 + $0x180] sm:$0xff]
    %v4485 = vld [vmem:[#allocation7 + $0x188] sm:$0xff]
    %v4486 = vld [vmem:[#allocation7 + $0x190] sm:$0xff]
    %v4487 = vld [vmem:[#allocation7 + $0x198] sm:$0xff]
    %v4488 = vld [vmem:[#allocation7 + $0x1a0] sm:$0xff]
    %v4489 = vld [vmem:[#allocation7 + $0x1a8] sm:$0xff]
    %v4490 = vld [vmem:[#allocation7 + $0x1b0] sm:$0xff]
    %v4491 = vld [vmem:[#allocation7 + $0x1b8] sm:$0xff]
    %v4492 = vld [vmem:[#allocation7 + $0x1c0] sm:$0xff]
    %v4493 = vld [vmem:[#allocation7 + $0x1c8] sm:$0xff]
    %v4494 = vld [vmem:[#allocation7 + $0x1d0] sm:$0xff]
    %v4495 = vld [vmem:[#allocation7 + $0x1d8] sm:$0xff]
    %v4496 = vld [vmem:[#allocation7 + $0x1e0] sm:$0xff]
    %v4497 = vld [vmem:[#allocation7 + $0x1e8] sm:$0xff]
    %v4498 = vld [vmem:[#allocation7 + $0x1f0] sm:$0xff]
    %v4499 = vld [vmem:[#allocation7 + $0x1f8] sm:$0xff]
    %4500 = vmatprep.subr.mxu0 %v4437
    %4501 = vmatpush1.msra.mxu0 %v4436
    %4502 = vmatprep.subr.mxu0 %v4441
    %4503 = vmatpush1.msra.mxu0 %v4440
    %4504 = vmatprep.subr.mxu0 %v4445
    %4505 = vmatpush1.msra.mxu0 %v4444
    %4506 = vmatprep.subr.mxu0 %v4449
    %4507 = vmatpush1.msra.mxu0 %v4448
    %4508 = vmatprep.subr.mxu0 %v4453
    %4509 = vmatpush1.msra.mxu0 %v4452
    %4510 = vmatprep.subr.mxu0 %v4457
    %4511 = vmatpush1.msra.mxu0 %v4456
    %4512 = vmatprep.subr.mxu0 %v4461
    %4513 = vmatpush1.msra.mxu0 %v4460
    %4514 = vmatprep.subr.mxu0 %v4465
    %4515 = vmatpush1.msra.mxu0 %v4464
    %4516 = vmatprep.subr.mxu0 %v4469
    %4517 = vmatpush1.msra.mxu0 %v4468
    %4518 = vmatprep.subr.mxu0 %v4473
    %4519 = vmatpush1.msra.mxu0 %v4472
    %4520 = vmatprep.subr.mxu0 %v4477
    %4521 = vmatpush1.msra.mxu0 %v4476
    %4522 = vmatprep.subr.mxu0 %v4481
    %4523 = vmatpush1.msra.mxu0 %v4480
    %4524 = vmatprep.subr.mxu0 %v4485
    %4525 = vmatpush1.msra.mxu0 %v4484
    %4526 = vmatprep.subr.mxu0 %v4489
    %4527 = vmatpush1.msra.mxu0 %v4488
    %4528 = vmatprep.subr.mxu0 %v4493
    %4529 = vmatpush1.msra.mxu0 %v4492
    %4530 = vmatprep.subr.mxu0 %v4497
    %4531 = vmatpush1.msra.mxu0 %v4496
    %4532 = vmatprep.subr.mxu0 0.0
    %4533 = vmatpush1.msra.mxu0 0.0
    %4534 = vmatprep.subr.mxu0 0.0
    %4535 = vmatpush1.msra.mxu0 0.0
    %4536 = vmatprep.subr.mxu0 0.0
    %4537 = vmatpush1.msra.mxu0 0.0
    %4538 = vmatprep.subr.mxu0 0.0
    %4539 = vmatpush1.msra.mxu0 0.0
    %4540 = vmatprep.subr.mxu0 0.0
    %4541 = vmatpush1.msra.mxu0 0.0
    %4542 = vmatprep.subr.mxu0 0.0
    %4543 = vmatpush1.msra.mxu0 0.0
    %4544 = vmatprep.subr.mxu0 0.0
    %4545 = vmatpush1.msra.mxu0 0.0
    %4546 = vmatprep.subr.mxu0 0.0
    %4547 = vmatpush1.msra.mxu0 0.0
    %4548 = vmatprep.subr.mxu0 0.0
    %4549 = vmatpush1.msra.mxu0 0.0
    %4550 = vmatprep.subr.mxu0 0.0
    %4551 = vmatpush1.msra.mxu0 0.0
    %4552 = vmatprep.subr.mxu0 0.0
    %4553 = vmatpush1.msra.mxu0 0.0
    %4554 = vmatprep.subr.mxu0 0.0
    %4555 = vmatpush1.msra.mxu0 0.0
    %4556 = vmatprep.subr.mxu0 0.0
    %4557 = vmatpush1.msra.mxu0 0.0
    %4558 = vmatprep.subr.mxu0 0.0
    %4559 = vmatpush1.msra.mxu0 0.0
    %4560 = vmatprep.subr.mxu0 0.0
    %4561 = vmatpush1.msra.mxu0 0.0
    %4562 = vmatprep.subr.mxu0 0.0
    %4563 = vmatpush1.msra.mxu0 0.0
    %4564 = vmatprep.mubr.f32.mxu0 0.0
    %4565 = vmatmul.mubr.f32.gmra.mrb[0].mxu0 %v4428
    %v4566 = vpop.f32.mrb[0].mxu0
    %v4567 = vadd.f32 0.0, %v4566
    %v4568 = vpop.f32.mrb[0].mxu0
    %v4569 = vadd.f32 0.0, %v4568
    %4570 = vdwg.mxu0
    %4571 = vmatprep.subr.mxu0 %v4439
    %4572 = vmatpush1.msra.mxu0 %v4438
    %4573 = vmatprep.subr.mxu0 %v4443
    %4574 = vmatpush1.msra.mxu0 %v4442
    %4575 = vmatprep.subr.mxu0 %v4447
    %4576 = vmatpush1.msra.mxu0 %v4446
    %4577 = vmatprep.subr.mxu0 %v4451
    %4578 = vmatpush1.msra.mxu0 %v4450
    %4579 = vmatprep.subr.mxu0 %v4455
    %4580 = vmatpush1.msra.mxu0 %v4454
    %4581 = vmatprep.subr.mxu0 %v4459
    %4582 = vmatpush1.msra.mxu0 %v4458
    %4583 = vmatprep.subr.mxu0 %v4463
    %4584 = vmatpush1.msra.mxu0 %v4462
    %4585 = vmatprep.subr.mxu0 %v4467
    %4586 = vmatpush1.msra.mxu0 %v4466
    %4587 = vmatprep.subr.mxu0 %v4471
    %4588 = vmatpush1.msra.mxu0 %v4470
    %4589 = vmatprep.subr.mxu0 %v4475
    %4590 = vmatpush1.msra.mxu0 %v4474
    %4591 = vmatprep.subr.mxu0 %v4479
    %4592 = vmatpush1.msra.mxu0 %v4478
    %4593 = vmatprep.subr.mxu0 %v4483
    %4594 = vmatpush1.msra.mxu0 %v4482
    %4595 = vmatprep.subr.mxu0 %v4487
    %4596 = vmatpush1.msra.mxu0 %v4486
    %4597 = vmatprep.subr.mxu0 %v4491
    %4598 = vmatpush1.msra.mxu0 %v4490
    %4599 = vmatprep.subr.mxu0 %v4495
    %4600 = vmatpush1.msra.mxu0 %v4494
    %4601 = vmatprep.subr.mxu0 %v4499
    %4602 = vmatpush1.msra.mxu0 %v4498
    %4603 = vmatprep.subr.mxu0 0.0
    %4604 = vmatpush1.msra.mxu0 0.0
    %4605 = vmatprep.subr.mxu0 0.0
    %4606 = vmatpush1.msra.mxu0 0.0
    %4607 = vmatprep.subr.mxu0 0.0
    %4608 = vmatpush1.msra.mxu0 0.0
    %4609 = vmatprep.subr.mxu0 0.0
    %4610 = vmatpush1.msra.mxu0 0.0
    %4611 = vmatprep.subr.mxu0 0.0
    %4612 = vmatpush1.msra.mxu0 0.0
    %4613 = vmatprep.subr.mxu0 0.0
    %4614 = vmatpush1.msra.mxu0 0.0
    %4615 = vmatprep.subr.mxu0 0.0
    %4616 = vmatpush1.msra.mxu0 0.0
    %4617 = vmatprep.subr.mxu0 0.0
    %4618 = vmatpush1.msra.mxu0 0.0
    %4619 = vmatprep.subr.mxu0 0.0
    %4620 = vmatpush1.msra.mxu0 0.0
    %4621 = vmatprep.subr.mxu0 0.0
    %4622 = vmatpush1.msra.mxu0 0.0
    %4623 = vmatprep.subr.mxu0 0.0
    %4624 = vmatpush1.msra.mxu0 0.0
    %4625 = vmatprep.subr.mxu0 0.0
    %4626 = vmatpush1.msra.mxu0 0.0
    %4627 = vmatprep.subr.mxu0 0.0
    %4628 = vmatpush1.msra.mxu0 0.0
    %4629 = vmatprep.subr.mxu0 0.0
    %4630 = vmatpush1.msra.mxu0 0.0
    %4631 = vmatprep.subr.mxu0 0.0
    %4632 = vmatpush1.msra.mxu0 0.0
    %4633 = vmatprep.subr.mxu0 0.0
    %4634 = vmatpush1.msra.mxu0 0.0
    %4635 = vmatprep.mubr.f32.mxu0 0.0
    %4636 = vmatmul.mubr.f32.gmra.mrb[0].mxu0 %v4428
    %v4637 = vpop.f32.mrb[0].mxu0
    %v4638 = vadd.f32 0.0, %v4637
    %v4639 = vpop.f32.mrb[0].mxu0
    %v4640 = vadd.f32 0.0, %v4639
    %4641 = vdwg.mxu0
    %v4642 = vadd.f32 %v4432, %v4567
    %v4643 = vadd.f32 %v4433, %v4569
    %v4644 = vadd.f32 %v4434, %v4638
    %v4645 = vadd.f32 %v4435, %v4640
    %v4646 = vxor.u32 %v4642, 2147483648
    %v4647 = vmul.f32 %v4646, 1.442695
    %v4648 = vpow.pop %v4647
    %v4649 = vadd.f32 %v4648, 1.0
    %v4650 = vrcp.pop %v4649
    %v4651 = vmul.f32 1.0, %v4650
    %v4652 = vxor.u32 %v4643, 2147483648
    %v4653 = vmul.f32 %v4652, 1.442695
    %v4654 = vpow.pop %v4653
    %v4655 = vadd.f32 %v4654, 1.0
    %v4656 = vrcp.pop %v4655
    %v4657 = vmul.f32 1.0, %v4656
    %v4658 = vtanh.pop %v4644
    %v4659 = vxor.u32 %v4645, 2147483648
    %v4660 = vmul.f32 %v4659, 1.442695
    %v4661 = vpow.pop %v4660
    %v4662 = vadd.f32 %v4661, 1.0
    %v4663 = vrcp.pop %v4662
    %v4664 = vmul.f32 1.0, %v4663
    %v4665 = vmul.f32 %v4657, %v3943
    %v4666 = vmul.f32 %v4651, %v4658
    %v4667 = vadd.f32 %v4665, %v4666
    %v4668 = vtanh.pop %v4667
    %v4669 = vmul.f32 %v4664, %v4668
    %s4670 = scalar_lea.vmem %s1, 48
    %v4671 = vld [vmem:[%s4670] sm:$0xff]
    %v4672 = vmul.f32 %v4671, 0.33333334
    %4674 = vset.pattern.permute.xlu0 0
    %4675 = vperm.xlu0 %4674, %v4672
    %v4676 = vpop.permute.xlu0 %4675
    %v4678 = vld [vmem:[#allocation9] sm:$0xff]
    %v4679 = vld [vmem:[#allocation9 + $0x8] sm:$0xff]
    %v4680 = vld [vmem:[#allocation9 + $0x10] sm:$0xff]
    %v4681 = vld [vmem:[#allocation9 + $0x18] sm:$0xff]
    %v4682 = vld [vmem:[#allocation9 + $0x20] sm:$0xff]
    %v4683 = vld [vmem:[#allocation9 + $0x28] sm:$0xff]
    %v4684 = vld [vmem:[#allocation9 + $0x30] sm:$0xff]
    %v4685 = vld [vmem:[#allocation9 + $0x38] sm:$0xff]
    %v4686 = vld [vmem:[#allocation9 + $0x40] sm:$0xff]
    %v4687 = vld [vmem:[#allocation9 + $0x48] sm:$0xff]
    %v4688 = vld [vmem:[#allocation9 + $0x50] sm:$0xff]
    %v4689 = vld [vmem:[#allocation9 + $0x58] sm:$0xff]
    %v4690 = vld [vmem:[#allocation9 + $0x60] sm:$0xff]
    %v4691 = vld [vmem:[#allocation9 + $0x68] sm:$0xff]
    %v4692 = vld [vmem:[#allocation9 + $0x70] sm:$0xff]
    %v4693 = vld [vmem:[#allocation9 + $0x78] sm:$0xff]
    %v4694 = vld [vmem:[%s4] sm:$0x1]
    %v4696 = vlaneseq
    %v4697 = vshrl.u32 %v4696, 7
    %v4698 = vsub.s32 0, %v4697
    %v4699 = vrot.slane %v4694, %v4698
    %4701 = vmatprep.subr.mxu0 0.0
    %4702 = vmatpush1.msra.mxu0 %v4678
    %4703 = vmatprep.subr.mxu0 0.0
    %4704 = vmatpush1.msra.mxu0 %v4679
    %4705 = vmatprep.subr.mxu0 0.0
    %4706 = vmatpush1.msra.mxu0 %v4680
    %4707 = vmatprep.subr.mxu0 0.0
    %4708 = vmatpush1.msra.mxu0 %v4681
    %4709 = vmatprep.subr.mxu0 0.0
    %4710 = vmatpush1.msra.mxu0 %v4682
    %4711 = vmatprep.subr.mxu0 0.0
    %4712 = vmatpush1.msra.mxu0 %v4683
    %4713 = vmatprep.subr.mxu0 0.0
    %4714 = vmatpush1.msra.mxu0 %v4684
    %4715 = vmatprep.subr.mxu0 0.0
    %4716 = vmatpush1.msra.mxu0 %v4685
    %4717 = vmatprep.subr.mxu0 0.0
    %4718 = vmatpush1.msra.mxu0 %v4686
    %4719 = vmatprep.subr.mxu0 0.0
    %4720 = vmatpush1.msra.mxu0 %v4687
    %4721 = vmatprep.subr.mxu0 0.0
    %4722 = vmatpush1.msra.mxu0 %v4688
    %4723 = vmatprep.subr.mxu0 0.0
    %4724 = vmatpush1.msra.mxu0 %v4689
    %4725 = vmatprep.subr.mxu0 0.0
    %4726 = vmatpush1.msra.mxu0 %v4690
    %4727 = vmatprep.subr.mxu0 0.0
    %4728 = vmatpush1.msra.mxu0 %v4691
    %4729 = vmatprep.subr.mxu0 0.0
    %4730 = vmatpush1.msra.mxu0 %v4692
    %4731 = vmatprep.subr.mxu0 0.0
    %4732 = vmatpush1.msra.mxu0 %v4693
    %4733 = vmatprep.subr.mxu0 0.0
    %4734 = vmatpush1.msra.mxu0 0.0
    %4735 = vmatprep.subr.mxu0 0.0
    %4736 = vmatpush1.msra.mxu0 0.0
    %4737 = vmatprep.subr.mxu0 0.0
    %4738 = vmatpush1.msra.mxu0 0.0
    %4739 = vmatprep.subr.mxu0 0.0
    %4740 = vmatpush1.msra.mxu0 0.0
    %4741 = vmatprep.subr.mxu0 0.0
    %4742 = vmatpush1.msra.mxu0 0.0
    %4743 = vmatprep.subr.mxu0 0.0
    %4744 = vmatpush1.msra.mxu0 0.0
    %4745 = vmatprep.subr.mxu0 0.0
    %4746 = vmatpush1.msra.mxu0 0.0
    %4747 = vmatprep.subr.mxu0 0.0
    %4748 = vmatpush1.msra.mxu0 0.0
    %4749 = vmatprep.subr.mxu0 0.0
    %4750 = vmatpush1.msra.mxu0 0.0
    %4751 = vmatprep.subr.mxu0 0.0
    %4752 = vmatpush1.msra.mxu0 0.0
    %4753 = vmatprep.subr.mxu0 0.0
    %4754 = vmatpush1.msra.mxu0 0.0
    %4755 = vmatprep.subr.mxu0 0.0
    %4756 = vmatpush1.msra.mxu0 0.0
    %4757 = vmatprep.subr.mxu0 0.0
    %4758 = vmatpush1.msra.mxu0 0.0
    %4759 = vmatprep.subr.mxu0 0.0
    %4760 = vmatpush1.msra.mxu0 0.0
    %4761 = vmatprep.subr.mxu0 0.0
    %4762 = vmatpush1.msra.mxu0 0.0
    %4763 = vmatprep.subr.mxu0 0.0
    %4764 = vmatpush1.msra.mxu0 0.0
    %4765 = vmatprep.mubr.f32.mxu0 0.0
    %4766 = vmatmul.mubr.f32.gmra.mrb[0].mxu0 %v4669
    %v4767 = vpop.f32.mrb[0].mxu0
    %v4768 = vadd.f32 %v4699, %v4767
    %v4769 = vpop.f32.mrb[0].mxu0
    %4770 = vdwg.mxu0
    %v4771 = vtanh.pop %v4768
    %v4772 = vld [vmem:[#allocation10] sm:$0xff]
    %v4773 = vld [vmem:[#allocation10 + $0x8] sm:$0xff]
    %v4774 = vld [vmem:[#allocation10 + $0x10] sm:$0xff]
    %v4775 = vld [vmem:[#allocation10 + $0x18] sm:$0xff]
    %v4776 = vld [vmem:[#allocation10 + $0x20] sm:$0xff]
    %v4777 = vld [vmem:[#allocation10 + $0x28] sm:$0xff]
    %v4778 = vld [vmem:[#allocation10 + $0x30] sm:$0xff]
    %v4779 = vld [vmem:[#allocation10 + $0x38] sm:$0xff]
    %v4780 = vld [vmem:[#allocation10 + $0x40] sm:$0xff]
    %v4781 = vld [vmem:[#allocation10 + $0x48] sm:$0xff]
    %v4782 = vld [vmem:[#allocation10 + $0x50] sm:$0xff]
    %v4783 = vld [vmem:[#allocation10 + $0x58] sm:$0xff]
    %v4784 = vld [vmem:[#allocation10 + $0x60] sm:$0xff]
    %v4785 = vld [vmem:[#allocation10 + $0x68] sm:$0xff]
    %v4786 = vld [vmem:[#allocation10 + $0x70] sm:$0xff]
    %v4787 = vld [vmem:[#allocation10 + $0x78] sm:$0xff]
    %v4788 = vld [vmem:[%s6] sm:$0x1]
    %v4790 = vlaneseq
    %v4791 = vshrl.u32 %v4790, 7
    %v4792 = vsub.s32 0, %v4791
    %v4793 = vrot.slane %v4788, %v4792
    %4795 = vmatprep.subr.mxu0 0.0
    %4796 = vmatpush1.msra.mxu0 %v4772
    %4797 = vmatprep.subr.mxu0 0.0
    %4798 = vmatpush1.msra.mxu0 %v4773
    %4799 = vmatprep.subr.mxu0 0.0
    %4800 = vmatpush1.msra.mxu0 %v4774
    %4801 = vmatprep.subr.mxu0 0.0
    %4802 = vmatpush1.msra.mxu0 %v4775
    %4803 = vmatprep.subr.mxu0 0.0
    %4804 = vmatpush1.msra.mxu0 %v4776
    %4805 = vmatprep.subr.mxu0 0.0
    %4806 = vmatpush1.msra.mxu0 %v4777
    %4807 = vmatprep.subr.mxu0 0.0
    %4808 = vmatpush1.msra.mxu0 %v4778
    %4809 = vmatprep.subr.mxu0 0.0
    %4810 = vmatpush1.msra.mxu0 %v4779
    %4811 = vmatprep.subr.mxu0 0.0
    %4812 = vmatpush1.msra.mxu0 %v4780
    %4813 = vmatprep.subr.mxu0 0.0
    %4814 = vmatpush1.msra.mxu0 %v4781
    %4815 = vmatprep.subr.mxu0 0.0
    %4816 = vmatpush1.msra.mxu0 %v4782
    %4817 = vmatprep.subr.mxu0 0.0
    %4818 = vmatpush1.msra.mxu0 %v4783
    %4819 = vmatprep.subr.mxu0 0.0
    %4820 = vmatpush1.msra.mxu0 %v4784
    %4821 = vmatprep.subr.mxu0 0.0
    %4822 = vmatpush1.msra.mxu0 %v4785
    %4823 = vmatprep.subr.mxu0 0.0
    %4824 = vmatpush1.msra.mxu0 %v4786
    %4825 = vmatprep.subr.mxu0 0.0
    %4826 = vmatpush1.msra.mxu0 %v4787
    %4827 = vmatprep.subr.mxu0 0.0
    %4828 = vmatpush1.msra.mxu0 0.0
    %4829 = vmatprep.subr.mxu0 0.0
    %4830 = vmatpush1.msra.mxu0 0.0
    %4831 = vmatprep.subr.mxu0 0.0
    %4832 = vmatpush1.msra.mxu0 0.0
    %4833 = vmatprep.subr.mxu0 0.0
    %4834 = vmatpush1.msra.mxu0 0.0
    %4835 = vmatprep.subr.mxu0 0.0
    %4836 = vmatpush1.msra.mxu0 0.0
    %4837 = vmatprep.subr.mxu0 0.0
    %4838 = vmatpush1.msra.mxu0 0.0
    %4839 = vmatprep.subr.mxu0 0.0
    %4840 = vmatpush1.msra.mxu0 0.0
    %4841 = vmatprep.subr.mxu0 0.0
    %4842 = vmatpush1.msra.mxu0 0.0
    %4843 = vmatprep.subr.mxu0 0.0
    %4844 = vmatpush1.msra.mxu0 0.0
    %4845 = vmatprep.subr.mxu0 0.0
    %4846 = vmatpush1.msra.mxu0 0.0
    %4847 = vmatprep.subr.mxu0 0.0
    %4848 = vmatpush1.msra.mxu0 0.0
    %4849 = vmatprep.subr.mxu0 0.0
    %4850 = vmatpush1.msra.mxu0 0.0
    %4851 = vmatprep.subr.mxu0 0.0
    %4852 = vmatpush1.msra.mxu0 0.0
    %4853 = vmatprep.subr.mxu0 0.0
    %4854 = vmatpush1.msra.mxu0 0.0
    %4855 = vmatprep.subr.mxu0 0.0
    %4856 = vmatpush1.msra.mxu0 0.0
    %4857 = vmatprep.subr.mxu0 0.0
    %4858 = vmatpush1.msra.mxu0 0.0
    %4859 = vmatprep.mubr.f32.mxu0 0.0
    %4860 = vmatmul.mubr.f32.gmra.mrb[0].mxu0 %v4771
    %v4861 = vpop.f32.mrb[0].mxu0
    %v4862 = vadd.f32 %v4793, %v4861
    %v4863 = vpop.f32.mrb[0].mxu0
    %4864 = vdwg.mxu0
    %v4865 = vmul.f32 %v4676, %v4862
    %v4866 = vadd.f32 %v4669, %v4865
    %4867 = vmatprep.subr.mxu0 0.0
    %4868 = vmatpush1.msra.mxu0 %v4678
    %4869 = vmatprep.subr.mxu0 0.0
    %4870 = vmatpush1.msra.mxu0 %v4679
    %4871 = vmatprep.subr.mxu0 0.0
    %4872 = vmatpush1.msra.mxu0 %v4680
    %4873 = vmatprep.subr.mxu0 0.0
    %4874 = vmatpush1.msra.mxu0 %v4681
    %4875 = vmatprep.subr.mxu0 0.0
    %4876 = vmatpush1.msra.mxu0 %v4682
    %4877 = vmatprep.subr.mxu0 0.0
    %4878 = vmatpush1.msra.mxu0 %v4683
    %4879 = vmatprep.subr.mxu0 0.0
    %4880 = vmatpush1.msra.mxu0 %v4684
    %4881 = vmatprep.subr.mxu0 0.0
    %4882 = vmatpush1.msra.mxu0 %v4685
    %4883 = vmatprep.subr.mxu0 0.0
    %4884 = vmatpush1.msra.mxu0 %v4686
    %4885 = vmatprep.subr.mxu0 0.0
    %4886 = vmatpush1.msra.mxu0 %v4687
    %4887 = vmatprep.subr.mxu0 0.0
    %4888 = vmatpush1.msra.mxu0 %v4688
    %4889 = vmatprep.subr.mxu0 0.0
    %4890 = vmatpush1.msra.mxu0 %v4689
    %4891 = vmatprep.subr.mxu0 0.0
    %4892 = vmatpush1.msra.mxu0 %v4690
    %4893 = vmatprep.subr.mxu0 0.0
    %4894 = vmatpush1.msra.mxu0 %v4691
    %4895 = vmatprep.subr.mxu0 0.0
    %4896 = vmatpush1.msra.mxu0 %v4692
    %4897 = vmatprep.subr.mxu0 0.0
    %4898 = vmatpush1.msra.mxu0 %v4693
    %4899 = vmatprep.subr.mxu0 0.0
    %4900 = vmatpush1.msra.mxu0 0.0
    %4901 = vmatprep.subr.mxu0 0.0
    %4902 = vmatpush1.msra.mxu0 0.0
    %4903 = vmatprep.subr.mxu0 0.0
    %4904 = vmatpush1.msra.mxu0 0.0
    %4905 = vmatprep.subr.mxu0 0.0
    %4906 = vmatpush1.msra.mxu0 0.0
    %4907 = vmatprep.subr.mxu0 0.0
    %4908 = vmatpush1.msra.mxu0 0.0
    %4909 = vmatprep.subr.mxu0 0.0
    %4910 = vmatpush1.msra.mxu0 0.0
    %4911 = vmatprep.subr.mxu0 0.0
    %4912 = vmatpush1.msra.mxu0 0.0
    %4913 = vmatprep.subr.mxu0 0.0
    %4914 = vmatpush1.msra.mxu0 0.0
    %4915 = vmatprep.subr.mxu0 0.0
    %4916 = vmatpush1.msra.mxu0 0.0
    %4917 = vmatprep.subr.mxu0 0.0
    %4918 = vmatpush1.msra.mxu0 0.0
    %4919 = vmatprep.subr.mxu0 0.0
    %4920 = vmatpush1.msra.mxu0 0.0
    %4921 = vmatprep.subr.mxu0 0.0
    %4922 = vmatpush1.msra.mxu0 0.0
    %4923 = vmatprep.subr.mxu0 0.0
    %4924 = vmatpush1.msra.mxu0 0.0
    %4925 = vmatprep.subr.mxu0 0.0
    %4926 = vmatpush1.msra.mxu0 0.0
    %4927 = vmatprep.subr.mxu0 0.0
    %4928 = vmatpush1.msra.mxu0 0.0
    %4929 = vmatprep.subr.mxu0 0.0
    %4930 = vmatpush1.msra.mxu0 0.0
    %4931 = vmatprep.mubr.f32.mxu0 0.0
    %4932 = vmatmul.mubr.f32.gmra.mrb[0].mxu0 %v4866
    %v4933 = vpop.f32.mrb[0].mxu0
    %v4934 = vadd.f32 %v4699, %v4933
    %v4935 = vpop.f32.mrb[0].mxu0
    %4936 = vdwg.mxu0
    %v4937 = vtanh.pop %v4934
    %4938 = vmatprep.subr.mxu0 0.0
    %4939 = vmatpush1.msra.mxu0 %v4772
    %4940 = vmatprep.subr.mxu0 0.0
    %4941 = vmatpush1.msra.mxu0 %v4773
    %4942 = vmatprep.subr.mxu0 0.0
    %4943 = vmatpush1.msra.mxu0 %v4774
    %4944 = vmatprep.subr.mxu0 0.0
    %4945 = vmatpush1.msra.mxu0 %v4775
    %4946 = vmatprep.subr.mxu0 0.0
    %4947 = vmatpush1.msra.mxu0 %v4776
    %4948 = vmatprep.subr.mxu0 0.0
    %4949 = vmatpush1.msra.mxu0 %v4777
    %4950 = vmatprep.subr.mxu0 0.0
    %4951 = vmatpush1.msra.mxu0 %v4778
    %4952 = vmatprep.subr.mxu0 0.0
    %4953 = vmatpush1.msra.mxu0 %v4779
    %4954 = vmatprep.subr.mxu0 0.0
    %4955 = vmatpush1.msra.mxu0 %v4780
    %4956 = vmatprep.subr.mxu0 0.0
    %4957 = vmatpush1.msra.mxu0 %v4781
    %4958 = vmatprep.subr.mxu0 0.0
    %4959 = vmatpush1.msra.mxu0 %v4782
    %4960 = vmatprep.subr.mxu0 0.0
    %4961 = vmatpush1.msra.mxu0 %v4783
    %4962 = vmatprep.subr.mxu0 0.0
    %4963 = vmatpush1.msra.mxu0 %v4784
    %4964 = vmatprep.subr.mxu0 0.0
    %4965 = vmatpush1.msra.mxu0 %v4785
    %4966 = vmatprep.subr.mxu0 0.0
    %4967 = vmatpush1.msra.mxu0 %v4786
    %4968 = vmatprep.subr.mxu0 0.0
    %4969 = vmatpush1.msra.mxu0 %v4787
    %4970 = vmatprep.subr.mxu0 0.0
    %4971 = vmatpush1.msra.mxu0 0.0
    %4972 = vmatprep.subr.mxu0 0.0
    %4973 = vmatpush1.msra.mxu0 0.0
    %4974 = vmatprep.subr.mxu0 0.0
    %4975 = vmatpush1.msra.mxu0 0.0
    %4976 = vmatprep.subr.mxu0 0.0
    %4977 = vmatpush1.msra.mxu0 0.0
    %4978 = vmatprep.subr.mxu0 0.0
    %4979 = vmatpush1.msra.mxu0 0.0
    %4980 = vmatprep.subr.mxu0 0.0
    %4981 = vmatpush1.msra.mxu0 0.0
    %4982 = vmatprep.subr.mxu0 0.0
    %4983 = vmatpush1.msra.mxu0 0.0
    %4984 = vmatprep.subr.mxu0 0.0
    %4985 = vmatpush1.msra.mxu0 0.0
    %4986 = vmatprep.subr.mxu0 0.0
    %4987 = vmatpush1.msra.mxu0 0.0
    %4988 = vmatprep.subr.mxu0 0.0
    %4989 = vmatpush1.msra.mxu0 0.0
    %4990 = vmatprep.subr.mxu0 0.0
    %4991 = vmatpush1.msra.mxu0 0.0
    %4992 = vmatprep.subr.mxu0 0.0
    %4993 = vmatpush1.msra.mxu0 0.0
    %4994 = vmatprep.subr.mxu0 0.0
    %4995 = vmatpush1.msra.mxu0 0.0
    %4996 = vmatprep.subr.mxu0 0.0
    %4997 = vmatpush1.msra.mxu0 0.0
    %4998 = vmatprep.subr.mxu0 0.0
    %4999 = vmatpush1.msra.mxu0 0.0
    %5000 = vmatprep.subr.mxu0 0.0
    %5001 = vmatpush1.msra.mxu0 0.0
    %5002 = vmatprep.mubr.f32.mxu0 0.0
    %5003 = vmatmul.mubr.f32.gmra.mrb[0].mxu0 %v4937
    %v5004 = vpop.f32.mrb[0].mxu0
    %v5005 = vadd.f32 %v4793, %v5004
    %v5006 = vpop.f32.mrb[0].mxu0
    %5007 = vdwg.mxu0
    %v5008 = vmul.f32 %v4676, %v5005
    %v5009 = vadd.f32 %v4866, %v5008
    %5010 = vmatprep.subr.mxu0 0.0
    %5011 = vmatpush1.msra.mxu0 %v4678
    %5012 = vmatprep.subr.mxu0 0.0
    %5013 = vmatpush1.msra.mxu0 %v4679
    %5014 = vmatprep.subr.mxu0 0.0
    %5015 = vmatpush1.msra.mxu0 %v4680
    %5016 = vmatprep.subr.mxu0 0.0
    %5017 = vmatpush1.msra.mxu0 %v4681
    %5018 = vmatprep.subr.mxu0 0.0
    %5019 = vmatpush1.msra.mxu0 %v4682
    %5020 = vmatprep.subr.mxu0 0.0
    %5021 = vmatpush1.msra.mxu0 %v4683
    %5022 = vmatprep.subr.mxu0 0.0
    %5023 = vmatpush1.msra.mxu0 %v4684
    %5024 = vmatprep.subr.mxu0 0.0
    %5025 = vmatpush1.msra.mxu0 %v4685
    %5026 = vmatprep.subr.mxu0 0.0
    %5027 = vmatpush1.msra.mxu0 %v4686
    %5028 = vmatprep.subr.mxu0 0.0
    %5029 = vmatpush1.msra.mxu0 %v4687
    %5030 = vmatprep.subr.mxu0 0.0
    %5031 = vmatpush1.msra.mxu0 %v4688
    %5032 = vmatprep.subr.mxu0 0.0
    %5033 = vmatpush1.msra.mxu0 %v4689
    %5034 = vmatprep.subr.mxu0 0.0
    %5035 = vmatpush1.msra.mxu0 %v4690
    %5036 = vmatprep.subr.mxu0 0.0
    %5037 = vmatpush1.msra.mxu0 %v4691
    %5038 = vmatprep.subr.mxu0 0.0
    %5039 = vmatpush1.msra.mxu0 %v4692
    %5040 = vmatprep.subr.mxu0 0.0
    %5041 = vmatpush1.msra.mxu0 %v4693
    %5042 = vmatprep.subr.mxu0 0.0
    %5043 = vmatpush1.msra.mxu0 0.0
    %5044 = vmatprep.subr.mxu0 0.0
    %5045 = vmatpush1.msra.mxu0 0.0
    %5046 = vmatprep.subr.mxu0 0.0
    %5047 = vmatpush1.msra.mxu0 0.0
    %5048 = vmatprep.subr.mxu0 0.0
    %5049 = vmatpush1.msra.mxu0 0.0
    %5050 = vmatprep.subr.mxu0 0.0
    %5051 = vmatpush1.msra.mxu0 0.0
    %5052 = vmatprep.subr.mxu0 0.0
    %5053 = vmatpush1.msra.mxu0 0.0
    %5054 = vmatprep.subr.mxu0 0.0
    %5055 = vmatpush1.msra.mxu0 0.0
    %5056 = vmatprep.subr.mxu0 0.0
    %5057 = vmatpush1.msra.mxu0 0.0
    %5058 = vmatprep.subr.mxu0 0.0
    %5059 = vmatpush1.msra.mxu0 0.0
    %5060 = vmatprep.subr.mxu0 0.0
    %5061 = vmatpush1.msra.mxu0 0.0
    %5062 = vmatprep.subr.mxu0 0.0
    %5063 = vmatpush1.msra.mxu0 0.0
    %5064 = vmatprep.subr.mxu0 0.0
    %5065 = vmatpush1.msra.mxu0 0.0
    %5066 = vmatprep.subr.mxu0 0.0
    %5067 = vmatpush1.msra.mxu0 0.0
    %5068 = vmatprep.subr.mxu0 0.0
    %5069 = vmatpush1.msra.mxu0 0.0
    %5070 = vmatprep.subr.mxu0 0.0
    %5071 = vmatpush1.msra.mxu0 0.0
    %5072 = vmatprep.subr.mxu0 0.0
    %5073 = vmatpush1.msra.mxu0 0.0
    %5074 = vmatprep.mubr.f32.mxu0 0.0
    %5075 = vmatmul.mubr.f32.gmra.mrb[0].mxu0 %v5009
    %v5076 = vpop.f32.mrb[0].mxu0
    %v5077 = vadd.f32 %v4699, %v5076
    %v5078 = vpop.f32.mrb[0].mxu0
    %5079 = vdwg.mxu0
    %v5080 = vtanh.pop %v5077
    %5081 = vmatprep.subr.mxu0 0.0
    %5082 = vmatpush1.msra.mxu0 %v4772
    %5083 = vmatprep.subr.mxu0 0.0
    %5084 = vmatpush1.msra.mxu0 %v4773
    %5085 = vmatprep.subr.mxu0 0.0
    %5086 = vmatpush1.msra.mxu0 %v4774
    %5087 = vmatprep.subr.mxu0 0.0
    %5088 = vmatpush1.msra.mxu0 %v4775
    %5089 = vmatprep.subr.mxu0 0.0
    %5090 = vmatpush1.msra.mxu0 %v4776
    %5091 = vmatprep.subr.mxu0 0.0
    %5092 = vmatpush1.msra.mxu0 %v4777
    %5093 = vmatprep.subr.mxu0 0.0
    %5094 = vmatpush1.msra.mxu0 %v4778
    %5095 = vmatprep.subr.mxu0 0.0
    %5096 = vmatpush1.msra.mxu0 %v4779
    %5097 = vmatprep.subr.mxu0 0.0
    %5098 = vmatpush1.msra.mxu0 %v4780
    %5099 = vmatprep.subr.mxu0 0.0
    %5100 = vmatpush1.msra.mxu0 %v4781
    %5101 = vmatprep.subr.mxu0 0.0
    %5102 = vmatpush1.msra.mxu0 %v4782
    %5103 = vmatprep.subr.mxu0 0.0
    %5104 = vmatpush1.msra.mxu0 %v4783
    %5105 = vmatprep.subr.mxu0 0.0
    %5106 = vmatpush1.msra.mxu0 %v4784
    %5107 = vmatprep.subr.mxu0 0.0
    %5108 = vmatpush1.msra.mxu0 %v4785
    %5109 = vmatprep.subr.mxu0 0.0
    %5110 = vmatpush1.msra.mxu0 %v4786
    %5111 = vmatprep.subr.mxu0 0.0
    %5112 = vmatpush1.msra.mxu0 %v4787
    %5113 = vmatprep.subr.mxu0 0.0
    %5114 = vmatpush1.msra.mxu0 0.0
    %5115 = vmatprep.subr.mxu0 0.0
    %5116 = vmatpush1.msra.mxu0 0.0
    %5117 = vmatprep.subr.mxu0 0.0
    %5118 = vmatpush1.msra.mxu0 0.0
    %5119 = vmatprep.subr.mxu0 0.0
    %5120 = vmatpush1.msra.mxu0 0.0
    %5121 = vmatprep.subr.mxu0 0.0
    %5122 = vmatpush1.msra.mxu0 0.0
    %5123 = vmatprep.subr.mxu0 0.0
    %5124 = vmatpush1.msra.mxu0 0.0
    %5125 = vmatprep.subr.mxu0 0.0
    %5126 = vmatpush1.msra.mxu0 0.0
    %5127 = vmatprep.subr.mxu0 0.0
    %5128 = vmatpush1.msra.mxu0 0.0
    %5129 = vmatprep.subr.mxu0 0.0
    %5130 = vmatpush1.msra.mxu0 0.0
    %5131 = vmatprep.subr.mxu0 0.0
    %5132 = vmatpush1.msra.mxu0 0.0
    %5133 = vmatprep.subr.mxu0 0.0
    %5134 = vmatpush1.msra.mxu0 0.0
    %5135 = vmatprep.subr.mxu0 0.0
    %5136 = vmatpush1.msra.mxu0 0.0
    %5137 = vmatprep.subr.mxu0 0.0
    %5138 = vmatpush1.msra.mxu0 0.0
    %5139 = vmatprep.subr.mxu0 0.0
    %5140 = vmatpush1.msra.mxu0 0.0
    %5141 = vmatprep.subr.mxu0 0.0
    %5142 = vmatpush1.msra.mxu0 0.0
    %5143 = vmatprep.subr.mxu0 0.0
    %5144 = vmatpush1.msra.mxu0 0.0
    %5145 = vmatprep.mubr.f32.mxu0 0.0
    %5146 = vmatmul.mubr.f32.gmra.mrb[0].mxu0 %v5080
    %v5147 = vpop.f32.mrb[0].mxu0
    %v5148 = vadd.f32 %v4793, %v5147
    %v5149 = vpop.f32.mrb[0].mxu0
    %5150 = vdwg.mxu0
    %v5151 = vmul.f32 %v4676, %v5148
    %v5152 = vadd.f32 %v5009, %v5151
    %s5153 = scalar_lea.vmem [#allocation12], 48
    %5154 = vst [vmem:[%s5153] sm:$0xff] %v5152
    %s5155 = scalar_lea.vmem [#allocation4], 224
    %v5156 = vld [vmem:[%s5155] sm:$0xff]
    %v5157 = vld [vmem:[%s5155 + $0x8] sm:$0xff]
    %v5158 = vld [vmem:[%s5155 + $0x10] sm:$0xff]
    %v5159 = vld [vmem:[%s5155 + $0x18] sm:$0xff]
    %v5160 = vld [vmem:[#allocation7] sm:$0xff]
    %v5161 = vld [vmem:[#allocation7 + $0x8] sm:$0xff]
    %v5162 = vld [vmem:[#allocation7 + $0x10] sm:$0xff]
    %v5163 = vld [vmem:[#allocation7 + $0x18] sm:$0xff]
    %v5164 = vld [vmem:[#allocation7 + $0x20] sm:$0xff]
    %v5165 = vld [vmem:[#allocation7 + $0x28] sm:$0xff]
    %v5166 = vld [vmem:[#allocation7 + $0x30] sm:$0xff]
    %v5167 = vld [vmem:[#allocation7 + $0x38] sm:$0xff]
    %v5168 = vld [vmem:[#allocation7 + $0x40] sm:$0xff]
    %v5169 = vld [vmem:[#allocation7 + $0x48] sm:$0xff]
    %v5170 = vld [vmem:[#allocation7 + $0x50] sm:$0xff]
    %v5171 = vld [vmem:[#allocation7 + $0x58] sm:$0xff]
    %v5172 = vld [vmem:[#allocation7 + $0x60] sm:$0xff]
    %v5173 = vld [vmem:[#allocation7 + $0x68] sm:$0xff]
    %v5174 = vld [vmem:[#allocation7 + $0x70] sm:$0xff]
    %v5175 = vld [vmem:[#allocation7 + $0x78] sm:$0xff]
    %v5176 = vld [vmem:[#allocation7 + $0x80] sm:$0xff]
    %v5177 = vld [vmem:[#allocation7 + $0x88] sm:$0xff]
    %v5178 = vld [vmem:[#allocation7 + $0x90] sm:$0xff]
    %v5179 = vld [vmem:[#allocation7 + $0x98] sm:$0xff]
    %v5180 = vld [vmem:[#allocation7 + $0xa0] sm:$0xff]
    %v5181 = vld [vmem:[#allocation7 + $0xa8] sm:$0xff]
    %v5182 = vld [vmem:[#allocation7 + $0xb0] sm:$0xff]
    %v5183 = vld [vmem:[#allocation7 + $0xb8] sm:$0xff]
    %v5184 = vld [vmem:[#allocation7 + $0xc0] sm:$0xff]
    %v5185 = vld [vmem:[#allocation7 + $0xc8] sm:$0xff]
    %v5186 = vld [vmem:[#allocation7 + $0xd0] sm:$0xff]
    %v5187 = vld [vmem:[#allocation7 + $0xd8] sm:$0xff]
    %v5188 = vld [vmem:[#allocation7 + $0xe0] sm:$0xff]
    %v5189 = vld [vmem:[#allocation7 + $0xe8] sm:$0xff]
    %v5190 = vld [vmem:[#allocation7 + $0xf0] sm:$0xff]
    %v5191 = vld [vmem:[#allocation7 + $0xf8] sm:$0xff]
    %v5192 = vld [vmem:[#allocation7 + $0x100] sm:$0xff]
    %v5193 = vld [vmem:[#allocation7 + $0x108] sm:$0xff]
    %v5194 = vld [vmem:[#allocation7 + $0x110] sm:$0xff]
    %v5195 = vld [vmem:[#allocation7 + $0x118] sm:$0xff]
    %v5196 = vld [vmem:[#allocation7 + $0x120] sm:$0xff]
    %v5197 = vld [vmem:[#allocation7 + $0x128] sm:$0xff]
    %v5198 = vld [vmem:[#allocation7 + $0x130] sm:$0xff]
    %v5199 = vld [vmem:[#allocation7 + $0x138] sm:$0xff]
    %v5200 = vld [vmem:[#allocation7 + $0x140] sm:$0xff]
    %v5201 = vld [vmem:[#allocation7 + $0x148] sm:$0xff]
    %v5202 = vld [vmem:[#allocation7 + $0x150] sm:$0xff]
    %v5203 = vld [vmem:[#allocation7 + $0x158] sm:$0xff]
    %v5204 = vld [vmem:[#allocation7 + $0x160] sm:$0xff]
    %v5205 = vld [vmem:[#allocation7 + $0x168] sm:$0xff]
    %v5206 = vld [vmem:[#allocation7 + $0x170] sm:$0xff]
    %v5207 = vld [vmem:[#allocation7 + $0x178] sm:$0xff]
    %v5208 = vld [vmem:[#allocation7 + $0x180] sm:$0xff]
    %v5209 = vld [vmem:[#allocation7 + $0x188] sm:$0xff]
    %v5210 = vld [vmem:[#allocation7 + $0x190] sm:$0xff]
    %v5211 = vld [vmem:[#allocation7 + $0x198] sm:$0xff]
    %v5212 = vld [vmem:[#allocation7 + $0x1a0] sm:$0xff]
    %v5213 = vld [vmem:[#allocation7 + $0x1a8] sm:$0xff]
    %v5214 = vld [vmem:[#allocation7 + $0x1b0] sm:$0xff]
    %v5215 = vld [vmem:[#allocation7 + $0x1b8] sm:$0xff]
    %v5216 = vld [vmem:[#allocation7 + $0x1c0] sm:$0xff]
    %v5217 = vld [vmem:[#allocation7 + $0x1c8] sm:$0xff]
    %v5218 = vld [vmem:[#allocation7 + $0x1d0] sm:$0xff]
    %v5219 = vld [vmem:[#allocation7 + $0x1d8] sm:$0xff]
    %v5220 = vld [vmem:[#allocation7 + $0x1e0] sm:$0xff]
    %v5221 = vld [vmem:[#allocation7 + $0x1e8] sm:$0xff]
    %v5222 = vld [vmem:[#allocation7 + $0x1f0] sm:$0xff]
    %v5223 = vld [vmem:[#allocation7 + $0x1f8] sm:$0xff]
    %5224 = vmatprep.subr.mxu0 %v5161
    %5225 = vmatpush1.msra.mxu0 %v5160
    %5226 = vmatprep.subr.mxu0 %v5165
    %5227 = vmatpush1.msra.mxu0 %v5164
    %5228 = vmatprep.subr.mxu0 %v5169
    %5229 = vmatpush1.msra.mxu0 %v5168
    %5230 = vmatprep.subr.mxu0 %v5173
    %5231 = vmatpush1.msra.mxu0 %v5172
    %5232 = vmatprep.subr.mxu0 %v5177
    %5233 = vmatpush1.msra.mxu0 %v5176
    %5234 = vmatprep.subr.mxu0 %v5181
    %5235 = vmatpush1.msra.mxu0 %v5180
    %5236 = vmatprep.subr.mxu0 %v5185
    %5237 = vmatpush1.msra.mxu0 %v5184
    %5238 = vmatprep.subr.mxu0 %v5189
    %5239 = vmatpush1.msra.mxu0 %v5188
    %5240 = vmatprep.subr.mxu0 %v5193
    %5241 = vmatpush1.msra.mxu0 %v5192
    %5242 = vmatprep.subr.mxu0 %v5197
    %5243 = vmatpush1.msra.mxu0 %v5196
    %5244 = vmatprep.subr.mxu0 %v5201
    %5245 = vmatpush1.msra.mxu0 %v5200
    %5246 = vmatprep.subr.mxu0 %v5205
    %5247 = vmatpush1.msra.mxu0 %v5204
    %5248 = vmatprep.subr.mxu0 %v5209
    %5249 = vmatpush1.msra.mxu0 %v5208
    %5250 = vmatprep.subr.mxu0 %v5213
    %5251 = vmatpush1.msra.mxu0 %v5212
    %5252 = vmatprep.subr.mxu0 %v5217
    %5253 = vmatpush1.msra.mxu0 %v5216
    %5254 = vmatprep.subr.mxu0 %v5221
    %5255 = vmatpush1.msra.mxu0 %v5220
    %5256 = vmatprep.subr.mxu0 0.0
    %5257 = vmatpush1.msra.mxu0 0.0
    %5258 = vmatprep.subr.mxu0 0.0
    %5259 = vmatpush1.msra.mxu0 0.0
    %5260 = vmatprep.subr.mxu0 0.0
    %5261 = vmatpush1.msra.mxu0 0.0
    %5262 = vmatprep.subr.mxu0 0.0
    %5263 = vmatpush1.msra.mxu0 0.0
    %5264 = vmatprep.subr.mxu0 0.0
    %5265 = vmatpush1.msra.mxu0 0.0
    %5266 = vmatprep.subr.mxu0 0.0
    %5267 = vmatpush1.msra.mxu0 0.0
    %5268 = vmatprep.subr.mxu0 0.0
    %5269 = vmatpush1.msra.mxu0 0.0
    %5270 = vmatprep.subr.mxu0 0.0
    %5271 = vmatpush1.msra.mxu0 0.0
    %5272 = vmatprep.subr.mxu0 0.0
    %5273 = vmatpush1.msra.mxu0 0.0
    %5274 = vmatprep.subr.mxu0 0.0
    %5275 = vmatpush1.msra.mxu0 0.0
    %5276 = vmatprep.subr.mxu0 0.0
    %5277 = vmatpush1.msra.mxu0 0.0
    %5278 = vmatprep.subr.mxu0 0.0
    %5279 = vmatpush1.msra.mxu0 0.0
    %5280 = vmatprep.subr.mxu0 0.0
    %5281 = vmatpush1.msra.mxu0 0.0
    %5282 = vmatprep.subr.mxu0 0.0
    %5283 = vmatpush1.msra.mxu0 0.0
    %5284 = vmatprep.subr.mxu0 0.0
    %5285 = vmatpush1.msra.mxu0 0.0
    %5286 = vmatprep.subr.mxu0 0.0
    %5287 = vmatpush1.msra.mxu0 0.0
    %5288 = vmatprep.mubr.f32.mxu0 0.0
    %5289 = vmatmul.mubr.f32.gmra.mrb[0].mxu0 %v5152
    %v5290 = vpop.f32.mrb[0].mxu0
    %v5291 = vadd.f32 0.0, %v5290
    %v5292 = vpop.f32.mrb[0].mxu0
    %v5293 = vadd.f32 0.0, %v5292
    %5294 = vdwg.mxu0
    %5295 = vmatprep.subr.mxu0 %v5163
    %5296 = vmatpush1.msra.mxu0 %v5162
    %5297 = vmatprep.subr.mxu0 %v5167
    %5298 = vmatpush1.msra.mxu0 %v5166
    %5299 = vmatprep.subr.mxu0 %v5171
    %5300 = vmatpush1.msra.mxu0 %v5170
    %5301 = vmatprep.subr.mxu0 %v5175
    %5302 = vmatpush1.msra.mxu0 %v5174
    %5303 = vmatprep.subr.mxu0 %v5179
    %5304 = vmatpush1.msra.mxu0 %v5178
    %5305 = vmatprep.subr.mxu0 %v5183
    %5306 = vmatpush1.msra.mxu0 %v5182
    %5307 = vmatprep.subr.mxu0 %v5187
    %5308 = vmatpush1.msra.mxu0 %v5186
    %5309 = vmatprep.subr.mxu0 %v5191
    %5310 = vmatpush1.msra.mxu0 %v5190
    %5311 = vmatprep.subr.mxu0 %v5195
    %5312 = vmatpush1.msra.mxu0 %v5194
    %5313 = vmatprep.subr.mxu0 %v5199
    %5314 = vmatpush1.msra.mxu0 %v5198
    %5315 = vmatprep.subr.mxu0 %v5203
    %5316 = vmatpush1.msra.mxu0 %v5202
    %5317 = vmatprep.subr.mxu0 %v5207
    %5318 = vmatpush1.msra.mxu0 %v5206
    %5319 = vmatprep.subr.mxu0 %v5211
    %5320 = vmatpush1.msra.mxu0 %v5210
    %5321 = vmatprep.subr.mxu0 %v5215
    %5322 = vmatpush1.msra.mxu0 %v5214
    %5323 = vmatprep.subr.mxu0 %v5219
    %5324 = vmatpush1.msra.mxu0 %v5218
    %5325 = vmatprep.subr.mxu0 %v5223
    %5326 = vmatpush1.msra.mxu0 %v5222
    %5327 = vmatprep.subr.mxu0 0.0
    %5328 = vmatpush1.msra.mxu0 0.0
    %5329 = vmatprep.subr.mxu0 0.0
    %5330 = vmatpush1.msra.mxu0 0.0
    %5331 = vmatprep.subr.mxu0 0.0
    %5332 = vmatpush1.msra.mxu0 0.0
    %5333 = vmatprep.subr.mxu0 0.0
    %5334 = vmatpush1.msra.mxu0 0.0
    %5335 = vmatprep.subr.mxu0 0.0
    %5336 = vmatpush1.msra.mxu0 0.0
    %5337 = vmatprep.subr.mxu0 0.0
    %5338 = vmatpush1.msra.mxu0 0.0
    %5339 = vmatprep.subr.mxu0 0.0
    %5340 = vmatpush1.msra.mxu0 0.0
    %5341 = vmatprep.subr.mxu0 0.0
    %5342 = vmatpush1.msra.mxu0 0.0
    %5343 = vmatprep.subr.mxu0 0.0
    %5344 = vmatpush1.msra.mxu0 0.0
    %5345 = vmatprep.subr.mxu0 0.0
    %5346 = vmatpush1.msra.mxu0 0.0
    %5347 = vmatprep.subr.mxu0 0.0
    %5348 = vmatpush1.msra.mxu0 0.0
    %5349 = vmatprep.subr.mxu0 0.0
    %5350 = vmatpush1.msra.mxu0 0.0
    %5351 = vmatprep.subr.mxu0 0.0
    %5352 = vmatpush1.msra.mxu0 0.0
    %5353 = vmatprep.subr.mxu0 0.0
    %5354 = vmatpush1.msra.mxu0 0.0
    %5355 = vmatprep.subr.mxu0 0.0
    %5356 = vmatpush1.msra.mxu0 0.0
    %5357 = vmatprep.subr.mxu0 0.0
    %5358 = vmatpush1.msra.mxu0 0.0
    %5359 = vmatprep.mubr.f32.mxu0 0.0
    %5360 = vmatmul.mubr.f32.gmra.mrb[0].mxu0 %v5152
    %v5361 = vpop.f32.mrb[0].mxu0
    %v5362 = vadd.f32 0.0, %v5361
    %v5363 = vpop.f32.mrb[0].mxu0
    %v5364 = vadd.f32 0.0, %v5363
    %5365 = vdwg.mxu0
    %v5366 = vadd.f32 %v5156, %v5291
    %v5367 = vadd.f32 %v5157, %v5293
    %v5368 = vadd.f32 %v5158, %v5362
    %v5369 = vadd.f32 %v5159, %v5364
    %v5370 = vxor.u32 %v5366, 2147483648
    %v5371 = vmul.f32 %v5370, 1.442695
    %v5372 = vpow.pop %v5371
    %v5373 = vadd.f32 %v5372, 1.0
    %v5374 = vrcp.pop %v5373
    %v5375 = vmul.f32 1.0, %v5374
    %v5376 = vxor.u32 %v5367, 2147483648
    %v5377 = vmul.f32 %v5376, 1.442695
    %v5378 = vpow.pop %v5377
    %v5379 = vadd.f32 %v5378, 1.0
    %v5380 = vrcp.pop %v5379
    %v5381 = vmul.f32 1.0, %v5380
    %v5382 = vtanh.pop %v5368
    %v5383 = vxor.u32 %v5369, 2147483648
    %v5384 = vmul.f32 %v5383, 1.442695
    %v5385 = vpow.pop %v5384
    %v5386 = vadd.f32 %v5385, 1.0
    %v5387 = vrcp.pop %v5386
    %v5388 = vmul.f32 1.0, %v5387
    %v5389 = vmul.f32 %v5381, %v4667
    %v5390 = vmul.f32 %v5375, %v5382
    %v5391 = vadd.f32 %v5389, %v5390
    %v5392 = vtanh.pop %v5391
    %v5393 = vmul.f32 %v5388, %v5392
    %s5394 = scalar_lea.vmem %s1, 56
    %v5395 = vld [vmem:[%s5394] sm:$0xff]
    %v5396 = vmul.f32 %v5395, 0.33333334
    %5398 = vset.pattern.permute.xlu0 0
    %5399 = vperm.xlu0 %5398, %v5396
    %v5400 = vpop.permute.xlu0 %5399
    %v5402 = vld [vmem:[#allocation9] sm:$0xff]
    %v5403 = vld [vmem:[#allocation9 + $0x8] sm:$0xff]
    %v5404 = vld [vmem:[#allocation9 + $0x10] sm:$0xff]
    %v5405 = vld [vmem:[#allocation9 + $0x18] sm:$0xff]
    %v5406 = vld [vmem:[#allocation9 + $0x20] sm:$0xff]
    %v5407 = vld [vmem:[#allocation9 + $0x28] sm:$0xff]
    %v5408 = vld [vmem:[#allocation9 + $0x30] sm:$0xff]
    %v5409 = vld [vmem:[#allocation9 + $0x38] sm:$0xff]
    %v5410 = vld [vmem:[#allocation9 + $0x40] sm:$0xff]
    %v5411 = vld [vmem:[#allocation9 + $0x48] sm:$0xff]
    %v5412 = vld [vmem:[#allocation9 + $0x50] sm:$0xff]
    %v5413 = vld [vmem:[#allocation9 + $0x58] sm:$0xff]
    %v5414 = vld [vmem:[#allocation9 + $0x60] sm:$0xff]
    %v5415 = vld [vmem:[#allocation9 + $0x68] sm:$0xff]
    %v5416 = vld [vmem:[#allocation9 + $0x70] sm:$0xff]
    %v5417 = vld [vmem:[#allocation9 + $0x78] sm:$0xff]
    %v5418 = vld [vmem:[%s4] sm:$0x1]
    %v5420 = vlaneseq
    %v5421 = vshrl.u32 %v5420, 7
    %v5422 = vsub.s32 0, %v5421
    %v5423 = vrot.slane %v5418, %v5422
    %5425 = vmatprep.subr.mxu0 0.0
    %5426 = vmatpush1.msra.mxu0 %v5402
    %5427 = vmatprep.subr.mxu0 0.0
    %5428 = vmatpush1.msra.mxu0 %v5403
    %5429 = vmatprep.subr.mxu0 0.0
    %5430 = vmatpush1.msra.mxu0 %v5404
    %5431 = vmatprep.subr.mxu0 0.0
    %5432 = vmatpush1.msra.mxu0 %v5405
    %5433 = vmatprep.subr.mxu0 0.0
    %5434 = vmatpush1.msra.mxu0 %v5406
    %5435 = vmatprep.subr.mxu0 0.0
    %5436 = vmatpush1.msra.mxu0 %v5407
    %5437 = vmatprep.subr.mxu0 0.0
    %5438 = vmatpush1.msra.mxu0 %v5408
    %5439 = vmatprep.subr.mxu0 0.0
    %5440 = vmatpush1.msra.mxu0 %v5409
    %5441 = vmatprep.subr.mxu0 0.0
    %5442 = vmatpush1.msra.mxu0 %v5410
    %5443 = vmatprep.subr.mxu0 0.0
    %5444 = vmatpush1.msra.mxu0 %v5411
    %5445 = vmatprep.subr.mxu0 0.0
    %5446 = vmatpush1.msra.mxu0 %v5412
    %5447 = vmatprep.subr.mxu0 0.0
    %5448 = vmatpush1.msra.mxu0 %v5413
    %5449 = vmatprep.subr.mxu0 0.0
    %5450 = vmatpush1.msra.mxu0 %v5414
    %5451 = vmatprep.subr.mxu0 0.0
    %5452 = vmatpush1.msra.mxu0 %v5415
    %5453 = vmatprep.subr.mxu0 0.0
    %5454 = vmatpush1.msra.mxu0 %v5416
    %5455 = vmatprep.subr.mxu0 0.0
    %5456 = vmatpush1.msra.mxu0 %v5417
    %5457 = vmatprep.subr.mxu0 0.0
    %5458 = vmatpush1.msra.mxu0 0.0
    %5459 = vmatprep.subr.mxu0 0.0
    %5460 = vmatpush1.msra.mxu0 0.0
    %5461 = vmatprep.subr.mxu0 0.0
    %5462 = vmatpush1.msra.mxu0 0.0
    %5463 = vmatprep.subr.mxu0 0.0
    %5464 = vmatpush1.msra.mxu0 0.0
    %5465 = vmatprep.subr.mxu0 0.0
    %5466 = vmatpush1.msra.mxu0 0.0
    %5467 = vmatprep.subr.mxu0 0.0
    %5468 = vmatpush1.msra.mxu0 0.0
    %5469 = vmatprep.subr.mxu0 0.0
    %5470 = vmatpush1.msra.mxu0 0.0
    %5471 = vmatprep.subr.mxu0 0.0
    %5472 = vmatpush1.msra.mxu0 0.0
    %5473 = vmatprep.subr.mxu0 0.0
    %5474 = vmatpush1.msra.mxu0 0.0
    %5475 = vmatprep.subr.mxu0 0.0
    %5476 = vmatpush1.msra.mxu0 0.0
    %5477 = vmatprep.subr.mxu0 0.0
    %5478 = vmatpush1.msra.mxu0 0.0
    %5479 = vmatprep.subr.mxu0 0.0
    %5480 = vmatpush1.msra.mxu0 0.0
    %5481 = vmatprep.subr.mxu0 0.0
    %5482 = vmatpush1.msra.mxu0 0.0
    %5483 = vmatprep.subr.mxu0 0.0
    %5484 = vmatpush1.msra.mxu0 0.0
    %5485 = vmatprep.subr.mxu0 0.0
    %5486 = vmatpush1.msra.mxu0 0.0
    %5487 = vmatprep.subr.mxu0 0.0
    %5488 = vmatpush1.msra.mxu0 0.0
    %5489 = vmatprep.mubr.f32.mxu0 0.0
    %5490 = vmatmul.mubr.f32.gmra.mrb[0].mxu0 %v5393
    %v5491 = vpop.f32.mrb[0].mxu0
    %v5492 = vadd.f32 %v5423, %v5491
    %v5493 = vpop.f32.mrb[0].mxu0
    %5494 = vdwg.mxu0
    %v5495 = vtanh.pop %v5492
    %v5496 = vld [vmem:[#allocation10] sm:$0xff]
    %v5497 = vld [vmem:[#allocation10 + $0x8] sm:$0xff]
    %v5498 = vld [vmem:[#allocation10 + $0x10] sm:$0xff]
    %v5499 = vld [vmem:[#allocation10 + $0x18] sm:$0xff]
    %v5500 = vld [vmem:[#allocation10 + $0x20] sm:$0xff]
    %v5501 = vld [vmem:[#allocation10 + $0x28] sm:$0xff]
    %v5502 = vld [vmem:[#allocation10 + $0x30] sm:$0xff]
    %v5503 = vld [vmem:[#allocation10 + $0x38] sm:$0xff]
    %v5504 = vld [vmem:[#allocation10 + $0x40] sm:$0xff]
    %v5505 = vld [vmem:[#allocation10 + $0x48] sm:$0xff]
    %v5506 = vld [vmem:[#allocation10 + $0x50] sm:$0xff]
    %v5507 = vld [vmem:[#allocation10 + $0x58] sm:$0xff]
    %v5508 = vld [vmem:[#allocation10 + $0x60] sm:$0xff]
    %v5509 = vld [vmem:[#allocation10 + $0x68] sm:$0xff]
    %v5510 = vld [vmem:[#allocation10 + $0x70] sm:$0xff]
    %v5511 = vld [vmem:[#allocation10 + $0x78] sm:$0xff]
    %v5512 = vld [vmem:[%s6] sm:$0x1]
    %v5514 = vlaneseq
    %v5515 = vshrl.u32 %v5514, 7
    %v5516 = vsub.s32 0, %v5515
    %v5517 = vrot.slane %v5512, %v5516
    %5519 = vmatprep.subr.mxu0 0.0
    %5520 = vmatpush1.msra.mxu0 %v5496
    %5521 = vmatprep.subr.mxu0 0.0
    %5522 = vmatpush1.msra.mxu0 %v5497
    %5523 = vmatprep.subr.mxu0 0.0
    %5524 = vmatpush1.msra.mxu0 %v5498
    %5525 = vmatprep.subr.mxu0 0.0
    %5526 = vmatpush1.msra.mxu0 %v5499
    %5527 = vmatprep.subr.mxu0 0.0
    %5528 = vmatpush1.msra.mxu0 %v5500
    %5529 = vmatprep.subr.mxu0 0.0
    %5530 = vmatpush1.msra.mxu0 %v5501
    %5531 = vmatprep.subr.mxu0 0.0
    %5532 = vmatpush1.msra.mxu0 %v5502
    %5533 = vmatprep.subr.mxu0 0.0
    %5534 = vmatpush1.msra.mxu0 %v5503
    %5535 = vmatprep.subr.mxu0 0.0
    %5536 = vmatpush1.msra.mxu0 %v5504
    %5537 = vmatprep.subr.mxu0 0.0
    %5538 = vmatpush1.msra.mxu0 %v5505
    %5539 = vmatprep.subr.mxu0 0.0
    %5540 = vmatpush1.msra.mxu0 %v5506
    %5541 = vmatprep.subr.mxu0 0.0
    %5542 = vmatpush1.msra.mxu0 %v5507
    %5543 = vmatprep.subr.mxu0 0.0
    %5544 = vmatpush1.msra.mxu0 %v5508
    %5545 = vmatprep.subr.mxu0 0.0
    %5546 = vmatpush1.msra.mxu0 %v5509
    %5547 = vmatprep.subr.mxu0 0.0
    %5548 = vmatpush1.msra.mxu0 %v5510
    %5549 = vmatprep.subr.mxu0 0.0
    %5550 = vmatpush1.msra.mxu0 %v5511
    %5551 = vmatprep.subr.mxu0 0.0
    %5552 = vmatpush1.msra.mxu0 0.0
    %5553 = vmatprep.subr.mxu0 0.0
    %5554 = vmatpush1.msra.mxu0 0.0
    %5555 = vmatprep.subr.mxu0 0.0
    %5556 = vmatpush1.msra.mxu0 0.0
    %5557 = vmatprep.subr.mxu0 0.0
    %5558 = vmatpush1.msra.mxu0 0.0
    %5559 = vmatprep.subr.mxu0 0.0
    %5560 = vmatpush1.msra.mxu0 0.0
    %5561 = vmatprep.subr.mxu0 0.0
    %5562 = vmatpush1.msra.mxu0 0.0
    %5563 = vmatprep.subr.mxu0 0.0
    %5564 = vmatpush1.msra.mxu0 0.0
    %5565 = vmatprep.subr.mxu0 0.0
    %5566 = vmatpush1.msra.mxu0 0.0
    %5567 = vmatprep.subr.mxu0 0.0
    %5568 = vmatpush1.msra.mxu0 0.0
    %5569 = vmatprep.subr.mxu0 0.0
    %5570 = vmatpush1.msra.mxu0 0.0
    %5571 = vmatprep.subr.mxu0 0.0
    %5572 = vmatpush1.msra.mxu0 0.0
    %5573 = vmatprep.subr.mxu0 0.0
    %5574 = vmatpush1.msra.mxu0 0.0
    %5575 = vmatprep.subr.mxu0 0.0
    %5576 = vmatpush1.msra.mxu0 0.0
    %5577 = vmatprep.subr.mxu0 0.0
    %5578 = vmatpush1.msra.mxu0 0.0
    %5579 = vmatprep.subr.mxu0 0.0
    %5580 = vmatpush1.msra.mxu0 0.0
    %5581 = vmatprep.subr.mxu0 0.0
    %5582 = vmatpush1.msra.mxu0 0.0
    %5583 = vmatprep.mubr.f32.mxu0 0.0
    %5584 = vmatmul.mubr.f32.gmra.mrb[0].mxu0 %v5495
    %v5585 = vpop.f32.mrb[0].mxu0
    %v5586 = vadd.f32 %v5517, %v5585
    %v5587 = vpop.f32.mrb[0].mxu0
    %5588 = vdwg.mxu0
    %v5589 = vmul.f32 %v5400, %v5586
    %v5590 = vadd.f32 %v5393, %v5589
    %5591 = vmatprep.subr.mxu0 0.0
    %5592 = vmatpush1.msra.mxu0 %v5402
    %5593 = vmatprep.subr.mxu0 0.0
    %5594 = vmatpush1.msra.mxu0 %v5403
    %5595 = vmatprep.subr.mxu0 0.0
    %5596 = vmatpush1.msra.mxu0 %v5404
    %5597 = vmatprep.subr.mxu0 0.0
    %5598 = vmatpush1.msra.mxu0 %v5405
    %5599 = vmatprep.subr.mxu0 0.0
    %5600 = vmatpush1.msra.mxu0 %v5406
    %5601 = vmatprep.subr.mxu0 0.0
    %5602 = vmatpush1.msra.mxu0 %v5407
    %5603 = vmatprep.subr.mxu0 0.0
    %5604 = vmatpush1.msra.mxu0 %v5408
    %5605 = vmatprep.subr.mxu0 0.0
    %5606 = vmatpush1.msra.mxu0 %v5409
    %5607 = vmatprep.subr.mxu0 0.0
    %5608 = vmatpush1.msra.mxu0 %v5410
    %5609 = vmatprep.subr.mxu0 0.0
    %5610 = vmatpush1.msra.mxu0 %v5411
    %5611 = vmatprep.subr.mxu0 0.0
    %5612 = vmatpush1.msra.mxu0 %v5412
    %5613 = vmatprep.subr.mxu0 0.0
    %5614 = vmatpush1.msra.mxu0 %v5413
    %5615 = vmatprep.subr.mxu0 0.0
    %5616 = vmatpush1.msra.mxu0 %v5414
    %5617 = vmatprep.subr.mxu0 0.0
    %5618 = vmatpush1.msra.mxu0 %v5415
    %5619 = vmatprep.subr.mxu0 0.0
    %5620 = vmatpush1.msra.mxu0 %v5416
    %5621 = vmatprep.subr.mxu0 0.0
    %5622 = vmatpush1.msra.mxu0 %v5417
    %5623 = vmatprep.subr.mxu0 0.0
    %5624 = vmatpush1.msra.mxu0 0.0
    %5625 = vmatprep.subr.mxu0 0.0
    %5626 = vmatpush1.msra.mxu0 0.0
    %5627 = vmatprep.subr.mxu0 0.0
    %5628 = vmatpush1.msra.mxu0 0.0
    %5629 = vmatprep.subr.mxu0 0.0
    %5630 = vmatpush1.msra.mxu0 0.0
    %5631 = vmatprep.subr.mxu0 0.0
    %5632 = vmatpush1.msra.mxu0 0.0
    %5633 = vmatprep.subr.mxu0 0.0
    %5634 = vmatpush1.msra.mxu0 0.0
    %5635 = vmatprep.subr.mxu0 0.0
    %5636 = vmatpush1.msra.mxu0 0.0
    %5637 = vmatprep.subr.mxu0 0.0
    %5638 = vmatpush1.msra.mxu0 0.0
    %5639 = vmatprep.subr.mxu0 0.0
    %5640 = vmatpush1.msra.mxu0 0.0
    %5641 = vmatprep.subr.mxu0 0.0
    %5642 = vmatpush1.msra.mxu0 0.0
    %5643 = vmatprep.subr.mxu0 0.0
    %5644 = vmatpush1.msra.mxu0 0.0
    %5645 = vmatprep.subr.mxu0 0.0
    %5646 = vmatpush1.msra.mxu0 0.0
    %5647 = vmatprep.subr.mxu0 0.0
    %5648 = vmatpush1.msra.mxu0 0.0
    %5649 = vmatprep.subr.mxu0 0.0
    %5650 = vmatpush1.msra.mxu0 0.0
    %5651 = vmatprep.subr.mxu0 0.0
    %5652 = vmatpush1.msra.mxu0 0.0
    %5653 = vmatprep.subr.mxu0 0.0
    %5654 = vmatpush1.msra.mxu0 0.0
    %5655 = vmatprep.mubr.f32.mxu0 0.0
    %5656 = vmatmul.mubr.f32.gmra.mrb[0].mxu0 %v5590
    %v5657 = vpop.f32.mrb[0].mxu0
    %v5658 = vadd.f32 %v5423, %v5657
    %v5659 = vpop.f32.mrb[0].mxu0
    %5660 = vdwg.mxu0
    %v5661 = vtanh.pop %v5658
    %5662 = vmatprep.subr.mxu0 0.0
    %5663 = vmatpush1.msra.mxu0 %v5496
    %5664 = vmatprep.subr.mxu0 0.0
    %5665 = vmatpush1.msra.mxu0 %v5497
    %5666 = vmatprep.subr.mxu0 0.0
    %5667 = vmatpush1.msra.mxu0 %v5498
    %5668 = vmatprep.subr.mxu0 0.0
    %5669 = vmatpush1.msra.mxu0 %v5499
    %5670 = vmatprep.subr.mxu0 0.0
    %5671 = vmatpush1.msra.mxu0 %v5500
    %5672 = vmatprep.subr.mxu0 0.0
    %5673 = vmatpush1.msra.mxu0 %v5501
    %5674 = vmatprep.subr.mxu0 0.0
    %5675 = vmatpush1.msra.mxu0 %v5502
    %5676 = vmatprep.subr.mxu0 0.0
    %5677 = vmatpush1.msra.mxu0 %v5503
    %5678 = vmatprep.subr.mxu0 0.0
    %5679 = vmatpush1.msra.mxu0 %v5504
    %5680 = vmatprep.subr.mxu0 0.0
    %5681 = vmatpush1.msra.mxu0 %v5505
    %5682 = vmatprep.subr.mxu0 0.0
    %5683 = vmatpush1.msra.mxu0 %v5506
    %5684 = vmatprep.subr.mxu0 0.0
    %5685 = vmatpush1.msra.mxu0 %v5507
    %5686 = vmatprep.subr.mxu0 0.0
    %5687 = vmatpush1.msra.mxu0 %v5508
    %5688 = vmatprep.subr.mxu0 0.0
    %5689 = vmatpush1.msra.mxu0 %v5509
    %5690 = vmatprep.subr.mxu0 0.0
    %5691 = vmatpush1.msra.mxu0 %v5510
    %5692 = vmatprep.subr.mxu0 0.0
    %5693 = vmatpush1.msra.mxu0 %v5511
    %5694 = vmatprep.subr.mxu0 0.0
    %5695 = vmatpush1.msra.mxu0 0.0
    %5696 = vmatprep.subr.mxu0 0.0
    %5697 = vmatpush1.msra.mxu0 0.0
    %5698 = vmatprep.subr.mxu0 0.0
    %5699 = vmatpush1.msra.mxu0 0.0
    %5700 = vmatprep.subr.mxu0 0.0
    %5701 = vmatpush1.msra.mxu0 0.0
    %5702 = vmatprep.subr.mxu0 0.0
    %5703 = vmatpush1.msra.mxu0 0.0
    %5704 = vmatprep.subr.mxu0 0.0
    %5705 = vmatpush1.msra.mxu0 0.0
    %5706 = vmatprep.subr.mxu0 0.0
    %5707 = vmatpush1.msra.mxu0 0.0
    %5708 = vmatprep.subr.mxu0 0.0
    %5709 = vmatpush1.msra.mxu0 0.0
    %5710 = vmatprep.subr.mxu0 0.0
    %5711 = vmatpush1.msra.mxu0 0.0
    %5712 = vmatprep.subr.mxu0 0.0
    %5713 = vmatpush1.msra.mxu0 0.0
    %5714 = vmatprep.subr.mxu0 0.0
    %5715 = vmatpush1.msra.mxu0 0.0
    %5716 = vmatprep.subr.mxu0 0.0
    %5717 = vmatpush1.msra.mxu0 0.0
    %5718 = vmatprep.subr.mxu0 0.0
    %5719 = vmatpush1.msra.mxu0 0.0
    %5720 = vmatprep.subr.mxu0 0.0
    %5721 = vmatpush1.msra.mxu0 0.0
    %5722 = vmatprep.subr.mxu0 0.0
    %5723 = vmatpush1.msra.mxu0 0.0
    %5724 = vmatprep.subr.mxu0 0.0
    %5725 = vmatpush1.msra.mxu0 0.0
    %5726 = vmatprep.mubr.f32.mxu0 0.0
    %5727 = vmatmul.mubr.f32.gmra.mrb[0].mxu0 %v5661
    %v5728 = vpop.f32.mrb[0].mxu0
    %v5729 = vadd.f32 %v5517, %v5728
    %v5730 = vpop.f32.mrb[0].mxu0
    %5731 = vdwg.mxu0
    %v5732 = vmul.f32 %v5400, %v5729
    %v5733 = vadd.f32 %v5590, %v5732
    %5734 = vmatprep.subr.mxu0 0.0
    %5735 = vmatpush1.msra.mxu0 %v5402
    %5736 = vmatprep.subr.mxu0 0.0
    %5737 = vmatpush1.msra.mxu0 %v5403
    %5738 = vmatprep.subr.mxu0 0.0
    %5739 = vmatpush1.msra.mxu0 %v5404
    %5740 = vmatprep.subr.mxu0 0.0
    %5741 = vmatpush1.msra.mxu0 %v5405
    %5742 = vmatprep.subr.mxu0 0.0
    %5743 = vmatpush1.msra.mxu0 %v5406
    %5744 = vmatprep.subr.mxu0 0.0
    %5745 = vmatpush1.msra.mxu0 %v5407
    %5746 = vmatprep.subr.mxu0 0.0
    %5747 = vmatpush1.msra.mxu0 %v5408
    %5748 = vmatprep.subr.mxu0 0.0
    %5749 = vmatpush1.msra.mxu0 %v5409
    %5750 = vmatprep.subr.mxu0 0.0
    %5751 = vmatpush1.msra.mxu0 %v5410
    %5752 = vmatprep.subr.mxu0 0.0
    %5753 = vmatpush1.msra.mxu0 %v5411
    %5754 = vmatprep.subr.mxu0 0.0
    %5755 = vmatpush1.msra.mxu0 %v5412
    %5756 = vmatprep.subr.mxu0 0.0
    %5757 = vmatpush1.msra.mxu0 %v5413
    %5758 = vmatprep.subr.mxu0 0.0
    %5759 = vmatpush1.msra.mxu0 %v5414
    %5760 = vmatprep.subr.mxu0 0.0
    %5761 = vmatpush1.msra.mxu0 %v5415
    %5762 = vmatprep.subr.mxu0 0.0
    %5763 = vmatpush1.msra.mxu0 %v5416
    %5764 = vmatprep.subr.mxu0 0.0
    %5765 = vmatpush1.msra.mxu0 %v5417
    %5766 = vmatprep.subr.mxu0 0.0
    %5767 = vmatpush1.msra.mxu0 0.0
    %5768 = vmatprep.subr.mxu0 0.0
    %5769 = vmatpush1.msra.mxu0 0.0
    %5770 = vmatprep.subr.mxu0 0.0
    %5771 = vmatpush1.msra.mxu0 0.0
    %5772 = vmatprep.subr.mxu0 0.0
    %5773 = vmatpush1.msra.mxu0 0.0
    %5774 = vmatprep.subr.mxu0 0.0
    %5775 = vmatpush1.msra.mxu0 0.0
    %5776 = vmatprep.subr.mxu0 0.0
    %5777 = vmatpush1.msra.mxu0 0.0
    %5778 = vmatprep.subr.mxu0 0.0
    %5779 = vmatpush1.msra.mxu0 0.0
    %5780 = vmatprep.subr.mxu0 0.0
    %5781 = vmatpush1.msra.mxu0 0.0
    %5782 = vmatprep.subr.mxu0 0.0
    %5783 = vmatpush1.msra.mxu0 0.0
    %5784 = vmatprep.subr.mxu0 0.0
    %5785 = vmatpush1.msra.mxu0 0.0
    %5786 = vmatprep.subr.mxu0 0.0
    %5787 = vmatpush1.msra.mxu0 0.0
    %5788 = vmatprep.subr.mxu0 0.0
    %5789 = vmatpush1.msra.mxu0 0.0
    %5790 = vmatprep.subr.mxu0 0.0
    %5791 = vmatpush1.msra.mxu0 0.0
    %5792 = vmatprep.subr.mxu0 0.0
    %5793 = vmatpush1.msra.mxu0 0.0
    %5794 = vmatprep.subr.mxu0 0.0
    %5795 = vmatpush1.msra.mxu0 0.0
    %5796 = vmatprep.subr.mxu0 0.0
    %5797 = vmatpush1.msra.mxu0 0.0
    %5798 = vmatprep.mubr.f32.mxu0 0.0
    %5799 = vmatmul.mubr.f32.gmra.mrb[0].mxu0 %v5733
    %v5800 = vpop.f32.mrb[0].mxu0
    %v5801 = vadd.f32 %v5423, %v5800
    %v5802 = vpop.f32.mrb[0].mxu0
    %5803 = vdwg.mxu0
    %v5804 = vtanh.pop %v5801
    %5805 = vmatprep.subr.mxu0 0.0
    %5806 = vmatpush1.msra.mxu0 %v5496
    %5807 = vmatprep.subr.mxu0 0.0
    %5808 = vmatpush1.msra.mxu0 %v5497
    %5809 = vmatprep.subr.mxu0 0.0
    %5810 = vmatpush1.msra.mxu0 %v5498
    %5811 = vmatprep.subr.mxu0 0.0
    %5812 = vmatpush1.msra.mxu0 %v5499
    %5813 = vmatprep.subr.mxu0 0.0
    %5814 = vmatpush1.msra.mxu0 %v5500
    %5815 = vmatprep.subr.mxu0 0.0
    %5816 = vmatpush1.msra.mxu0 %v5501
    %5817 = vmatprep.subr.mxu0 0.0
    %5818 = vmatpush1.msra.mxu0 %v5502
    %5819 = vmatprep.subr.mxu0 0.0
    %5820 = vmatpush1.msra.mxu0 %v5503
    %5821 = vmatprep.subr.mxu0 0.0
    %5822 = vmatpush1.msra.mxu0 %v5504
    %5823 = vmatprep.subr.mxu0 0.0
    %5824 = vmatpush1.msra.mxu0 %v5505
    %5825 = vmatprep.subr.mxu0 0.0
    %5826 = vmatpush1.msra.mxu0 %v5506
    %5827 = vmatprep.subr.mxu0 0.0
    %5828 = vmatpush1.msra.mxu0 %v5507
    %5829 = vmatprep.subr.mxu0 0.0
    %5830 = vmatpush1.msra.mxu0 %v5508
    %5831 = vmatprep.subr.mxu0 0.0
    %5832 = vmatpush1.msra.mxu0 %v5509
    %5833 = vmatprep.subr.mxu0 0.0
    %5834 = vmatpush1.msra.mxu0 %v5510
    %5835 = vmatprep.subr.mxu0 0.0
    %5836 = vmatpush1.msra.mxu0 %v5511
    %5837 = vmatprep.subr.mxu0 0.0
    %5838 = vmatpush1.msra.mxu0 0.0
    %5839 = vmatprep.subr.mxu0 0.0
    %5840 = vmatpush1.msra.mxu0 0.0
    %5841 = vmatprep.subr.mxu0 0.0
    %5842 = vmatpush1.msra.mxu0 0.0
    %5843 = vmatprep.subr.mxu0 0.0
    %5844 = vmatpush1.msra.mxu0 0.0
    %5845 = vmatprep.subr.mxu0 0.0
    %5846 = vmatpush1.msra.mxu0 0.0
    %5847 = vmatprep.subr.mxu0 0.0
    %5848 = vmatpush1.msra.mxu0 0.0
    %5849 = vmatprep.subr.mxu0 0.0
    %5850 = vmatpush1.msra.mxu0 0.0
    %5851 = vmatprep.subr.mxu0 0.0
    %5852 = vmatpush1.msra.mxu0 0.0
    %5853 = vmatprep.subr.mxu0 0.0
    %5854 = vmatpush1.msra.mxu0 0.0
    %5855 = vmatprep.subr.mxu0 0.0
    %5856 = vmatpush1.msra.mxu0 0.0
    %5857 = vmatprep.subr.mxu0 0.0
    %5858 = vmatpush1.msra.mxu0 0.0
    %5859 = vmatprep.subr.mxu0 0.0
    %5860 = vmatpush1.msra.mxu0 0.0
    %5861 = vmatprep.subr.mxu0 0.0
    %5862 = vmatpush1.msra.mxu0 0.0
    %5863 = vmatprep.subr.mxu0 0.0
    %5864 = vmatpush1.msra.mxu0 0.0
    %5865 = vmatprep.subr.mxu0 0.0
    %5866 = vmatpush1.msra.mxu0 0.0
    %5867 = vmatprep.subr.mxu0 0.0
    %5868 = vmatpush1.msra.mxu0 0.0
    %5869 = vmatprep.mubr.f32.mxu0 0.0
    %5870 = vmatmul.mubr.f32.gmra.mrb[0].mxu0 %v5804
    %v5871 = vpop.f32.mrb[0].mxu0
    %v5872 = vadd.f32 %v5517, %v5871
    %v5873 = vpop.f32.mrb[0].mxu0
    %5874 = vdwg.mxu0
    %v5875 = vmul.f32 %v5400, %v5872
    %v5876 = vadd.f32 %v5733, %v5875
    %s5877 = scalar_lea.vmem [#allocation12], 56
    %5878 = vst [vmem:[%s5877] sm:$0xff] %v5876
    %5879 = vst [vmem:[#allocation2] sm:$0xff] %v5876
    %5880 = vst [vmem:[#allocation3] sm:$0xff] %v5391
    // Predicated region
    $region50: #{tpu_custom_call.1} parent=1 // pred_check
      _
    $region51: #{tpu_custom_call.1} parent=1 // pred_check_branch
      %5882 = sbr.rel (0) target = $region53
    $region52: #{tpu_custom_call.1} parent=1 // pred_region
      %s5884 = ssub.s32 1024, 1024
      %5885 = vsyncadd [#allocation6], %s5884
      %s5886 = sshll.u32 [#allocation12], 4
      %s5887 = int_to_ptr.vmem [resolvable:$true] %s5886
      %5892 = dma.vmem_to_hbm [thread:$0]  %s5887, 1024, %s7, [#allocation6], 128, 128, 8
    $region53: #{tpu_custom_call.1} parent=1 // pred_fallthru
      _
    // Predicated region
    $region54: #{tpu_custom_call.1} parent=1 // pred_check
      _
    $region55: #{tpu_custom_call.1} parent=1 // pred_check_branch
      %5894 = sbr.rel (0) target = $region57
    $region56: #{tpu_custom_call.1} parent=1 // pred_region
      %5895 = dma.done [#allocation6], 1024
    $region57: #{tpu_custom_call.1} parent=1 // pred_fallthru
      _
    %5896 = vsyncpa [#allocation5], 1
    %5897 = vsyncpa [#allocation8], 1
    %5898 = vsyncpa [#allocation11], 1
    %5899 = vsyncpa [#allocation6], 1

</llo_original>
